<compile_context>
chip_gen: v6e
topology: v6e:2x2x1
jax: 0.10.0
libtpu: 0.0.40
codegen_flags: <defaults>
</compile_context>

<pallas_src>
import functools

import numpy as np
import jax
import jax.numpy as jnp
from jax import lax
from jax.experimental import pallas as pl
from jax.experimental.pallas import tpu as pltpu

BN_EPS = 1e-5


def _l2norm(x):
    # matches VSRN l2norm: x / sqrt(sum(x^2, dim=-1, keepdim=True))
    # (rsqrt -> EUP slot; no epsilon, same as the PyTorch reference)
    return x * lax.rsqrt(jnp.sum(x * x, axis=-1, keepdims=True))


# ----------------------------- fused Pallas kernel ----------------------------

def _vsrn_encoder_kernel(x_ref, fcw_ref, fcb_ref,
                         wg_ref, bg_ref, wt_ref, bt_ref, wp_ref, bp_ref,
                         ww_ref, bw_ref,
                         gbng_ref, gbnb_ref, gbnm_ref, gbnv_ref,
                         wih_ref, whh_ref, bih_ref, bhh_ref,
                         bng_ref, bnb_ref, bnm_ref, bnv_ref,
                         o_ref, *, apply_l2):
    BB, N, F = x_ref.shape          # batch-block, regions, img_dim
    D = fcw_ref.shape[1]            # embed_dim
    M = BB * N                      # rows fed to the MXU per matmul

    # ---- fc (+ optional l2norm) ------------------------------------------
    x = x_ref[...].reshape(M, F)
    e = jnp.dot(x, fcw_ref[...], preferred_element_type=jnp.float32) + fcb_ref[...]
    if apply_l2:                    # dataset_name != 'f30k'
        e = _l2norm(e)

    # ---- 4 x Rs_GCN reasoning blocks (static unrolled) --------------------
    num_gcn = wg_ref.shape[0]
    inv_n = 1.0 / N
    for i in range(num_gcn):
        g_v = jnp.dot(e, wg_ref[i], preferred_element_type=jnp.float32) + bg_ref[i]
        th = jnp.dot(e, wt_ref[i], preferred_element_type=jnp.float32) + bt_ref[i]
        ph = jnp.dot(e, wp_ref[i], preferred_element_type=jnp.float32) + bp_ref[i]
        # Region affinity R = theta @ phi^T / N.  Contraction over the lane
        # axis of both operands (trans_b matmul path; no transpose of phi).
        R = jnp.einsum("bnd,bmd->bnm",
                       th.reshape(BB, N, D), ph.reshape(BB, N, D),
                       preferred_element_type=jnp.float32) * inv_n
        y = jnp.einsum("bnm,bmd->bnd", R, g_v.reshape(BB, N, D),
                       preferred_element_type=jnp.float32).reshape(M, D)
        w_y = jnp.dot(y, ww_ref[i], preferred_element_type=jnp.float32) + bw_ref[i]
        # BatchNorm1d (eval mode): per-channel affine.
        scale = gbng_ref[i] * lax.rsqrt(gbnv_ref[i] + BN_EPS)
        w_y = (w_y - gbnm_ref[i]) * scale + gbnb_ref[i]
        e = w_y + e                                              # residual

    # ---- l2norm -> GRU (last hidden) -> BatchNorm(eval) -> l2norm ---------
    e = _l2norm(e)
    # Precompute input gates for the whole sequence in one (M, 3D) matmul.
    gi = (jnp.dot(e, wih_ref[...], preferred_element_type=jnp.float32)
          + bih_ref[...]).reshape(BB, N, 3 * D)
    h = jnp.zeros((BB, D), jnp.float32)
    for t in range(N):              # static unroll; h stays in vregs
        gh = jnp.dot(h, whh_ref[...], preferred_element_type=jnp.float32) + bhh_ref[...]
        gi_t = gi[:, t, :]
        r = jax.nn.sigmoid(gi_t[:, 0:D] + gh[:, 0:D])
        z = jax.nn.sigmoid(gi_t[:, D:2 * D] + gh[:, D:2 * D])
        n = jnp.tanh(gi_t[:, 2 * D:3 * D] + r * gh[:, 2 * D:3 * D])
        h = (1.0 - z) * n + z * h

    scale = bng_ref[...] * lax.rsqrt(bnv_ref[...] + BN_EPS)
    o_ref[...] = _l2norm((h - bnm_ref[...]) * scale + bnb_ref[...])


# --------------------------------- wrapper ------------------------------------

def _rep_spec(shape):
    nd = len(shape)
    return pl.BlockSpec(shape, lambda b, _nd=nd: (0,) * _nd)


def image_encoder_forward(images, params, apply_l2_after_fc, *, batch_block=None):
    B, N, F = images.shape
    D = params["fc"]["w_t"].shape[1]
    if batch_block is None:
        # One block holding all B*N rows.  On v7x (2 TensorCores) pass
        # batch_block = B // 2 (a multiple of 8, or == B) to shard the
        # "parallel" batch axis across both cores.
        batch_block = B
    num_blocks = pl.cdiv(B, batch_block)

    g, gru, bn = params["gcn"], params["gru"], params["bn"]
    weight_args = (
        params["fc"]["w_t"], params["fc"]["b"],
        g["wg"], g["bg"], g["wt"], g["bt"], g["wp"], g["bp"], g["ww"], g["bw"],
        g["bn_gamma"], g["bn_beta"], g["bn_mean"], g["bn_var"],
        gru["wih_t"], gru["whh_t"], gru["bih"], gru["bhh"],
        bn["gamma"], bn["beta"], bn["mean"], bn["var"],
    )

    return pl.pallas_call(
        functools.partial(_vsrn_encoder_kernel, apply_l2=apply_l2_after_fc),
        out_shape=jax.ShapeDtypeStruct((B, D), jnp.float32),
        grid=(num_blocks,),
        in_specs=[pl.BlockSpec((batch_block, N, F), lambda b: (b, 0, 0))]
                 + [_rep_spec(a.shape) for a in weight_args],
        out_specs=pl.BlockSpec((batch_block, D), lambda b: (b, 0)),
        compiler_params=pltpu.CompilerParams(
            dimension_semantics=("parallel",),
            # Raise the scoped VMEM limit above the conservative default so
            # all weights stay resident (demo uses only a few MiB; for real
            # D=2048 sizes see the K-tiling / bf16 TODO at the top).
            vmem_limit_bytes=64 * 1024 * 1024,
        ),
    )(images, *weight_args)


# ------------------------------ parameter init --------------------------------

def init_params(key, img_dim, embed_dim, num_gcn=4):
    D = embed_dim
    it = iter(jax.random.split(key, 64))
    nxt = lambda: next(it)

    # fc: Xavier-uniform weight, zero bias (matches ImageEncoder.init_weights)
    r = np.sqrt(6.0) / np.sqrt(img_dim + D)
    fc_w = jax.random.uniform(nxt(), (D, img_dim), jnp.float32, -r, r)
    fc = {"w_t": fc_w.T, "b": jnp.zeros((1, D), jnp.float32)}

    def conv1x1(k, cin, cout):
        # 1x1 Conv1d == linear on the channel axis; PyTorch-default-like bounds
        bound = 1.0 / np.sqrt(cin)
        kw, kb = jax.random.split(k)
        w = jax.random.uniform(kw, (cout, cin), jnp.float32, -bound, bound)
        b = jax.random.uniform(kb, (1, cout), jnp.float32, -bound, bound)
        return w.T, b

    wg, bg, wt, bt, wp, bp, ww, bw = [], [], [], [], [], [], [], []
    bng, bnb, bnm, bnv = [], [], [], []
    for _ in range(num_gcn):
        a, b_ = conv1x1(nxt(), D, D); wg.append(a); bg.append(b_)
        a, b_ = conv1x1(nxt(), D, D); wt.append(a); bt.append(b_)
        a, b_ = conv1x1(nxt(), D, D); wp.append(a); bp.append(b_)
        a, b_ = conv1x1(nxt(), D, D); ww.append(a); bw.append(b_)
        k1, k2, k3, k4 = jax.random.split(nxt(), 4)
        # NOTE: reference Rs_GCN zero-inits this BN (identity block);
        # non-trivial values are used here so the kernel path is exercised.
        bng.append(jax.random.uniform(k1, (1, D), jnp.float32, 0.5, 1.5))
        bnb.append(0.1 * jax.random.normal(k2, (1, D), jnp.float32))
        bnm.append(0.1 * jax.random.normal(k3, (1, D), jnp.float32))
        bnv.append(jax.random.uniform(k4, (1, D), jnp.float32, 0.5, 1.5))
    gcn = {"wg": jnp.stack(wg), "bg": jnp.stack(bg),
           "wt": jnp.stack(wt), "bt": jnp.stack(bt),
           "wp": jnp.stack(wp), "bp": jnp.stack(bp),
           "ww": jnp.stack(ww), "bw": jnp.stack(bw),
           "bn_gamma": jnp.stack(bng), "bn_beta": jnp.stack(bnb),
           "bn_mean": jnp.stack(bnm), "bn_var": jnp.stack(bnv)}

    # GRU (PyTorch gate order r, z, n), uniform(-1/sqrt(D), 1/sqrt(D))
    bound = 1.0 / np.sqrt(D)
    wih = jax.random.uniform(nxt(), (3 * D, D), jnp.float32, -bound, bound)
    whh = jax.random.uniform(nxt(), (3 * D, D), jnp.float32, -bound, bound)
    bih = jax.random.uniform(nxt(), (1, 3 * D), jnp.float32, -bound, bound)
    bhh = jax.random.uniform(nxt(), (1, 3 * D), jnp.float32, -bound, bound)
    gru = {"wih_t": wih.T, "whh_t": whh.T, "bih": bih, "bhh": bhh}

    k1, k2 = jax.random.split(nxt())
    bn = {"gamma": jax.random.uniform(k1, (1, D), jnp.float32, 0.5, 1.5),
          "beta": 0.1 * jax.random.normal(k2, (1, D), jnp.float32),
          "mean": jnp.zeros((1, D), jnp.float32),
          "var": jnp.ones((1, D), jnp.float32)}

    return {"fc": fc, "gcn": gcn, "gru": gru, "bn": bn}


# ---------------------------- pure-JAX reference -------------------------------

def reference_forward(images, params, apply_l2_after_fc):
    e = images @ params["fc"]["w_t"] + params["fc"]["b"]
    if apply_l2_after_fc:
        e = _l2norm(e)
    g = params["gcn"]
    for i in range(g["wg"].shape[0]):
        x = e
        g_v = x @ g["wg"][i] + g["bg"][i]
        th = x @ g["wt"][i] + g["bt"][i]
        ph = x @ g["wp"][i] + g["bp"][i]
        R = jnp.einsum("bnd,bmd->bnm", th, ph) / x.shape[1]
        y = jnp.einsum("bnm,bmd->bnd", R, g_v)
        w_y = y @ g["ww"][i] + g["bw"][i]
        scale = g["bn_gamma"][i] * lax.rsqrt(g["bn_var"][i] + BN_EPS)
        w_y = (w_y - g["bn_mean"][i]) * scale + g["bn_beta"][i]
        e = w_y + x
    e = _l2norm(e)
    gp = params["gru"]
    B, N, D = e.shape
    gi = e @ gp["wih_t"] + gp["bih"]
    h = jnp.zeros((B, D), jnp.float32)
    for t in range(N):
        gh = h @ gp["whh_t"] + gp["bhh"]
        r = jax.nn.sigmoid(gi[:, t, 0:D] + gh[:, 0:D])
        z = jax.nn.sigmoid(gi[:, t, D:2 * D] + gh[:, D:2 * D])
        n = jnp.tanh(gi[:, t, 2 * D:3 * D] + r * gh[:, 2 * D:3 * D])
        h = (1.0 - z) * n + z * h
    bn = params["bn"]
    scale = bn["gamma"] * lax.rsqrt(bn["var"] + BN_EPS)
    return _l2norm((h - bn["mean"]) * scale + bn["beta"])


# ------------------------------------ main -------------------------------------

if __name__ == "__main__":
    B, N_REGIONS = 2, 8
    IMG_DIM, EMBED_DIM = 128, 128       # lane-dense (multiple of 128) channel axes
    DATASET_NAME = "coco"               # != 'f30k' -> l2-normalize after the fc layer

    key = jax.random.PRNGKey(0)
    k_img, k_par = jax.random.split(key)
    images = jax.random.normal(k_img, (B, N_REGIONS, IMG_DIM), jnp.float32)
    params = init_params(k_par, IMG_DIM, EMBED_DIM)

    out = image_encoder_forward(images, params,
                                apply_l2_after_fc=(DATASET_NAME != "f30k"))
    out = jax.block_until_ready(out)

    ref = reference_forward(images, params, DATASET_NAME != "f30k")
    np.testing.assert_allclose(np.asarray(out), np.asarray(ref),
                               rtol=2e-3, atol=2e-3)
    assert out.shape == (B, EMBED_DIM)
    print("KERNEL_OK")
</pallas_src>

<mosaic_0001>
module attributes {stable_mosaic.version = 11 : i64} {
  func.func @_vsrn_encoder_kernel(%arg0: i32, %arg1: memref<2x8x128xf32, #tpu.memory_space<vmem>>, %arg2: memref<128x128xf32, #tpu.memory_space<vmem>>, %arg3: memref<1x128xf32, #tpu.memory_space<vmem>>, %arg4: memref<4x128x128xf32, #tpu.memory_space<vmem>>, %arg5: memref<4x1x128xf32, #tpu.memory_space<vmem>>, %arg6: memref<4x128x128xf32, #tpu.memory_space<vmem>>, %arg7: memref<4x1x128xf32, #tpu.memory_space<vmem>>, %arg8: memref<4x128x128xf32, #tpu.memory_space<vmem>>, %arg9: memref<4x1x128xf32, #tpu.memory_space<vmem>>, %arg10: memref<4x128x128xf32, #tpu.memory_space<vmem>>, %arg11: memref<4x1x128xf32, #tpu.memory_space<vmem>>, %arg12: memref<4x1x128xf32, #tpu.memory_space<vmem>>, %arg13: memref<4x1x128xf32, #tpu.memory_space<vmem>>, %arg14: memref<4x1x128xf32, #tpu.memory_space<vmem>>, %arg15: memref<4x1x128xf32, #tpu.memory_space<vmem>>, %arg16: memref<128x384xf32, #tpu.memory_space<vmem>>, %arg17: memref<128x384xf32, #tpu.memory_space<vmem>>, %arg18: memref<1x384xf32, #tpu.memory_space<vmem>>, %arg19: memref<1x384xf32, #tpu.memory_space<vmem>>, %arg20: memref<1x128xf32, #tpu.memory_space<vmem>>, %arg21: memref<1x128xf32, #tpu.memory_space<vmem>>, %arg22: memref<1x128xf32, #tpu.memory_space<vmem>>, %arg23: memref<1x128xf32, #tpu.memory_space<vmem>>, %arg24: memref<2x128xf32, #tpu.memory_space<vmem>>) attributes {dimension_semantics = [#tpu.dimension_semantics<parallel>], iteration_bounds = array<i64: 1>, scalar_prefetch = 0 : i64, scratch_operands = 0 : i64, tpu.core_type = #tpu.core_type<tc>, window_params = [{transform_indices = @transform_0, window_bounds = array<i64: 2, 8, 128>}, {pipeline_mode = #tpu.pipeline_mode<synchronous>, transform_indices = @transform_1, window_bounds = array<i64: 128, 128>}, {pipeline_mode = #tpu.pipeline_mode<synchronous>, transform_indices = @transform_2, window_bounds = array<i64: 1, 128>}, {pipeline_mode = #tpu.pipeline_mode<synchronous>, transform_indices = @transform_3, window_bounds = array<i64: 4, 128, 128>}, {pipeline_mode = #tpu.pipeline_mode<synchronous>, transform_indices = @transform_4, window_bounds = array<i64: 4, 1, 128>}, {pipeline_mode = #tpu.pipeline_mode<synchronous>, transform_indices = @transform_5, window_bounds = array<i64: 4, 128, 128>}, {pipeline_mode = #tpu.pipeline_mode<synchronous>, transform_indices = @transform_6, window_bounds = array<i64: 4, 1, 128>}, {pipeline_mode = #tpu.pipeline_mode<synchronous>, transform_indices = @transform_7, window_bounds = array<i64: 4, 128, 128>}, {pipeline_mode = #tpu.pipeline_mode<synchronous>, transform_indices = @transform_8, window_bounds = array<i64: 4, 1, 128>}, {pipeline_mode = #tpu.pipeline_mode<synchronous>, transform_indices = @transform_9, window_bounds = array<i64: 4, 128, 128>}, {pipeline_mode = #tpu.pipeline_mode<synchronous>, transform_indices = @transform_10, window_bounds = array<i64: 4, 1, 128>}, {pipeline_mode = #tpu.pipeline_mode<synchronous>, transform_indices = @transform_11, window_bounds = array<i64: 4, 1, 128>}, {pipeline_mode = #tpu.pipeline_mode<synchronous>, transform_indices = @transform_12, window_bounds = array<i64: 4, 1, 128>}, {pipeline_mode = #tpu.pipeline_mode<synchronous>, transform_indices = @transform_13, window_bounds = array<i64: 4, 1, 128>}, {pipeline_mode = #tpu.pipeline_mode<synchronous>, transform_indices = @transform_14, window_bounds = array<i64: 4, 1, 128>}, {pipeline_mode = #tpu.pipeline_mode<synchronous>, transform_indices = @transform_15, window_bounds = array<i64: 128, 384>}, {pipeline_mode = #tpu.pipeline_mode<synchronous>, transform_indices = @transform_16, window_bounds = array<i64: 128, 384>}, {pipeline_mode = #tpu.pipeline_mode<synchronous>, transform_indices = @transform_17, window_bounds = array<i64: 1, 384>}, {pipeline_mode = #tpu.pipeline_mode<synchronous>, transform_indices = @transform_18, window_bounds = array<i64: 1, 384>}, {pipeline_mode = #tpu.pipeline_mode<synchronous>, transform_indices = @transform_19, window_bounds = array<i64: 1, 128>}, {pipeline_mode = #tpu.pipeline_mode<synchronous>, transform_indices = @transform_20, window_bounds = array<i64: 1, 128>}, {pipeline_mode = #tpu.pipeline_mode<synchronous>, transform_indices = @transform_21, window_bounds = array<i64: 1, 128>}, {pipeline_mode = #tpu.pipeline_mode<synchronous>, transform_indices = @transform_22, window_bounds = array<i64: 1, 128>}, {transform_indices = @transform_23, window_bounds = array<i64: 2, 128>}]} {
    %c0 = arith.constant 0 : index
    %c0_0 = arith.constant 0 : index
    %c0_1 = arith.constant 0 : index
    %0 = vector.load %arg1[%c0, %c0_0, %c0_1] : memref<2x8x128xf32, #tpu.memory_space<vmem>>, vector<2x8x128xf32>
    %1 = vector.shape_cast %0 : vector<2x8x128xf32> to vector<16x128xf32>
    %c0_2 = arith.constant 0 : index
    %c0_3 = arith.constant 0 : index
    %2 = vector.load %arg2[%c0_2, %c0_3] : memref<128x128xf32, #tpu.memory_space<vmem>>, vector<128x128xf32>
    %cst = arith.constant dense<0.000000e+00> : vector<16x128xf32>
    %3 = tpu.matmul %1, %2, %cst {dimension_numbers = #tpu.dot_dimension_numbers<[1], [0], [0], [1], [0, 0, 1, 1], [], []>} : vector<16x128xf32>, vector<128x128xf32>, vector<16x128xf32> -> vector<16x128xf32>
    %c0_4 = arith.constant 0 : index
    %c0_5 = arith.constant 0 : index
    %4 = vector.load %arg3[%c0_4, %c0_5] : memref<1x128xf32, #tpu.memory_space<vmem>>, vector<1x128xf32>
    %5 = vector.broadcast %4 : vector<1x128xf32> to vector<16x128xf32>
    %6 = arith.addf %3, %5 : vector<16x128xf32>
    %7 = arith.mulf %6, %6 : vector<16x128xf32>
    %cst_6 = arith.constant dense<0.000000e+00> : vector<16xf32>
    %8 = vector.multi_reduction <add>, %7, %cst_6 [1] : vector<16x128xf32> to vector<16xf32>
    %9 = vector.shape_cast %8 : vector<16xf32> to vector<16x1xf32>
    %10 = math.rsqrt %9 : vector<16x1xf32>
    %11 = vector.broadcast %10 : vector<16x1xf32> to vector<16x128xf32>
    %12 = arith.mulf %6, %11 : vector<16x128xf32>
    %c0_7 = arith.constant 0 : index
    %c0_8 = arith.constant 0 : index
    %c0_9 = arith.constant 0 : index
    %13 = vector.load %arg4[%c0_7, %c0_8, %c0_9] : memref<4x128x128xf32, #tpu.memory_space<vmem>>, vector<1x128x128xf32>
    %14 = vector.shape_cast %13 : vector<1x128x128xf32> to vector<128x128xf32>
    %cst_10 = arith.constant dense<0.000000e+00> : vector<16x128xf32>
    %15 = tpu.matmul %12, %14, %cst_10 {dimension_numbers = #tpu.dot_dimension_numbers<[1], [0], [0], [1], [0, 0, 1, 1], [], []>} : vector<16x128xf32>, vector<128x128xf32>, vector<16x128xf32> -> vector<16x128xf32>
    %c0_11 = arith.constant 0 : index
    %c0_12 = arith.constant 0 : index
    %c0_13 = arith.constant 0 : index
    %16 = vector.load %arg5[%c0_11, %c0_12, %c0_13] : memref<4x1x128xf32, #tpu.memory_space<vmem>>, vector<1x1x128xf32>
    %17 = vector.shape_cast %16 : vector<1x1x128xf32> to vector<1x128xf32>
    %18 = vector.broadcast %17 : vector<1x128xf32> to vector<16x128xf32>
    %19 = arith.addf %15, %18 : vector<16x128xf32>
    %c0_14 = arith.constant 0 : index
    %c0_15 = arith.constant 0 : index
    %c0_16 = arith.constant 0 : index
    %20 = vector.load %arg6[%c0_14, %c0_15, %c0_16] : memref<4x128x128xf32, #tpu.memory_space<vmem>>, vector<1x128x128xf32>
    %21 = vector.shape_cast %20 : vector<1x128x128xf32> to vector<128x128xf32>
    %cst_17 = arith.constant dense<0.000000e+00> : vector<16x128xf32>
    %22 = tpu.matmul %12, %21, %cst_17 {dimension_numbers = #tpu.dot_dimension_numbers<[1], [0], [0], [1], [0, 0, 1, 1], [], []>} : vector<16x128xf32>, vector<128x128xf32>, vector<16x128xf32> -> vector<16x128xf32>
    %c0_18 = arith.constant 0 : index
    %c0_19 = arith.constant 0 : index
    %c0_20 = arith.constant 0 : index
    %23 = vector.load %arg7[%c0_18, %c0_19, %c0_20] : memref<4x1x128xf32, #tpu.memory_space<vmem>>, vector<1x1x128xf32>
    %24 = vector.shape_cast %23 : vector<1x1x128xf32> to vector<1x128xf32>
    %25 = vector.broadcast %24 : vector<1x128xf32> to vector<16x128xf32>
    %26 = arith.addf %22, %25 : vector<16x128xf32>
    %c0_21 = arith.constant 0 : index
    %c0_22 = arith.constant 0 : index
    %c0_23 = arith.constant 0 : index
    %27 = vector.load %arg8[%c0_21, %c0_22, %c0_23] : memref<4x128x128xf32, #tpu.memory_space<vmem>>, vector<1x128x128xf32>
    %28 = vector.shape_cast %27 : vector<1x128x128xf32> to vector<128x128xf32>
    %cst_24 = arith.constant dense<0.000000e+00> : vector<16x128xf32>
    %29 = tpu.matmul %12, %28, %cst_24 {dimension_numbers = #tpu.dot_dimension_numbers<[1], [0], [0], [1], [0, 0, 1, 1], [], []>} : vector<16x128xf32>, vector<128x128xf32>, vector<16x128xf32> -> vector<16x128xf32>
    %c0_25 = arith.constant 0 : index
    %c0_26 = arith.constant 0 : index
    %c0_27 = arith.constant 0 : index
    %30 = vector.load %arg9[%c0_25, %c0_26, %c0_27] : memref<4x1x128xf32, #tpu.memory_space<vmem>>, vector<1x1x128xf32>
    %31 = vector.shape_cast %30 : vector<1x1x128xf32> to vector<1x128xf32>
    %32 = vector.broadcast %31 : vector<1x128xf32> to vector<16x128xf32>
    %33 = arith.addf %29, %32 : vector<16x128xf32>
    %34 = vector.shape_cast %26 : vector<16x128xf32> to vector<2x8x128xf32>
    %35 = vector.shape_cast %33 : vector<16x128xf32> to vector<2x8x128xf32>
    "tpu.trace_start"() <{level = 10 : i32, message = "bnd,bmd->bnm"}> : () -> ()
    %cst_28 = arith.constant dense<0.000000e+00> : vector<2x8x8xf32>
    %36 = tpu.matmul %34, %35, %cst_28 {dimension_numbers = #tpu.dot_dimension_numbers<[2], [2], [1], [1], [0, 0, 0, 1, 1, 1], [0], [0]>} : vector<2x8x128xf32>, vector<2x8x128xf32>, vector<2x8x8xf32> -> vector<2x8x8xf32>
    "tpu.trace_stop"() : () -> ()
    %cst_29 = arith.constant 1.250000e-01 : f32
    %37 = vector.broadcast %cst_29 : f32 to vector<2x8x8xf32>
    %38 = arith.mulf %36, %37 : vector<2x8x8xf32>
    %39 = vector.shape_cast %19 : vector<16x128xf32> to vector<2x8x128xf32>
    "tpu.trace_start"() <{level = 10 : i32, message = "bnm,bmd->bnd"}> : () -> ()
    %cst_30 = arith.constant dense<0.000000e+00> : vector<2x8x128xf32>
    %40 = tpu.matmul %38, %39, %cst_30 {dimension_numbers = #tpu.dot_dimension_numbers<[2], [1], [1], [2], [0, 0, 0, 1, 1, 2], [0], [0]>} : vector<2x8x8xf32>, vector<2x8x128xf32>, vector<2x8x128xf32> -> vector<2x8x128xf32>
    "tpu.trace_stop"() : () -> ()
    %41 = vector.shape_cast %40 : vector<2x8x128xf32> to vector<16x128xf32>
    %c0_31 = arith.constant 0 : index
    %c0_32 = arith.constant 0 : index
    %c0_33 = arith.constant 0 : index
    %42 = vector.load %arg10[%c0_31, %c0_32, %c0_33] : memref<4x128x128xf32, #tpu.memory_space<vmem>>, vector<1x128x128xf32>
    %43 = vector.shape_cast %42 : vector<1x128x128xf32> to vector<128x128xf32>
    %cst_34 = arith.constant dense<0.000000e+00> : vector<16x128xf32>
    %44 = tpu.matmul %41, %43, %cst_34 {dimension_numbers = #tpu.dot_dimension_numbers<[1], [0], [0], [1], [0, 0, 1, 1], [], []>} : vector<16x128xf32>, vector<128x128xf32>, vector<16x128xf32> -> vector<16x128xf32>
    %c0_35 = arith.constant 0 : index
    %c0_36 = arith.constant 0 : index
    %c0_37 = arith.constant 0 : index
    %45 = vector.load %arg11[%c0_35, %c0_36, %c0_37] : memref<4x1x128xf32, #tpu.memory_space<vmem>>, vector<1x1x128xf32>
    %46 = vector.shape_cast %45 : vector<1x1x128xf32> to vector<1x128xf32>
    %47 = vector.broadcast %46 : vector<1x128xf32> to vector<16x128xf32>
    %48 = arith.addf %44, %47 : vector<16x128xf32>
    %c0_38 = arith.constant 0 : index
    %c0_39 = arith.constant 0 : index
    %c0_40 = arith.constant 0 : index
    %49 = vector.load %arg12[%c0_38, %c0_39, %c0_40] : memref<4x1x128xf32, #tpu.memory_space<vmem>>, vector<1x1x128xf32>
    %50 = vector.shape_cast %49 : vector<1x1x128xf32> to vector<1x128xf32>
    %c0_41 = arith.constant 0 : index
    %c0_42 = arith.constant 0 : index
    %c0_43 = arith.constant 0 : index
    %51 = vector.load %arg15[%c0_41, %c0_42, %c0_43] : memref<4x1x128xf32, #tpu.memory_space<vmem>>, vector<1x1x128xf32>
    %52 = vector.shape_cast %51 : vector<1x1x128xf32> to vector<1x128xf32>
    %cst_44 = arith.constant 9.99999974E-6 : f32
    %53 = vector.broadcast %cst_44 : f32 to vector<1x128xf32>
    %54 = arith.addf %52, %53 : vector<1x128xf32>
    %55 = math.rsqrt %54 : vector<1x128xf32>
    %56 = arith.mulf %50, %55 : vector<1x128xf32>
    %c0_45 = arith.constant 0 : index
    %c0_46 = arith.constant 0 : index
    %c0_47 = arith.constant 0 : index
    %57 = vector.load %arg14[%c0_45, %c0_46, %c0_47] : memref<4x1x128xf32, #tpu.memory_space<vmem>>, vector<1x1x128xf32>
    %58 = vector.shape_cast %57 : vector<1x1x128xf32> to vector<1x128xf32>
    %59 = vector.broadcast %58 : vector<1x128xf32> to vector<16x128xf32>
    %60 = arith.subf %48, %59 : vector<16x128xf32>
    %61 = vector.broadcast %56 : vector<1x128xf32> to vector<16x128xf32>
    %62 = arith.mulf %60, %61 : vector<16x128xf32>
    %c0_48 = arith.constant 0 : index
    %c0_49 = arith.constant 0 : index
    %c0_50 = arith.constant 0 : index
    %63 = vector.load %arg13[%c0_48, %c0_49, %c0_50] : memref<4x1x128xf32, #tpu.memory_space<vmem>>, vector<1x1x128xf32>
    %64 = vector.shape_cast %63 : vector<1x1x128xf32> to vector<1x128xf32>
    %65 = vector.broadcast %64 : vector<1x128xf32> to vector<16x128xf32>
    %66 = arith.addf %62, %65 : vector<16x128xf32>
    %67 = arith.addf %66, %12 : vector<16x128xf32>
    %c1 = arith.constant 1 : index
    %c0_51 = arith.constant 0 : index
    %c0_52 = arith.constant 0 : index
    %68 = vector.load %arg4[%c1, %c0_51, %c0_52] : memref<4x128x128xf32, #tpu.memory_space<vmem>>, vector<1x128x128xf32>
    %69 = vector.shape_cast %68 : vector<1x128x128xf32> to vector<128x128xf32>
    %cst_53 = arith.constant dense<0.000000e+00> : vector<16x128xf32>
    %70 = tpu.matmul %67, %69, %cst_53 {dimension_numbers = #tpu.dot_dimension_numbers<[1], [0], [0], [1], [0, 0, 1, 1], [], []>} : vector<16x128xf32>, vector<128x128xf32>, vector<16x128xf32> -> vector<16x128xf32>
    %c1_54 = arith.constant 1 : index
    %c0_55 = arith.constant 0 : index
    %c0_56 = arith.constant 0 : index
    %71 = vector.load %arg5[%c1_54, %c0_55, %c0_56] : memref<4x1x128xf32, #tpu.memory_space<vmem>>, vector<1x1x128xf32>
    %72 = vector.shape_cast %71 : vector<1x1x128xf32> to vector<1x128xf32>
    %73 = vector.broadcast %72 : vector<1x128xf32> to vector<16x128xf32>
    %74 = arith.addf %70, %73 : vector<16x128xf32>
    %c1_57 = arith.constant 1 : index
    %c0_58 = arith.constant 0 : index
    %c0_59 = arith.constant 0 : index
    %75 = vector.load %arg6[%c1_57, %c0_58, %c0_59] : memref<4x128x128xf32, #tpu.memory_space<vmem>>, vector<1x128x128xf32>
    %76 = vector.shape_cast %75 : vector<1x128x128xf32> to vector<128x128xf32>
    %cst_60 = arith.constant dense<0.000000e+00> : vector<16x128xf32>
    %77 = tpu.matmul %67, %76, %cst_60 {dimension_numbers = #tpu.dot_dimension_numbers<[1], [0], [0], [1], [0, 0, 1, 1], [], []>} : vector<16x128xf32>, vector<128x128xf32>, vector<16x128xf32> -> vector<16x128xf32>
    %c1_61 = arith.constant 1 : index
    %c0_62 = arith.constant 0 : index
    %c0_63 = arith.constant 0 : index
    %78 = vector.load %arg7[%c1_61, %c0_62, %c0_63] : memref<4x1x128xf32, #tpu.memory_space<vmem>>, vector<1x1x128xf32>
    %79 = vector.shape_cast %78 : vector<1x1x128xf32> to vector<1x128xf32>
    %80 = vector.broadcast %79 : vector<1x128xf32> to vector<16x128xf32>
    %81 = arith.addf %77, %80 : vector<16x128xf32>
    %c1_64 = arith.constant 1 : index
    %c0_65 = arith.constant 0 : index
    %c0_66 = arith.constant 0 : index
    %82 = vector.load %arg8[%c1_64, %c0_65, %c0_66] : memref<4x128x128xf32, #tpu.memory_space<vmem>>, vector<1x128x128xf32>
    %83 = vector.shape_cast %82 : vector<1x128x128xf32> to vector<128x128xf32>
    %cst_67 = arith.constant dense<0.000000e+00> : vector<16x128xf32>
    %84 = tpu.matmul %67, %83, %cst_67 {dimension_numbers = #tpu.dot_dimension_numbers<[1], [0], [0], [1], [0, 0, 1, 1], [], []>} : vector<16x128xf32>, vector<128x128xf32>, vector<16x128xf32> -> vector<16x128xf32>
    %c1_68 = arith.constant 1 : index
    %c0_69 = arith.constant 0 : index
    %c0_70 = arith.constant 0 : index
    %85 = vector.load %arg9[%c1_68, %c0_69, %c0_70] : memref<4x1x128xf32, #tpu.memory_space<vmem>>, vector<1x1x128xf32>
    %86 = vector.shape_cast %85 : vector<1x1x128xf32> to vector<1x128xf32>
    %87 = vector.broadcast %86 : vector<1x128xf32> to vector<16x128xf32>
    %88 = arith.addf %84, %87 : vector<16x128xf32>
    %89 = vector.shape_cast %81 : vector<16x128xf32> to vector<2x8x128xf32>
    %90 = vector.shape_cast %88 : vector<16x128xf32> to vector<2x8x128xf32>
    "tpu.trace_start"() <{level = 10 : i32, message = "bnd,bmd->bnm"}> : () -> ()
    %cst_71 = arith.constant dense<0.000000e+00> : vector<2x8x8xf32>
    %91 = tpu.matmul %89, %90, %cst_71 {dimension_numbers = #tpu.dot_dimension_numbers<[2], [2], [1], [1], [0, 0, 0, 1, 1, 1], [0], [0]>} : vector<2x8x128xf32>, vector<2x8x128xf32>, vector<2x8x8xf32> -> vector<2x8x8xf32>
    "tpu.trace_stop"() : () -> ()
    %cst_72 = arith.constant 1.250000e-01 : f32
    %92 = vector.broadcast %cst_72 : f32 to vector<2x8x8xf32>
    %93 = arith.mulf %91, %92 : vector<2x8x8xf32>
    %94 = vector.shape_cast %74 : vector<16x128xf32> to vector<2x8x128xf32>
    "tpu.trace_start"() <{level = 10 : i32, message = "bnm,bmd->bnd"}> : () -> ()
    %cst_73 = arith.constant dense<0.000000e+00> : vector<2x8x128xf32>
    %95 = tpu.matmul %93, %94, %cst_73 {dimension_numbers = #tpu.dot_dimension_numbers<[2], [1], [1], [2], [0, 0, 0, 1, 1, 2], [0], [0]>} : vector<2x8x8xf32>, vector<2x8x128xf32>, vector<2x8x128xf32> -> vector<2x8x128xf32>
    "tpu.trace_stop"() : () -> ()
    %96 = vector.shape_cast %95 : vector<2x8x128xf32> to vector<16x128xf32>
    %c1_74 = arith.constant 1 : index
    %c0_75 = arith.constant 0 : index
    %c0_76 = arith.constant 0 : index
    %97 = vector.load %arg10[%c1_74, %c0_75, %c0_76] : memref<4x128x128xf32, #tpu.memory_space<vmem>>, vector<1x128x128xf32>
    %98 = vector.shape_cast %97 : vector<1x128x128xf32> to vector<128x128xf32>
    %cst_77 = arith.constant dense<0.000000e+00> : vector<16x128xf32>
    %99 = tpu.matmul %96, %98, %cst_77 {dimension_numbers = #tpu.dot_dimension_numbers<[1], [0], [0], [1], [0, 0, 1, 1], [], []>} : vector<16x128xf32>, vector<128x128xf32>, vector<16x128xf32> -> vector<16x128xf32>
    %c1_78 = arith.constant 1 : index
    %c0_79 = arith.constant 0 : index
    %c0_80 = arith.constant 0 : index
    %100 = vector.load %arg11[%c1_78, %c0_79, %c0_80] : memref<4x1x128xf32, #tpu.memory_space<vmem>>, vector<1x1x128xf32>
    %101 = vector.shape_cast %100 : vector<1x1x128xf32> to vector<1x128xf32>
    %102 = vector.broadcast %101 : vector<1x128xf32> to vector<16x128xf32>
    %103 = arith.addf %99, %102 : vector<16x128xf32>
    %c1_81 = arith.constant 1 : index
    %c0_82 = arith.constant 0 : index
    %c0_83 = arith.constant 0 : index
    %104 = vector.load %arg12[%c1_81, %c0_82, %c0_83] : memref<4x1x128xf32, #tpu.memory_space<vmem>>, vector<1x1x128xf32>
    %105 = vector.shape_cast %104 : vector<1x1x128xf32> to vector<1x128xf32>
    %c1_84 = arith.constant 1 : index
    %c0_85 = arith.constant 0 : index
    %c0_86 = arith.constant 0 : index
    %106 = vector.load %arg15[%c1_84, %c0_85, %c0_86] : memref<4x1x128xf32, #tpu.memory_space<vmem>>, vector<1x1x128xf32>
    %107 = vector.shape_cast %106 : vector<1x1x128xf32> to vector<1x128xf32>
    %cst_87 = arith.constant 9.99999974E-6 : f32
    %108 = vector.broadcast %cst_87 : f32 to vector<1x128xf32>
    %109 = arith.addf %107, %108 : vector<1x128xf32>
    %110 = math.rsqrt %109 : vector<1x128xf32>
    %111 = arith.mulf %105, %110 : vector<1x128xf32>
    %c1_88 = arith.constant 1 : index
    %c0_89 = arith.constant 0 : index
    %c0_90 = arith.constant 0 : index
    %112 = vector.load %arg14[%c1_88, %c0_89, %c0_90] : memref<4x1x128xf32, #tpu.memory_space<vmem>>, vector<1x1x128xf32>
    %113 = vector.shape_cast %112 : vector<1x1x128xf32> to vector<1x128xf32>
    %114 = vector.broadcast %113 : vector<1x128xf32> to vector<16x128xf32>
    %115 = arith.subf %103, %114 : vector<16x128xf32>
    %116 = vector.broadcast %111 : vector<1x128xf32> to vector<16x128xf32>
    %117 = arith.mulf %115, %116 : vector<16x128xf32>
    %c1_91 = arith.constant 1 : index
    %c0_92 = arith.constant 0 : index
    %c0_93 = arith.constant 0 : index
    %118 = vector.load %arg13[%c1_91, %c0_92, %c0_93] : memref<4x1x128xf32, #tpu.memory_space<vmem>>, vector<1x1x128xf32>
    %119 = vector.shape_cast %118 : vector<1x1x128xf32> to vector<1x128xf32>
    %120 = vector.broadcast %119 : vector<1x128xf32> to vector<16x128xf32>
    %121 = arith.addf %117, %120 : vector<16x128xf32>
    %122 = arith.addf %121, %67 : vector<16x128xf32>
    %c2 = arith.constant 2 : index
    %c0_94 = arith.constant 0 : index
    %c0_95 = arith.constant 0 : index
    %123 = vector.load %arg4[%c2, %c0_94, %c0_95] : memref<4x128x128xf32, #tpu.memory_space<vmem>>, vector<1x128x128xf32>
    %124 = vector.shape_cast %123 : vector<1x128x128xf32> to vector<128x128xf32>
    %cst_96 = arith.constant dense<0.000000e+00> : vector<16x128xf32>
    %125 = tpu.matmul %122, %124, %cst_96 {dimension_numbers = #tpu.dot_dimension_numbers<[1], [0], [0], [1], [0, 0, 1, 1], [], []>} : vector<16x128xf32>, vector<128x128xf32>, vector<16x128xf32> -> vector<16x128xf32>
    %c2_97 = arith.constant 2 : index
    %c0_98 = arith.constant 0 : index
    %c0_99 = arith.constant 0 : index
    %126 = vector.load %arg5[%c2_97, %c0_98, %c0_99] : memref<4x1x128xf32, #tpu.memory_space<vmem>>, vector<1x1x128xf32>
    %127 = vector.shape_cast %126 : vector<1x1x128xf32> to vector<1x128xf32>
    %128 = vector.broadcast %127 : vector<1x128xf32> to vector<16x128xf32>
    %129 = arith.addf %125, %128 : vector<16x128xf32>
    %c2_100 = arith.constant 2 : index
    %c0_101 = arith.constant 0 : index
    %c0_102 = arith.constant 0 : index
    %130 = vector.load %arg6[%c2_100, %c0_101, %c0_102] : memref<4x128x128xf32, #tpu.memory_space<vmem>>, vector<1x128x128xf32>
    %131 = vector.shape_cast %130 : vector<1x128x128xf32> to vector<128x128xf32>
    %cst_103 = arith.constant dense<0.000000e+00> : vector<16x128xf32>
    %132 = tpu.matmul %122, %131, %cst_103 {dimension_numbers = #tpu.dot_dimension_numbers<[1], [0], [0], [1], [0, 0, 1, 1], [], []>} : vector<16x128xf32>, vector<128x128xf32>, vector<16x128xf32> -> vector<16x128xf32>
    %c2_104 = arith.constant 2 : index
    %c0_105 = arith.constant 0 : index
    %c0_106 = arith.constant 0 : index
    %133 = vector.load %arg7[%c2_104, %c0_105, %c0_106] : memref<4x1x128xf32, #tpu.memory_space<vmem>>, vector<1x1x128xf32>
    %134 = vector.shape_cast %133 : vector<1x1x128xf32> to vector<1x128xf32>
    %135 = vector.broadcast %134 : vector<1x128xf32> to vector<16x128xf32>
    %136 = arith.addf %132, %135 : vector<16x128xf32>
    %c2_107 = arith.constant 2 : index
    %c0_108 = arith.constant 0 : index
    %c0_109 = arith.constant 0 : index
    %137 = vector.load %arg8[%c2_107, %c0_108, %c0_109] : memref<4x128x128xf32, #tpu.memory_space<vmem>>, vector<1x128x128xf32>
    %138 = vector.shape_cast %137 : vector<1x128x128xf32> to vector<128x128xf32>
    %cst_110 = arith.constant dense<0.000000e+00> : vector<16x128xf32>
    %139 = tpu.matmul %122, %138, %cst_110 {dimension_numbers = #tpu.dot_dimension_numbers<[1], [0], [0], [1], [0, 0, 1, 1], [], []>} : vector<16x128xf32>, vector<128x128xf32>, vector<16x128xf32> -> vector<16x128xf32>
    %c2_111 = arith.constant 2 : index
    %c0_112 = arith.constant 0 : index
    %c0_113 = arith.constant 0 : index
    %140 = vector.load %arg9[%c2_111, %c0_112, %c0_113] : memref<4x1x128xf32, #tpu.memory_space<vmem>>, vector<1x1x128xf32>
    %141 = vector.shape_cast %140 : vector<1x1x128xf32> to vector<1x128xf32>
    %142 = vector.broadcast %141 : vector<1x128xf32> to vector<16x128xf32>
    %143 = arith.addf %139, %142 : vector<16x128xf32>
    %144 = vector.shape_cast %136 : vector<16x128xf32> to vector<2x8x128xf32>
    %145 = vector.shape_cast %143 : vector<16x128xf32> to vector<2x8x128xf32>
    "tpu.trace_start"() <{level = 10 : i32, message = "bnd,bmd->bnm"}> : () -> ()
    %cst_114 = arith.constant dense<0.000000e+00> : vector<2x8x8xf32>
    %146 = tpu.matmul %144, %145, %cst_114 {dimension_numbers = #tpu.dot_dimension_numbers<[2], [2], [1], [1], [0, 0, 0, 1, 1, 1], [0], [0]>} : vector<2x8x128xf32>, vector<2x8x128xf32>, vector<2x8x8xf32> -> vector<2x8x8xf32>
    "tpu.trace_stop"() : () -> ()
    %cst_115 = arith.constant 1.250000e-01 : f32
    %147 = vector.broadcast %cst_115 : f32 to vector<2x8x8xf32>
    %148 = arith.mulf %146, %147 : vector<2x8x8xf32>
    %149 = vector.shape_cast %129 : vector<16x128xf32> to vector<2x8x128xf32>
    "tpu.trace_start"() <{level = 10 : i32, message = "bnm,bmd->bnd"}> : () -> ()
    %cst_116 = arith.constant dense<0.000000e+00> : vector<2x8x128xf32>
    %150 = tpu.matmul %148, %149, %cst_116 {dimension_numbers = #tpu.dot_dimension_numbers<[2], [1], [1], [2], [0, 0, 0, 1, 1, 2], [0], [0]>} : vector<2x8x8xf32>, vector<2x8x128xf32>, vector<2x8x128xf32> -> vector<2x8x128xf32>
    "tpu.trace_stop"() : () -> ()
    %151 = vector.shape_cast %150 : vector<2x8x128xf32> to vector<16x128xf32>
    %c2_117 = arith.constant 2 : index
    %c0_118 = arith.constant 0 : index
    %c0_119 = arith.constant 0 : index
    %152 = vector.load %arg10[%c2_117, %c0_118, %c0_119] : memref<4x128x128xf32, #tpu.memory_space<vmem>>, vector<1x128x128xf32>
    %153 = vector.shape_cast %152 : vector<1x128x128xf32> to vector<128x128xf32>
    %cst_120 = arith.constant dense<0.000000e+00> : vector<16x128xf32>
    %154 = tpu.matmul %151, %153, %cst_120 {dimension_numbers = #tpu.dot_dimension_numbers<[1], [0], [0], [1], [0, 0, 1, 1], [], []>} : vector<16x128xf32>, vector<128x128xf32>, vector<16x128xf32> -> vector<16x128xf32>
    %c2_121 = arith.constant 2 : index
    %c0_122 = arith.constant 0 : index
    %c0_123 = arith.constant 0 : index
    %155 = vector.load %arg11[%c2_121, %c0_122, %c0_123] : memref<4x1x128xf32, #tpu.memory_space<vmem>>, vector<1x1x128xf32>
    %156 = vector.shape_cast %155 : vector<1x1x128xf32> to vector<1x128xf32>
    %157 = vector.broadcast %156 : vector<1x128xf32> to vector<16x128xf32>
    %158 = arith.addf %154, %157 : vector<16x128xf32>
    %c2_124 = arith.constant 2 : index
    %c0_125 = arith.constant 0 : index
    %c0_126 = arith.constant 0 : index
    %159 = vector.load %arg12[%c2_124, %c0_125, %c0_126] : memref<4x1x128xf32, #tpu.memory_space<vmem>>, vector<1x1x128xf32>
    %160 = vector.shape_cast %159 : vector<1x1x128xf32> to vector<1x128xf32>
    %c2_127 = arith.constant 2 : index
    %c0_128 = arith.constant 0 : index
    %c0_129 = arith.constant 0 : index
    %161 = vector.load %arg15[%c2_127, %c0_128, %c0_129] : memref<4x1x128xf32, #tpu.memory_space<vmem>>, vector<1x1x128xf32>
    %162 = vector.shape_cast %161 : vector<1x1x128xf32> to vector<1x128xf32>
    %cst_130 = arith.constant 9.99999974E-6 : f32
    %163 = vector.broadcast %cst_130 : f32 to vector<1x128xf32>
    %164 = arith.addf %162, %163 : vector<1x128xf32>
    %165 = math.rsqrt %164 : vector<1x128xf32>
    %166 = arith.mulf %160, %165 : vector<1x128xf32>
    %c2_131 = arith.constant 2 : index
    %c0_132 = arith.constant 0 : index
    %c0_133 = arith.constant 0 : index
    %167 = vector.load %arg14[%c2_131, %c0_132, %c0_133] : memref<4x1x128xf32, #tpu.memory_space<vmem>>, vector<1x1x128xf32>
    %168 = vector.shape_cast %167 : vector<1x1x128xf32> to vector<1x128xf32>
    %169 = vector.broadcast %168 : vector<1x128xf32> to vector<16x128xf32>
    %170 = arith.subf %158, %169 : vector<16x128xf32>
    %171 = vector.broadcast %166 : vector<1x128xf32> to vector<16x128xf32>
    %172 = arith.mulf %170, %171 : vector<16x128xf32>
    %c2_134 = arith.constant 2 : index
    %c0_135 = arith.constant 0 : index
    %c0_136 = arith.constant 0 : index
    %173 = vector.load %arg13[%c2_134, %c0_135, %c0_136] : memref<4x1x128xf32, #tpu.memory_space<vmem>>, vector<1x1x128xf32>
    %174 = vector.shape_cast %173 : vector<1x1x128xf32> to vector<1x128xf32>
    %175 = vector.broadcast %174 : vector<1x128xf32> to vector<16x128xf32>
    %176 = arith.addf %172, %175 : vector<16x128xf32>
    %177 = arith.addf %176, %122 : vector<16x128xf32>
    %c3 = arith.constant 3 : index
    %c0_137 = arith.constant 0 : index
    %c0_138 = arith.constant 0 : index
    %178 = vector.load %arg4[%c3, %c0_137, %c0_138] : memref<4x128x128xf32, #tpu.memory_space<vmem>>, vector<1x128x128xf32>
    %179 = vector.shape_cast %178 : vector<1x128x128xf32> to vector<128x128xf32>
    %cst_139 = arith.constant dense<0.000000e+00> : vector<16x128xf32>
    %180 = tpu.matmul %177, %179, %cst_139 {dimension_numbers = #tpu.dot_dimension_numbers<[1], [0], [0], [1], [0, 0, 1, 1], [], []>} : vector<16x128xf32>, vector<128x128xf32>, vector<16x128xf32> -> vector<16x128xf32>
    %c3_140 = arith.constant 3 : index
    %c0_141 = arith.constant 0 : index
    %c0_142 = arith.constant 0 : index
    %181 = vector.load %arg5[%c3_140, %c0_141, %c0_142] : memref<4x1x128xf32, #tpu.memory_space<vmem>>, vector<1x1x128xf32>
    %182 = vector.shape_cast %181 : vector<1x1x128xf32> to vector<1x128xf32>
    %183 = vector.broadcast %182 : vector<1x128xf32> to vector<16x128xf32>
    %184 = arith.addf %180, %183 : vector<16x128xf32>
    %c3_143 = arith.constant 3 : index
    %c0_144 = arith.constant 0 : index
    %c0_145 = arith.constant 0 : index
    %185 = vector.load %arg6[%c3_143, %c0_144, %c0_145] : memref<4x128x128xf32, #tpu.memory_space<vmem>>, vector<1x128x128xf32>
    %186 = vector.shape_cast %185 : vector<1x128x128xf32> to vector<128x128xf32>
    %cst_146 = arith.constant dense<0.000000e+00> : vector<16x128xf32>
    %187 = tpu.matmul %177, %186, %cst_146 {dimension_numbers = #tpu.dot_dimension_numbers<[1], [0], [0], [1], [0, 0, 1, 1], [], []>} : vector<16x128xf32>, vector<128x128xf32>, vector<16x128xf32> -> vector<16x128xf32>
    %c3_147 = arith.constant 3 : index
    %c0_148 = arith.constant 0 : index
    %c0_149 = arith.constant 0 : index
    %188 = vector.load %arg7[%c3_147, %c0_148, %c0_149] : memref<4x1x128xf32, #tpu.memory_space<vmem>>, vector<1x1x128xf32>
    %189 = vector.shape_cast %188 : vector<1x1x128xf32> to vector<1x128xf32>
    %190 = vector.broadcast %189 : vector<1x128xf32> to vector<16x128xf32>
    %191 = arith.addf %187, %190 : vector<16x128xf32>
    %c3_150 = arith.constant 3 : index
    %c0_151 = arith.constant 0 : index
    %c0_152 = arith.constant 0 : index
    %192 = vector.load %arg8[%c3_150, %c0_151, %c0_152] : memref<4x128x128xf32, #tpu.memory_space<vmem>>, vector<1x128x128xf32>
    %193 = vector.shape_cast %192 : vector<1x128x128xf32> to vector<128x128xf32>
    %cst_153 = arith.constant dense<0.000000e+00> : vector<16x128xf32>
    %194 = tpu.matmul %177, %193, %cst_153 {dimension_numbers = #tpu.dot_dimension_numbers<[1], [0], [0], [1], [0, 0, 1, 1], [], []>} : vector<16x128xf32>, vector<128x128xf32>, vector<16x128xf32> -> vector<16x128xf32>
    %c3_154 = arith.constant 3 : index
    %c0_155 = arith.constant 0 : index
    %c0_156 = arith.constant 0 : index
    %195 = vector.load %arg9[%c3_154, %c0_155, %c0_156] : memref<4x1x128xf32, #tpu.memory_space<vmem>>, vector<1x1x128xf32>
    %196 = vector.shape_cast %195 : vector<1x1x128xf32> to vector<1x128xf32>
    %197 = vector.broadcast %196 : vector<1x128xf32> to vector<16x128xf32>
    %198 = arith.addf %194, %197 : vector<16x128xf32>
    %199 = vector.shape_cast %191 : vector<16x128xf32> to vector<2x8x128xf32>
    %200 = vector.shape_cast %198 : vector<16x128xf32> to vector<2x8x128xf32>
    "tpu.trace_start"() <{level = 10 : i32, message = "bnd,bmd->bnm"}> : () -> ()
    %cst_157 = arith.constant dense<0.000000e+00> : vector<2x8x8xf32>
    %201 = tpu.matmul %199, %200, %cst_157 {dimension_numbers = #tpu.dot_dimension_numbers<[2], [2], [1], [1], [0, 0, 0, 1, 1, 1], [0], [0]>} : vector<2x8x128xf32>, vector<2x8x128xf32>, vector<2x8x8xf32> -> vector<2x8x8xf32>
    "tpu.trace_stop"() : () -> ()
    %cst_158 = arith.constant 1.250000e-01 : f32
    %202 = vector.broadcast %cst_158 : f32 to vector<2x8x8xf32>
    %203 = arith.mulf %201, %202 : vector<2x8x8xf32>
    %204 = vector.shape_cast %184 : vector<16x128xf32> to vector<2x8x128xf32>
    "tpu.trace_start"() <{level = 10 : i32, message = "bnm,bmd->bnd"}> : () -> ()
    %cst_159 = arith.constant dense<0.000000e+00> : vector<2x8x128xf32>
    %205 = tpu.matmul %203, %204, %cst_159 {dimension_numbers = #tpu.dot_dimension_numbers<[2], [1], [1], [2], [0, 0, 0, 1, 1, 2], [0], [0]>} : vector<2x8x8xf32>, vector<2x8x128xf32>, vector<2x8x128xf32> -> vector<2x8x128xf32>
    "tpu.trace_stop"() : () -> ()
    %206 = vector.shape_cast %205 : vector<2x8x128xf32> to vector<16x128xf32>
    %c3_160 = arith.constant 3 : index
    %c0_161 = arith.constant 0 : index
    %c0_162 = arith.constant 0 : index
    %207 = vector.load %arg10[%c3_160, %c0_161, %c0_162] : memref<4x128x128xf32, #tpu.memory_space<vmem>>, vector<1x128x128xf32>
    %208 = vector.shape_cast %207 : vector<1x128x128xf32> to vector<128x128xf32>
    %cst_163 = arith.constant dense<0.000000e+00> : vector<16x128xf32>
    %209 = tpu.matmul %206, %208, %cst_163 {dimension_numbers = #tpu.dot_dimension_numbers<[1], [0], [0], [1], [0, 0, 1, 1], [], []>} : vector<16x128xf32>, vector<128x128xf32>, vector<16x128xf32> -> vector<16x128xf32>
    %c3_164 = arith.constant 3 : index
    %c0_165 = arith.constant 0 : index
    %c0_166 = arith.constant 0 : index
    %210 = vector.load %arg11[%c3_164, %c0_165, %c0_166] : memref<4x1x128xf32, #tpu.memory_space<vmem>>, vector<1x1x128xf32>
    %211 = vector.shape_cast %210 : vector<1x1x128xf32> to vector<1x128xf32>
    %212 = vector.broadcast %211 : vector<1x128xf32> to vector<16x128xf32>
    %213 = arith.addf %209, %212 : vector<16x128xf32>
    %c3_167 = arith.constant 3 : index
    %c0_168 = arith.constant 0 : index
    %c0_169 = arith.constant 0 : index
    %214 = vector.load %arg12[%c3_167, %c0_168, %c0_169] : memref<4x1x128xf32, #tpu.memory_space<vmem>>, vector<1x1x128xf32>
    %215 = vector.shape_cast %214 : vector<1x1x128xf32> to vector<1x128xf32>
    %c3_170 = arith.constant 3 : index
    %c0_171 = arith.constant 0 : index
    %c0_172 = arith.constant 0 : index
    %216 = vector.load %arg15[%c3_170, %c0_171, %c0_172] : memref<4x1x128xf32, #tpu.memory_space<vmem>>, vector<1x1x128xf32>
    %217 = vector.shape_cast %216 : vector<1x1x128xf32> to vector<1x128xf32>
    %cst_173 = arith.constant 9.99999974E-6 : f32
    %218 = vector.broadcast %cst_173 : f32 to vector<1x128xf32>
    %219 = arith.addf %217, %218 : vector<1x128xf32>
    %220 = math.rsqrt %219 : vector<1x128xf32>
    %221 = arith.mulf %215, %220 : vector<1x128xf32>
    %c3_174 = arith.constant 3 : index
    %c0_175 = arith.constant 0 : index
    %c0_176 = arith.constant 0 : index
    %222 = vector.load %arg14[%c3_174, %c0_175, %c0_176] : memref<4x1x128xf32, #tpu.memory_space<vmem>>, vector<1x1x128xf32>
    %223 = vector.shape_cast %222 : vector<1x1x128xf32> to vector<1x128xf32>
    %224 = vector.broadcast %223 : vector<1x128xf32> to vector<16x128xf32>
    %225 = arith.subf %213, %224 : vector<16x128xf32>
    %226 = vector.broadcast %221 : vector<1x128xf32> to vector<16x128xf32>
    %227 = arith.mulf %225, %226 : vector<16x128xf32>
    %c3_177 = arith.constant 3 : index
    %c0_178 = arith.constant 0 : index
    %c0_179 = arith.constant 0 : index
    %228 = vector.load %arg13[%c3_177, %c0_178, %c0_179] : memref<4x1x128xf32, #tpu.memory_space<vmem>>, vector<1x1x128xf32>
    %229 = vector.shape_cast %228 : vector<1x1x128xf32> to vector<1x128xf32>
    %230 = vector.broadcast %229 : vector<1x128xf32> to vector<16x128xf32>
    %231 = arith.addf %227, %230 : vector<16x128xf32>
    %232 = arith.addf %231, %177 : vector<16x128xf32>
    %233 = arith.mulf %232, %232 : vector<16x128xf32>
    %cst_180 = arith.constant dense<0.000000e+00> : vector<16xf32>
    %234 = vector.multi_reduction <add>, %233, %cst_180 [1] : vector<16x128xf32> to vector<16xf32>
    %235 = vector.shape_cast %234 : vector<16xf32> to vector<16x1xf32>
    %236 = math.rsqrt %235 : vector<16x1xf32>
    %237 = vector.broadcast %236 : vector<16x1xf32> to vector<16x128xf32>
    %238 = arith.mulf %232, %237 : vector<16x128xf32>
    %c0_181 = arith.constant 0 : index
    %c0_182 = arith.constant 0 : index
    %239 = vector.load %arg16[%c0_181, %c0_182] : memref<128x384xf32, #tpu.memory_space<vmem>>, vector<128x384xf32>
    %cst_183 = arith.constant dense<0.000000e+00> : vector<16x384xf32>
    %240 = tpu.matmul %238, %239, %cst_183 {dimension_numbers = #tpu.dot_dimension_numbers<[1], [0], [0], [1], [0, 0, 1, 1], [], []>} : vector<16x128xf32>, vector<128x384xf32>, vector<16x384xf32> -> vector<16x384xf32>
    %c0_184 = arith.constant 0 : index
    %c0_185 = arith.constant 0 : index
    %241 = vector.load %arg18[%c0_184, %c0_185] : memref<1x384xf32, #tpu.memory_space<vmem>>, vector<1x384xf32>
    %242 = vector.broadcast %241 : vector<1x384xf32> to vector<16x384xf32>
    %243 = arith.addf %240, %242 : vector<16x384xf32>
    %244 = vector.shape_cast %243 : vector<16x384xf32> to vector<2x8x384xf32>
    %cst_186 = arith.constant 0.000000e+00 : f32
    %245 = vector.broadcast %cst_186 : f32 to vector<2x128xf32>
    %c0_187 = arith.constant 0 : index
    %c0_188 = arith.constant 0 : index
    %246 = vector.load %arg17[%c0_187, %c0_188] : memref<128x384xf32, #tpu.memory_space<vmem>>, vector<128x384xf32>
    %cst_189 = arith.constant dense<0.000000e+00> : vector<2x384xf32>
    %247 = tpu.matmul %245, %246, %cst_189 {dimension_numbers = #tpu.dot_dimension_numbers<[1], [0], [0], [1], [0, 0, 1, 1], [], []>} : vector<2x128xf32>, vector<128x384xf32>, vector<2x384xf32> -> vector<2x384xf32>
    %c0_190 = arith.constant 0 : index
    %c0_191 = arith.constant 0 : index
    %248 = vector.load %arg19[%c0_190, %c0_191] : memref<1x384xf32, #tpu.memory_space<vmem>>, vector<1x384xf32>
    %249 = vector.broadcast %248 : vector<1x384xf32> to vector<2x384xf32>
    %250 = arith.addf %247, %249 : vector<2x384xf32>
    %251 = vector.extract_strided_slice %244 {offsets = [0, 0, 0], sizes = [2, 1, 384], strides = [1, 1, 1]} : vector<2x8x384xf32> to vector<2x1x384xf32>
    %252 = vector.shape_cast %251 : vector<2x1x384xf32> to vector<2x384xf32>
    %253 = vector.extract_strided_slice %252 {offsets = [0, 0], sizes = [2, 128], strides = [1, 1]} : vector<2x384xf32> to vector<2x128xf32>
    %254 = vector.extract_strided_slice %250 {offsets = [0, 0], sizes = [2, 128], strides = [1, 1]} : vector<2x384xf32> to vector<2x128xf32>
    %255 = arith.addf %253, %254 : vector<2x128xf32>
    %256 = arith.negf %255 : vector<2x128xf32>
    %257 = math.exp %256 : vector<2x128xf32>
    %cst_192 = arith.constant 1.000000e+00 : f32
    %258 = vector.broadcast %cst_192 : f32 to vector<2x128xf32>
    %259 = arith.addf %258, %257 : vector<2x128xf32>
    %260 = arith.divf %258, %259 : vector<2x128xf32>
    %261 = vector.extract_strided_slice %252 {offsets = [0, 128], sizes = [2, 128], strides = [1, 1]} : vector<2x384xf32> to vector<2x128xf32>
    %262 = vector.extract_strided_slice %250 {offsets = [0, 128], sizes = [2, 128], strides = [1, 1]} : vector<2x384xf32> to vector<2x128xf32>
    %263 = arith.addf %261, %262 : vector<2x128xf32>
    %264 = arith.negf %263 : vector<2x128xf32>
    %265 = math.exp %264 : vector<2x128xf32>
    %cst_193 = arith.constant 1.000000e+00 : f32
    %266 = vector.broadcast %cst_193 : f32 to vector<2x128xf32>
    %267 = arith.addf %266, %265 : vector<2x128xf32>
    %268 = arith.divf %266, %267 : vector<2x128xf32>
    %269 = vector.extract_strided_slice %252 {offsets = [0, 256], sizes = [2, 128], strides = [1, 1]} : vector<2x384xf32> to vector<2x128xf32>
    %270 = vector.extract_strided_slice %250 {offsets = [0, 256], sizes = [2, 128], strides = [1, 1]} : vector<2x384xf32> to vector<2x128xf32>
    %271 = arith.mulf %260, %270 : vector<2x128xf32>
    %272 = arith.addf %269, %271 : vector<2x128xf32>
    %273 = math.tanh %272 : vector<2x128xf32>
    %cst_194 = arith.constant 1.000000e+00 : f32
    %274 = vector.broadcast %cst_194 : f32 to vector<2x128xf32>
    %275 = arith.subf %274, %268 : vector<2x128xf32>
    %276 = arith.mulf %275, %273 : vector<2x128xf32>
    %277 = arith.mulf %268, %245 : vector<2x128xf32>
    %278 = arith.addf %276, %277 : vector<2x128xf32>
    %c0_195 = arith.constant 0 : index
    %c0_196 = arith.constant 0 : index
    %279 = vector.load %arg17[%c0_195, %c0_196] : memref<128x384xf32, #tpu.memory_space<vmem>>, vector<128x384xf32>
    %cst_197 = arith.constant dense<0.000000e+00> : vector<2x384xf32>
    %280 = tpu.matmul %278, %279, %cst_197 {dimension_numbers = #tpu.dot_dimension_numbers<[1], [0], [0], [1], [0, 0, 1, 1], [], []>} : vector<2x128xf32>, vector<128x384xf32>, vector<2x384xf32> -> vector<2x384xf32>
    %c0_198 = arith.constant 0 : index
    %c0_199 = arith.constant 0 : index
    %281 = vector.load %arg19[%c0_198, %c0_199] : memref<1x384xf32, #tpu.memory_space<vmem>>, vector<1x384xf32>
    %282 = vector.broadcast %281 : vector<1x384xf32> to vector<2x384xf32>
    %283 = arith.addf %280, %282 : vector<2x384xf32>
    %284 = vector.extract_strided_slice %244 {offsets = [0, 1, 0], sizes = [2, 1, 384], strides = [1, 1, 1]} : vector<2x8x384xf32> to vector<2x1x384xf32>
    %285 = vector.shape_cast %284 : vector<2x1x384xf32> to vector<2x384xf32>
    %286 = vector.extract_strided_slice %285 {offsets = [0, 0], sizes = [2, 128], strides = [1, 1]} : vector<2x384xf32> to vector<2x128xf32>
    %287 = vector.extract_strided_slice %283 {offsets = [0, 0], sizes = [2, 128], strides = [1, 1]} : vector<2x384xf32> to vector<2x128xf32>
    %288 = arith.addf %286, %287 : vector<2x128xf32>
    %289 = arith.negf %288 : vector<2x128xf32>
    %290 = math.exp %289 : vector<2x128xf32>
    %cst_200 = arith.constant 1.000000e+00 : f32
    %291 = vector.broadcast %cst_200 : f32 to vector<2x128xf32>
    %292 = arith.addf %291, %290 : vector<2x128xf32>
    %293 = arith.divf %291, %292 : vector<2x128xf32>
    %294 = vector.extract_strided_slice %285 {offsets = [0, 128], sizes = [2, 128], strides = [1, 1]} : vector<2x384xf32> to vector<2x128xf32>
    %295 = vector.extract_strided_slice %283 {offsets = [0, 128], sizes = [2, 128], strides = [1, 1]} : vector<2x384xf32> to vector<2x128xf32>
    %296 = arith.addf %294, %295 : vector<2x128xf32>
    %297 = arith.negf %296 : vector<2x128xf32>
    %298 = math.exp %297 : vector<2x128xf32>
    %cst_201 = arith.constant 1.000000e+00 : f32
    %299 = vector.broadcast %cst_201 : f32 to vector<2x128xf32>
    %300 = arith.addf %299, %298 : vector<2x128xf32>
    %301 = arith.divf %299, %300 : vector<2x128xf32>
    %302 = vector.extract_strided_slice %285 {offsets = [0, 256], sizes = [2, 128], strides = [1, 1]} : vector<2x384xf32> to vector<2x128xf32>
    %303 = vector.extract_strided_slice %283 {offsets = [0, 256], sizes = [2, 128], strides = [1, 1]} : vector<2x384xf32> to vector<2x128xf32>
    %304 = arith.mulf %293, %303 : vector<2x128xf32>
    %305 = arith.addf %302, %304 : vector<2x128xf32>
    %306 = math.tanh %305 : vector<2x128xf32>
    %cst_202 = arith.constant 1.000000e+00 : f32
    %307 = vector.broadcast %cst_202 : f32 to vector<2x128xf32>
    %308 = arith.subf %307, %301 : vector<2x128xf32>
    %309 = arith.mulf %308, %306 : vector<2x128xf32>
    %310 = arith.mulf %301, %278 : vector<2x128xf32>
    %311 = arith.addf %309, %310 : vector<2x128xf32>
    %c0_203 = arith.constant 0 : index
    %c0_204 = arith.constant 0 : index
    %312 = vector.load %arg17[%c0_203, %c0_204] : memref<128x384xf32, #tpu.memory_space<vmem>>, vector<128x384xf32>
    %cst_205 = arith.constant dense<0.000000e+00> : vector<2x384xf32>
    %313 = tpu.matmul %311, %312, %cst_205 {dimension_numbers = #tpu.dot_dimension_numbers<[1], [0], [0], [1], [0, 0, 1, 1], [], []>} : vector<2x128xf32>, vector<128x384xf32>, vector<2x384xf32> -> vector<2x384xf32>
    %c0_206 = arith.constant 0 : index
    %c0_207 = arith.constant 0 : index
    %314 = vector.load %arg19[%c0_206, %c0_207] : memref<1x384xf32, #tpu.memory_space<vmem>>, vector<1x384xf32>
    %315 = vector.broadcast %314 : vector<1x384xf32> to vector<2x384xf32>
    %316 = arith.addf %313, %315 : vector<2x384xf32>
    %317 = vector.extract_strided_slice %244 {offsets = [0, 2, 0], sizes = [2, 1, 384], strides = [1, 1, 1]} : vector<2x8x384xf32> to vector<2x1x384xf32>
    %318 = vector.shape_cast %317 : vector<2x1x384xf32> to vector<2x384xf32>
    %319 = vector.extract_strided_slice %318 {offsets = [0, 0], sizes = [2, 128], strides = [1, 1]} : vector<2x384xf32> to vector<2x128xf32>
    %320 = vector.extract_strided_slice %316 {offsets = [0, 0], sizes = [2, 128], strides = [1, 1]} : vector<2x384xf32> to vector<2x128xf32>
    %321 = arith.addf %319, %320 : vector<2x128xf32>
    %322 = arith.negf %321 : vector<2x128xf32>
    %323 = math.exp %322 : vector<2x128xf32>
    %cst_208 = arith.constant 1.000000e+00 : f32
    %324 = vector.broadcast %cst_208 : f32 to vector<2x128xf32>
    %325 = arith.addf %324, %323 : vector<2x128xf32>
    %326 = arith.divf %324, %325 : vector<2x128xf32>
    %327 = vector.extract_strided_slice %318 {offsets = [0, 128], sizes = [2, 128], strides = [1, 1]} : vector<2x384xf32> to vector<2x128xf32>
    %328 = vector.extract_strided_slice %316 {offsets = [0, 128], sizes = [2, 128], strides = [1, 1]} : vector<2x384xf32> to vector<2x128xf32>
    %329 = arith.addf %327, %328 : vector<2x128xf32>
    %330 = arith.negf %329 : vector<2x128xf32>
    %331 = math.exp %330 : vector<2x128xf32>
    %cst_209 = arith.constant 1.000000e+00 : f32
    %332 = vector.broadcast %cst_209 : f32 to vector<2x128xf32>
    %333 = arith.addf %332, %331 : vector<2x128xf32>
    %334 = arith.divf %332, %333 : vector<2x128xf32>
    %335 = vector.extract_strided_slice %318 {offsets = [0, 256], sizes = [2, 128], strides = [1, 1]} : vector<2x384xf32> to vector<2x128xf32>
    %336 = vector.extract_strided_slice %316 {offsets = [0, 256], sizes = [2, 128], strides = [1, 1]} : vector<2x384xf32> to vector<2x128xf32>
    %337 = arith.mulf %326, %336 : vector<2x128xf32>
    %338 = arith.addf %335, %337 : vector<2x128xf32>
    %339 = math.tanh %338 : vector<2x128xf32>
    %cst_210 = arith.constant 1.000000e+00 : f32
    %340 = vector.broadcast %cst_210 : f32 to vector<2x128xf32>
    %341 = arith.subf %340, %334 : vector<2x128xf32>
    %342 = arith.mulf %341, %339 : vector<2x128xf32>
    %343 = arith.mulf %334, %311 : vector<2x128xf32>
    %344 = arith.addf %342, %343 : vector<2x128xf32>
    %c0_211 = arith.constant 0 : index
    %c0_212 = arith.constant 0 : index
    %345 = vector.load %arg17[%c0_211, %c0_212] : memref<128x384xf32, #tpu.memory_space<vmem>>, vector<128x384xf32>
    %cst_213 = arith.constant dense<0.000000e+00> : vector<2x384xf32>
    %346 = tpu.matmul %344, %345, %cst_213 {dimension_numbers = #tpu.dot_dimension_numbers<[1], [0], [0], [1], [0, 0, 1, 1], [], []>} : vector<2x128xf32>, vector<128x384xf32>, vector<2x384xf32> -> vector<2x384xf32>
    %c0_214 = arith.constant 0 : index
    %c0_215 = arith.constant 0 : index
    %347 = vector.load %arg19[%c0_214, %c0_215] : memref<1x384xf32, #tpu.memory_space<vmem>>, vector<1x384xf32>
    %348 = vector.broadcast %347 : vector<1x384xf32> to vector<2x384xf32>
    %349 = arith.addf %346, %348 : vector<2x384xf32>
    %350 = vector.extract_strided_slice %244 {offsets = [0, 3, 0], sizes = [2, 1, 384], strides = [1, 1, 1]} : vector<2x8x384xf32> to vector<2x1x384xf32>
    %351 = vector.shape_cast %350 : vector<2x1x384xf32> to vector<2x384xf32>
    %352 = vector.extract_strided_slice %351 {offsets = [0, 0], sizes = [2, 128], strides = [1, 1]} : vector<2x384xf32> to vector<2x128xf32>
    %353 = vector.extract_strided_slice %349 {offsets = [0, 0], sizes = [2, 128], strides = [1, 1]} : vector<2x384xf32> to vector<2x128xf32>
    %354 = arith.addf %352, %353 : vector<2x128xf32>
    %355 = arith.negf %354 : vector<2x128xf32>
    %356 = math.exp %355 : vector<2x128xf32>
    %cst_216 = arith.constant 1.000000e+00 : f32
    %357 = vector.broadcast %cst_216 : f32 to vector<2x128xf32>
    %358 = arith.addf %357, %356 : vector<2x128xf32>
    %359 = arith.divf %357, %358 : vector<2x128xf32>
    %360 = vector.extract_strided_slice %351 {offsets = [0, 128], sizes = [2, 128], strides = [1, 1]} : vector<2x384xf32> to vector<2x128xf32>
    %361 = vector.extract_strided_slice %349 {offsets = [0, 128], sizes = [2, 128], strides = [1, 1]} : vector<2x384xf32> to vector<2x128xf32>
    %362 = arith.addf %360, %361 : vector<2x128xf32>
    %363 = arith.negf %362 : vector<2x128xf32>
    %364 = math.exp %363 : vector<2x128xf32>
    %cst_217 = arith.constant 1.000000e+00 : f32
    %365 = vector.broadcast %cst_217 : f32 to vector<2x128xf32>
    %366 = arith.addf %365, %364 : vector<2x128xf32>
    %367 = arith.divf %365, %366 : vector<2x128xf32>
    %368 = vector.extract_strided_slice %351 {offsets = [0, 256], sizes = [2, 128], strides = [1, 1]} : vector<2x384xf32> to vector<2x128xf32>
    %369 = vector.extract_strided_slice %349 {offsets = [0, 256], sizes = [2, 128], strides = [1, 1]} : vector<2x384xf32> to vector<2x128xf32>
    %370 = arith.mulf %359, %369 : vector<2x128xf32>
    %371 = arith.addf %368, %370 : vector<2x128xf32>
    %372 = math.tanh %371 : vector<2x128xf32>
    %cst_218 = arith.constant 1.000000e+00 : f32
    %373 = vector.broadcast %cst_218 : f32 to vector<2x128xf32>
    %374 = arith.subf %373, %367 : vector<2x128xf32>
    %375 = arith.mulf %374, %372 : vector<2x128xf32>
    %376 = arith.mulf %367, %344 : vector<2x128xf32>
    %377 = arith.addf %375, %376 : vector<2x128xf32>
    %c0_219 = arith.constant 0 : index
    %c0_220 = arith.constant 0 : index
    %378 = vector.load %arg17[%c0_219, %c0_220] : memref<128x384xf32, #tpu.memory_space<vmem>>, vector<128x384xf32>
    %cst_221 = arith.constant dense<0.000000e+00> : vector<2x384xf32>
    %379 = tpu.matmul %377, %378, %cst_221 {dimension_numbers = #tpu.dot_dimension_numbers<[1], [0], [0], [1], [0, 0, 1, 1], [], []>} : vector<2x128xf32>, vector<128x384xf32>, vector<2x384xf32> -> vector<2x384xf32>
    %c0_222 = arith.constant 0 : index
    %c0_223 = arith.constant 0 : index
    %380 = vector.load %arg19[%c0_222, %c0_223] : memref<1x384xf32, #tpu.memory_space<vmem>>, vector<1x384xf32>
    %381 = vector.broadcast %380 : vector<1x384xf32> to vector<2x384xf32>
    %382 = arith.addf %379, %381 : vector<2x384xf32>
    %383 = vector.extract_strided_slice %244 {offsets = [0, 4, 0], sizes = [2, 1, 384], strides = [1, 1, 1]} : vector<2x8x384xf32> to vector<2x1x384xf32>
    %384 = vector.shape_cast %383 : vector<2x1x384xf32> to vector<2x384xf32>
    %385 = vector.extract_strided_slice %384 {offsets = [0, 0], sizes = [2, 128], strides = [1, 1]} : vector<2x384xf32> to vector<2x128xf32>
    %386 = vector.extract_strided_slice %382 {offsets = [0, 0], sizes = [2, 128], strides = [1, 1]} : vector<2x384xf32> to vector<2x128xf32>
    %387 = arith.addf %385, %386 : vector<2x128xf32>
    %388 = arith.negf %387 : vector<2x128xf32>
    %389 = math.exp %388 : vector<2x128xf32>
    %cst_224 = arith.constant 1.000000e+00 : f32
    %390 = vector.broadcast %cst_224 : f32 to vector<2x128xf32>
    %391 = arith.addf %390, %389 : vector<2x128xf32>
    %392 = arith.divf %390, %391 : vector<2x128xf32>
    %393 = vector.extract_strided_slice %384 {offsets = [0, 128], sizes = [2, 128], strides = [1, 1]} : vector<2x384xf32> to vector<2x128xf32>
    %394 = vector.extract_strided_slice %382 {offsets = [0, 128], sizes = [2, 128], strides = [1, 1]} : vector<2x384xf32> to vector<2x128xf32>
    %395 = arith.addf %393, %394 : vector<2x128xf32>
    %396 = arith.negf %395 : vector<2x128xf32>
    %397 = math.exp %396 : vector<2x128xf32>
    %cst_225 = arith.constant 1.000000e+00 : f32
    %398 = vector.broadcast %cst_225 : f32 to vector<2x128xf32>
    %399 = arith.addf %398, %397 : vector<2x128xf32>
    %400 = arith.divf %398, %399 : vector<2x128xf32>
    %401 = vector.extract_strided_slice %384 {offsets = [0, 256], sizes = [2, 128], strides = [1, 1]} : vector<2x384xf32> to vector<2x128xf32>
    %402 = vector.extract_strided_slice %382 {offsets = [0, 256], sizes = [2, 128], strides = [1, 1]} : vector<2x384xf32> to vector<2x128xf32>
    %403 = arith.mulf %392, %402 : vector<2x128xf32>
    %404 = arith.addf %401, %403 : vector<2x128xf32>
    %405 = math.tanh %404 : vector<2x128xf32>
    %cst_226 = arith.constant 1.000000e+00 : f32
    %406 = vector.broadcast %cst_226 : f32 to vector<2x128xf32>
    %407 = arith.subf %406, %400 : vector<2x128xf32>
    %408 = arith.mulf %407, %405 : vector<2x128xf32>
    %409 = arith.mulf %400, %377 : vector<2x128xf32>
    %410 = arith.addf %408, %409 : vector<2x128xf32>
    %c0_227 = arith.constant 0 : index
    %c0_228 = arith.constant 0 : index
    %411 = vector.load %arg17[%c0_227, %c0_228] : memref<128x384xf32, #tpu.memory_space<vmem>>, vector<128x384xf32>
    %cst_229 = arith.constant dense<0.000000e+00> : vector<2x384xf32>
    %412 = tpu.matmul %410, %411, %cst_229 {dimension_numbers = #tpu.dot_dimension_numbers<[1], [0], [0], [1], [0, 0, 1, 1], [], []>} : vector<2x128xf32>, vector<128x384xf32>, vector<2x384xf32> -> vector<2x384xf32>
    %c0_230 = arith.constant 0 : index
    %c0_231 = arith.constant 0 : index
    %413 = vector.load %arg19[%c0_230, %c0_231] : memref<1x384xf32, #tpu.memory_space<vmem>>, vector<1x384xf32>
    %414 = vector.broadcast %413 : vector<1x384xf32> to vector<2x384xf32>
    %415 = arith.addf %412, %414 : vector<2x384xf32>
    %416 = vector.extract_strided_slice %244 {offsets = [0, 5, 0], sizes = [2, 1, 384], strides = [1, 1, 1]} : vector<2x8x384xf32> to vector<2x1x384xf32>
    %417 = vector.shape_cast %416 : vector<2x1x384xf32> to vector<2x384xf32>
    %418 = vector.extract_strided_slice %417 {offsets = [0, 0], sizes = [2, 128], strides = [1, 1]} : vector<2x384xf32> to vector<2x128xf32>
    %419 = vector.extract_strided_slice %415 {offsets = [0, 0], sizes = [2, 128], strides = [1, 1]} : vector<2x384xf32> to vector<2x128xf32>
    %420 = arith.addf %418, %419 : vector<2x128xf32>
    %421 = arith.negf %420 : vector<2x128xf32>
    %422 = math.exp %421 : vector<2x128xf32>
    %cst_232 = arith.constant 1.000000e+00 : f32
    %423 = vector.broadcast %cst_232 : f32 to vector<2x128xf32>
    %424 = arith.addf %423, %422 : vector<2x128xf32>
    %425 = arith.divf %423, %424 : vector<2x128xf32>
    %426 = vector.extract_strided_slice %417 {offsets = [0, 128], sizes = [2, 128], strides = [1, 1]} : vector<2x384xf32> to vector<2x128xf32>
    %427 = vector.extract_strided_slice %415 {offsets = [0, 128], sizes = [2, 128], strides = [1, 1]} : vector<2x384xf32> to vector<2x128xf32>
    %428 = arith.addf %426, %427 : vector<2x128xf32>
    %429 = arith.negf %428 : vector<2x128xf32>
    %430 = math.exp %429 : vector<2x128xf32>
    %cst_233 = arith.constant 1.000000e+00 : f32
    %431 = vector.broadcast %cst_233 : f32 to vector<2x128xf32>
    %432 = arith.addf %431, %430 : vector<2x128xf32>
    %433 = arith.divf %431, %432 : vector<2x128xf32>
    %434 = vector.extract_strided_slice %417 {offsets = [0, 256], sizes = [2, 128], strides = [1, 1]} : vector<2x384xf32> to vector<2x128xf32>
    %435 = vector.extract_strided_slice %415 {offsets = [0, 256], sizes = [2, 128], strides = [1, 1]} : vector<2x384xf32> to vector<2x128xf32>
    %436 = arith.mulf %425, %435 : vector<2x128xf32>
    %437 = arith.addf %434, %436 : vector<2x128xf32>
    %438 = math.tanh %437 : vector<2x128xf32>
    %cst_234 = arith.constant 1.000000e+00 : f32
    %439 = vector.broadcast %cst_234 : f32 to vector<2x128xf32>
    %440 = arith.subf %439, %433 : vector<2x128xf32>
    %441 = arith.mulf %440, %438 : vector<2x128xf32>
    %442 = arith.mulf %433, %410 : vector<2x128xf32>
    %443 = arith.addf %441, %442 : vector<2x128xf32>
    %c0_235 = arith.constant 0 : index
    %c0_236 = arith.constant 0 : index
    %444 = vector.load %arg17[%c0_235, %c0_236] : memref<128x384xf32, #tpu.memory_space<vmem>>, vector<128x384xf32>
    %cst_237 = arith.constant dense<0.000000e+00> : vector<2x384xf32>
    %445 = tpu.matmul %443, %444, %cst_237 {dimension_numbers = #tpu.dot_dimension_numbers<[1], [0], [0], [1], [0, 0, 1, 1], [], []>} : vector<2x128xf32>, vector<128x384xf32>, vector<2x384xf32> -> vector<2x384xf32>
    %c0_238 = arith.constant 0 : index
    %c0_239 = arith.constant 0 : index
    %446 = vector.load %arg19[%c0_238, %c0_239] : memref<1x384xf32, #tpu.memory_space<vmem>>, vector<1x384xf32>
    %447 = vector.broadcast %446 : vector<1x384xf32> to vector<2x384xf32>
    %448 = arith.addf %445, %447 : vector<2x384xf32>
    %449 = vector.extract_strided_slice %244 {offsets = [0, 6, 0], sizes = [2, 1, 384], strides = [1, 1, 1]} : vector<2x8x384xf32> to vector<2x1x384xf32>
    %450 = vector.shape_cast %449 : vector<2x1x384xf32> to vector<2x384xf32>
    %451 = vector.extract_strided_slice %450 {offsets = [0, 0], sizes = [2, 128], strides = [1, 1]} : vector<2x384xf32> to vector<2x128xf32>
    %452 = vector.extract_strided_slice %448 {offsets = [0, 0], sizes = [2, 128], strides = [1, 1]} : vector<2x384xf32> to vector<2x128xf32>
    %453 = arith.addf %451, %452 : vector<2x128xf32>
    %454 = arith.negf %453 : vector<2x128xf32>
    %455 = math.exp %454 : vector<2x128xf32>
    %cst_240 = arith.constant 1.000000e+00 : f32
    %456 = vector.broadcast %cst_240 : f32 to vector<2x128xf32>
    %457 = arith.addf %456, %455 : vector<2x128xf32>
    %458 = arith.divf %456, %457 : vector<2x128xf32>
    %459 = vector.extract_strided_slice %450 {offsets = [0, 128], sizes = [2, 128], strides = [1, 1]} : vector<2x384xf32> to vector<2x128xf32>
    %460 = vector.extract_strided_slice %448 {offsets = [0, 128], sizes = [2, 128], strides = [1, 1]} : vector<2x384xf32> to vector<2x128xf32>
    %461 = arith.addf %459, %460 : vector<2x128xf32>
    %462 = arith.negf %461 : vector<2x128xf32>
    %463 = math.exp %462 : vector<2x128xf32>
    %cst_241 = arith.constant 1.000000e+00 : f32
    %464 = vector.broadcast %cst_241 : f32 to vector<2x128xf32>
    %465 = arith.addf %464, %463 : vector<2x128xf32>
    %466 = arith.divf %464, %465 : vector<2x128xf32>
    %467 = vector.extract_strided_slice %450 {offsets = [0, 256], sizes = [2, 128], strides = [1, 1]} : vector<2x384xf32> to vector<2x128xf32>
    %468 = vector.extract_strided_slice %448 {offsets = [0, 256], sizes = [2, 128], strides = [1, 1]} : vector<2x384xf32> to vector<2x128xf32>
    %469 = arith.mulf %458, %468 : vector<2x128xf32>
    %470 = arith.addf %467, %469 : vector<2x128xf32>
    %471 = math.tanh %470 : vector<2x128xf32>
    %cst_242 = arith.constant 1.000000e+00 : f32
    %472 = vector.broadcast %cst_242 : f32 to vector<2x128xf32>
    %473 = arith.subf %472, %466 : vector<2x128xf32>
    %474 = arith.mulf %473, %471 : vector<2x128xf32>
    %475 = arith.mulf %466, %443 : vector<2x128xf32>
    %476 = arith.addf %474, %475 : vector<2x128xf32>
    %c0_243 = arith.constant 0 : index
    %c0_244 = arith.constant 0 : index
    %477 = vector.load %arg17[%c0_243, %c0_244] : memref<128x384xf32, #tpu.memory_space<vmem>>, vector<128x384xf32>
    %cst_245 = arith.constant dense<0.000000e+00> : vector<2x384xf32>
    %478 = tpu.matmul %476, %477, %cst_245 {dimension_numbers = #tpu.dot_dimension_numbers<[1], [0], [0], [1], [0, 0, 1, 1], [], []>} : vector<2x128xf32>, vector<128x384xf32>, vector<2x384xf32> -> vector<2x384xf32>
    %c0_246 = arith.constant 0 : index
    %c0_247 = arith.constant 0 : index
    %479 = vector.load %arg19[%c0_246, %c0_247] : memref<1x384xf32, #tpu.memory_space<vmem>>, vector<1x384xf32>
    %480 = vector.broadcast %479 : vector<1x384xf32> to vector<2x384xf32>
    %481 = arith.addf %478, %480 : vector<2x384xf32>
    %482 = vector.extract_strided_slice %244 {offsets = [0, 7, 0], sizes = [2, 1, 384], strides = [1, 1, 1]} : vector<2x8x384xf32> to vector<2x1x384xf32>
    %483 = vector.shape_cast %482 : vector<2x1x384xf32> to vector<2x384xf32>
    %484 = vector.extract_strided_slice %483 {offsets = [0, 0], sizes = [2, 128], strides = [1, 1]} : vector<2x384xf32> to vector<2x128xf32>
    %485 = vector.extract_strided_slice %481 {offsets = [0, 0], sizes = [2, 128], strides = [1, 1]} : vector<2x384xf32> to vector<2x128xf32>
    %486 = arith.addf %484, %485 : vector<2x128xf32>
    %487 = arith.negf %486 : vector<2x128xf32>
    %488 = math.exp %487 : vector<2x128xf32>
    %cst_248 = arith.constant 1.000000e+00 : f32
    %489 = vector.broadcast %cst_248 : f32 to vector<2x128xf32>
    %490 = arith.addf %489, %488 : vector<2x128xf32>
    %491 = arith.divf %489, %490 : vector<2x128xf32>
    %492 = vector.extract_strided_slice %483 {offsets = [0, 128], sizes = [2, 128], strides = [1, 1]} : vector<2x384xf32> to vector<2x128xf32>
    %493 = vector.extract_strided_slice %481 {offsets = [0, 128], sizes = [2, 128], strides = [1, 1]} : vector<2x384xf32> to vector<2x128xf32>
    %494 = arith.addf %492, %493 : vector<2x128xf32>
    %495 = arith.negf %494 : vector<2x128xf32>
    %496 = math.exp %495 : vector<2x128xf32>
    %cst_249 = arith.constant 1.000000e+00 : f32
    %497 = vector.broadcast %cst_249 : f32 to vector<2x128xf32>
    %498 = arith.addf %497, %496 : vector<2x128xf32>
    %499 = arith.divf %497, %498 : vector<2x128xf32>
    %500 = vector.extract_strided_slice %483 {offsets = [0, 256], sizes = [2, 128], strides = [1, 1]} : vector<2x384xf32> to vector<2x128xf32>
    %501 = vector.extract_strided_slice %481 {offsets = [0, 256], sizes = [2, 128], strides = [1, 1]} : vector<2x384xf32> to vector<2x128xf32>
    %502 = arith.mulf %491, %501 : vector<2x128xf32>
    %503 = arith.addf %500, %502 : vector<2x128xf32>
    %504 = math.tanh %503 : vector<2x128xf32>
    %cst_250 = arith.constant 1.000000e+00 : f32
    %505 = vector.broadcast %cst_250 : f32 to vector<2x128xf32>
    %506 = arith.subf %505, %499 : vector<2x128xf32>
    %507 = arith.mulf %506, %504 : vector<2x128xf32>
    %508 = arith.mulf %499, %476 : vector<2x128xf32>
    %509 = arith.addf %507, %508 : vector<2x128xf32>
    %c0_251 = arith.constant 0 : index
    %c0_252 = arith.constant 0 : index
    %510 = vector.load %arg20[%c0_251, %c0_252] : memref<1x128xf32, #tpu.memory_space<vmem>>, vector<1x128xf32>
    %c0_253 = arith.constant 0 : index
    %c0_254 = arith.constant 0 : index
    %511 = vector.load %arg23[%c0_253, %c0_254] : memref<1x128xf32, #tpu.memory_space<vmem>>, vector<1x128xf32>
    %cst_255 = arith.constant 9.99999974E-6 : f32
    %512 = vector.broadcast %cst_255 : f32 to vector<1x128xf32>
    %513 = arith.addf %511, %512 : vector<1x128xf32>
    %514 = math.rsqrt %513 : vector<1x128xf32>
    %515 = arith.mulf %510, %514 : vector<1x128xf32>
    %c0_256 = arith.constant 0 : index
    %c0_257 = arith.constant 0 : index
    %516 = vector.load %arg22[%c0_256, %c0_257] : memref<1x128xf32, #tpu.memory_space<vmem>>, vector<1x128xf32>
    %517 = vector.broadcast %516 : vector<1x128xf32> to vector<2x128xf32>
    %518 = arith.subf %509, %517 : vector<2x128xf32>
    %519 = vector.broadcast %515 : vector<1x128xf32> to vector<2x128xf32>
    %520 = arith.mulf %518, %519 : vector<2x128xf32>
    %c0_258 = arith.constant 0 : index
    %c0_259 = arith.constant 0 : index
    %521 = vector.load %arg21[%c0_258, %c0_259] : memref<1x128xf32, #tpu.memory_space<vmem>>, vector<1x128xf32>
    %522 = vector.broadcast %521 : vector<1x128xf32> to vector<2x128xf32>
    %523 = arith.addf %520, %522 : vector<2x128xf32>
    %524 = arith.mulf %523, %523 : vector<2x128xf32>
    %cst_260 = arith.constant dense<0.000000e+00> : vector<2xf32>
    %525 = vector.multi_reduction <add>, %524, %cst_260 [1] : vector<2x128xf32> to vector<2xf32>
    %526 = vector.shape_cast %525 : vector<2xf32> to vector<2x1xf32>
    %527 = math.rsqrt %526 : vector<2x1xf32>
    %528 = vector.broadcast %527 : vector<2x1xf32> to vector<2x128xf32>
    %529 = arith.mulf %523, %528 : vector<2x128xf32>
    %c0_261 = arith.constant 0 : index
    %c0_262 = arith.constant 0 : index
    %530 = vector.load %arg24[%c0_261, %c0_262] : memref<2x128xf32, #tpu.memory_space<vmem>>, vector<2x128xf32>
    tpu.vector_store %arg24[%c0_261, %c0_262], %529 {strides = array<i32>} : memref<2x128xf32, #tpu.memory_space<vmem>>, vector<2x128xf32>,
    return
  }
  func.func @transform_0(%arg0: i32) -> (i32, i32, i32) {
    %c0_i32 = arith.constant 0 : i32
    %c0_i32_0 = arith.constant 0 : i32
    %c0_i32_1 = arith.constant 0 : i32
    return %arg0, %c0_i32, %c0_i32_0 : i32, i32, i32
  }
  func.func @transform_1(%arg0: i32) -> (i32, i32) {
    %c0_i32 = arith.constant 0 : i32
    %c0_i32_0 = arith.constant 0 : i32
    %c0_i32_1 = arith.constant 0 : i32
    return %c0_i32, %c0_i32_0 : i32, i32
  }
  func.func @transform_2(%arg0: i32) -> (i32, i32) {
    %c0_i32 = arith.constant 0 : i32
    %c0_i32_0 = arith.constant 0 : i32
    %c0_i32_1 = arith.constant 0 : i32
    return %c0_i32, %c0_i32_0 : i32, i32
  }
  func.func @transform_3(%arg0: i32) -> (i32, i32, i32) {
    %c0_i32 = arith.constant 0 : i32
    %c0_i32_0 = arith.constant 0 : i32
    %c0_i32_1 = arith.constant 0 : i32
    %c0_i32_2 = arith.constant 0 : i32
    return %c0_i32, %c0_i32_0, %c0_i32_1 : i32, i32, i32
  }
  func.func @transform_4(%arg0: i32) -> (i32, i32, i32) {
    %c0_i32 = arith.constant 0 : i32
    %c0_i32_0 = arith.constant 0 : i32
    %c0_i32_1 = arith.constant 0 : i32
    %c0_i32_2 = arith.constant 0 : i32
    return %c0_i32, %c0_i32_0, %c0_i32_1 : i32, i32, i32
  }
  func.func @transform_5(%arg0: i32) -> (i32, i32, i32) {
    %c0_i32 = arith.constant 0 : i32
    %c0_i32_0 = arith.constant 0 : i32
    %c0_i32_1 = arith.constant 0 : i32
    %c0_i32_2 = arith.constant 0 : i32
    return %c0_i32, %c0_i32_0, %c0_i32_1 : i32, i32, i32
  }
  func.func @transform_6(%arg0: i32) -> (i32, i32, i32) {
    %c0_i32 = arith.constant 0 : i32
    %c0_i32_0 = arith.constant 0 : i32
    %c0_i32_1 = arith.constant 0 : i32
    %c0_i32_2 = arith.constant 0 : i32
    return %c0_i32, %c0_i32_0, %c0_i32_1 : i32, i32, i32
  }
  func.func @transform_7(%arg0: i32) -> (i32, i32, i32) {
    %c0_i32 = arith.constant 0 : i32
    %c0_i32_0 = arith.constant 0 : i32
    %c0_i32_1 = arith.constant 0 : i32
    %c0_i32_2 = arith.constant 0 : i32
    return %c0_i32, %c0_i32_0, %c0_i32_1 : i32, i32, i32
  }
  func.func @transform_8(%arg0: i32) -> (i32, i32, i32) {
    %c0_i32 = arith.constant 0 : i32
    %c0_i32_0 = arith.constant 0 : i32
    %c0_i32_1 = arith.constant 0 : i32
    %c0_i32_2 = arith.constant 0 : i32
    return %c0_i32, %c0_i32_0, %c0_i32_1 : i32, i32, i32
  }
  func.func @transform_9(%arg0: i32) -> (i32, i32, i32) {
    %c0_i32 = arith.constant 0 : i32
    %c0_i32_0 = arith.constant 0 : i32
    %c0_i32_1 = arith.constant 0 : i32
    %c0_i32_2 = arith.constant 0 : i32
    return %c0_i32, %c0_i32_0, %c0_i32_1 : i32, i32, i32
  }
  func.func @transform_10(%arg0: i32) -> (i32, i32, i32) {
    %c0_i32 = arith.constant 0 : i32
    %c0_i32_0 = arith.constant 0 : i32
    %c0_i32_1 = arith.constant 0 : i32
    %c0_i32_2 = arith.constant 0 : i32
    return %c0_i32, %c0_i32_0, %c0_i32_1 : i32, i32, i32
  }
  func.func @transform_11(%arg0: i32) -> (i32, i32, i32) {
    %c0_i32 = arith.constant 0 : i32
    %c0_i32_0 = arith.constant 0 : i32
    %c0_i32_1 = arith.constant 0 : i32
    %c0_i32_2 = arith.constant 0 : i32
    return %c0_i32, %c0_i32_0, %c0_i32_1 : i32, i32, i32
  }
  func.func @transform_12(%arg0: i32) -> (i32, i32, i32) {
    %c0_i32 = arith.constant 0 : i32
    %c0_i32_0 = arith.constant 0 : i32
    %c0_i32_1 = arith.constant 0 : i32
    %c0_i32_2 = arith.constant 0 : i32
    return %c0_i32, %c0_i32_0, %c0_i32_1 : i32, i32, i32
  }
  func.func @transform_13(%arg0: i32) -> (i32, i32, i32) {
    %c0_i32 = arith.constant 0 : i32
    %c0_i32_0 = arith.constant 0 : i32
    %c0_i32_1 = arith.constant 0 : i32
    %c0_i32_2 = arith.constant 0 : i32
    return %c0_i32, %c0_i32_0, %c0_i32_1 : i32, i32, i32
  }
  func.func @transform_14(%arg0: i32) -> (i32, i32, i32) {
    %c0_i32 = arith.constant 0 : i32
    %c0_i32_0 = arith.constant 0 : i32
    %c0_i32_1 = arith.constant 0 : i32
    %c0_i32_2 = arith.constant 0 : i32
    return %c0_i32, %c0_i32_0, %c0_i32_1 : i32, i32, i32
  }
  func.func @transform_15(%arg0: i32) -> (i32, i32) {
    %c0_i32 = arith.constant 0 : i32
    %c0_i32_0 = arith.constant 0 : i32
    %c0_i32_1 = arith.constant 0 : i32
    return %c0_i32, %c0_i32_0 : i32, i32
  }
  func.func @transform_16(%arg0: i32) -> (i32, i32) {
    %c0_i32 = arith.constant 0 : i32
    %c0_i32_0 = arith.constant 0 : i32
    %c0_i32_1 = arith.constant 0 : i32
    return %c0_i32, %c0_i32_0 : i32, i32
  }
  func.func @transform_17(%arg0: i32) -> (i32, i32) {
    %c0_i32 = arith.constant 0 : i32
    %c0_i32_0 = arith.constant 0 : i32
    %c0_i32_1 = arith.constant 0 : i32
    return %c0_i32, %c0_i32_0 : i32, i32
  }
  func.func @transform_18(%arg0: i32) -> (i32, i32) {
    %c0_i32 = arith.constant 0 : i32
    %c0_i32_0 = arith.constant 0 : i32
    %c0_i32_1 = arith.constant 0 : i32
    return %c0_i32, %c0_i32_0 : i32, i32
  }
  func.func @transform_19(%arg0: i32) -> (i32, i32) {
    %c0_i32 = arith.constant 0 : i32
    %c0_i32_0 = arith.constant 0 : i32
    %c0_i32_1 = arith.constant 0 : i32
    return %c0_i32, %c0_i32_0 : i32, i32
  }
  func.func @transform_20(%arg0: i32) -> (i32, i32) {
    %c0_i32 = arith.constant 0 : i32
    %c0_i32_0 = arith.constant 0 : i32
    %c0_i32_1 = arith.constant 0 : i32
    return %c0_i32, %c0_i32_0 : i32, i32
  }
  func.func @transform_21(%arg0: i32) -> (i32, i32) {
    %c0_i32 = arith.constant 0 : i32
    %c0_i32_0 = arith.constant 0 : i32
    %c0_i32_1 = arith.constant 0 : i32
    return %c0_i32, %c0_i32_0 : i32, i32
  }
  func.func @transform_22(%arg0: i32) -> (i32, i32) {
    %c0_i32 = arith.constant 0 : i32
    %c0_i32_0 = arith.constant 0 : i32
    %c0_i32_1 = arith.constant 0 : i32
    return %c0_i32, %c0_i32_0 : i32, i32
  }
  func.func @transform_23(%arg0: i32) -> (i32, i32) {
    %c0_i32 = arith.constant 0 : i32
    %c0_i32_0 = arith.constant 0 : i32
    return %arg0, %c0_i32 : i32, i32
  }
}

</mosaic_0001>

<llo_original>
// kernel: tpu_custom_call.1
$region0: #{tpu_custom_call.1}
  #allocation0 [shape = 'u32[]', space=smem, size = 0x4, offset = 0x4, fixed_abs, tag = 'smem constant byte address 0x4 - core index']
  #allocation1 [shape = 'u32[144,128]{1,0:T(1,128)}', space=vmem, size = 0x12000, scoped, tag = 'internal scratch']
  %s0 = inlined_call_operand.hbm [shape: f32[2,8,128], index: 0, kind: input, shape index: {}]
  %s1 = inlined_call_operand.hbm [shape: f32[128,128], index: 1, kind: input, shape index: {}]
  %s2 = inlined_call_operand.hbm [shape: f32[1,128], index: 2, kind: input, shape index: {}]
  %s3 = inlined_call_operand.hbm [shape: f32[4,128,128], index: 3, kind: input, shape index: {}]
  %s4 = inlined_call_operand.vmem [shape: f32[4,1,128], index: 4, kind: input, shape index: {}]
  %s5 = inlined_call_operand.hbm [shape: f32[4,128,128], index: 5, kind: input, shape index: {}]
  %s6 = inlined_call_operand.vmem [shape: f32[4,1,128], index: 6, kind: input, shape index: {}]
  %s7 = inlined_call_operand.hbm [shape: f32[4,128,128], index: 7, kind: input, shape index: {}]
  %s8 = inlined_call_operand.vmem [shape: f32[4,1,128], index: 8, kind: input, shape index: {}]
  %s9 = inlined_call_operand.hbm [shape: f32[4,128,128], index: 9, kind: input, shape index: {}]
  %s10 = inlined_call_operand.vmem [shape: f32[4,1,128], index: 10, kind: input, shape index: {}]
  %s11 = inlined_call_operand.vmem [shape: f32[4,1,128], index: 11, kind: input, shape index: {}]
  %s12 = inlined_call_operand.hbm [shape: f32[4,1,128], index: 12, kind: input, shape index: {}]
  %s13 = inlined_call_operand.hbm [shape: f32[4,1,128], index: 13, kind: input, shape index: {}]
  %s14 = inlined_call_operand.vmem [shape: f32[4,1,128], index: 14, kind: input, shape index: {}]
  %s15 = inlined_call_operand.hbm [shape: f32[128,384], index: 15, kind: input, shape index: {}]
  %s16 = inlined_call_operand.hbm [shape: f32[128,384], index: 16, kind: input, shape index: {}]
  %s17 = inlined_call_operand.vmem [shape: f32[1,384], index: 17, kind: input, shape index: {}]
  %s18 = inlined_call_operand.vmem [shape: f32[1,384], index: 18, kind: input, shape index: {}]
  %s19 = inlined_call_operand.vmem [shape: f32[1,128], index: 19, kind: input, shape index: {}]
  %s20 = inlined_call_operand.vmem [shape: f32[1,128], index: 20, kind: input, shape index: {}]
  %s21 = inlined_call_operand.vmem [shape: f32[1,128], index: 21, kind: input, shape index: {}]
  %s22 = inlined_call_operand.vmem [shape: f32[1,128], index: 22, kind: input, shape index: {}]
  %s23 = inlined_call_operand.hbm [shape: f32[2,128], index: 23, kind: output, shape index: {}]
  %s24 = sld [smem:[#allocation0]]
  $region146: #{tpu_custom_call.1} parent=0
    _
  %s26 = ssub.s32 1, %s24
  %s27 = scalar_select 0, %s26, %s24
  $region1: #{tpu_custom_call.1} parent=0
    #allocation2 [shape = 'u8[8192]{0}', space=vmem, size = 0x2000, scoped, tag = 'input window, operand 0, single buffered']
    #allocation3 [shape = 's32[1]{0}', space=sflag, size = 0x4, scoped, tag = 'scoped memory for tpu_custom_call.1']
    #allocation4 [shape = 's32[1]{0}', space=sflag, size = 0x4, scoped, tag = 'scoped memory for tpu_custom_call.1']
    #allocation5 [shape = 'u8[65536]{0}', space=vmem, size = 0x10000, scoped, tag = 'input window, operand 1, single buffered']
    #allocation6 [shape = 's32[1]{0}', space=sflag, size = 0x4, scoped, tag = 'scoped memory for tpu_custom_call.1']
    #allocation7 [shape = 'u8[512]{0}', space=vmem, size = 0x400, scoped, tag = 'input window, operand 2, single buffered']
    #allocation8 [shape = 'u8[262144]{0}', space=vmem, size = 0x40000, scoped, tag = 'input window, operand 3, single buffered']
    #allocation9 [shape = 's32[1]{0}', space=sflag, size = 0x4, scoped, tag = 'scoped memory for tpu_custom_call.1']
    #allocation10 [shape = 'u8[262144]{0}', space=vmem, size = 0x40000, scoped, tag = 'input window, operand 5, single buffered']
    #allocation11 [shape = 'u8[262144]{0}', space=vmem, size = 0x40000, scoped, tag = 'input window, operand 7, single buffered']
    #allocation12 [shape = 's32[1]{0}', space=sflag, size = 0x4, scoped, tag = 'scoped memory for tpu_custom_call.1']
    #allocation13 [shape = 'u8[262144]{0}', space=vmem, size = 0x40000, scoped, tag = 'input window, operand 9, single buffered']
    #allocation14 [shape = 'u8[2048]{0}', space=vmem, size = 0x800, scoped, tag = 'input window, operand 12, single buffered']
    #allocation15 [shape = 's32[1]{0}', space=sflag, size = 0x4, scoped, tag = 'scoped memory for tpu_custom_call.1']
    #allocation16 [shape = 'u8[2048]{0}', space=vmem, size = 0x800, scoped, tag = 'input window, operand 13, single buffered']
    #allocation17 [shape = 'u8[196608]{0}', space=vmem, size = 0x30000, scoped, tag = 'input window, operand 15, single buffered']
    #allocation18 [shape = 's32[1]{0}', space=sflag, size = 0x4, scoped, tag = 'scoped memory for tpu_custom_call.1']
    #allocation19 [shape = 'u8[196608]{0}', space=vmem, size = 0x30000, scoped, tag = 'input window, operand 16, single buffered']
    #allocation20 [shape = 'u8[1024]{0}', space=vmem, size = 0x400, scoped, tag = 'output window, operand 0, single buffered']
    %28 = vsyncpa [#allocation3], 0
    %29 = vsyncpa [#allocation6], 0
    %30 = vsyncpa [#allocation9], 0
    %31 = vsyncpa [#allocation12], 0
    %32 = vsyncpa [#allocation15], 0
    %33 = vsyncpa [#allocation18], 0
    %34 = vsyncpa [#allocation4], 0
    // Predicated region
    $region2: #{tpu_custom_call.1} parent=1 // pred_check
      _
    $region3: #{tpu_custom_call.1} parent=1 // pred_check_branch
      %36 = sbr.rel (0) target = $region5
    $region4: #{tpu_custom_call.1} parent=1 // pred_region
      %s38 = ssub.s32 256, 256
      %39 = vsyncadd [#allocation3], %s38
      %s40 = sshll.u32 [#allocation2], 4
      %s41 = int_to_ptr.vmem [resolvable:$true] %s40
      %46 = dma.hbm_to_vmem [thread:$0]  %s0, 256, %s41, [#allocation3], 128, 128, 8
    $region5: #{tpu_custom_call.1} parent=1 // pred_fallthru
      _
    // Predicated region
    $region6: #{tpu_custom_call.1} parent=1 // pred_check
      _
    $region7: #{tpu_custom_call.1} parent=1 // pred_check_branch
      %48 = sbr.rel (0) target = $region9
    $region8: #{tpu_custom_call.1} parent=1 // pred_region
      %s50 = ssub.s32 2048, 2048
      %51 = vsyncadd [#allocation6], %s50
      %s52 = sshll.u32 [#allocation5], 4
      %s53 = int_to_ptr.vmem [resolvable:$true] %s52
      %58 = dma.hbm_to_vmem [thread:$0]  %s1, 2048, %s53, [#allocation6], 128, 128, 8
    $region9: #{tpu_custom_call.1} parent=1 // pred_fallthru
      _
    // Predicated region
    $region10: #{tpu_custom_call.1} parent=1 // pred_check
      _
    $region11: #{tpu_custom_call.1} parent=1 // pred_check_branch
      %60 = sbr.rel (0) target = $region13
    $region12: #{tpu_custom_call.1} parent=1 // pred_region
      %s62 = ssub.s32 16, 16
      %63 = vsyncadd [#allocation6], %s62
      %s65 = sshll.u32 [#allocation7], 4
      %s66 = int_to_ptr.vmem [resolvable:$true] %s65
      %68 = dma.hbm_to_vmem [thread:$0]  %s2, 16, %s66, [#allocation6]
    $region13: #{tpu_custom_call.1} parent=1 // pred_fallthru
      _
    // Predicated region
    $region14: #{tpu_custom_call.1} parent=1 // pred_check
      _
    $region15: #{tpu_custom_call.1} parent=1 // pred_check_branch
      %70 = sbr.rel (0) target = $region17
    $region16: #{tpu_custom_call.1} parent=1 // pred_region
      %s72 = ssub.s32 8192, 8192
      %73 = vsyncadd [#allocation9], %s72
      %s74 = sshll.u32 [#allocation8], 4
      %s75 = int_to_ptr.vmem [resolvable:$true] %s74
      %80 = dma.hbm_to_vmem [thread:$0]  %s3, 8192, %s75, [#allocation9], 128, 128, 8
    $region17: #{tpu_custom_call.1} parent=1 // pred_fallthru
      _
    // Predicated region
    $region18: #{tpu_custom_call.1} parent=1 // pred_check
      _
    $region19: #{tpu_custom_call.1} parent=1 // pred_check_branch
      %82 = sbr.rel (0) target = $region21
    $region20: #{tpu_custom_call.1} parent=1 // pred_region
      _
    $region21: #{tpu_custom_call.1} parent=1 // pred_fallthru
      _
    // Predicated region
    $region22: #{tpu_custom_call.1} parent=1 // pred_check
      _
    $region23: #{tpu_custom_call.1} parent=1 // pred_check_branch
      %84 = sbr.rel (0) target = $region25
    $region24: #{tpu_custom_call.1} parent=1 // pred_region
      %s86 = ssub.s32 8192, 8192
      %87 = vsyncadd [#allocation9], %s86
      %s88 = sshll.u32 [#allocation10], 4
      %s89 = int_to_ptr.vmem [resolvable:$true] %s88
      %94 = dma.hbm_to_vmem [thread:$0]  %s5, 8192, %s89, [#allocation9], 128, 128, 8
    $region25: #{tpu_custom_call.1} parent=1 // pred_fallthru
      _
    // Predicated region
    $region26: #{tpu_custom_call.1} parent=1 // pred_check
      _
    $region27: #{tpu_custom_call.1} parent=1 // pred_check_branch
      %96 = sbr.rel (0) target = $region29
    $region28: #{tpu_custom_call.1} parent=1 // pred_region
      _
    $region29: #{tpu_custom_call.1} parent=1 // pred_fallthru
      _
    // Predicated region
    $region30: #{tpu_custom_call.1} parent=1 // pred_check
      _
    $region31: #{tpu_custom_call.1} parent=1 // pred_check_branch
      %98 = sbr.rel (0) target = $region33
    $region32: #{tpu_custom_call.1} parent=1 // pred_region
      %s100 = ssub.s32 8192, 8192
      %101 = vsyncadd [#allocation12], %s100
      %s102 = sshll.u32 [#allocation11], 4
      %s103 = int_to_ptr.vmem [resolvable:$true] %s102
      %108 = dma.hbm_to_vmem [thread:$0]  %s7, 8192, %s103, [#allocation12], 128, 128, 8
    $region33: #{tpu_custom_call.1} parent=1 // pred_fallthru
      _
    // Predicated region
    $region34: #{tpu_custom_call.1} parent=1 // pred_check
      _
    $region35: #{tpu_custom_call.1} parent=1 // pred_check_branch
      %110 = sbr.rel (0) target = $region37
    $region36: #{tpu_custom_call.1} parent=1 // pred_region
      _
    $region37: #{tpu_custom_call.1} parent=1 // pred_fallthru
      _
    // Predicated region
    $region38: #{tpu_custom_call.1} parent=1 // pred_check
      _
    $region39: #{tpu_custom_call.1} parent=1 // pred_check_branch
      %112 = sbr.rel (0) target = $region41
    $region40: #{tpu_custom_call.1} parent=1 // pred_region
      %s114 = ssub.s32 8192, 8192
      %115 = vsyncadd [#allocation12], %s114
      %s116 = sshll.u32 [#allocation13], 4
      %s117 = int_to_ptr.vmem [resolvable:$true] %s116
      %122 = dma.hbm_to_vmem [thread:$0]  %s9, 8192, %s117, [#allocation12], 128, 128, 8
    $region41: #{tpu_custom_call.1} parent=1 // pred_fallthru
      _
    // Predicated region
    $region42: #{tpu_custom_call.1} parent=1 // pred_check
      _
    $region43: #{tpu_custom_call.1} parent=1 // pred_check_branch
      %124 = sbr.rel (0) target = $region45
    $region44: #{tpu_custom_call.1} parent=1 // pred_region
      _
    $region45: #{tpu_custom_call.1} parent=1 // pred_fallthru
      _
    // Predicated region
    $region46: #{tpu_custom_call.1} parent=1 // pred_check
      _
    $region47: #{tpu_custom_call.1} parent=1 // pred_check_branch
      %126 = sbr.rel (0) target = $region49
    $region48: #{tpu_custom_call.1} parent=1 // pred_region
      _
    $region49: #{tpu_custom_call.1} parent=1 // pred_fallthru
      _
    // Predicated region
    $region50: #{tpu_custom_call.1} parent=1 // pred_check
      _
    $region51: #{tpu_custom_call.1} parent=1 // pred_check_branch
      %128 = sbr.rel (0) target = $region53
    $region52: #{tpu_custom_call.1} parent=1 // pred_region
      %s130 = ssub.s32 64, 64
      %131 = vsyncadd [#allocation15], %s130
      %s132 = sshll.u32 [#allocation14], 4
      %s133 = int_to_ptr.vmem [resolvable:$true] %s132
      %138 = dma.hbm_to_vmem [thread:$0]  %s12, 64, %s133, [#allocation15], 16, 16, 1
    $region53: #{tpu_custom_call.1} parent=1 // pred_fallthru
      _
    // Predicated region
    $region54: #{tpu_custom_call.1} parent=1 // pred_check
      _
    $region55: #{tpu_custom_call.1} parent=1 // pred_check_branch
      %140 = sbr.rel (0) target = $region57
    $region56: #{tpu_custom_call.1} parent=1 // pred_region
      %s142 = ssub.s32 64, 64
      %143 = vsyncadd [#allocation15], %s142
      %s144 = sshll.u32 [#allocation16], 4
      %s145 = int_to_ptr.vmem [resolvable:$true] %s144
      %150 = dma.hbm_to_vmem [thread:$0]  %s13, 64, %s145, [#allocation15], 16, 16, 1
    $region57: #{tpu_custom_call.1} parent=1 // pred_fallthru
      _
    // Predicated region
    $region58: #{tpu_custom_call.1} parent=1 // pred_check
      _
    $region59: #{tpu_custom_call.1} parent=1 // pred_check_branch
      %152 = sbr.rel (0) target = $region61
    $region60: #{tpu_custom_call.1} parent=1 // pred_region
      _
    $region61: #{tpu_custom_call.1} parent=1 // pred_fallthru
      _
    // Predicated region
    $region62: #{tpu_custom_call.1} parent=1 // pred_check
      _
    $region63: #{tpu_custom_call.1} parent=1 // pred_check_branch
      %154 = sbr.rel (0) target = $region65
    $region64: #{tpu_custom_call.1} parent=1 // pred_region
      %s156 = ssub.s32 6144, 6144
      %157 = vsyncadd [#allocation18], %s156
      %s158 = sshll.u32 [#allocation17], 4
      %s159 = int_to_ptr.vmem [resolvable:$true] %s158
      %164 = dma.hbm_to_vmem [thread:$0]  %s15, 6144, %s159, [#allocation18], 384, 384, 24
    $region65: #{tpu_custom_call.1} parent=1 // pred_fallthru
      _
    // Predicated region
    $region66: #{tpu_custom_call.1} parent=1 // pred_check
      _
    $region67: #{tpu_custom_call.1} parent=1 // pred_check_branch
      %166 = sbr.rel (0) target = $region69
    $region68: #{tpu_custom_call.1} parent=1 // pred_region
      %s168 = ssub.s32 6144, 6144
      %169 = vsyncadd [#allocation18], %s168
      %s170 = sshll.u32 [#allocation19], 4
      %s171 = int_to_ptr.vmem [resolvable:$true] %s170
      %176 = dma.hbm_to_vmem [thread:$0]  %s16, 6144, %s171, [#allocation18], 384, 384, 24
    $region69: #{tpu_custom_call.1} parent=1 // pred_fallthru
      _
    // Predicated region
    $region70: #{tpu_custom_call.1} parent=1 // pred_check
      _
    $region71: #{tpu_custom_call.1} parent=1 // pred_check_branch
      %178 = sbr.rel (0) target = $region73
    $region72: #{tpu_custom_call.1} parent=1 // pred_region
      _
    $region73: #{tpu_custom_call.1} parent=1 // pred_fallthru
      _
    // Predicated region
    $region74: #{tpu_custom_call.1} parent=1 // pred_check
      _
    $region75: #{tpu_custom_call.1} parent=1 // pred_check_branch
      %180 = sbr.rel (0) target = $region77
    $region76: #{tpu_custom_call.1} parent=1 // pred_region
      _
    $region77: #{tpu_custom_call.1} parent=1 // pred_fallthru
      _
    // Predicated region
    $region78: #{tpu_custom_call.1} parent=1 // pred_check
      _
    $region79: #{tpu_custom_call.1} parent=1 // pred_check_branch
      %182 = sbr.rel (0) target = $region81
    $region80: #{tpu_custom_call.1} parent=1 // pred_region
      _
    $region81: #{tpu_custom_call.1} parent=1 // pred_fallthru
      _
    // Predicated region
    $region82: #{tpu_custom_call.1} parent=1 // pred_check
      _
    $region83: #{tpu_custom_call.1} parent=1 // pred_check_branch
      %184 = sbr.rel (0) target = $region85
    $region84: #{tpu_custom_call.1} parent=1 // pred_region
      _
    $region85: #{tpu_custom_call.1} parent=1 // pred_fallthru
      _
    // Predicated region
    $region86: #{tpu_custom_call.1} parent=1 // pred_check
      _
    $region87: #{tpu_custom_call.1} parent=1 // pred_check_branch
      %186 = sbr.rel (0) target = $region89
    $region88: #{tpu_custom_call.1} parent=1 // pred_region
      _
    $region89: #{tpu_custom_call.1} parent=1 // pred_fallthru
      _
    // Predicated region
    $region90: #{tpu_custom_call.1} parent=1 // pred_check
      _
    $region91: #{tpu_custom_call.1} parent=1 // pred_check_branch
      %188 = sbr.rel (0) target = $region93
    $region92: #{tpu_custom_call.1} parent=1 // pred_region
      _
    $region93: #{tpu_custom_call.1} parent=1 // pred_fallthru
      _
    // Predicated region
    $region94: #{tpu_custom_call.1} parent=1 // pred_check
      _
    $region95: #{tpu_custom_call.1} parent=1 // pred_check_branch
      %190 = sbr.rel (0) target = $region97
    $region96: #{tpu_custom_call.1} parent=1 // pred_region
      %191 = dma.done [#allocation3], 256
    $region97: #{tpu_custom_call.1} parent=1 // pred_fallthru
      _
    // Predicated region
    $region98: #{tpu_custom_call.1} parent=1 // pred_check
      _
    $region99: #{tpu_custom_call.1} parent=1 // pred_check_branch
      %193 = sbr.rel (0) target = $region101
    $region100: #{tpu_custom_call.1} parent=1 // pred_region
      %194 = dma.done [#allocation6], 2048
    $region101: #{tpu_custom_call.1} parent=1 // pred_fallthru
      _
    // Predicated region
    $region102: #{tpu_custom_call.1} parent=1 // pred_check
      _
    $region103: #{tpu_custom_call.1} parent=1 // pred_check_branch
      %196 = sbr.rel (0) target = $region105
    $region104: #{tpu_custom_call.1} parent=1 // pred_region
      %197 = dma.done [#allocation6], 16
    $region105: #{tpu_custom_call.1} parent=1 // pred_fallthru
      _
    // Predicated region
    $region106: #{tpu_custom_call.1} parent=1 // pred_check
      _
    $region107: #{tpu_custom_call.1} parent=1 // pred_check_branch
      %199 = sbr.rel (0) target = $region109
    $region108: #{tpu_custom_call.1} parent=1 // pred_region
      %200 = dma.done [#allocation9], 8192
    $region109: #{tpu_custom_call.1} parent=1 // pred_fallthru
      _
    // Predicated region
    $region110: #{tpu_custom_call.1} parent=1 // pred_check
      _
    $region111: #{tpu_custom_call.1} parent=1 // pred_check_branch
      %202 = sbr.rel (0) target = $region113
    $region112: #{tpu_custom_call.1} parent=1 // pred_region
      %203 = dma.done [#allocation9], 8192
    $region113: #{tpu_custom_call.1} parent=1 // pred_fallthru
      _
    // Predicated region
    $region114: #{tpu_custom_call.1} parent=1 // pred_check
      _
    $region115: #{tpu_custom_call.1} parent=1 // pred_check_branch
      %205 = sbr.rel (0) target = $region117
    $region116: #{tpu_custom_call.1} parent=1 // pred_region
      %206 = dma.done [#allocation12], 8192
    $region117: #{tpu_custom_call.1} parent=1 // pred_fallthru
      _
    // Predicated region
    $region118: #{tpu_custom_call.1} parent=1 // pred_check
      _
    $region119: #{tpu_custom_call.1} parent=1 // pred_check_branch
      %208 = sbr.rel (0) target = $region121
    $region120: #{tpu_custom_call.1} parent=1 // pred_region
      %209 = dma.done [#allocation12], 8192
    $region121: #{tpu_custom_call.1} parent=1 // pred_fallthru
      _
    // Predicated region
    $region122: #{tpu_custom_call.1} parent=1 // pred_check
      _
    $region123: #{tpu_custom_call.1} parent=1 // pred_check_branch
      %211 = sbr.rel (0) target = $region125
    $region124: #{tpu_custom_call.1} parent=1 // pred_region
      %212 = dma.done [#allocation15], 64
    $region125: #{tpu_custom_call.1} parent=1 // pred_fallthru
      _
    // Predicated region
    $region126: #{tpu_custom_call.1} parent=1 // pred_check
      _
    $region127: #{tpu_custom_call.1} parent=1 // pred_check_branch
      %214 = sbr.rel (0) target = $region129
    $region128: #{tpu_custom_call.1} parent=1 // pred_region
      %215 = dma.done [#allocation15], 64
    $region129: #{tpu_custom_call.1} parent=1 // pred_fallthru
      _
    // Predicated region
    $region130: #{tpu_custom_call.1} parent=1 // pred_check
      _
    $region131: #{tpu_custom_call.1} parent=1 // pred_check_branch
      %217 = sbr.rel (0) target = $region133
    $region132: #{tpu_custom_call.1} parent=1 // pred_region
      %218 = dma.done [#allocation18], 6144
    $region133: #{tpu_custom_call.1} parent=1 // pred_fallthru
      _
    // Predicated region
    $region134: #{tpu_custom_call.1} parent=1 // pred_check
      _
    $region135: #{tpu_custom_call.1} parent=1 // pred_check_branch
      %220 = sbr.rel (0) target = $region137
    $region136: #{tpu_custom_call.1} parent=1 // pred_region
      %221 = dma.done [#allocation18], 6144
    $region137: #{tpu_custom_call.1} parent=1 // pred_fallthru
      _
    %v222 = vld [vmem:[#allocation2] sm:$0xff]
    %v223 = vld [vmem:[#allocation2 + $0x8] sm:$0xff]
    %v224 = vld [vmem:[#allocation5] sm:$0xff]
    %v225 = vld [vmem:[#allocation5 + $0x8] sm:$0xff]
    %v226 = vld [vmem:[#allocation5 + $0x10] sm:$0xff]
    %v227 = vld [vmem:[#allocation5 + $0x18] sm:$0xff]
    %v228 = vld [vmem:[#allocation5 + $0x20] sm:$0xff]
    %v229 = vld [vmem:[#allocation5 + $0x28] sm:$0xff]
    %v230 = vld [vmem:[#allocation5 + $0x30] sm:$0xff]
    %v231 = vld [vmem:[#allocation5 + $0x38] sm:$0xff]
    %v232 = vld [vmem:[#allocation5 + $0x40] sm:$0xff]
    %v233 = vld [vmem:[#allocation5 + $0x48] sm:$0xff]
    %v234 = vld [vmem:[#allocation5 + $0x50] sm:$0xff]
    %v235 = vld [vmem:[#allocation5 + $0x58] sm:$0xff]
    %v236 = vld [vmem:[#allocation5 + $0x60] sm:$0xff]
    %v237 = vld [vmem:[#allocation5 + $0x68] sm:$0xff]
    %v238 = vld [vmem:[#allocation5 + $0x70] sm:$0xff]
    %v239 = vld [vmem:[#allocation5 + $0x78] sm:$0xff]
    %v240 = vld [vmem:[#allocation7] sm:$0x1]
    %v242 = vlaneseq
    %v243 = vshrl.u32 %v242, 7
    %v244 = vsub.s32 0, %v243
    %v245 = vrot.slane %v240, %v244
    %247 = vmatprep.subr.mxu0 0.0
    %248 = vmatpush1.msra.mxu0 %v239
    %249 = vmatprep.subr.mxu0 0.0
    %250 = vmatpush1.msra.mxu0 %v238
    %251 = vmatprep.subr.mxu0 0.0
    %252 = vmatpush1.msra.mxu0 %v237
    %253 = vmatprep.subr.mxu0 0.0
    %254 = vmatpush1.msra.mxu0 %v236
    %255 = vmatprep.subr.mxu0 0.0
    %256 = vmatpush1.msra.mxu0 %v235
    %257 = vmatprep.subr.mxu0 0.0
    %258 = vmatpush1.msra.mxu0 %v234
    %259 = vmatprep.subr.mxu0 0.0
    %260 = vmatpush1.msra.mxu0 %v233
    %261 = vmatprep.subr.mxu0 0.0
    %262 = vmatpush1.msra.mxu0 %v232
    %263 = vmatprep.subr.mxu0 0.0
    %264 = vmatpush1.msra.mxu0 %v231
    %265 = vmatprep.subr.mxu0 0.0
    %266 = vmatpush1.msra.mxu0 %v230
    %267 = vmatprep.subr.mxu0 0.0
    %268 = vmatpush1.msra.mxu0 %v229
    %269 = vmatprep.subr.mxu0 0.0
    %270 = vmatpush1.msra.mxu0 %v228
    %271 = vmatprep.subr.mxu0 0.0
    %272 = vmatpush1.msra.mxu0 %v227
    %273 = vmatprep.subr.mxu0 0.0
    %274 = vmatpush1.msra.mxu0 %v226
    %275 = vmatprep.subr.mxu0 0.0
    %276 = vmatpush1.msra.mxu0 %v225
    %277 = vmatprep.subr.mxu0 0.0
    %278 = vmatpush1.msra.mxu0 %v224
    %279 = vmatprep.subr.mxu0 0.0
    %280 = vmatpush2.msra.mxu0 0.0
    %281 = vmatprep.subr.mxu0 0.0
    %282 = vmatpush2.msra.mxu0 0.0
    %283 = vmatprep.subr.mxu0 0.0
    %284 = vmatpush2.msra.mxu0 0.0
    %285 = vmatprep.subr.mxu0 0.0
    %286 = vmatpush2.msra.mxu0 0.0
    %287 = vmatprep.subr.mxu0 0.0
    %288 = vmatpush2.msra.mxu0 0.0
    %289 = vmatprep.subr.mxu0 0.0
    %290 = vmatpush2.msra.mxu0 0.0
    %291 = vmatprep.subr.mxu0 0.0
    %292 = vmatpush2.msra.mxu0 0.0
    %293 = vmatprep.subr.mxu0 0.0
    %294 = vmatpush2.msra.mxu0 0.0
    %295 = vmatprep.subr.mxu0 0.0
    %296 = vmatpush2.msra.mxu0 0.0
    %297 = vmatprep.subr.mxu0 0.0
    %298 = vmatpush2.msra.mxu0 0.0
    %299 = vmatprep.subr.mxu0 0.0
    %300 = vmatpush2.msra.mxu0 0.0
    %301 = vmatprep.subr.mxu0 0.0
    %302 = vmatpush2.msra.mxu0 0.0
    %303 = vmatprep.subr.mxu0 0.0
    %304 = vmatpush2.msra.mxu0 0.0
    %305 = vmatprep.subr.mxu0 0.0
    %306 = vmatpush2.msra.mxu0 0.0
    %307 = vmatprep.subr.mxu0 0.0
    %308 = vmatpush2.msra.mxu0 0.0
    %309 = vmatprep.subr.mxu0 0.0
    %310 = vmatpush2.msra.mxu0 0.0
    %311 = vmatprep.mubr.f32.mxu0 0.0
    %312 = vmatmul.mubr.f32.gmra.mxu0 %v222
    %v313 = vpop.f32.mrf.mxu0
    %v314 = vadd.f32 %v245, %v313
    %v315 = vpop.f32.mrf.mxu0
    %316 = vmatprep.mubr.f32.mxu0 0.0
    %317 = vmatmul.mubr.f32.gmra.mxu0 %v223
    %v318 = vpop.f32.mrf.mxu0
    %v319 = vadd.f32 %v245, %v318
    %v320 = vpop.f32.mrf.mxu0
    %321 = vdwg.mxu0
    %v322 = vmul.f32 %v314, %v314
    %v323 = vmul.f32 %v319, %v319
    %324 = vadd.xlane.f32.xlu0 %v322
    %v325 = vpop.xlane.xlu0 %324
    %326 = vadd.xlane.f32.xlu0 %v323
    %v327 = vpop.xlane.xlu0 %326
    %v328 = vrsqrt.pop %v325
    %v329 = vrsqrt.pop %v327
    %v330 = vmul.f32 %v314, %v328
    %v331 = vmul.f32 %v319, %v329
    %v332 = vld [vmem:[#allocation8] sm:$0xff]
    %v333 = vld [vmem:[#allocation8 + $0x8] sm:$0xff]
    %v334 = vld [vmem:[#allocation8 + $0x10] sm:$0xff]
    %v335 = vld [vmem:[#allocation8 + $0x18] sm:$0xff]
    %v336 = vld [vmem:[#allocation8 + $0x20] sm:$0xff]
    %v337 = vld [vmem:[#allocation8 + $0x28] sm:$0xff]
    %v338 = vld [vmem:[#allocation8 + $0x30] sm:$0xff]
    %v339 = vld [vmem:[#allocation8 + $0x38] sm:$0xff]
    %v340 = vld [vmem:[#allocation8 + $0x40] sm:$0xff]
    %v341 = vld [vmem:[#allocation8 + $0x48] sm:$0xff]
    %v342 = vld [vmem:[#allocation8 + $0x50] sm:$0xff]
    %v343 = vld [vmem:[#allocation8 + $0x58] sm:$0xff]
    %v344 = vld [vmem:[#allocation8 + $0x60] sm:$0xff]
    %v345 = vld [vmem:[#allocation8 + $0x68] sm:$0xff]
    %v346 = vld [vmem:[#allocation8 + $0x70] sm:$0xff]
    %v347 = vld [vmem:[#allocation8 + $0x78] sm:$0xff]
    %v348 = vld [vmem:[%s4] sm:$0x1]
    %v350 = vlaneseq
    %v351 = vshrl.u32 %v350, 7
    %v352 = vsub.s32 0, %v351
    %v353 = vrot.slane %v348, %v352
    %355 = vmatprep.subr.mxu0 0.0
    %356 = vmatpush1.msra.mxu0 %v347
    %357 = vmatprep.subr.mxu0 0.0
    %358 = vmatpush1.msra.mxu0 %v346
    %359 = vmatprep.subr.mxu0 0.0
    %360 = vmatpush1.msra.mxu0 %v345
    %361 = vmatprep.subr.mxu0 0.0
    %362 = vmatpush1.msra.mxu0 %v344
    %363 = vmatprep.subr.mxu0 0.0
    %364 = vmatpush1.msra.mxu0 %v343
    %365 = vmatprep.subr.mxu0 0.0
    %366 = vmatpush1.msra.mxu0 %v342
    %367 = vmatprep.subr.mxu0 0.0
    %368 = vmatpush1.msra.mxu0 %v341
    %369 = vmatprep.subr.mxu0 0.0
    %370 = vmatpush1.msra.mxu0 %v340
    %371 = vmatprep.subr.mxu0 0.0
    %372 = vmatpush1.msra.mxu0 %v339
    %373 = vmatprep.subr.mxu0 0.0
    %374 = vmatpush1.msra.mxu0 %v338
    %375 = vmatprep.subr.mxu0 0.0
    %376 = vmatpush1.msra.mxu0 %v337
    %377 = vmatprep.subr.mxu0 0.0
    %378 = vmatpush1.msra.mxu0 %v336
    %379 = vmatprep.subr.mxu0 0.0
    %380 = vmatpush1.msra.mxu0 %v335
    %381 = vmatprep.subr.mxu0 0.0
    %382 = vmatpush1.msra.mxu0 %v334
    %383 = vmatprep.subr.mxu0 0.0
    %384 = vmatpush1.msra.mxu0 %v333
    %385 = vmatprep.subr.mxu0 0.0
    %386 = vmatpush1.msra.mxu0 %v332
    %387 = vmatprep.subr.mxu0 0.0
    %388 = vmatpush2.msra.mxu0 0.0
    %389 = vmatprep.subr.mxu0 0.0
    %390 = vmatpush2.msra.mxu0 0.0
    %391 = vmatprep.subr.mxu0 0.0
    %392 = vmatpush2.msra.mxu0 0.0
    %393 = vmatprep.subr.mxu0 0.0
    %394 = vmatpush2.msra.mxu0 0.0
    %395 = vmatprep.subr.mxu0 0.0
    %396 = vmatpush2.msra.mxu0 0.0
    %397 = vmatprep.subr.mxu0 0.0
    %398 = vmatpush2.msra.mxu0 0.0
    %399 = vmatprep.subr.mxu0 0.0
    %400 = vmatpush2.msra.mxu0 0.0
    %401 = vmatprep.subr.mxu0 0.0
    %402 = vmatpush2.msra.mxu0 0.0
    %403 = vmatprep.subr.mxu0 0.0
    %404 = vmatpush2.msra.mxu0 0.0
    %405 = vmatprep.subr.mxu0 0.0
    %406 = vmatpush2.msra.mxu0 0.0
    %407 = vmatprep.subr.mxu0 0.0
    %408 = vmatpush2.msra.mxu0 0.0
    %409 = vmatprep.subr.mxu0 0.0
    %410 = vmatpush2.msra.mxu0 0.0
    %411 = vmatprep.subr.mxu0 0.0
    %412 = vmatpush2.msra.mxu0 0.0
    %413 = vmatprep.subr.mxu0 0.0
    %414 = vmatpush2.msra.mxu0 0.0
    %415 = vmatprep.subr.mxu0 0.0
    %416 = vmatpush2.msra.mxu0 0.0
    %417 = vmatprep.subr.mxu0 0.0
    %418 = vmatpush2.msra.mxu0 0.0
    %419 = vmatprep.mubr.f32.mxu0 0.0
    %420 = vmatmul.mubr.f32.gmra.mxu0 %v330
    %v421 = vpop.f32.mrf.mxu0
    %v422 = vadd.f32 %v353, %v421
    %v423 = vpop.f32.mrf.mxu0
    %424 = vmatprep.mubr.f32.mxu0 0.0
    %425 = vmatmul.mubr.f32.gmra.mxu0 %v331
    %v426 = vpop.f32.mrf.mxu0
    %v427 = vadd.f32 %v353, %v426
    %v428 = vpop.f32.mrf.mxu0
    %429 = vdwg.mxu0
    %v430 = vld [vmem:[#allocation10] sm:$0xff]
    %v431 = vld [vmem:[#allocation10 + $0x8] sm:$0xff]
    %v432 = vld [vmem:[#allocation10 + $0x10] sm:$0xff]
    %v433 = vld [vmem:[#allocation10 + $0x18] sm:$0xff]
    %v434 = vld [vmem:[#allocation10 + $0x20] sm:$0xff]
    %v435 = vld [vmem:[#allocation10 + $0x28] sm:$0xff]
    %v436 = vld [vmem:[#allocation10 + $0x30] sm:$0xff]
    %v437 = vld [vmem:[#allocation10 + $0x38] sm:$0xff]
    %v438 = vld [vmem:[#allocation10 + $0x40] sm:$0xff]
    %v439 = vld [vmem:[#allocation10 + $0x48] sm:$0xff]
    %v440 = vld [vmem:[#allocation10 + $0x50] sm:$0xff]
    %v441 = vld [vmem:[#allocation10 + $0x58] sm:$0xff]
    %v442 = vld [vmem:[#allocation10 + $0x60] sm:$0xff]
    %v443 = vld [vmem:[#allocation10 + $0x68] sm:$0xff]
    %v444 = vld [vmem:[#allocation10 + $0x70] sm:$0xff]
    %v445 = vld [vmem:[#allocation10 + $0x78] sm:$0xff]
    %v446 = vld [vmem:[%s6] sm:$0x1]
    %v448 = vlaneseq
    %v449 = vshrl.u32 %v448, 7
    %v450 = vsub.s32 0, %v449
    %v451 = vrot.slane %v446, %v450
    %453 = vmatprep.subr.mxu0 0.0
    %454 = vmatpush1.msra.mxu0 %v445
    %455 = vmatprep.subr.mxu0 0.0
    %456 = vmatpush1.msra.mxu0 %v444
    %457 = vmatprep.subr.mxu0 0.0
    %458 = vmatpush1.msra.mxu0 %v443
    %459 = vmatprep.subr.mxu0 0.0
    %460 = vmatpush1.msra.mxu0 %v442
    %461 = vmatprep.subr.mxu0 0.0
    %462 = vmatpush1.msra.mxu0 %v441
    %463 = vmatprep.subr.mxu0 0.0
    %464 = vmatpush1.msra.mxu0 %v440
    %465 = vmatprep.subr.mxu0 0.0
    %466 = vmatpush1.msra.mxu0 %v439
    %467 = vmatprep.subr.mxu0 0.0
    %468 = vmatpush1.msra.mxu0 %v438
    %469 = vmatprep.subr.mxu0 0.0
    %470 = vmatpush1.msra.mxu0 %v437
    %471 = vmatprep.subr.mxu0 0.0
    %472 = vmatpush1.msra.mxu0 %v436
    %473 = vmatprep.subr.mxu0 0.0
    %474 = vmatpush1.msra.mxu0 %v435
    %475 = vmatprep.subr.mxu0 0.0
    %476 = vmatpush1.msra.mxu0 %v434
    %477 = vmatprep.subr.mxu0 0.0
    %478 = vmatpush1.msra.mxu0 %v433
    %479 = vmatprep.subr.mxu0 0.0
    %480 = vmatpush1.msra.mxu0 %v432
    %481 = vmatprep.subr.mxu0 0.0
    %482 = vmatpush1.msra.mxu0 %v431
    %483 = vmatprep.subr.mxu0 0.0
    %484 = vmatpush1.msra.mxu0 %v430
    %485 = vmatprep.subr.mxu0 0.0
    %486 = vmatpush2.msra.mxu0 0.0
    %487 = vmatprep.subr.mxu0 0.0
    %488 = vmatpush2.msra.mxu0 0.0
    %489 = vmatprep.subr.mxu0 0.0
    %490 = vmatpush2.msra.mxu0 0.0
    %491 = vmatprep.subr.mxu0 0.0
    %492 = vmatpush2.msra.mxu0 0.0
    %493 = vmatprep.subr.mxu0 0.0
    %494 = vmatpush2.msra.mxu0 0.0
    %495 = vmatprep.subr.mxu0 0.0
    %496 = vmatpush2.msra.mxu0 0.0
    %497 = vmatprep.subr.mxu0 0.0
    %498 = vmatpush2.msra.mxu0 0.0
    %499 = vmatprep.subr.mxu0 0.0
    %500 = vmatpush2.msra.mxu0 0.0
    %501 = vmatprep.subr.mxu0 0.0
    %502 = vmatpush2.msra.mxu0 0.0
    %503 = vmatprep.subr.mxu0 0.0
    %504 = vmatpush2.msra.mxu0 0.0
    %505 = vmatprep.subr.mxu0 0.0
    %506 = vmatpush2.msra.mxu0 0.0
    %507 = vmatprep.subr.mxu0 0.0
    %508 = vmatpush2.msra.mxu0 0.0
    %509 = vmatprep.subr.mxu0 0.0
    %510 = vmatpush2.msra.mxu0 0.0
    %511 = vmatprep.subr.mxu0 0.0
    %512 = vmatpush2.msra.mxu0 0.0
    %513 = vmatprep.subr.mxu0 0.0
    %514 = vmatpush2.msra.mxu0 0.0
    %515 = vmatprep.subr.mxu0 0.0
    %516 = vmatpush2.msra.mxu0 0.0
    %517 = vmatprep.mubr.f32.mxu0 0.0
    %518 = vmatmul.mubr.f32.gmra.mxu0 %v330
    %v519 = vpop.f32.mrf.mxu0
    %v520 = vadd.f32 %v451, %v519
    %v521 = vpop.f32.mrf.mxu0
    %522 = vmatprep.mubr.f32.mxu0 0.0
    %523 = vmatmul.mubr.f32.gmra.mxu0 %v331
    %v524 = vpop.f32.mrf.mxu0
    %v525 = vadd.f32 %v451, %v524
    %v526 = vpop.f32.mrf.mxu0
    %527 = vdwg.mxu0
    %v528 = vld [vmem:[#allocation11] sm:$0xff]
    %v529 = vld [vmem:[#allocation11 + $0x8] sm:$0xff]
    %v530 = vld [vmem:[#allocation11 + $0x10] sm:$0xff]
    %v531 = vld [vmem:[#allocation11 + $0x18] sm:$0xff]
    %v532 = vld [vmem:[#allocation11 + $0x20] sm:$0xff]
    %v533 = vld [vmem:[#allocation11 + $0x28] sm:$0xff]
    %v534 = vld [vmem:[#allocation11 + $0x30] sm:$0xff]
    %v535 = vld [vmem:[#allocation11 + $0x38] sm:$0xff]
    %v536 = vld [vmem:[#allocation11 + $0x40] sm:$0xff]
    %v537 = vld [vmem:[#allocation11 + $0x48] sm:$0xff]
    %v538 = vld [vmem:[#allocation11 + $0x50] sm:$0xff]
    %v539 = vld [vmem:[#allocation11 + $0x58] sm:$0xff]
    %v540 = vld [vmem:[#allocation11 + $0x60] sm:$0xff]
    %v541 = vld [vmem:[#allocation11 + $0x68] sm:$0xff]
    %v542 = vld [vmem:[#allocation11 + $0x70] sm:$0xff]
    %v543 = vld [vmem:[#allocation11 + $0x78] sm:$0xff]
    %v544 = vld [vmem:[%s8] sm:$0x1]
    %v546 = vlaneseq
    %v547 = vshrl.u32 %v546, 7
    %v548 = vsub.s32 0, %v547
    %v549 = vrot.slane %v544, %v548
    %551 = vmatprep.subr.mxu0 0.0
    %552 = vmatpush1.msra.mxu0 %v543
    %553 = vmatprep.subr.mxu0 0.0
    %554 = vmatpush1.msra.mxu0 %v542
    %555 = vmatprep.subr.mxu0 0.0
    %556 = vmatpush1.msra.mxu0 %v541
    %557 = vmatprep.subr.mxu0 0.0
    %558 = vmatpush1.msra.mxu0 %v540
    %559 = vmatprep.subr.mxu0 0.0
    %560 = vmatpush1.msra.mxu0 %v539
    %561 = vmatprep.subr.mxu0 0.0
    %562 = vmatpush1.msra.mxu0 %v538
    %563 = vmatprep.subr.mxu0 0.0
    %564 = vmatpush1.msra.mxu0 %v537
    %565 = vmatprep.subr.mxu0 0.0
    %566 = vmatpush1.msra.mxu0 %v536
    %567 = vmatprep.subr.mxu0 0.0
    %568 = vmatpush1.msra.mxu0 %v535
    %569 = vmatprep.subr.mxu0 0.0
    %570 = vmatpush1.msra.mxu0 %v534
    %571 = vmatprep.subr.mxu0 0.0
    %572 = vmatpush1.msra.mxu0 %v533
    %573 = vmatprep.subr.mxu0 0.0
    %574 = vmatpush1.msra.mxu0 %v532
    %575 = vmatprep.subr.mxu0 0.0
    %576 = vmatpush1.msra.mxu0 %v531
    %577 = vmatprep.subr.mxu0 0.0
    %578 = vmatpush1.msra.mxu0 %v530
    %579 = vmatprep.subr.mxu0 0.0
    %580 = vmatpush1.msra.mxu0 %v529
    %581 = vmatprep.subr.mxu0 0.0
    %582 = vmatpush1.msra.mxu0 %v528
    %583 = vmatprep.subr.mxu0 0.0
    %584 = vmatpush2.msra.mxu0 0.0
    %585 = vmatprep.subr.mxu0 0.0
    %586 = vmatpush2.msra.mxu0 0.0
    %587 = vmatprep.subr.mxu0 0.0
    %588 = vmatpush2.msra.mxu0 0.0
    %589 = vmatprep.subr.mxu0 0.0
    %590 = vmatpush2.msra.mxu0 0.0
    %591 = vmatprep.subr.mxu0 0.0
    %592 = vmatpush2.msra.mxu0 0.0
    %593 = vmatprep.subr.mxu0 0.0
    %594 = vmatpush2.msra.mxu0 0.0
    %595 = vmatprep.subr.mxu0 0.0
    %596 = vmatpush2.msra.mxu0 0.0
    %597 = vmatprep.subr.mxu0 0.0
    %598 = vmatpush2.msra.mxu0 0.0
    %599 = vmatprep.subr.mxu0 0.0
    %600 = vmatpush2.msra.mxu0 0.0
    %601 = vmatprep.subr.mxu0 0.0
    %602 = vmatpush2.msra.mxu0 0.0
    %603 = vmatprep.subr.mxu0 0.0
    %604 = vmatpush2.msra.mxu0 0.0
    %605 = vmatprep.subr.mxu0 0.0
    %606 = vmatpush2.msra.mxu0 0.0
    %607 = vmatprep.subr.mxu0 0.0
    %608 = vmatpush2.msra.mxu0 0.0
    %609 = vmatprep.subr.mxu0 0.0
    %610 = vmatpush2.msra.mxu0 0.0
    %611 = vmatprep.subr.mxu0 0.0
    %612 = vmatpush2.msra.mxu0 0.0
    %613 = vmatprep.subr.mxu0 0.0
    %614 = vmatpush2.msra.mxu0 0.0
    %615 = vmatprep.mubr.f32.mxu0 0.0
    %616 = vmatmul.mubr.f32.gmra.mxu0 %v330
    %v617 = vpop.f32.mrf.mxu0
    %v618 = vadd.f32 %v549, %v617
    %v619 = vpop.f32.mrf.mxu0
    %620 = vmatprep.mubr.f32.mxu0 0.0
    %621 = vmatmul.mubr.f32.gmra.mxu0 %v331
    %v622 = vpop.f32.mrf.mxu0
    %v623 = vadd.f32 %v549, %v622
    %v624 = vpop.f32.mrf.mxu0
    %625 = vdwg.mxu0
    %626 = vmatprep.subr.mxu0 0.0
    %627 = vmatpush1.xpose.msra.mxu0 0.0
    %628 = vmatprep.subr.mxu0 0.0
    %629 = vmatpush1.xpose.msra.mxu0 0.0
    %630 = vmatprep.subr.mxu0 0.0
    %631 = vmatpush1.xpose.msra.mxu0 0.0
    %632 = vmatprep.subr.mxu0 0.0
    %633 = vmatpush1.xpose.msra.mxu0 0.0
    %634 = vmatprep.subr.mxu0 0.0
    %635 = vmatpush1.xpose.msra.mxu0 0.0
    %636 = vmatprep.subr.mxu0 0.0
    %637 = vmatpush1.xpose.msra.mxu0 0.0
    %638 = vmatprep.subr.mxu0 0.0
    %639 = vmatpush1.xpose.msra.mxu0 0.0
    %640 = vmatprep.subr.mxu0 0.0
    %641 = vmatpush1.xpose.msra.mxu0 0.0
    %642 = vmatprep.subr.mxu0 0.0
    %643 = vmatpush1.xpose.msra.mxu0 0.0
    %644 = vmatprep.subr.mxu0 0.0
    %645 = vmatpush1.xpose.msra.mxu0 0.0
    %646 = vmatprep.subr.mxu0 0.0
    %647 = vmatpush1.xpose.msra.mxu0 0.0
    %648 = vmatprep.subr.mxu0 0.0
    %649 = vmatpush1.xpose.msra.mxu0 0.0
    %650 = vmatprep.subr.mxu0 0.0
    %651 = vmatpush1.xpose.msra.mxu0 0.0
    %652 = vmatprep.subr.mxu0 0.0
    %653 = vmatpush1.xpose.msra.mxu0 0.0
    %654 = vmatprep.subr.mxu0 0.0
    %655 = vmatpush1.xpose.msra.mxu0 0.0
    %656 = vmatprep.subr.mxu0 0.0
    %657 = vmatpush1.xpose.msra.mxu0 %v618
    %658 = vmatprep.subr.mxu0 0.0
    %659 = vmatpush2.xpose.msra.mxu0 0.0
    %660 = vmatprep.subr.mxu0 0.0
    %661 = vmatpush2.xpose.msra.mxu0 0.0
    %662 = vmatprep.subr.mxu0 0.0
    %663 = vmatpush2.xpose.msra.mxu0 0.0
    %664 = vmatprep.subr.mxu0 0.0
    %665 = vmatpush2.xpose.msra.mxu0 0.0
    %666 = vmatprep.subr.mxu0 0.0
    %667 = vmatpush2.xpose.msra.mxu0 0.0
    %668 = vmatprep.subr.mxu0 0.0
    %669 = vmatpush2.xpose.msra.mxu0 0.0
    %670 = vmatprep.subr.mxu0 0.0
    %671 = vmatpush2.xpose.msra.mxu0 0.0
    %672 = vmatprep.subr.mxu0 0.0
    %673 = vmatpush2.xpose.msra.mxu0 0.0
    %674 = vmatprep.subr.mxu0 0.0
    %675 = vmatpush2.xpose.msra.mxu0 0.0
    %676 = vmatprep.subr.mxu0 0.0
    %677 = vmatpush2.xpose.msra.mxu0 0.0
    %678 = vmatprep.subr.mxu0 0.0
    %679 = vmatpush2.xpose.msra.mxu0 0.0
    %680 = vmatprep.subr.mxu0 0.0
    %681 = vmatpush2.xpose.msra.mxu0 0.0
    %682 = vmatprep.subr.mxu0 0.0
    %683 = vmatpush2.xpose.msra.mxu0 0.0
    %684 = vmatprep.subr.mxu0 0.0
    %685 = vmatpush2.xpose.msra.mxu0 0.0
    %686 = vmatprep.subr.mxu0 0.0
    %687 = vmatpush2.xpose.msra.mxu0 0.0
    %688 = vmatprep.subr.mxu0 0.0
    %689 = vmatpush2.xpose.msra.mxu0 0.0
    %690 = vmatprep.mubr.f32.mxu0 0.0
    %691 = vmatmul.mubr.f32.gmra.mxu0 %v520
    %v692 = vpop.f32.mrf.mxu0
    %v693 = vadd.f32 0.0, %v692
    %v694 = vpop.f32.mrf.mxu0
    %695 = vdwg.mxu0
    %696 = vmatprep.subr.mxu0 0.0
    %697 = vmatpush1.xpose.msra.mxu0 0.0
    %698 = vmatprep.subr.mxu0 0.0
    %699 = vmatpush1.xpose.msra.mxu0 0.0
    %700 = vmatprep.subr.mxu0 0.0
    %701 = vmatpush1.xpose.msra.mxu0 0.0
    %702 = vmatprep.subr.mxu0 0.0
    %703 = vmatpush1.xpose.msra.mxu0 0.0
    %704 = vmatprep.subr.mxu0 0.0
    %705 = vmatpush1.xpose.msra.mxu0 0.0
    %706 = vmatprep.subr.mxu0 0.0
    %707 = vmatpush1.xpose.msra.mxu0 0.0
    %708 = vmatprep.subr.mxu0 0.0
    %709 = vmatpush1.xpose.msra.mxu0 0.0
    %710 = vmatprep.subr.mxu0 0.0
    %711 = vmatpush1.xpose.msra.mxu0 0.0
    %712 = vmatprep.subr.mxu0 0.0
    %713 = vmatpush1.xpose.msra.mxu0 0.0
    %714 = vmatprep.subr.mxu0 0.0
    %715 = vmatpush1.xpose.msra.mxu0 0.0
    %716 = vmatprep.subr.mxu0 0.0
    %717 = vmatpush1.xpose.msra.mxu0 0.0
    %718 = vmatprep.subr.mxu0 0.0
    %719 = vmatpush1.xpose.msra.mxu0 0.0
    %720 = vmatprep.subr.mxu0 0.0
    %721 = vmatpush1.xpose.msra.mxu0 0.0
    %722 = vmatprep.subr.mxu0 0.0
    %723 = vmatpush1.xpose.msra.mxu0 0.0
    %724 = vmatprep.subr.mxu0 0.0
    %725 = vmatpush1.xpose.msra.mxu0 0.0
    %726 = vmatprep.subr.mxu0 0.0
    %727 = vmatpush1.xpose.msra.mxu0 %v623
    %728 = vmatprep.subr.mxu0 0.0
    %729 = vmatpush2.xpose.msra.mxu0 0.0
    %730 = vmatprep.subr.mxu0 0.0
    %731 = vmatpush2.xpose.msra.mxu0 0.0
    %732 = vmatprep.subr.mxu0 0.0
    %733 = vmatpush2.xpose.msra.mxu0 0.0
    %734 = vmatprep.subr.mxu0 0.0
    %735 = vmatpush2.xpose.msra.mxu0 0.0
    %736 = vmatprep.subr.mxu0 0.0
    %737 = vmatpush2.xpose.msra.mxu0 0.0
    %738 = vmatprep.subr.mxu0 0.0
    %739 = vmatpush2.xpose.msra.mxu0 0.0
    %740 = vmatprep.subr.mxu0 0.0
    %741 = vmatpush2.xpose.msra.mxu0 0.0
    %742 = vmatprep.subr.mxu0 0.0
    %743 = vmatpush2.xpose.msra.mxu0 0.0
    %744 = vmatprep.subr.mxu0 0.0
    %745 = vmatpush2.xpose.msra.mxu0 0.0
    %746 = vmatprep.subr.mxu0 0.0
    %747 = vmatpush2.xpose.msra.mxu0 0.0
    %748 = vmatprep.subr.mxu0 0.0
    %749 = vmatpush2.xpose.msra.mxu0 0.0
    %750 = vmatprep.subr.mxu0 0.0
    %751 = vmatpush2.xpose.msra.mxu0 0.0
    %752 = vmatprep.subr.mxu0 0.0
    %753 = vmatpush2.xpose.msra.mxu0 0.0
    %754 = vmatprep.subr.mxu0 0.0
    %755 = vmatpush2.xpose.msra.mxu0 0.0
    %756 = vmatprep.subr.mxu0 0.0
    %757 = vmatpush2.xpose.msra.mxu0 0.0
    %758 = vmatprep.subr.mxu0 0.0
    %759 = vmatpush2.xpose.msra.mxu0 0.0
    %760 = vmatprep.mubr.f32.mxu0 0.0
    %761 = vmatmul.mubr.f32.gmra.mxu0 %v525
    %v762 = vpop.f32.mrf.mxu0
    %v763 = vadd.f32 0.0, %v762
    %v764 = vpop.f32.mrf.mxu0
    %765 = vdwg.mxu0
    %v766 = vmul.f32 %v693, 0.125
    %v767 = vmul.f32 %v763, 0.125
    %vm768 = vcmask 64512
    %v770 = vsel %vm768, %v766, 0
    %772 = vmatprep.subr.mxu0 0.0
    %773 = vmatpush1.msra.mxu0 0.0
    %774 = vmatprep.subr.mxu0 0.0
    %775 = vmatpush1.msra.mxu0 0.0
    %776 = vmatprep.subr.mxu0 0.0
    %777 = vmatpush1.msra.mxu0 0.0
    %778 = vmatprep.subr.mxu0 0.0
    %779 = vmatpush1.msra.mxu0 0.0
    %780 = vmatprep.subr.mxu0 0.0
    %781 = vmatpush1.msra.mxu0 0.0
    %782 = vmatprep.subr.mxu0 0.0
    %783 = vmatpush1.msra.mxu0 0.0
    %784 = vmatprep.subr.mxu0 0.0
    %785 = vmatpush1.msra.mxu0 0.0
    %786 = vmatprep.subr.mxu0 0.0
    %787 = vmatpush1.msra.mxu0 0.0
    %788 = vmatprep.subr.mxu0 0.0
    %789 = vmatpush1.msra.mxu0 0.0
    %790 = vmatprep.subr.mxu0 0.0
    %791 = vmatpush1.msra.mxu0 0.0
    %792 = vmatprep.subr.mxu0 0.0
    %793 = vmatpush1.msra.mxu0 0.0
    %794 = vmatprep.subr.mxu0 0.0
    %795 = vmatpush1.msra.mxu0 0.0
    %796 = vmatprep.subr.mxu0 0.0
    %797 = vmatpush1.msra.mxu0 0.0
    %798 = vmatprep.subr.mxu0 0.0
    %799 = vmatpush1.msra.mxu0 0.0
    %800 = vmatprep.subr.mxu0 0.0
    %801 = vmatpush1.msra.mxu0 0.0
    %802 = vmatprep.subr.mxu0 0.0
    %803 = vmatpush1.msra.mxu0 %v422
    %804 = vmatprep.subr.mxu0 0.0
    %805 = vmatpush2.msra.mxu0 0.0
    %806 = vmatprep.subr.mxu0 0.0
    %807 = vmatpush2.msra.mxu0 0.0
    %808 = vmatprep.subr.mxu0 0.0
    %809 = vmatpush2.msra.mxu0 0.0
    %810 = vmatprep.subr.mxu0 0.0
    %811 = vmatpush2.msra.mxu0 0.0
    %812 = vmatprep.subr.mxu0 0.0
    %813 = vmatpush2.msra.mxu0 0.0
    %814 = vmatprep.subr.mxu0 0.0
    %815 = vmatpush2.msra.mxu0 0.0
    %816 = vmatprep.subr.mxu0 0.0
    %817 = vmatpush2.msra.mxu0 0.0
    %818 = vmatprep.subr.mxu0 0.0
    %819 = vmatpush2.msra.mxu0 0.0
    %820 = vmatprep.subr.mxu0 0.0
    %821 = vmatpush2.msra.mxu0 0.0
    %822 = vmatprep.subr.mxu0 0.0
    %823 = vmatpush2.msra.mxu0 0.0
    %824 = vmatprep.subr.mxu0 0.0
    %825 = vmatpush2.msra.mxu0 0.0
    %826 = vmatprep.subr.mxu0 0.0
    %827 = vmatpush2.msra.mxu0 0.0
    %828 = vmatprep.subr.mxu0 0.0
    %829 = vmatpush2.msra.mxu0 0.0
    %830 = vmatprep.subr.mxu0 0.0
    %831 = vmatpush2.msra.mxu0 0.0
    %832 = vmatprep.subr.mxu0 0.0
    %833 = vmatpush2.msra.mxu0 0.0
    %834 = vmatprep.subr.mxu0 0.0
    %835 = vmatpush2.msra.mxu0 0.0
    %836 = vmatprep.mubr.f32.mxu0 0.0
    %837 = vmatmul.mubr.f32.gmra.mxu0 %v770
    %v838 = vpop.f32.mrf.mxu0
    %v839 = vadd.f32 0.0, %v838
    %v840 = vpop.f32.mrf.mxu0
    %841 = vdwg.mxu0
    %v843 = vsel %vm768, %v767, 0
    %845 = vmatprep.subr.mxu0 0.0
    %846 = vmatpush1.msra.mxu0 0.0
    %847 = vmatprep.subr.mxu0 0.0
    %848 = vmatpush1.msra.mxu0 0.0
    %849 = vmatprep.subr.mxu0 0.0
    %850 = vmatpush1.msra.mxu0 0.0
    %851 = vmatprep.subr.mxu0 0.0
    %852 = vmatpush1.msra.mxu0 0.0
    %853 = vmatprep.subr.mxu0 0.0
    %854 = vmatpush1.msra.mxu0 0.0
    %855 = vmatprep.subr.mxu0 0.0
    %856 = vmatpush1.msra.mxu0 0.0
    %857 = vmatprep.subr.mxu0 0.0
    %858 = vmatpush1.msra.mxu0 0.0
    %859 = vmatprep.subr.mxu0 0.0
    %860 = vmatpush1.msra.mxu0 0.0
    %861 = vmatprep.subr.mxu0 0.0
    %862 = vmatpush1.msra.mxu0 0.0
    %863 = vmatprep.subr.mxu0 0.0
    %864 = vmatpush1.msra.mxu0 0.0
    %865 = vmatprep.subr.mxu0 0.0
    %866 = vmatpush1.msra.mxu0 0.0
    %867 = vmatprep.subr.mxu0 0.0
    %868 = vmatpush1.msra.mxu0 0.0
    %869 = vmatprep.subr.mxu0 0.0
    %870 = vmatpush1.msra.mxu0 0.0
    %871 = vmatprep.subr.mxu0 0.0
    %872 = vmatpush1.msra.mxu0 0.0
    %873 = vmatprep.subr.mxu0 0.0
    %874 = vmatpush1.msra.mxu0 0.0
    %875 = vmatprep.subr.mxu0 0.0
    %876 = vmatpush1.msra.mxu0 %v427
    %877 = vmatprep.subr.mxu0 0.0
    %878 = vmatpush2.msra.mxu0 0.0
    %879 = vmatprep.subr.mxu0 0.0
    %880 = vmatpush2.msra.mxu0 0.0
    %881 = vmatprep.subr.mxu0 0.0
    %882 = vmatpush2.msra.mxu0 0.0
    %883 = vmatprep.subr.mxu0 0.0
    %884 = vmatpush2.msra.mxu0 0.0
    %885 = vmatprep.subr.mxu0 0.0
    %886 = vmatpush2.msra.mxu0 0.0
    %887 = vmatprep.subr.mxu0 0.0
    %888 = vmatpush2.msra.mxu0 0.0
    %889 = vmatprep.subr.mxu0 0.0
    %890 = vmatpush2.msra.mxu0 0.0
    %891 = vmatprep.subr.mxu0 0.0
    %892 = vmatpush2.msra.mxu0 0.0
    %893 = vmatprep.subr.mxu0 0.0
    %894 = vmatpush2.msra.mxu0 0.0
    %895 = vmatprep.subr.mxu0 0.0
    %896 = vmatpush2.msra.mxu0 0.0
    %897 = vmatprep.subr.mxu0 0.0
    %898 = vmatpush2.msra.mxu0 0.0
    %899 = vmatprep.subr.mxu0 0.0
    %900 = vmatpush2.msra.mxu0 0.0
    %901 = vmatprep.subr.mxu0 0.0
    %902 = vmatpush2.msra.mxu0 0.0
    %903 = vmatprep.subr.mxu0 0.0
    %904 = vmatpush2.msra.mxu0 0.0
    %905 = vmatprep.subr.mxu0 0.0
    %906 = vmatpush2.msra.mxu0 0.0
    %907 = vmatprep.subr.mxu0 0.0
    %908 = vmatpush2.msra.mxu0 0.0
    %909 = vmatprep.mubr.f32.mxu0 0.0
    %910 = vmatmul.mubr.f32.gmra.mxu0 %v843
    %v911 = vpop.f32.mrf.mxu0
    %v912 = vadd.f32 0.0, %v911
    %v913 = vpop.f32.mrf.mxu0
    %914 = vdwg.mxu0
    %v915 = vld [vmem:[#allocation13] sm:$0xff]
    %v916 = vld [vmem:[#allocation13 + $0x8] sm:$0xff]
    %v917 = vld [vmem:[#allocation13 + $0x10] sm:$0xff]
    %v918 = vld [vmem:[#allocation13 + $0x18] sm:$0xff]
    %v919 = vld [vmem:[#allocation13 + $0x20] sm:$0xff]
    %v920 = vld [vmem:[#allocation13 + $0x28] sm:$0xff]
    %v921 = vld [vmem:[#allocation13 + $0x30] sm:$0xff]
    %v922 = vld [vmem:[#allocation13 + $0x38] sm:$0xff]
    %v923 = vld [vmem:[#allocation13 + $0x40] sm:$0xff]
    %v924 = vld [vmem:[#allocation13 + $0x48] sm:$0xff]
    %v925 = vld [vmem:[#allocation13 + $0x50] sm:$0xff]
    %v926 = vld [vmem:[#allocation13 + $0x58] sm:$0xff]
    %v927 = vld [vmem:[#allocation13 + $0x60] sm:$0xff]
    %v928 = vld [vmem:[#allocation13 + $0x68] sm:$0xff]
    %v929 = vld [vmem:[#allocation13 + $0x70] sm:$0xff]
    %v930 = vld [vmem:[#allocation13 + $0x78] sm:$0xff]
    %v931 = vld [vmem:[%s10] sm:$0x1]
    %v933 = vlaneseq
    %v934 = vshrl.u32 %v933, 7
    %v935 = vsub.s32 0, %v934
    %v936 = vrot.slane %v931, %v935
    %938 = vmatprep.subr.mxu0 0.0
    %939 = vmatpush1.msra.mxu0 %v930
    %940 = vmatprep.subr.mxu0 0.0
    %941 = vmatpush1.msra.mxu0 %v929
    %942 = vmatprep.subr.mxu0 0.0
    %943 = vmatpush1.msra.mxu0 %v928
    %944 = vmatprep.subr.mxu0 0.0
    %945 = vmatpush1.msra.mxu0 %v927
    %946 = vmatprep.subr.mxu0 0.0
    %947 = vmatpush1.msra.mxu0 %v926
    %948 = vmatprep.subr.mxu0 0.0
    %949 = vmatpush1.msra.mxu0 %v925
    %950 = vmatprep.subr.mxu0 0.0
    %951 = vmatpush1.msra.mxu0 %v924
    %952 = vmatprep.subr.mxu0 0.0
    %953 = vmatpush1.msra.mxu0 %v923
    %954 = vmatprep.subr.mxu0 0.0
    %955 = vmatpush1.msra.mxu0 %v922
    %956 = vmatprep.subr.mxu0 0.0
    %957 = vmatpush1.msra.mxu0 %v921
    %958 = vmatprep.subr.mxu0 0.0
    %959 = vmatpush1.msra.mxu0 %v920
    %960 = vmatprep.subr.mxu0 0.0
    %961 = vmatpush1.msra.mxu0 %v919
    %962 = vmatprep.subr.mxu0 0.0
    %963 = vmatpush1.msra.mxu0 %v918
    %964 = vmatprep.subr.mxu0 0.0
    %965 = vmatpush1.msra.mxu0 %v917
    %966 = vmatprep.subr.mxu0 0.0
    %967 = vmatpush1.msra.mxu0 %v916
    %968 = vmatprep.subr.mxu0 0.0
    %969 = vmatpush1.msra.mxu0 %v915
    %970 = vmatprep.subr.mxu0 0.0
    %971 = vmatpush2.msra.mxu0 0.0
    %972 = vmatprep.subr.mxu0 0.0
    %973 = vmatpush2.msra.mxu0 0.0
    %974 = vmatprep.subr.mxu0 0.0
    %975 = vmatpush2.msra.mxu0 0.0
    %976 = vmatprep.subr.mxu0 0.0
    %977 = vmatpush2.msra.mxu0 0.0
    %978 = vmatprep.subr.mxu0 0.0
    %979 = vmatpush2.msra.mxu0 0.0
    %980 = vmatprep.subr.mxu0 0.0
    %981 = vmatpush2.msra.mxu0 0.0
    %982 = vmatprep.subr.mxu0 0.0
    %983 = vmatpush2.msra.mxu0 0.0
    %984 = vmatprep.subr.mxu0 0.0
    %985 = vmatpush2.msra.mxu0 0.0
    %986 = vmatprep.subr.mxu0 0.0
    %987 = vmatpush2.msra.mxu0 0.0
    %988 = vmatprep.subr.mxu0 0.0
    %989 = vmatpush2.msra.mxu0 0.0
    %990 = vmatprep.subr.mxu0 0.0
    %991 = vmatpush2.msra.mxu0 0.0
    %992 = vmatprep.subr.mxu0 0.0
    %993 = vmatpush2.msra.mxu0 0.0
    %994 = vmatprep.subr.mxu0 0.0
    %995 = vmatpush2.msra.mxu0 0.0
    %996 = vmatprep.subr.mxu0 0.0
    %997 = vmatpush2.msra.mxu0 0.0
    %998 = vmatprep.subr.mxu0 0.0
    %999 = vmatpush2.msra.mxu0 0.0
    %1000 = vmatprep.subr.mxu0 0.0
    %1001 = vmatpush2.msra.mxu0 0.0
    %1002 = vmatprep.mubr.f32.mxu0 0.0
    %1003 = vmatmul.mubr.f32.gmra.mxu0 %v839
    %v1004 = vpop.f32.mrf.mxu0
    %v1005 = vadd.f32 %v936, %v1004
    %v1006 = vpop.f32.mrf.mxu0
    %1007 = vmatprep.mubr.f32.mxu0 0.0
    %1008 = vmatmul.mubr.f32.gmra.mxu0 %v912
    %v1009 = vpop.f32.mrf.mxu0
    %v1010 = vadd.f32 %v936, %v1009
    %v1011 = vpop.f32.mrf.mxu0
    %1012 = vdwg.mxu0
    %v1013 = vld [vmem:[%s11] sm:$0x1]
    %v1014 = vld [vmem:[%s14] sm:$0x1]
    %v1015 = vadd.f32 %v1014, 1e-05
    %v1016 = vrsqrt.pop %v1015
    %v1017 = vmul.f32 %v1013, %v1016
    %v1018 = vld [vmem:[#allocation16] sm:$0x1]
    %v1020 = vlaneseq
    %v1021 = vshrl.u32 %v1020, 7
    %v1022 = vsub.s32 0, %v1021
    %v1023 = vrot.slane %v1018, %v1022
    %v1025 = vsub.f32 %v1005, %v1023
    %v1026 = vsub.f32 %v1010, %v1023
    %v1028 = vlaneseq
    %v1029 = vshrl.u32 %v1028, 7
    %v1030 = vsub.s32 0, %v1029
    %v1031 = vrot.slane %v1017, %v1030
    %v1033 = vmul.f32 %v1025, %v1031
    %v1034 = vmul.f32 %v1026, %v1031
    %v1035 = vld [vmem:[#allocation14] sm:$0x1]
    %v1037 = vlaneseq
    %v1038 = vshrl.u32 %v1037, 7
    %v1039 = vsub.s32 0, %v1038
    %v1040 = vrot.slane %v1035, %v1039
    %v1042 = vadd.f32 %v1033, %v1040
    %v1043 = vadd.f32 %v1034, %v1040
    %v1044 = vadd.f32 %v1042, %v330
    %v1045 = vadd.f32 %v1043, %v331
    %s1046 = scalar_lea.vmem [#allocation8], 128
    %v1047 = vld [vmem:[%s1046] sm:$0xff]
    %v1048 = vld [vmem:[%s1046 + $0x8] sm:$0xff]
    %v1049 = vld [vmem:[%s1046 + $0x10] sm:$0xff]
    %v1050 = vld [vmem:[%s1046 + $0x18] sm:$0xff]
    %v1051 = vld [vmem:[%s1046 + $0x20] sm:$0xff]
    %v1052 = vld [vmem:[%s1046 + $0x28] sm:$0xff]
    %v1053 = vld [vmem:[%s1046 + $0x30] sm:$0xff]
    %v1054 = vld [vmem:[%s1046 + $0x38] sm:$0xff]
    %v1055 = vld [vmem:[%s1046 + $0x40] sm:$0xff]
    %v1056 = vld [vmem:[%s1046 + $0x48] sm:$0xff]
    %v1057 = vld [vmem:[%s1046 + $0x50] sm:$0xff]
    %v1058 = vld [vmem:[%s1046 + $0x58] sm:$0xff]
    %v1059 = vld [vmem:[%s1046 + $0x60] sm:$0xff]
    %v1060 = vld [vmem:[%s1046 + $0x68] sm:$0xff]
    %v1061 = vld [vmem:[%s1046 + $0x70] sm:$0xff]
    %v1062 = vld [vmem:[%s1046 + $0x78] sm:$0xff]
    %s1063 = scalar_lea.vmem %s4, 1
    %v1064 = vld [vmem:[%s1063] sm:$0x1]
    %v1066 = vlaneseq
    %v1067 = vshrl.u32 %v1066, 7
    %v1068 = vsub.s32 0, %v1067
    %v1069 = vrot.slane %v1064, %v1068
    %1071 = vmatprep.subr.mxu0 0.0
    %1072 = vmatpush1.msra.mxu0 %v1062
    %1073 = vmatprep.subr.mxu0 0.0
    %1074 = vmatpush1.msra.mxu0 %v1061
    %1075 = vmatprep.subr.mxu0 0.0
    %1076 = vmatpush1.msra.mxu0 %v1060
    %1077 = vmatprep.subr.mxu0 0.0
    %1078 = vmatpush1.msra.mxu0 %v1059
    %1079 = vmatprep.subr.mxu0 0.0
    %1080 = vmatpush1.msra.mxu0 %v1058
    %1081 = vmatprep.subr.mxu0 0.0
    %1082 = vmatpush1.msra.mxu0 %v1057
    %1083 = vmatprep.subr.mxu0 0.0
    %1084 = vmatpush1.msra.mxu0 %v1056
    %1085 = vmatprep.subr.mxu0 0.0
    %1086 = vmatpush1.msra.mxu0 %v1055
    %1087 = vmatprep.subr.mxu0 0.0
    %1088 = vmatpush1.msra.mxu0 %v1054
    %1089 = vmatprep.subr.mxu0 0.0
    %1090 = vmatpush1.msra.mxu0 %v1053
    %1091 = vmatprep.subr.mxu0 0.0
    %1092 = vmatpush1.msra.mxu0 %v1052
    %1093 = vmatprep.subr.mxu0 0.0
    %1094 = vmatpush1.msra.mxu0 %v1051
    %1095 = vmatprep.subr.mxu0 0.0
    %1096 = vmatpush1.msra.mxu0 %v1050
    %1097 = vmatprep.subr.mxu0 0.0
    %1098 = vmatpush1.msra.mxu0 %v1049
    %1099 = vmatprep.subr.mxu0 0.0
    %1100 = vmatpush1.msra.mxu0 %v1048
    %1101 = vmatprep.subr.mxu0 0.0
    %1102 = vmatpush1.msra.mxu0 %v1047
    %1103 = vmatprep.subr.mxu0 0.0
    %1104 = vmatpush2.msra.mxu0 0.0
    %1105 = vmatprep.subr.mxu0 0.0
    %1106 = vmatpush2.msra.mxu0 0.0
    %1107 = vmatprep.subr.mxu0 0.0
    %1108 = vmatpush2.msra.mxu0 0.0
    %1109 = vmatprep.subr.mxu0 0.0
    %1110 = vmatpush2.msra.mxu0 0.0
    %1111 = vmatprep.subr.mxu0 0.0
    %1112 = vmatpush2.msra.mxu0 0.0
    %1113 = vmatprep.subr.mxu0 0.0
    %1114 = vmatpush2.msra.mxu0 0.0
    %1115 = vmatprep.subr.mxu0 0.0
    %1116 = vmatpush2.msra.mxu0 0.0
    %1117 = vmatprep.subr.mxu0 0.0
    %1118 = vmatpush2.msra.mxu0 0.0
    %1119 = vmatprep.subr.mxu0 0.0
    %1120 = vmatpush2.msra.mxu0 0.0
    %1121 = vmatprep.subr.mxu0 0.0
    %1122 = vmatpush2.msra.mxu0 0.0
    %1123 = vmatprep.subr.mxu0 0.0
    %1124 = vmatpush2.msra.mxu0 0.0
    %1125 = vmatprep.subr.mxu0 0.0
    %1126 = vmatpush2.msra.mxu0 0.0
    %1127 = vmatprep.subr.mxu0 0.0
    %1128 = vmatpush2.msra.mxu0 0.0
    %1129 = vmatprep.subr.mxu0 0.0
    %1130 = vmatpush2.msra.mxu0 0.0
    %1131 = vmatprep.subr.mxu0 0.0
    %1132 = vmatpush2.msra.mxu0 0.0
    %1133 = vmatprep.subr.mxu0 0.0
    %1134 = vmatpush2.msra.mxu0 0.0
    %1135 = vmatprep.mubr.f32.mxu0 0.0
    %1136 = vmatmul.mubr.f32.gmra.mxu0 %v1044
    %v1137 = vpop.f32.mrf.mxu0
    %v1138 = vadd.f32 %v1069, %v1137
    %v1139 = vpop.f32.mrf.mxu0
    %1140 = vmatprep.mubr.f32.mxu0 0.0
    %1141 = vmatmul.mubr.f32.gmra.mxu0 %v1045
    %v1142 = vpop.f32.mrf.mxu0
    %v1143 = vadd.f32 %v1069, %v1142
    %v1144 = vpop.f32.mrf.mxu0
    %1145 = vdwg.mxu0
    %s1146 = scalar_lea.vmem [#allocation10], 128
    %v1147 = vld [vmem:[%s1146] sm:$0xff]
    %v1148 = vld [vmem:[%s1146 + $0x8] sm:$0xff]
    %v1149 = vld [vmem:[%s1146 + $0x10] sm:$0xff]
    %v1150 = vld [vmem:[%s1146 + $0x18] sm:$0xff]
    %v1151 = vld [vmem:[%s1146 + $0x20] sm:$0xff]
    %v1152 = vld [vmem:[%s1146 + $0x28] sm:$0xff]
    %v1153 = vld [vmem:[%s1146 + $0x30] sm:$0xff]
    %v1154 = vld [vmem:[%s1146 + $0x38] sm:$0xff]
    %v1155 = vld [vmem:[%s1146 + $0x40] sm:$0xff]
    %v1156 = vld [vmem:[%s1146 + $0x48] sm:$0xff]
    %v1157 = vld [vmem:[%s1146 + $0x50] sm:$0xff]
    %v1158 = vld [vmem:[%s1146 + $0x58] sm:$0xff]
    %v1159 = vld [vmem:[%s1146 + $0x60] sm:$0xff]
    %v1160 = vld [vmem:[%s1146 + $0x68] sm:$0xff]
    %v1161 = vld [vmem:[%s1146 + $0x70] sm:$0xff]
    %v1162 = vld [vmem:[%s1146 + $0x78] sm:$0xff]
    %s1163 = scalar_lea.vmem %s6, 1
    %v1164 = vld [vmem:[%s1163] sm:$0x1]
    %v1166 = vlaneseq
    %v1167 = vshrl.u32 %v1166, 7
    %v1168 = vsub.s32 0, %v1167
    %v1169 = vrot.slane %v1164, %v1168
    %1171 = vmatprep.subr.mxu0 0.0
    %1172 = vmatpush1.msra.mxu0 %v1162
    %1173 = vmatprep.subr.mxu0 0.0
    %1174 = vmatpush1.msra.mxu0 %v1161
    %1175 = vmatprep.subr.mxu0 0.0
    %1176 = vmatpush1.msra.mxu0 %v1160
    %1177 = vmatprep.subr.mxu0 0.0
    %1178 = vmatpush1.msra.mxu0 %v1159
    %1179 = vmatprep.subr.mxu0 0.0
    %1180 = vmatpush1.msra.mxu0 %v1158
    %1181 = vmatprep.subr.mxu0 0.0
    %1182 = vmatpush1.msra.mxu0 %v1157
    %1183 = vmatprep.subr.mxu0 0.0
    %1184 = vmatpush1.msra.mxu0 %v1156
    %1185 = vmatprep.subr.mxu0 0.0
    %1186 = vmatpush1.msra.mxu0 %v1155
    %1187 = vmatprep.subr.mxu0 0.0
    %1188 = vmatpush1.msra.mxu0 %v1154
    %1189 = vmatprep.subr.mxu0 0.0
    %1190 = vmatpush1.msra.mxu0 %v1153
    %1191 = vmatprep.subr.mxu0 0.0
    %1192 = vmatpush1.msra.mxu0 %v1152
    %1193 = vmatprep.subr.mxu0 0.0
    %1194 = vmatpush1.msra.mxu0 %v1151
    %1195 = vmatprep.subr.mxu0 0.0
    %1196 = vmatpush1.msra.mxu0 %v1150
    %1197 = vmatprep.subr.mxu0 0.0
    %1198 = vmatpush1.msra.mxu0 %v1149
    %1199 = vmatprep.subr.mxu0 0.0
    %1200 = vmatpush1.msra.mxu0 %v1148
    %1201 = vmatprep.subr.mxu0 0.0
    %1202 = vmatpush1.msra.mxu0 %v1147
    %1203 = vmatprep.subr.mxu0 0.0
    %1204 = vmatpush2.msra.mxu0 0.0
    %1205 = vmatprep.subr.mxu0 0.0
    %1206 = vmatpush2.msra.mxu0 0.0
    %1207 = vmatprep.subr.mxu0 0.0
    %1208 = vmatpush2.msra.mxu0 0.0
    %1209 = vmatprep.subr.mxu0 0.0
    %1210 = vmatpush2.msra.mxu0 0.0
    %1211 = vmatprep.subr.mxu0 0.0
    %1212 = vmatpush2.msra.mxu0 0.0
    %1213 = vmatprep.subr.mxu0 0.0
    %1214 = vmatpush2.msra.mxu0 0.0
    %1215 = vmatprep.subr.mxu0 0.0
    %1216 = vmatpush2.msra.mxu0 0.0
    %1217 = vmatprep.subr.mxu0 0.0
    %1218 = vmatpush2.msra.mxu0 0.0
    %1219 = vmatprep.subr.mxu0 0.0
    %1220 = vmatpush2.msra.mxu0 0.0
    %1221 = vmatprep.subr.mxu0 0.0
    %1222 = vmatpush2.msra.mxu0 0.0
    %1223 = vmatprep.subr.mxu0 0.0
    %1224 = vmatpush2.msra.mxu0 0.0
    %1225 = vmatprep.subr.mxu0 0.0
    %1226 = vmatpush2.msra.mxu0 0.0
    %1227 = vmatprep.subr.mxu0 0.0
    %1228 = vmatpush2.msra.mxu0 0.0
    %1229 = vmatprep.subr.mxu0 0.0
    %1230 = vmatpush2.msra.mxu0 0.0
    %1231 = vmatprep.subr.mxu0 0.0
    %1232 = vmatpush2.msra.mxu0 0.0
    %1233 = vmatprep.subr.mxu0 0.0
    %1234 = vmatpush2.msra.mxu0 0.0
    %1235 = vmatprep.mubr.f32.mxu0 0.0
    %1236 = vmatmul.mubr.f32.gmra.mxu0 %v1044
    %v1237 = vpop.f32.mrf.mxu0
    %v1238 = vadd.f32 %v1169, %v1237
    %v1239 = vpop.f32.mrf.mxu0
    %1240 = vmatprep.mubr.f32.mxu0 0.0
    %1241 = vmatmul.mubr.f32.gmra.mxu0 %v1045
    %v1242 = vpop.f32.mrf.mxu0
    %v1243 = vadd.f32 %v1169, %v1242
    %v1244 = vpop.f32.mrf.mxu0
    %1245 = vdwg.mxu0
    %s1246 = scalar_lea.vmem [#allocation11], 128
    %v1247 = vld [vmem:[%s1246] sm:$0xff]
    %v1248 = vld [vmem:[%s1246 + $0x8] sm:$0xff]
    %v1249 = vld [vmem:[%s1246 + $0x10] sm:$0xff]
    %v1250 = vld [vmem:[%s1246 + $0x18] sm:$0xff]
    %v1251 = vld [vmem:[%s1246 + $0x20] sm:$0xff]
    %v1252 = vld [vmem:[%s1246 + $0x28] sm:$0xff]
    %v1253 = vld [vmem:[%s1246 + $0x30] sm:$0xff]
    %v1254 = vld [vmem:[%s1246 + $0x38] sm:$0xff]
    %v1255 = vld [vmem:[%s1246 + $0x40] sm:$0xff]
    %v1256 = vld [vmem:[%s1246 + $0x48] sm:$0xff]
    %v1257 = vld [vmem:[%s1246 + $0x50] sm:$0xff]
    %v1258 = vld [vmem:[%s1246 + $0x58] sm:$0xff]
    %v1259 = vld [vmem:[%s1246 + $0x60] sm:$0xff]
    %v1260 = vld [vmem:[%s1246 + $0x68] sm:$0xff]
    %v1261 = vld [vmem:[%s1246 + $0x70] sm:$0xff]
    %v1262 = vld [vmem:[%s1246 + $0x78] sm:$0xff]
    %s1263 = scalar_lea.vmem %s8, 1
    %v1264 = vld [vmem:[%s1263] sm:$0x1]
    %v1266 = vlaneseq
    %v1267 = vshrl.u32 %v1266, 7
    %v1268 = vsub.s32 0, %v1267
    %v1269 = vrot.slane %v1264, %v1268
    %1271 = vmatprep.subr.mxu0 0.0
    %1272 = vmatpush1.msra.mxu0 %v1262
    %1273 = vmatprep.subr.mxu0 0.0
    %1274 = vmatpush1.msra.mxu0 %v1261
    %1275 = vmatprep.subr.mxu0 0.0
    %1276 = vmatpush1.msra.mxu0 %v1260
    %1277 = vmatprep.subr.mxu0 0.0
    %1278 = vmatpush1.msra.mxu0 %v1259
    %1279 = vmatprep.subr.mxu0 0.0
    %1280 = vmatpush1.msra.mxu0 %v1258
    %1281 = vmatprep.subr.mxu0 0.0
    %1282 = vmatpush1.msra.mxu0 %v1257
    %1283 = vmatprep.subr.mxu0 0.0
    %1284 = vmatpush1.msra.mxu0 %v1256
    %1285 = vmatprep.subr.mxu0 0.0
    %1286 = vmatpush1.msra.mxu0 %v1255
    %1287 = vmatprep.subr.mxu0 0.0
    %1288 = vmatpush1.msra.mxu0 %v1254
    %1289 = vmatprep.subr.mxu0 0.0
    %1290 = vmatpush1.msra.mxu0 %v1253
    %1291 = vmatprep.subr.mxu0 0.0
    %1292 = vmatpush1.msra.mxu0 %v1252
    %1293 = vmatprep.subr.mxu0 0.0
    %1294 = vmatpush1.msra.mxu0 %v1251
    %1295 = vmatprep.subr.mxu0 0.0
    %1296 = vmatpush1.msra.mxu0 %v1250
    %1297 = vmatprep.subr.mxu0 0.0
    %1298 = vmatpush1.msra.mxu0 %v1249
    %1299 = vmatprep.subr.mxu0 0.0
    %1300 = vmatpush1.msra.mxu0 %v1248
    %1301 = vmatprep.subr.mxu0 0.0
    %1302 = vmatpush1.msra.mxu0 %v1247
    %1303 = vmatprep.subr.mxu0 0.0
    %1304 = vmatpush2.msra.mxu0 0.0
    %1305 = vmatprep.subr.mxu0 0.0
    %1306 = vmatpush2.msra.mxu0 0.0
    %1307 = vmatprep.subr.mxu0 0.0
    %1308 = vmatpush2.msra.mxu0 0.0
    %1309 = vmatprep.subr.mxu0 0.0
    %1310 = vmatpush2.msra.mxu0 0.0
    %1311 = vmatprep.subr.mxu0 0.0
    %1312 = vmatpush2.msra.mxu0 0.0
    %1313 = vmatprep.subr.mxu0 0.0
    %1314 = vmatpush2.msra.mxu0 0.0
    %1315 = vmatprep.subr.mxu0 0.0
    %1316 = vmatpush2.msra.mxu0 0.0
    %1317 = vmatprep.subr.mxu0 0.0
    %1318 = vmatpush2.msra.mxu0 0.0
    %1319 = vmatprep.subr.mxu0 0.0
    %1320 = vmatpush2.msra.mxu0 0.0
    %1321 = vmatprep.subr.mxu0 0.0
    %1322 = vmatpush2.msra.mxu0 0.0
    %1323 = vmatprep.subr.mxu0 0.0
    %1324 = vmatpush2.msra.mxu0 0.0
    %1325 = vmatprep.subr.mxu0 0.0
    %1326 = vmatpush2.msra.mxu0 0.0
    %1327 = vmatprep.subr.mxu0 0.0
    %1328 = vmatpush2.msra.mxu0 0.0
    %1329 = vmatprep.subr.mxu0 0.0
    %1330 = vmatpush2.msra.mxu0 0.0
    %1331 = vmatprep.subr.mxu0 0.0
    %1332 = vmatpush2.msra.mxu0 0.0
    %1333 = vmatprep.subr.mxu0 0.0
    %1334 = vmatpush2.msra.mxu0 0.0
    %1335 = vmatprep.mubr.f32.mxu0 0.0
    %1336 = vmatmul.mubr.f32.gmra.mxu0 %v1044
    %v1337 = vpop.f32.mrf.mxu0
    %v1338 = vadd.f32 %v1269, %v1337
    %v1339 = vpop.f32.mrf.mxu0
    %1340 = vmatprep.mubr.f32.mxu0 0.0
    %1341 = vmatmul.mubr.f32.gmra.mxu0 %v1045
    %v1342 = vpop.f32.mrf.mxu0
    %v1343 = vadd.f32 %v1269, %v1342
    %v1344 = vpop.f32.mrf.mxu0
    %1345 = vdwg.mxu0
    %1346 = vmatprep.subr.mxu0 0.0
    %1347 = vmatpush1.xpose.msra.mxu0 0.0
    %1348 = vmatprep.subr.mxu0 0.0
    %1349 = vmatpush1.xpose.msra.mxu0 0.0
    %1350 = vmatprep.subr.mxu0 0.0
    %1351 = vmatpush1.xpose.msra.mxu0 0.0
    %1352 = vmatprep.subr.mxu0 0.0
    %1353 = vmatpush1.xpose.msra.mxu0 0.0
    %1354 = vmatprep.subr.mxu0 0.0
    %1355 = vmatpush1.xpose.msra.mxu0 0.0
    %1356 = vmatprep.subr.mxu0 0.0
    %1357 = vmatpush1.xpose.msra.mxu0 0.0
    %1358 = vmatprep.subr.mxu0 0.0
    %1359 = vmatpush1.xpose.msra.mxu0 0.0
    %1360 = vmatprep.subr.mxu0 0.0
    %1361 = vmatpush1.xpose.msra.mxu0 0.0
    %1362 = vmatprep.subr.mxu0 0.0
    %1363 = vmatpush1.xpose.msra.mxu0 0.0
    %1364 = vmatprep.subr.mxu0 0.0
    %1365 = vmatpush1.xpose.msra.mxu0 0.0
    %1366 = vmatprep.subr.mxu0 0.0
    %1367 = vmatpush1.xpose.msra.mxu0 0.0
    %1368 = vmatprep.subr.mxu0 0.0
    %1369 = vmatpush1.xpose.msra.mxu0 0.0
    %1370 = vmatprep.subr.mxu0 0.0
    %1371 = vmatpush1.xpose.msra.mxu0 0.0
    %1372 = vmatprep.subr.mxu0 0.0
    %1373 = vmatpush1.xpose.msra.mxu0 0.0
    %1374 = vmatprep.subr.mxu0 0.0
    %1375 = vmatpush1.xpose.msra.mxu0 0.0
    %1376 = vmatprep.subr.mxu0 0.0
    %1377 = vmatpush1.xpose.msra.mxu0 %v1338
    %1378 = vmatprep.subr.mxu0 0.0
    %1379 = vmatpush2.xpose.msra.mxu0 0.0
    %1380 = vmatprep.subr.mxu0 0.0
    %1381 = vmatpush2.xpose.msra.mxu0 0.0
    %1382 = vmatprep.subr.mxu0 0.0
    %1383 = vmatpush2.xpose.msra.mxu0 0.0
    %1384 = vmatprep.subr.mxu0 0.0
    %1385 = vmatpush2.xpose.msra.mxu0 0.0
    %1386 = vmatprep.subr.mxu0 0.0
    %1387 = vmatpush2.xpose.msra.mxu0 0.0
    %1388 = vmatprep.subr.mxu0 0.0
    %1389 = vmatpush2.xpose.msra.mxu0 0.0
    %1390 = vmatprep.subr.mxu0 0.0
    %1391 = vmatpush2.xpose.msra.mxu0 0.0
    %1392 = vmatprep.subr.mxu0 0.0
    %1393 = vmatpush2.xpose.msra.mxu0 0.0
    %1394 = vmatprep.subr.mxu0 0.0
    %1395 = vmatpush2.xpose.msra.mxu0 0.0
    %1396 = vmatprep.subr.mxu0 0.0
    %1397 = vmatpush2.xpose.msra.mxu0 0.0
    %1398 = vmatprep.subr.mxu0 0.0
    %1399 = vmatpush2.xpose.msra.mxu0 0.0
    %1400 = vmatprep.subr.mxu0 0.0
    %1401 = vmatpush2.xpose.msra.mxu0 0.0
    %1402 = vmatprep.subr.mxu0 0.0
    %1403 = vmatpush2.xpose.msra.mxu0 0.0
    %1404 = vmatprep.subr.mxu0 0.0
    %1405 = vmatpush2.xpose.msra.mxu0 0.0
    %1406 = vmatprep.subr.mxu0 0.0
    %1407 = vmatpush2.xpose.msra.mxu0 0.0
    %1408 = vmatprep.subr.mxu0 0.0
    %1409 = vmatpush2.xpose.msra.mxu0 0.0
    %1410 = vmatprep.mubr.f32.mxu0 0.0
    %1411 = vmatmul.mubr.f32.gmra.mxu0 %v1238
    %v1412 = vpop.f32.mrf.mxu0
    %v1413 = vadd.f32 0.0, %v1412
    %v1414 = vpop.f32.mrf.mxu0
    %1415 = vdwg.mxu0
    %1416 = vmatprep.subr.mxu0 0.0
    %1417 = vmatpush1.xpose.msra.mxu0 0.0
    %1418 = vmatprep.subr.mxu0 0.0
    %1419 = vmatpush1.xpose.msra.mxu0 0.0
    %1420 = vmatprep.subr.mxu0 0.0
    %1421 = vmatpush1.xpose.msra.mxu0 0.0
    %1422 = vmatprep.subr.mxu0 0.0
    %1423 = vmatpush1.xpose.msra.mxu0 0.0
    %1424 = vmatprep.subr.mxu0 0.0
    %1425 = vmatpush1.xpose.msra.mxu0 0.0
    %1426 = vmatprep.subr.mxu0 0.0
    %1427 = vmatpush1.xpose.msra.mxu0 0.0
    %1428 = vmatprep.subr.mxu0 0.0
    %1429 = vmatpush1.xpose.msra.mxu0 0.0
    %1430 = vmatprep.subr.mxu0 0.0
    %1431 = vmatpush1.xpose.msra.mxu0 0.0
    %1432 = vmatprep.subr.mxu0 0.0
    %1433 = vmatpush1.xpose.msra.mxu0 0.0
    %1434 = vmatprep.subr.mxu0 0.0
    %1435 = vmatpush1.xpose.msra.mxu0 0.0
    %1436 = vmatprep.subr.mxu0 0.0
    %1437 = vmatpush1.xpose.msra.mxu0 0.0
    %1438 = vmatprep.subr.mxu0 0.0
    %1439 = vmatpush1.xpose.msra.mxu0 0.0
    %1440 = vmatprep.subr.mxu0 0.0
    %1441 = vmatpush1.xpose.msra.mxu0 0.0
    %1442 = vmatprep.subr.mxu0 0.0
    %1443 = vmatpush1.xpose.msra.mxu0 0.0
    %1444 = vmatprep.subr.mxu0 0.0
    %1445 = vmatpush1.xpose.msra.mxu0 0.0
    %1446 = vmatprep.subr.mxu0 0.0
    %1447 = vmatpush1.xpose.msra.mxu0 %v1343
    %1448 = vmatprep.subr.mxu0 0.0
    %1449 = vmatpush2.xpose.msra.mxu0 0.0
    %1450 = vmatprep.subr.mxu0 0.0
    %1451 = vmatpush2.xpose.msra.mxu0 0.0
    %1452 = vmatprep.subr.mxu0 0.0
    %1453 = vmatpush2.xpose.msra.mxu0 0.0
    %1454 = vmatprep.subr.mxu0 0.0
    %1455 = vmatpush2.xpose.msra.mxu0 0.0
    %1456 = vmatprep.subr.mxu0 0.0
    %1457 = vmatpush2.xpose.msra.mxu0 0.0
    %1458 = vmatprep.subr.mxu0 0.0
    %1459 = vmatpush2.xpose.msra.mxu0 0.0
    %1460 = vmatprep.subr.mxu0 0.0
    %1461 = vmatpush2.xpose.msra.mxu0 0.0
    %1462 = vmatprep.subr.mxu0 0.0
    %1463 = vmatpush2.xpose.msra.mxu0 0.0
    %1464 = vmatprep.subr.mxu0 0.0
    %1465 = vmatpush2.xpose.msra.mxu0 0.0
    %1466 = vmatprep.subr.mxu0 0.0
    %1467 = vmatpush2.xpose.msra.mxu0 0.0
    %1468 = vmatprep.subr.mxu0 0.0
    %1469 = vmatpush2.xpose.msra.mxu0 0.0
    %1470 = vmatprep.subr.mxu0 0.0
    %1471 = vmatpush2.xpose.msra.mxu0 0.0
    %1472 = vmatprep.subr.mxu0 0.0
    %1473 = vmatpush2.xpose.msra.mxu0 0.0
    %1474 = vmatprep.subr.mxu0 0.0
    %1475 = vmatpush2.xpose.msra.mxu0 0.0
    %1476 = vmatprep.subr.mxu0 0.0
    %1477 = vmatpush2.xpose.msra.mxu0 0.0
    %1478 = vmatprep.subr.mxu0 0.0
    %1479 = vmatpush2.xpose.msra.mxu0 0.0
    %1480 = vmatprep.mubr.f32.mxu0 0.0
    %1481 = vmatmul.mubr.f32.gmra.mxu0 %v1243
    %v1482 = vpop.f32.mrf.mxu0
    %v1483 = vadd.f32 0.0, %v1482
    %v1484 = vpop.f32.mrf.mxu0
    %1485 = vdwg.mxu0
    %v1486 = vmul.f32 %v1413, 0.125
    %v1487 = vmul.f32 %v1483, 0.125
    %v1489 = vsel %vm768, %v1486, 0
    %1491 = vmatprep.subr.mxu0 0.0
    %1492 = vmatpush1.msra.mxu0 0.0
    %1493 = vmatprep.subr.mxu0 0.0
    %1494 = vmatpush1.msra.mxu0 0.0
    %1495 = vmatprep.subr.mxu0 0.0
    %1496 = vmatpush1.msra.mxu0 0.0
    %1497 = vmatprep.subr.mxu0 0.0
    %1498 = vmatpush1.msra.mxu0 0.0
    %1499 = vmatprep.subr.mxu0 0.0
    %1500 = vmatpush1.msra.mxu0 0.0
    %1501 = vmatprep.subr.mxu0 0.0
    %1502 = vmatpush1.msra.mxu0 0.0
    %1503 = vmatprep.subr.mxu0 0.0
    %1504 = vmatpush1.msra.mxu0 0.0
    %1505 = vmatprep.subr.mxu0 0.0
    %1506 = vmatpush1.msra.mxu0 0.0
    %1507 = vmatprep.subr.mxu0 0.0
    %1508 = vmatpush1.msra.mxu0 0.0
    %1509 = vmatprep.subr.mxu0 0.0
    %1510 = vmatpush1.msra.mxu0 0.0
    %1511 = vmatprep.subr.mxu0 0.0
    %1512 = vmatpush1.msra.mxu0 0.0
    %1513 = vmatprep.subr.mxu0 0.0
    %1514 = vmatpush1.msra.mxu0 0.0
    %1515 = vmatprep.subr.mxu0 0.0
    %1516 = vmatpush1.msra.mxu0 0.0
    %1517 = vmatprep.subr.mxu0 0.0
    %1518 = vmatpush1.msra.mxu0 0.0
    %1519 = vmatprep.subr.mxu0 0.0
    %1520 = vmatpush1.msra.mxu0 0.0
    %1521 = vmatprep.subr.mxu0 0.0
    %1522 = vmatpush1.msra.mxu0 %v1138
    %1523 = vmatprep.subr.mxu0 0.0
    %1524 = vmatpush2.msra.mxu0 0.0
    %1525 = vmatprep.subr.mxu0 0.0
    %1526 = vmatpush2.msra.mxu0 0.0
    %1527 = vmatprep.subr.mxu0 0.0
    %1528 = vmatpush2.msra.mxu0 0.0
    %1529 = vmatprep.subr.mxu0 0.0
    %1530 = vmatpush2.msra.mxu0 0.0
    %1531 = vmatprep.subr.mxu0 0.0
    %1532 = vmatpush2.msra.mxu0 0.0
    %1533 = vmatprep.subr.mxu0 0.0
    %1534 = vmatpush2.msra.mxu0 0.0
    %1535 = vmatprep.subr.mxu0 0.0
    %1536 = vmatpush2.msra.mxu0 0.0
    %1537 = vmatprep.subr.mxu0 0.0
    %1538 = vmatpush2.msra.mxu0 0.0
    %1539 = vmatprep.subr.mxu0 0.0
    %1540 = vmatpush2.msra.mxu0 0.0
    %1541 = vmatprep.subr.mxu0 0.0
    %1542 = vmatpush2.msra.mxu0 0.0
    %1543 = vmatprep.subr.mxu0 0.0
    %1544 = vmatpush2.msra.mxu0 0.0
    %1545 = vmatprep.subr.mxu0 0.0
    %1546 = vmatpush2.msra.mxu0 0.0
    %1547 = vmatprep.subr.mxu0 0.0
    %1548 = vmatpush2.msra.mxu0 0.0
    %1549 = vmatprep.subr.mxu0 0.0
    %1550 = vmatpush2.msra.mxu0 0.0
    %1551 = vmatprep.subr.mxu0 0.0
    %1552 = vmatpush2.msra.mxu0 0.0
    %1553 = vmatprep.subr.mxu0 0.0
    %1554 = vmatpush2.msra.mxu0 0.0
    %1555 = vmatprep.mubr.f32.mxu0 0.0
    %1556 = vmatmul.mubr.f32.gmra.mxu0 %v1489
    %v1557 = vpop.f32.mrf.mxu0
    %v1558 = vadd.f32 0.0, %v1557
    %v1559 = vpop.f32.mrf.mxu0
    %1560 = vdwg.mxu0
    %v1562 = vsel %vm768, %v1487, 0
    %1564 = vmatprep.subr.mxu0 0.0
    %1565 = vmatpush1.msra.mxu0 0.0
    %1566 = vmatprep.subr.mxu0 0.0
    %1567 = vmatpush1.msra.mxu0 0.0
    %1568 = vmatprep.subr.mxu0 0.0
    %1569 = vmatpush1.msra.mxu0 0.0
    %1570 = vmatprep.subr.mxu0 0.0
    %1571 = vmatpush1.msra.mxu0 0.0
    %1572 = vmatprep.subr.mxu0 0.0
    %1573 = vmatpush1.msra.mxu0 0.0
    %1574 = vmatprep.subr.mxu0 0.0
    %1575 = vmatpush1.msra.mxu0 0.0
    %1576 = vmatprep.subr.mxu0 0.0
    %1577 = vmatpush1.msra.mxu0 0.0
    %1578 = vmatprep.subr.mxu0 0.0
    %1579 = vmatpush1.msra.mxu0 0.0
    %1580 = vmatprep.subr.mxu0 0.0
    %1581 = vmatpush1.msra.mxu0 0.0
    %1582 = vmatprep.subr.mxu0 0.0
    %1583 = vmatpush1.msra.mxu0 0.0
    %1584 = vmatprep.subr.mxu0 0.0
    %1585 = vmatpush1.msra.mxu0 0.0
    %1586 = vmatprep.subr.mxu0 0.0
    %1587 = vmatpush1.msra.mxu0 0.0
    %1588 = vmatprep.subr.mxu0 0.0
    %1589 = vmatpush1.msra.mxu0 0.0
    %1590 = vmatprep.subr.mxu0 0.0
    %1591 = vmatpush1.msra.mxu0 0.0
    %1592 = vmatprep.subr.mxu0 0.0
    %1593 = vmatpush1.msra.mxu0 0.0
    %1594 = vmatprep.subr.mxu0 0.0
    %1595 = vmatpush1.msra.mxu0 %v1143
    %1596 = vmatprep.subr.mxu0 0.0
    %1597 = vmatpush2.msra.mxu0 0.0
    %1598 = vmatprep.subr.mxu0 0.0
    %1599 = vmatpush2.msra.mxu0 0.0
    %1600 = vmatprep.subr.mxu0 0.0
    %1601 = vmatpush2.msra.mxu0 0.0
    %1602 = vmatprep.subr.mxu0 0.0
    %1603 = vmatpush2.msra.mxu0 0.0
    %1604 = vmatprep.subr.mxu0 0.0
    %1605 = vmatpush2.msra.mxu0 0.0
    %1606 = vmatprep.subr.mxu0 0.0
    %1607 = vmatpush2.msra.mxu0 0.0
    %1608 = vmatprep.subr.mxu0 0.0
    %1609 = vmatpush2.msra.mxu0 0.0
    %1610 = vmatprep.subr.mxu0 0.0
    %1611 = vmatpush2.msra.mxu0 0.0
    %1612 = vmatprep.subr.mxu0 0.0
    %1613 = vmatpush2.msra.mxu0 0.0
    %1614 = vmatprep.subr.mxu0 0.0
    %1615 = vmatpush2.msra.mxu0 0.0
    %1616 = vmatprep.subr.mxu0 0.0
    %1617 = vmatpush2.msra.mxu0 0.0
    %1618 = vmatprep.subr.mxu0 0.0
    %1619 = vmatpush2.msra.mxu0 0.0
    %1620 = vmatprep.subr.mxu0 0.0
    %1621 = vmatpush2.msra.mxu0 0.0
    %1622 = vmatprep.subr.mxu0 0.0
    %1623 = vmatpush2.msra.mxu0 0.0
    %1624 = vmatprep.subr.mxu0 0.0
    %1625 = vmatpush2.msra.mxu0 0.0
    %1626 = vmatprep.subr.mxu0 0.0
    %1627 = vmatpush2.msra.mxu0 0.0
    %1628 = vmatprep.mubr.f32.mxu0 0.0
    %1629 = vmatmul.mubr.f32.gmra.mxu0 %v1562
    %v1630 = vpop.f32.mrf.mxu0
    %v1631 = vadd.f32 0.0, %v1630
    %v1632 = vpop.f32.mrf.mxu0
    %1633 = vdwg.mxu0
    %s1634 = scalar_lea.vmem [#allocation13], 128
    %v1635 = vld [vmem:[%s1634] sm:$0xff]
    %v1636 = vld [vmem:[%s1634 + $0x8] sm:$0xff]
    %v1637 = vld [vmem:[%s1634 + $0x10] sm:$0xff]
    %v1638 = vld [vmem:[%s1634 + $0x18] sm:$0xff]
    %v1639 = vld [vmem:[%s1634 + $0x20] sm:$0xff]
    %v1640 = vld [vmem:[%s1634 + $0x28] sm:$0xff]
    %v1641 = vld [vmem:[%s1634 + $0x30] sm:$0xff]
    %v1642 = vld [vmem:[%s1634 + $0x38] sm:$0xff]
    %v1643 = vld [vmem:[%s1634 + $0x40] sm:$0xff]
    %v1644 = vld [vmem:[%s1634 + $0x48] sm:$0xff]
    %v1645 = vld [vmem:[%s1634 + $0x50] sm:$0xff]
    %v1646 = vld [vmem:[%s1634 + $0x58] sm:$0xff]
    %v1647 = vld [vmem:[%s1634 + $0x60] sm:$0xff]
    %v1648 = vld [vmem:[%s1634 + $0x68] sm:$0xff]
    %v1649 = vld [vmem:[%s1634 + $0x70] sm:$0xff]
    %v1650 = vld [vmem:[%s1634 + $0x78] sm:$0xff]
    %s1651 = scalar_lea.vmem %s10, 1
    %v1652 = vld [vmem:[%s1651] sm:$0x1]
    %v1654 = vlaneseq
    %v1655 = vshrl.u32 %v1654, 7
    %v1656 = vsub.s32 0, %v1655
    %v1657 = vrot.slane %v1652, %v1656
    %1659 = vmatprep.subr.mxu0 0.0
    %1660 = vmatpush1.msra.mxu0 %v1650
    %1661 = vmatprep.subr.mxu0 0.0
    %1662 = vmatpush1.msra.mxu0 %v1649
    %1663 = vmatprep.subr.mxu0 0.0
    %1664 = vmatpush1.msra.mxu0 %v1648
    %1665 = vmatprep.subr.mxu0 0.0
    %1666 = vmatpush1.msra.mxu0 %v1647
    %1667 = vmatprep.subr.mxu0 0.0
    %1668 = vmatpush1.msra.mxu0 %v1646
    %1669 = vmatprep.subr.mxu0 0.0
    %1670 = vmatpush1.msra.mxu0 %v1645
    %1671 = vmatprep.subr.mxu0 0.0
    %1672 = vmatpush1.msra.mxu0 %v1644
    %1673 = vmatprep.subr.mxu0 0.0
    %1674 = vmatpush1.msra.mxu0 %v1643
    %1675 = vmatprep.subr.mxu0 0.0
    %1676 = vmatpush1.msra.mxu0 %v1642
    %1677 = vmatprep.subr.mxu0 0.0
    %1678 = vmatpush1.msra.mxu0 %v1641
    %1679 = vmatprep.subr.mxu0 0.0
    %1680 = vmatpush1.msra.mxu0 %v1640
    %1681 = vmatprep.subr.mxu0 0.0
    %1682 = vmatpush1.msra.mxu0 %v1639
    %1683 = vmatprep.subr.mxu0 0.0
    %1684 = vmatpush1.msra.mxu0 %v1638
    %1685 = vmatprep.subr.mxu0 0.0
    %1686 = vmatpush1.msra.mxu0 %v1637
    %1687 = vmatprep.subr.mxu0 0.0
    %1688 = vmatpush1.msra.mxu0 %v1636
    %1689 = vmatprep.subr.mxu0 0.0
    %1690 = vmatpush1.msra.mxu0 %v1635
    %1691 = vmatprep.subr.mxu0 0.0
    %1692 = vmatpush2.msra.mxu0 0.0
    %1693 = vmatprep.subr.mxu0 0.0
    %1694 = vmatpush2.msra.mxu0 0.0
    %1695 = vmatprep.subr.mxu0 0.0
    %1696 = vmatpush2.msra.mxu0 0.0
    %1697 = vmatprep.subr.mxu0 0.0
    %1698 = vmatpush2.msra.mxu0 0.0
    %1699 = vmatprep.subr.mxu0 0.0
    %1700 = vmatpush2.msra.mxu0 0.0
    %1701 = vmatprep.subr.mxu0 0.0
    %1702 = vmatpush2.msra.mxu0 0.0
    %1703 = vmatprep.subr.mxu0 0.0
    %1704 = vmatpush2.msra.mxu0 0.0
    %1705 = vmatprep.subr.mxu0 0.0
    %1706 = vmatpush2.msra.mxu0 0.0
    %1707 = vmatprep.subr.mxu0 0.0
    %1708 = vmatpush2.msra.mxu0 0.0
    %1709 = vmatprep.subr.mxu0 0.0
    %1710 = vmatpush2.msra.mxu0 0.0
    %1711 = vmatprep.subr.mxu0 0.0
    %1712 = vmatpush2.msra.mxu0 0.0
    %1713 = vmatprep.subr.mxu0 0.0
    %1714 = vmatpush2.msra.mxu0 0.0
    %1715 = vmatprep.subr.mxu0 0.0
    %1716 = vmatpush2.msra.mxu0 0.0
    %1717 = vmatprep.subr.mxu0 0.0
    %1718 = vmatpush2.msra.mxu0 0.0
    %1719 = vmatprep.subr.mxu0 0.0
    %1720 = vmatpush2.msra.mxu0 0.0
    %1721 = vmatprep.subr.mxu0 0.0
    %1722 = vmatpush2.msra.mxu0 0.0
    %1723 = vmatprep.mubr.f32.mxu0 0.0
    %1724 = vmatmul.mubr.f32.gmra.mxu0 %v1558
    %v1725 = vpop.f32.mrf.mxu0
    %v1726 = vadd.f32 %v1657, %v1725
    %v1727 = vpop.f32.mrf.mxu0
    %1728 = vmatprep.mubr.f32.mxu0 0.0
    %1729 = vmatmul.mubr.f32.gmra.mxu0 %v1631
    %v1730 = vpop.f32.mrf.mxu0
    %v1731 = vadd.f32 %v1657, %v1730
    %v1732 = vpop.f32.mrf.mxu0
    %1733 = vdwg.mxu0
    %s1734 = scalar_lea.vmem %s11, 1
    %v1735 = vld [vmem:[%s1734] sm:$0x1]
    %s1736 = scalar_lea.vmem %s14, 1
    %v1737 = vld [vmem:[%s1736] sm:$0x1]
    %v1738 = vadd.f32 %v1737, 1e-05
    %v1739 = vrsqrt.pop %v1738
    %v1740 = vmul.f32 %v1735, %v1739
    %s1741 = scalar_lea.vmem [#allocation16], 1
    %v1742 = vld [vmem:[%s1741] sm:$0x1]
    %v1744 = vlaneseq
    %v1745 = vshrl.u32 %v1744, 7
    %v1746 = vsub.s32 0, %v1745
    %v1747 = vrot.slane %v1742, %v1746
    %v1749 = vsub.f32 %v1726, %v1747
    %v1750 = vsub.f32 %v1731, %v1747
    %v1752 = vlaneseq
    %v1753 = vshrl.u32 %v1752, 7
    %v1754 = vsub.s32 0, %v1753
    %v1755 = vrot.slane %v1740, %v1754
    %v1757 = vmul.f32 %v1749, %v1755
    %v1758 = vmul.f32 %v1750, %v1755
    %s1759 = scalar_lea.vmem [#allocation14], 1
    %v1760 = vld [vmem:[%s1759] sm:$0x1]
    %v1762 = vlaneseq
    %v1763 = vshrl.u32 %v1762, 7
    %v1764 = vsub.s32 0, %v1763
    %v1765 = vrot.slane %v1760, %v1764
    %v1767 = vadd.f32 %v1757, %v1765
    %v1768 = vadd.f32 %v1758, %v1765
    %v1769 = vadd.f32 %v1767, %v1044
    %v1770 = vadd.f32 %v1768, %v1045
    %s1771 = scalar_lea.vmem [#allocation8], 256
    %v1772 = vld [vmem:[%s1771] sm:$0xff]
    %v1773 = vld [vmem:[%s1771 + $0x8] sm:$0xff]
    %v1774 = vld [vmem:[%s1771 + $0x10] sm:$0xff]
    %v1775 = vld [vmem:[%s1771 + $0x18] sm:$0xff]
    %v1776 = vld [vmem:[%s1771 + $0x20] sm:$0xff]
    %v1777 = vld [vmem:[%s1771 + $0x28] sm:$0xff]
    %v1778 = vld [vmem:[%s1771 + $0x30] sm:$0xff]
    %v1779 = vld [vmem:[%s1771 + $0x38] sm:$0xff]
    %v1780 = vld [vmem:[%s1771 + $0x40] sm:$0xff]
    %v1781 = vld [vmem:[%s1771 + $0x48] sm:$0xff]
    %v1782 = vld [vmem:[%s1771 + $0x50] sm:$0xff]
    %v1783 = vld [vmem:[%s1771 + $0x58] sm:$0xff]
    %v1784 = vld [vmem:[%s1771 + $0x60] sm:$0xff]
    %v1785 = vld [vmem:[%s1771 + $0x68] sm:$0xff]
    %v1786 = vld [vmem:[%s1771 + $0x70] sm:$0xff]
    %v1787 = vld [vmem:[%s1771 + $0x78] sm:$0xff]
    %s1788 = scalar_lea.vmem %s4, 2
    %v1789 = vld [vmem:[%s1788] sm:$0x1]
    %v1791 = vlaneseq
    %v1792 = vshrl.u32 %v1791, 7
    %v1793 = vsub.s32 0, %v1792
    %v1794 = vrot.slane %v1789, %v1793
    %1796 = vmatprep.subr.mxu0 0.0
    %1797 = vmatpush1.msra.mxu0 %v1787
    %1798 = vmatprep.subr.mxu0 0.0
    %1799 = vmatpush1.msra.mxu0 %v1786
    %1800 = vmatprep.subr.mxu0 0.0
    %1801 = vmatpush1.msra.mxu0 %v1785
    %1802 = vmatprep.subr.mxu0 0.0
    %1803 = vmatpush1.msra.mxu0 %v1784
    %1804 = vmatprep.subr.mxu0 0.0
    %1805 = vmatpush1.msra.mxu0 %v1783
    %1806 = vmatprep.subr.mxu0 0.0
    %1807 = vmatpush1.msra.mxu0 %v1782
    %1808 = vmatprep.subr.mxu0 0.0
    %1809 = vmatpush1.msra.mxu0 %v1781
    %1810 = vmatprep.subr.mxu0 0.0
    %1811 = vmatpush1.msra.mxu0 %v1780
    %1812 = vmatprep.subr.mxu0 0.0
    %1813 = vmatpush1.msra.mxu0 %v1779
    %1814 = vmatprep.subr.mxu0 0.0
    %1815 = vmatpush1.msra.mxu0 %v1778
    %1816 = vmatprep.subr.mxu0 0.0
    %1817 = vmatpush1.msra.mxu0 %v1777
    %1818 = vmatprep.subr.mxu0 0.0
    %1819 = vmatpush1.msra.mxu0 %v1776
    %1820 = vmatprep.subr.mxu0 0.0
    %1821 = vmatpush1.msra.mxu0 %v1775
    %1822 = vmatprep.subr.mxu0 0.0
    %1823 = vmatpush1.msra.mxu0 %v1774
    %1824 = vmatprep.subr.mxu0 0.0
    %1825 = vmatpush1.msra.mxu0 %v1773
    %1826 = vmatprep.subr.mxu0 0.0
    %1827 = vmatpush1.msra.mxu0 %v1772
    %1828 = vmatprep.subr.mxu0 0.0
    %1829 = vmatpush2.msra.mxu0 0.0
    %1830 = vmatprep.subr.mxu0 0.0
    %1831 = vmatpush2.msra.mxu0 0.0
    %1832 = vmatprep.subr.mxu0 0.0
    %1833 = vmatpush2.msra.mxu0 0.0
    %1834 = vmatprep.subr.mxu0 0.0
    %1835 = vmatpush2.msra.mxu0 0.0
    %1836 = vmatprep.subr.mxu0 0.0
    %1837 = vmatpush2.msra.mxu0 0.0
    %1838 = vmatprep.subr.mxu0 0.0
    %1839 = vmatpush2.msra.mxu0 0.0
    %1840 = vmatprep.subr.mxu0 0.0
    %1841 = vmatpush2.msra.mxu0 0.0
    %1842 = vmatprep.subr.mxu0 0.0
    %1843 = vmatpush2.msra.mxu0 0.0
    %1844 = vmatprep.subr.mxu0 0.0
    %1845 = vmatpush2.msra.mxu0 0.0
    %1846 = vmatprep.subr.mxu0 0.0
    %1847 = vmatpush2.msra.mxu0 0.0
    %1848 = vmatprep.subr.mxu0 0.0
    %1849 = vmatpush2.msra.mxu0 0.0
    %1850 = vmatprep.subr.mxu0 0.0
    %1851 = vmatpush2.msra.mxu0 0.0
    %1852 = vmatprep.subr.mxu0 0.0
    %1853 = vmatpush2.msra.mxu0 0.0
    %1854 = vmatprep.subr.mxu0 0.0
    %1855 = vmatpush2.msra.mxu0 0.0
    %1856 = vmatprep.subr.mxu0 0.0
    %1857 = vmatpush2.msra.mxu0 0.0
    %1858 = vmatprep.subr.mxu0 0.0
    %1859 = vmatpush2.msra.mxu0 0.0
    %1860 = vmatprep.mubr.f32.mxu0 0.0
    %1861 = vmatmul.mubr.f32.gmra.mxu0 %v1769
    %v1862 = vpop.f32.mrf.mxu0
    %v1863 = vadd.f32 %v1794, %v1862
    %v1864 = vpop.f32.mrf.mxu0
    %1865 = vmatprep.mubr.f32.mxu0 0.0
    %1866 = vmatmul.mubr.f32.gmra.mxu0 %v1770
    %v1867 = vpop.f32.mrf.mxu0
    %v1868 = vadd.f32 %v1794, %v1867
    %v1869 = vpop.f32.mrf.mxu0
    %1870 = vdwg.mxu0
    %s1871 = scalar_lea.vmem [#allocation10], 256
    %v1872 = vld [vmem:[%s1871] sm:$0xff]
    %v1873 = vld [vmem:[%s1871 + $0x8] sm:$0xff]
    %v1874 = vld [vmem:[%s1871 + $0x10] sm:$0xff]
    %v1875 = vld [vmem:[%s1871 + $0x18] sm:$0xff]
    %v1876 = vld [vmem:[%s1871 + $0x20] sm:$0xff]
    %v1877 = vld [vmem:[%s1871 + $0x28] sm:$0xff]
    %v1878 = vld [vmem:[%s1871 + $0x30] sm:$0xff]
    %v1879 = vld [vmem:[%s1871 + $0x38] sm:$0xff]
    %v1880 = vld [vmem:[%s1871 + $0x40] sm:$0xff]
    %v1881 = vld [vmem:[%s1871 + $0x48] sm:$0xff]
    %v1882 = vld [vmem:[%s1871 + $0x50] sm:$0xff]
    %v1883 = vld [vmem:[%s1871 + $0x58] sm:$0xff]
    %v1884 = vld [vmem:[%s1871 + $0x60] sm:$0xff]
    %v1885 = vld [vmem:[%s1871 + $0x68] sm:$0xff]
    %v1886 = vld [vmem:[%s1871 + $0x70] sm:$0xff]
    %v1887 = vld [vmem:[%s1871 + $0x78] sm:$0xff]
    %s1888 = scalar_lea.vmem %s6, 2
    %v1889 = vld [vmem:[%s1888] sm:$0x1]
    %v1891 = vlaneseq
    %v1892 = vshrl.u32 %v1891, 7
    %v1893 = vsub.s32 0, %v1892
    %v1894 = vrot.slane %v1889, %v1893
    %1896 = vmatprep.subr.mxu0 0.0
    %1897 = vmatpush1.msra.mxu0 %v1887
    %1898 = vmatprep.subr.mxu0 0.0
    %1899 = vmatpush1.msra.mxu0 %v1886
    %1900 = vmatprep.subr.mxu0 0.0
    %1901 = vmatpush1.msra.mxu0 %v1885
    %1902 = vmatprep.subr.mxu0 0.0
    %1903 = vmatpush1.msra.mxu0 %v1884
    %1904 = vmatprep.subr.mxu0 0.0
    %1905 = vmatpush1.msra.mxu0 %v1883
    %1906 = vmatprep.subr.mxu0 0.0
    %1907 = vmatpush1.msra.mxu0 %v1882
    %1908 = vmatprep.subr.mxu0 0.0
    %1909 = vmatpush1.msra.mxu0 %v1881
    %1910 = vmatprep.subr.mxu0 0.0
    %1911 = vmatpush1.msra.mxu0 %v1880
    %1912 = vmatprep.subr.mxu0 0.0
    %1913 = vmatpush1.msra.mxu0 %v1879
    %1914 = vmatprep.subr.mxu0 0.0
    %1915 = vmatpush1.msra.mxu0 %v1878
    %1916 = vmatprep.subr.mxu0 0.0
    %1917 = vmatpush1.msra.mxu0 %v1877
    %1918 = vmatprep.subr.mxu0 0.0
    %1919 = vmatpush1.msra.mxu0 %v1876
    %1920 = vmatprep.subr.mxu0 0.0
    %1921 = vmatpush1.msra.mxu0 %v1875
    %1922 = vmatprep.subr.mxu0 0.0
    %1923 = vmatpush1.msra.mxu0 %v1874
    %1924 = vmatprep.subr.mxu0 0.0
    %1925 = vmatpush1.msra.mxu0 %v1873
    %1926 = vmatprep.subr.mxu0 0.0
    %1927 = vmatpush1.msra.mxu0 %v1872
    %1928 = vmatprep.subr.mxu0 0.0
    %1929 = vmatpush2.msra.mxu0 0.0
    %1930 = vmatprep.subr.mxu0 0.0
    %1931 = vmatpush2.msra.mxu0 0.0
    %1932 = vmatprep.subr.mxu0 0.0
    %1933 = vmatpush2.msra.mxu0 0.0
    %1934 = vmatprep.subr.mxu0 0.0
    %1935 = vmatpush2.msra.mxu0 0.0
    %1936 = vmatprep.subr.mxu0 0.0
    %1937 = vmatpush2.msra.mxu0 0.0
    %1938 = vmatprep.subr.mxu0 0.0
    %1939 = vmatpush2.msra.mxu0 0.0
    %1940 = vmatprep.subr.mxu0 0.0
    %1941 = vmatpush2.msra.mxu0 0.0
    %1942 = vmatprep.subr.mxu0 0.0
    %1943 = vmatpush2.msra.mxu0 0.0
    %1944 = vmatprep.subr.mxu0 0.0
    %1945 = vmatpush2.msra.mxu0 0.0
    %1946 = vmatprep.subr.mxu0 0.0
    %1947 = vmatpush2.msra.mxu0 0.0
    %1948 = vmatprep.subr.mxu0 0.0
    %1949 = vmatpush2.msra.mxu0 0.0
    %1950 = vmatprep.subr.mxu0 0.0
    %1951 = vmatpush2.msra.mxu0 0.0
    %1952 = vmatprep.subr.mxu0 0.0
    %1953 = vmatpush2.msra.mxu0 0.0
    %1954 = vmatprep.subr.mxu0 0.0
    %1955 = vmatpush2.msra.mxu0 0.0
    %1956 = vmatprep.subr.mxu0 0.0
    %1957 = vmatpush2.msra.mxu0 0.0
    %1958 = vmatprep.subr.mxu0 0.0
    %1959 = vmatpush2.msra.mxu0 0.0
    %1960 = vmatprep.mubr.f32.mxu0 0.0
    %1961 = vmatmul.mubr.f32.gmra.mxu0 %v1769
    %v1962 = vpop.f32.mrf.mxu0
    %v1963 = vadd.f32 %v1894, %v1962
    %v1964 = vpop.f32.mrf.mxu0
    %1965 = vmatprep.mubr.f32.mxu0 0.0
    %1966 = vmatmul.mubr.f32.gmra.mxu0 %v1770
    %v1967 = vpop.f32.mrf.mxu0
    %v1968 = vadd.f32 %v1894, %v1967
    %v1969 = vpop.f32.mrf.mxu0
    %1970 = vdwg.mxu0
    %s1971 = scalar_lea.vmem [#allocation11], 256
    %v1972 = vld [vmem:[%s1971] sm:$0xff]
    %v1973 = vld [vmem:[%s1971 + $0x8] sm:$0xff]
    %v1974 = vld [vmem:[%s1971 + $0x10] sm:$0xff]
    %v1975 = vld [vmem:[%s1971 + $0x18] sm:$0xff]
    %v1976 = vld [vmem:[%s1971 + $0x20] sm:$0xff]
    %v1977 = vld [vmem:[%s1971 + $0x28] sm:$0xff]
    %v1978 = vld [vmem:[%s1971 + $0x30] sm:$0xff]
    %v1979 = vld [vmem:[%s1971 + $0x38] sm:$0xff]
    %v1980 = vld [vmem:[%s1971 + $0x40] sm:$0xff]
    %v1981 = vld [vmem:[%s1971 + $0x48] sm:$0xff]
    %v1982 = vld [vmem:[%s1971 + $0x50] sm:$0xff]
    %v1983 = vld [vmem:[%s1971 + $0x58] sm:$0xff]
    %v1984 = vld [vmem:[%s1971 + $0x60] sm:$0xff]
    %v1985 = vld [vmem:[%s1971 + $0x68] sm:$0xff]
    %v1986 = vld [vmem:[%s1971 + $0x70] sm:$0xff]
    %v1987 = vld [vmem:[%s1971 + $0x78] sm:$0xff]
    %s1988 = scalar_lea.vmem %s8, 2
    %v1989 = vld [vmem:[%s1988] sm:$0x1]
    %v1991 = vlaneseq
    %v1992 = vshrl.u32 %v1991, 7
    %v1993 = vsub.s32 0, %v1992
    %v1994 = vrot.slane %v1989, %v1993
    %1996 = vmatprep.subr.mxu0 0.0
    %1997 = vmatpush1.msra.mxu0 %v1987
    %1998 = vmatprep.subr.mxu0 0.0
    %1999 = vmatpush1.msra.mxu0 %v1986
    %2000 = vmatprep.subr.mxu0 0.0
    %2001 = vmatpush1.msra.mxu0 %v1985
    %2002 = vmatprep.subr.mxu0 0.0
    %2003 = vmatpush1.msra.mxu0 %v1984
    %2004 = vmatprep.subr.mxu0 0.0
    %2005 = vmatpush1.msra.mxu0 %v1983
    %2006 = vmatprep.subr.mxu0 0.0
    %2007 = vmatpush1.msra.mxu0 %v1982
    %2008 = vmatprep.subr.mxu0 0.0
    %2009 = vmatpush1.msra.mxu0 %v1981
    %2010 = vmatprep.subr.mxu0 0.0
    %2011 = vmatpush1.msra.mxu0 %v1980
    %2012 = vmatprep.subr.mxu0 0.0
    %2013 = vmatpush1.msra.mxu0 %v1979
    %2014 = vmatprep.subr.mxu0 0.0
    %2015 = vmatpush1.msra.mxu0 %v1978
    %2016 = vmatprep.subr.mxu0 0.0
    %2017 = vmatpush1.msra.mxu0 %v1977
    %2018 = vmatprep.subr.mxu0 0.0
    %2019 = vmatpush1.msra.mxu0 %v1976
    %2020 = vmatprep.subr.mxu0 0.0
    %2021 = vmatpush1.msra.mxu0 %v1975
    %2022 = vmatprep.subr.mxu0 0.0
    %2023 = vmatpush1.msra.mxu0 %v1974
    %2024 = vmatprep.subr.mxu0 0.0
    %2025 = vmatpush1.msra.mxu0 %v1973
    %2026 = vmatprep.subr.mxu0 0.0
    %2027 = vmatpush1.msra.mxu0 %v1972
    %2028 = vmatprep.subr.mxu0 0.0
    %2029 = vmatpush2.msra.mxu0 0.0
    %2030 = vmatprep.subr.mxu0 0.0
    %2031 = vmatpush2.msra.mxu0 0.0
    %2032 = vmatprep.subr.mxu0 0.0
    %2033 = vmatpush2.msra.mxu0 0.0
    %2034 = vmatprep.subr.mxu0 0.0
    %2035 = vmatpush2.msra.mxu0 0.0
    %2036 = vmatprep.subr.mxu0 0.0
    %2037 = vmatpush2.msra.mxu0 0.0
    %2038 = vmatprep.subr.mxu0 0.0
    %2039 = vmatpush2.msra.mxu0 0.0
    %2040 = vmatprep.subr.mxu0 0.0
    %2041 = vmatpush2.msra.mxu0 0.0
    %2042 = vmatprep.subr.mxu0 0.0
    %2043 = vmatpush2.msra.mxu0 0.0
    %2044 = vmatprep.subr.mxu0 0.0
    %2045 = vmatpush2.msra.mxu0 0.0
    %2046 = vmatprep.subr.mxu0 0.0
    %2047 = vmatpush2.msra.mxu0 0.0
    %2048 = vmatprep.subr.mxu0 0.0
    %2049 = vmatpush2.msra.mxu0 0.0
    %2050 = vmatprep.subr.mxu0 0.0
    %2051 = vmatpush2.msra.mxu0 0.0
    %2052 = vmatprep.subr.mxu0 0.0
    %2053 = vmatpush2.msra.mxu0 0.0
    %2054 = vmatprep.subr.mxu0 0.0
    %2055 = vmatpush2.msra.mxu0 0.0
    %2056 = vmatprep.subr.mxu0 0.0
    %2057 = vmatpush2.msra.mxu0 0.0
    %2058 = vmatprep.subr.mxu0 0.0
    %2059 = vmatpush2.msra.mxu0 0.0
    %2060 = vmatprep.mubr.f32.mxu0 0.0
    %2061 = vmatmul.mubr.f32.gmra.mxu0 %v1769
    %v2062 = vpop.f32.mrf.mxu0
    %v2063 = vadd.f32 %v1994, %v2062
    %v2064 = vpop.f32.mrf.mxu0
    %2065 = vmatprep.mubr.f32.mxu0 0.0
    %2066 = vmatmul.mubr.f32.gmra.mxu0 %v1770
    %v2067 = vpop.f32.mrf.mxu0
    %v2068 = vadd.f32 %v1994, %v2067
    %v2069 = vpop.f32.mrf.mxu0
    %2070 = vdwg.mxu0
    %2071 = vmatprep.subr.mxu0 0.0
    %2072 = vmatpush1.xpose.msra.mxu0 0.0
    %2073 = vmatprep.subr.mxu0 0.0
    %2074 = vmatpush1.xpose.msra.mxu0 0.0
    %2075 = vmatprep.subr.mxu0 0.0
    %2076 = vmatpush1.xpose.msra.mxu0 0.0
    %2077 = vmatprep.subr.mxu0 0.0
    %2078 = vmatpush1.xpose.msra.mxu0 0.0
    %2079 = vmatprep.subr.mxu0 0.0
    %2080 = vmatpush1.xpose.msra.mxu0 0.0
    %2081 = vmatprep.subr.mxu0 0.0
    %2082 = vmatpush1.xpose.msra.mxu0 0.0
    %2083 = vmatprep.subr.mxu0 0.0
    %2084 = vmatpush1.xpose.msra.mxu0 0.0
    %2085 = vmatprep.subr.mxu0 0.0
    %2086 = vmatpush1.xpose.msra.mxu0 0.0
    %2087 = vmatprep.subr.mxu0 0.0
    %2088 = vmatpush1.xpose.msra.mxu0 0.0
    %2089 = vmatprep.subr.mxu0 0.0
    %2090 = vmatpush1.xpose.msra.mxu0 0.0
    %2091 = vmatprep.subr.mxu0 0.0
    %2092 = vmatpush1.xpose.msra.mxu0 0.0
    %2093 = vmatprep.subr.mxu0 0.0
    %2094 = vmatpush1.xpose.msra.mxu0 0.0
    %2095 = vmatprep.subr.mxu0 0.0
    %2096 = vmatpush1.xpose.msra.mxu0 0.0
    %2097 = vmatprep.subr.mxu0 0.0
    %2098 = vmatpush1.xpose.msra.mxu0 0.0
    %2099 = vmatprep.subr.mxu0 0.0
    %2100 = vmatpush1.xpose.msra.mxu0 0.0
    %2101 = vmatprep.subr.mxu0 0.0
    %2102 = vmatpush1.xpose.msra.mxu0 %v2063
    %2103 = vmatprep.subr.mxu0 0.0
    %2104 = vmatpush2.xpose.msra.mxu0 0.0
    %2105 = vmatprep.subr.mxu0 0.0
    %2106 = vmatpush2.xpose.msra.mxu0 0.0
    %2107 = vmatprep.subr.mxu0 0.0
    %2108 = vmatpush2.xpose.msra.mxu0 0.0
    %2109 = vmatprep.subr.mxu0 0.0
    %2110 = vmatpush2.xpose.msra.mxu0 0.0
    %2111 = vmatprep.subr.mxu0 0.0
    %2112 = vmatpush2.xpose.msra.mxu0 0.0
    %2113 = vmatprep.subr.mxu0 0.0
    %2114 = vmatpush2.xpose.msra.mxu0 0.0
    %2115 = vmatprep.subr.mxu0 0.0
    %2116 = vmatpush2.xpose.msra.mxu0 0.0
    %2117 = vmatprep.subr.mxu0 0.0
    %2118 = vmatpush2.xpose.msra.mxu0 0.0
    %2119 = vmatprep.subr.mxu0 0.0
    %2120 = vmatpush2.xpose.msra.mxu0 0.0
    %2121 = vmatprep.subr.mxu0 0.0
    %2122 = vmatpush2.xpose.msra.mxu0 0.0
    %2123 = vmatprep.subr.mxu0 0.0
    %2124 = vmatpush2.xpose.msra.mxu0 0.0
    %2125 = vmatprep.subr.mxu0 0.0
    %2126 = vmatpush2.xpose.msra.mxu0 0.0
    %2127 = vmatprep.subr.mxu0 0.0
    %2128 = vmatpush2.xpose.msra.mxu0 0.0
    %2129 = vmatprep.subr.mxu0 0.0
    %2130 = vmatpush2.xpose.msra.mxu0 0.0
    %2131 = vmatprep.subr.mxu0 0.0
    %2132 = vmatpush2.xpose.msra.mxu0 0.0
    %2133 = vmatprep.subr.mxu0 0.0
    %2134 = vmatpush2.xpose.msra.mxu0 0.0
    %2135 = vmatprep.mubr.f32.mxu0 0.0
    %2136 = vmatmul.mubr.f32.gmra.mxu0 %v1963
    %v2137 = vpop.f32.mrf.mxu0
    %v2138 = vadd.f32 0.0, %v2137
    %v2139 = vpop.f32.mrf.mxu0
    %2140 = vdwg.mxu0
    %2141 = vmatprep.subr.mxu0 0.0
    %2142 = vmatpush1.xpose.msra.mxu0 0.0
    %2143 = vmatprep.subr.mxu0 0.0
    %2144 = vmatpush1.xpose.msra.mxu0 0.0
    %2145 = vmatprep.subr.mxu0 0.0
    %2146 = vmatpush1.xpose.msra.mxu0 0.0
    %2147 = vmatprep.subr.mxu0 0.0
    %2148 = vmatpush1.xpose.msra.mxu0 0.0
    %2149 = vmatprep.subr.mxu0 0.0
    %2150 = vmatpush1.xpose.msra.mxu0 0.0
    %2151 = vmatprep.subr.mxu0 0.0
    %2152 = vmatpush1.xpose.msra.mxu0 0.0
    %2153 = vmatprep.subr.mxu0 0.0
    %2154 = vmatpush1.xpose.msra.mxu0 0.0
    %2155 = vmatprep.subr.mxu0 0.0
    %2156 = vmatpush1.xpose.msra.mxu0 0.0
    %2157 = vmatprep.subr.mxu0 0.0
    %2158 = vmatpush1.xpose.msra.mxu0 0.0
    %2159 = vmatprep.subr.mxu0 0.0
    %2160 = vmatpush1.xpose.msra.mxu0 0.0
    %2161 = vmatprep.subr.mxu0 0.0
    %2162 = vmatpush1.xpose.msra.mxu0 0.0
    %2163 = vmatprep.subr.mxu0 0.0
    %2164 = vmatpush1.xpose.msra.mxu0 0.0
    %2165 = vmatprep.subr.mxu0 0.0
    %2166 = vmatpush1.xpose.msra.mxu0 0.0
    %2167 = vmatprep.subr.mxu0 0.0
    %2168 = vmatpush1.xpose.msra.mxu0 0.0
    %2169 = vmatprep.subr.mxu0 0.0
    %2170 = vmatpush1.xpose.msra.mxu0 0.0
    %2171 = vmatprep.subr.mxu0 0.0
    %2172 = vmatpush1.xpose.msra.mxu0 %v2068
    %2173 = vmatprep.subr.mxu0 0.0
    %2174 = vmatpush2.xpose.msra.mxu0 0.0
    %2175 = vmatprep.subr.mxu0 0.0
    %2176 = vmatpush2.xpose.msra.mxu0 0.0
    %2177 = vmatprep.subr.mxu0 0.0
    %2178 = vmatpush2.xpose.msra.mxu0 0.0
    %2179 = vmatprep.subr.mxu0 0.0
    %2180 = vmatpush2.xpose.msra.mxu0 0.0
    %2181 = vmatprep.subr.mxu0 0.0
    %2182 = vmatpush2.xpose.msra.mxu0 0.0
    %2183 = vmatprep.subr.mxu0 0.0
    %2184 = vmatpush2.xpose.msra.mxu0 0.0
    %2185 = vmatprep.subr.mxu0 0.0
    %2186 = vmatpush2.xpose.msra.mxu0 0.0
    %2187 = vmatprep.subr.mxu0 0.0
    %2188 = vmatpush2.xpose.msra.mxu0 0.0
    %2189 = vmatprep.subr.mxu0 0.0
    %2190 = vmatpush2.xpose.msra.mxu0 0.0
    %2191 = vmatprep.subr.mxu0 0.0
    %2192 = vmatpush2.xpose.msra.mxu0 0.0
    %2193 = vmatprep.subr.mxu0 0.0
    %2194 = vmatpush2.xpose.msra.mxu0 0.0
    %2195 = vmatprep.subr.mxu0 0.0
    %2196 = vmatpush2.xpose.msra.mxu0 0.0
    %2197 = vmatprep.subr.mxu0 0.0
    %2198 = vmatpush2.xpose.msra.mxu0 0.0
    %2199 = vmatprep.subr.mxu0 0.0
    %2200 = vmatpush2.xpose.msra.mxu0 0.0
    %2201 = vmatprep.subr.mxu0 0.0
    %2202 = vmatpush2.xpose.msra.mxu0 0.0
    %2203 = vmatprep.subr.mxu0 0.0
    %2204 = vmatpush2.xpose.msra.mxu0 0.0
    %2205 = vmatprep.mubr.f32.mxu0 0.0
    %2206 = vmatmul.mubr.f32.gmra.mxu0 %v1968
    %v2207 = vpop.f32.mrf.mxu0
    %v2208 = vadd.f32 0.0, %v2207
    %v2209 = vpop.f32.mrf.mxu0
    %2210 = vdwg.mxu0
    %v2211 = vmul.f32 %v2138, 0.125
    %v2212 = vmul.f32 %v2208, 0.125
    %v2214 = vsel %vm768, %v2211, 0
    %2216 = vmatprep.subr.mxu0 0.0
    %2217 = vmatpush1.msra.mxu0 0.0
    %2218 = vmatprep.subr.mxu0 0.0
    %2219 = vmatpush1.msra.mxu0 0.0
    %2220 = vmatprep.subr.mxu0 0.0
    %2221 = vmatpush1.msra.mxu0 0.0
    %2222 = vmatprep.subr.mxu0 0.0
    %2223 = vmatpush1.msra.mxu0 0.0
    %2224 = vmatprep.subr.mxu0 0.0
    %2225 = vmatpush1.msra.mxu0 0.0
    %2226 = vmatprep.subr.mxu0 0.0
    %2227 = vmatpush1.msra.mxu0 0.0
    %2228 = vmatprep.subr.mxu0 0.0
    %2229 = vmatpush1.msra.mxu0 0.0
    %2230 = vmatprep.subr.mxu0 0.0
    %2231 = vmatpush1.msra.mxu0 0.0
    %2232 = vmatprep.subr.mxu0 0.0
    %2233 = vmatpush1.msra.mxu0 0.0
    %2234 = vmatprep.subr.mxu0 0.0
    %2235 = vmatpush1.msra.mxu0 0.0
    %2236 = vmatprep.subr.mxu0 0.0
    %2237 = vmatpush1.msra.mxu0 0.0
    %2238 = vmatprep.subr.mxu0 0.0
    %2239 = vmatpush1.msra.mxu0 0.0
    %2240 = vmatprep.subr.mxu0 0.0
    %2241 = vmatpush1.msra.mxu0 0.0
    %2242 = vmatprep.subr.mxu0 0.0
    %2243 = vmatpush1.msra.mxu0 0.0
    %2244 = vmatprep.subr.mxu0 0.0
    %2245 = vmatpush1.msra.mxu0 0.0
    %2246 = vmatprep.subr.mxu0 0.0
    %2247 = vmatpush1.msra.mxu0 %v1863
    %2248 = vmatprep.subr.mxu0 0.0
    %2249 = vmatpush2.msra.mxu0 0.0
    %2250 = vmatprep.subr.mxu0 0.0
    %2251 = vmatpush2.msra.mxu0 0.0
    %2252 = vmatprep.subr.mxu0 0.0
    %2253 = vmatpush2.msra.mxu0 0.0
    %2254 = vmatprep.subr.mxu0 0.0
    %2255 = vmatpush2.msra.mxu0 0.0
    %2256 = vmatprep.subr.mxu0 0.0
    %2257 = vmatpush2.msra.mxu0 0.0
    %2258 = vmatprep.subr.mxu0 0.0
    %2259 = vmatpush2.msra.mxu0 0.0
    %2260 = vmatprep.subr.mxu0 0.0
    %2261 = vmatpush2.msra.mxu0 0.0
    %2262 = vmatprep.subr.mxu0 0.0
    %2263 = vmatpush2.msra.mxu0 0.0
    %2264 = vmatprep.subr.mxu0 0.0
    %2265 = vmatpush2.msra.mxu0 0.0
    %2266 = vmatprep.subr.mxu0 0.0
    %2267 = vmatpush2.msra.mxu0 0.0
    %2268 = vmatprep.subr.mxu0 0.0
    %2269 = vmatpush2.msra.mxu0 0.0
    %2270 = vmatprep.subr.mxu0 0.0
    %2271 = vmatpush2.msra.mxu0 0.0
    %2272 = vmatprep.subr.mxu0 0.0
    %2273 = vmatpush2.msra.mxu0 0.0
    %2274 = vmatprep.subr.mxu0 0.0
    %2275 = vmatpush2.msra.mxu0 0.0
    %2276 = vmatprep.subr.mxu0 0.0
    %2277 = vmatpush2.msra.mxu0 0.0
    %2278 = vmatprep.subr.mxu0 0.0
    %2279 = vmatpush2.msra.mxu0 0.0
    %2280 = vmatprep.mubr.f32.mxu0 0.0
    %2281 = vmatmul.mubr.f32.gmra.mxu0 %v2214
    %v2282 = vpop.f32.mrf.mxu0
    %v2283 = vadd.f32 0.0, %v2282
    %v2284 = vpop.f32.mrf.mxu0
    %2285 = vdwg.mxu0
    %v2287 = vsel %vm768, %v2212, 0
    %2289 = vmatprep.subr.mxu0 0.0
    %2290 = vmatpush1.msra.mxu0 0.0
    %2291 = vmatprep.subr.mxu0 0.0
    %2292 = vmatpush1.msra.mxu0 0.0
    %2293 = vmatprep.subr.mxu0 0.0
    %2294 = vmatpush1.msra.mxu0 0.0
    %2295 = vmatprep.subr.mxu0 0.0
    %2296 = vmatpush1.msra.mxu0 0.0
    %2297 = vmatprep.subr.mxu0 0.0
    %2298 = vmatpush1.msra.mxu0 0.0
    %2299 = vmatprep.subr.mxu0 0.0
    %2300 = vmatpush1.msra.mxu0 0.0
    %2301 = vmatprep.subr.mxu0 0.0
    %2302 = vmatpush1.msra.mxu0 0.0
    %2303 = vmatprep.subr.mxu0 0.0
    %2304 = vmatpush1.msra.mxu0 0.0
    %2305 = vmatprep.subr.mxu0 0.0
    %2306 = vmatpush1.msra.mxu0 0.0
    %2307 = vmatprep.subr.mxu0 0.0
    %2308 = vmatpush1.msra.mxu0 0.0
    %2309 = vmatprep.subr.mxu0 0.0
    %2310 = vmatpush1.msra.mxu0 0.0
    %2311 = vmatprep.subr.mxu0 0.0
    %2312 = vmatpush1.msra.mxu0 0.0
    %2313 = vmatprep.subr.mxu0 0.0
    %2314 = vmatpush1.msra.mxu0 0.0
    %2315 = vmatprep.subr.mxu0 0.0
    %2316 = vmatpush1.msra.mxu0 0.0
    %2317 = vmatprep.subr.mxu0 0.0
    %2318 = vmatpush1.msra.mxu0 0.0
    %2319 = vmatprep.subr.mxu0 0.0
    %2320 = vmatpush1.msra.mxu0 %v1868
    %2321 = vmatprep.subr.mxu0 0.0
    %2322 = vmatpush2.msra.mxu0 0.0
    %2323 = vmatprep.subr.mxu0 0.0
    %2324 = vmatpush2.msra.mxu0 0.0
    %2325 = vmatprep.subr.mxu0 0.0
    %2326 = vmatpush2.msra.mxu0 0.0
    %2327 = vmatprep.subr.mxu0 0.0
    %2328 = vmatpush2.msra.mxu0 0.0
    %2329 = vmatprep.subr.mxu0 0.0
    %2330 = vmatpush2.msra.mxu0 0.0
    %2331 = vmatprep.subr.mxu0 0.0
    %2332 = vmatpush2.msra.mxu0 0.0
    %2333 = vmatprep.subr.mxu0 0.0
    %2334 = vmatpush2.msra.mxu0 0.0
    %2335 = vmatprep.subr.mxu0 0.0
    %2336 = vmatpush2.msra.mxu0 0.0
    %2337 = vmatprep.subr.mxu0 0.0
    %2338 = vmatpush2.msra.mxu0 0.0
    %2339 = vmatprep.subr.mxu0 0.0
    %2340 = vmatpush2.msra.mxu0 0.0
    %2341 = vmatprep.subr.mxu0 0.0
    %2342 = vmatpush2.msra.mxu0 0.0
    %2343 = vmatprep.subr.mxu0 0.0
    %2344 = vmatpush2.msra.mxu0 0.0
    %2345 = vmatprep.subr.mxu0 0.0
    %2346 = vmatpush2.msra.mxu0 0.0
    %2347 = vmatprep.subr.mxu0 0.0
    %2348 = vmatpush2.msra.mxu0 0.0
    %2349 = vmatprep.subr.mxu0 0.0
    %2350 = vmatpush2.msra.mxu0 0.0
    %2351 = vmatprep.subr.mxu0 0.0
    %2352 = vmatpush2.msra.mxu0 0.0
    %2353 = vmatprep.mubr.f32.mxu0 0.0
    %2354 = vmatmul.mubr.f32.gmra.mxu0 %v2287
    %v2355 = vpop.f32.mrf.mxu0
    %v2356 = vadd.f32 0.0, %v2355
    %v2357 = vpop.f32.mrf.mxu0
    %2358 = vdwg.mxu0
    %s2359 = scalar_lea.vmem [#allocation13], 256
    %v2360 = vld [vmem:[%s2359] sm:$0xff]
    %v2361 = vld [vmem:[%s2359 + $0x8] sm:$0xff]
    %v2362 = vld [vmem:[%s2359 + $0x10] sm:$0xff]
    %v2363 = vld [vmem:[%s2359 + $0x18] sm:$0xff]
    %v2364 = vld [vmem:[%s2359 + $0x20] sm:$0xff]
    %v2365 = vld [vmem:[%s2359 + $0x28] sm:$0xff]
    %v2366 = vld [vmem:[%s2359 + $0x30] sm:$0xff]
    %v2367 = vld [vmem:[%s2359 + $0x38] sm:$0xff]
    %v2368 = vld [vmem:[%s2359 + $0x40] sm:$0xff]
    %v2369 = vld [vmem:[%s2359 + $0x48] sm:$0xff]
    %v2370 = vld [vmem:[%s2359 + $0x50] sm:$0xff]
    %v2371 = vld [vmem:[%s2359 + $0x58] sm:$0xff]
    %v2372 = vld [vmem:[%s2359 + $0x60] sm:$0xff]
    %v2373 = vld [vmem:[%s2359 + $0x68] sm:$0xff]
    %v2374 = vld [vmem:[%s2359 + $0x70] sm:$0xff]
    %v2375 = vld [vmem:[%s2359 + $0x78] sm:$0xff]
    %s2376 = scalar_lea.vmem %s10, 2
    %v2377 = vld [vmem:[%s2376] sm:$0x1]
    %v2379 = vlaneseq
    %v2380 = vshrl.u32 %v2379, 7
    %v2381 = vsub.s32 0, %v2380
    %v2382 = vrot.slane %v2377, %v2381
    %2384 = vmatprep.subr.mxu0 0.0
    %2385 = vmatpush1.msra.mxu0 %v2375
    %2386 = vmatprep.subr.mxu0 0.0
    %2387 = vmatpush1.msra.mxu0 %v2374
    %2388 = vmatprep.subr.mxu0 0.0
    %2389 = vmatpush1.msra.mxu0 %v2373
    %2390 = vmatprep.subr.mxu0 0.0
    %2391 = vmatpush1.msra.mxu0 %v2372
    %2392 = vmatprep.subr.mxu0 0.0
    %2393 = vmatpush1.msra.mxu0 %v2371
    %2394 = vmatprep.subr.mxu0 0.0
    %2395 = vmatpush1.msra.mxu0 %v2370
    %2396 = vmatprep.subr.mxu0 0.0
    %2397 = vmatpush1.msra.mxu0 %v2369
    %2398 = vmatprep.subr.mxu0 0.0
    %2399 = vmatpush1.msra.mxu0 %v2368
    %2400 = vmatprep.subr.mxu0 0.0
    %2401 = vmatpush1.msra.mxu0 %v2367
    %2402 = vmatprep.subr.mxu0 0.0
    %2403 = vmatpush1.msra.mxu0 %v2366
    %2404 = vmatprep.subr.mxu0 0.0
    %2405 = vmatpush1.msra.mxu0 %v2365
    %2406 = vmatprep.subr.mxu0 0.0
    %2407 = vmatpush1.msra.mxu0 %v2364
    %2408 = vmatprep.subr.mxu0 0.0
    %2409 = vmatpush1.msra.mxu0 %v2363
    %2410 = vmatprep.subr.mxu0 0.0
    %2411 = vmatpush1.msra.mxu0 %v2362
    %2412 = vmatprep.subr.mxu0 0.0
    %2413 = vmatpush1.msra.mxu0 %v2361
    %2414 = vmatprep.subr.mxu0 0.0
    %2415 = vmatpush1.msra.mxu0 %v2360
    %2416 = vmatprep.subr.mxu0 0.0
    %2417 = vmatpush2.msra.mxu0 0.0
    %2418 = vmatprep.subr.mxu0 0.0
    %2419 = vmatpush2.msra.mxu0 0.0
    %2420 = vmatprep.subr.mxu0 0.0
    %2421 = vmatpush2.msra.mxu0 0.0
    %2422 = vmatprep.subr.mxu0 0.0
    %2423 = vmatpush2.msra.mxu0 0.0
    %2424 = vmatprep.subr.mxu0 0.0
    %2425 = vmatpush2.msra.mxu0 0.0
    %2426 = vmatprep.subr.mxu0 0.0
    %2427 = vmatpush2.msra.mxu0 0.0
    %2428 = vmatprep.subr.mxu0 0.0
    %2429 = vmatpush2.msra.mxu0 0.0
    %2430 = vmatprep.subr.mxu0 0.0
    %2431 = vmatpush2.msra.mxu0 0.0
    %2432 = vmatprep.subr.mxu0 0.0
    %2433 = vmatpush2.msra.mxu0 0.0
    %2434 = vmatprep.subr.mxu0 0.0
    %2435 = vmatpush2.msra.mxu0 0.0
    %2436 = vmatprep.subr.mxu0 0.0
    %2437 = vmatpush2.msra.mxu0 0.0
    %2438 = vmatprep.subr.mxu0 0.0
    %2439 = vmatpush2.msra.mxu0 0.0
    %2440 = vmatprep.subr.mxu0 0.0
    %2441 = vmatpush2.msra.mxu0 0.0
    %2442 = vmatprep.subr.mxu0 0.0
    %2443 = vmatpush2.msra.mxu0 0.0
    %2444 = vmatprep.subr.mxu0 0.0
    %2445 = vmatpush2.msra.mxu0 0.0
    %2446 = vmatprep.subr.mxu0 0.0
    %2447 = vmatpush2.msra.mxu0 0.0
    %2448 = vmatprep.mubr.f32.mxu0 0.0
    %2449 = vmatmul.mubr.f32.gmra.mxu0 %v2283
    %v2450 = vpop.f32.mrf.mxu0
    %v2451 = vadd.f32 %v2382, %v2450
    %v2452 = vpop.f32.mrf.mxu0
    %2453 = vmatprep.mubr.f32.mxu0 0.0
    %2454 = vmatmul.mubr.f32.gmra.mxu0 %v2356
    %v2455 = vpop.f32.mrf.mxu0
    %v2456 = vadd.f32 %v2382, %v2455
    %v2457 = vpop.f32.mrf.mxu0
    %2458 = vdwg.mxu0
    %s2459 = scalar_lea.vmem %s11, 2
    %v2460 = vld [vmem:[%s2459] sm:$0x1]
    %s2461 = scalar_lea.vmem %s14, 2
    %v2462 = vld [vmem:[%s2461] sm:$0x1]
    %v2463 = vadd.f32 %v2462, 1e-05
    %v2464 = vrsqrt.pop %v2463
    %v2465 = vmul.f32 %v2460, %v2464
    %s2466 = scalar_lea.vmem [#allocation16], 2
    %v2467 = vld [vmem:[%s2466] sm:$0x1]
    %v2469 = vlaneseq
    %v2470 = vshrl.u32 %v2469, 7
    %v2471 = vsub.s32 0, %v2470
    %v2472 = vrot.slane %v2467, %v2471
    %v2474 = vsub.f32 %v2451, %v2472
    %v2475 = vsub.f32 %v2456, %v2472
    %v2477 = vlaneseq
    %v2478 = vshrl.u32 %v2477, 7
    %v2479 = vsub.s32 0, %v2478
    %v2480 = vrot.slane %v2465, %v2479
    %v2482 = vmul.f32 %v2474, %v2480
    %v2483 = vmul.f32 %v2475, %v2480
    %s2484 = scalar_lea.vmem [#allocation14], 2
    %v2485 = vld [vmem:[%s2484] sm:$0x1]
    %v2487 = vlaneseq
    %v2488 = vshrl.u32 %v2487, 7
    %v2489 = vsub.s32 0, %v2488
    %v2490 = vrot.slane %v2485, %v2489
    %v2492 = vadd.f32 %v2482, %v2490
    %v2493 = vadd.f32 %v2483, %v2490
    %v2494 = vadd.f32 %v2492, %v1769
    %v2495 = vadd.f32 %v2493, %v1770
    %s2496 = scalar_lea.vmem [#allocation8], 384
    %v2497 = vld [vmem:[%s2496] sm:$0xff]
    %v2498 = vld [vmem:[%s2496 + $0x8] sm:$0xff]
    %v2499 = vld [vmem:[%s2496 + $0x10] sm:$0xff]
    %v2500 = vld [vmem:[%s2496 + $0x18] sm:$0xff]
    %v2501 = vld [vmem:[%s2496 + $0x20] sm:$0xff]
    %v2502 = vld [vmem:[%s2496 + $0x28] sm:$0xff]
    %v2503 = vld [vmem:[%s2496 + $0x30] sm:$0xff]
    %v2504 = vld [vmem:[%s2496 + $0x38] sm:$0xff]
    %v2505 = vld [vmem:[%s2496 + $0x40] sm:$0xff]
    %v2506 = vld [vmem:[%s2496 + $0x48] sm:$0xff]
    %v2507 = vld [vmem:[%s2496 + $0x50] sm:$0xff]
    %v2508 = vld [vmem:[%s2496 + $0x58] sm:$0xff]
    %v2509 = vld [vmem:[%s2496 + $0x60] sm:$0xff]
    %v2510 = vld [vmem:[%s2496 + $0x68] sm:$0xff]
    %v2511 = vld [vmem:[%s2496 + $0x70] sm:$0xff]
    %v2512 = vld [vmem:[%s2496 + $0x78] sm:$0xff]
    %s2513 = scalar_lea.vmem %s4, 3
    %v2514 = vld [vmem:[%s2513] sm:$0x1]
    %v2516 = vlaneseq
    %v2517 = vshrl.u32 %v2516, 7
    %v2518 = vsub.s32 0, %v2517
    %v2519 = vrot.slane %v2514, %v2518
    %2521 = vmatprep.subr.mxu0 0.0
    %2522 = vmatpush1.msra.mxu0 %v2512
    %2523 = vmatprep.subr.mxu0 0.0
    %2524 = vmatpush1.msra.mxu0 %v2511
    %2525 = vmatprep.subr.mxu0 0.0
    %2526 = vmatpush1.msra.mxu0 %v2510
    %2527 = vmatprep.subr.mxu0 0.0
    %2528 = vmatpush1.msra.mxu0 %v2509
    %2529 = vmatprep.subr.mxu0 0.0
    %2530 = vmatpush1.msra.mxu0 %v2508
    %2531 = vmatprep.subr.mxu0 0.0
    %2532 = vmatpush1.msra.mxu0 %v2507
    %2533 = vmatprep.subr.mxu0 0.0
    %2534 = vmatpush1.msra.mxu0 %v2506
    %2535 = vmatprep.subr.mxu0 0.0
    %2536 = vmatpush1.msra.mxu0 %v2505
    %2537 = vmatprep.subr.mxu0 0.0
    %2538 = vmatpush1.msra.mxu0 %v2504
    %2539 = vmatprep.subr.mxu0 0.0
    %2540 = vmatpush1.msra.mxu0 %v2503
    %2541 = vmatprep.subr.mxu0 0.0
    %2542 = vmatpush1.msra.mxu0 %v2502
    %2543 = vmatprep.subr.mxu0 0.0
    %2544 = vmatpush1.msra.mxu0 %v2501
    %2545 = vmatprep.subr.mxu0 0.0
    %2546 = vmatpush1.msra.mxu0 %v2500
    %2547 = vmatprep.subr.mxu0 0.0
    %2548 = vmatpush1.msra.mxu0 %v2499
    %2549 = vmatprep.subr.mxu0 0.0
    %2550 = vmatpush1.msra.mxu0 %v2498
    %2551 = vmatprep.subr.mxu0 0.0
    %2552 = vmatpush1.msra.mxu0 %v2497
    %2553 = vmatprep.subr.mxu0 0.0
    %2554 = vmatpush2.msra.mxu0 0.0
    %2555 = vmatprep.subr.mxu0 0.0
    %2556 = vmatpush2.msra.mxu0 0.0
    %2557 = vmatprep.subr.mxu0 0.0
    %2558 = vmatpush2.msra.mxu0 0.0
    %2559 = vmatprep.subr.mxu0 0.0
    %2560 = vmatpush2.msra.mxu0 0.0
    %2561 = vmatprep.subr.mxu0 0.0
    %2562 = vmatpush2.msra.mxu0 0.0
    %2563 = vmatprep.subr.mxu0 0.0
    %2564 = vmatpush2.msra.mxu0 0.0
    %2565 = vmatprep.subr.mxu0 0.0
    %2566 = vmatpush2.msra.mxu0 0.0
    %2567 = vmatprep.subr.mxu0 0.0
    %2568 = vmatpush2.msra.mxu0 0.0
    %2569 = vmatprep.subr.mxu0 0.0
    %2570 = vmatpush2.msra.mxu0 0.0
    %2571 = vmatprep.subr.mxu0 0.0
    %2572 = vmatpush2.msra.mxu0 0.0
    %2573 = vmatprep.subr.mxu0 0.0
    %2574 = vmatpush2.msra.mxu0 0.0
    %2575 = vmatprep.subr.mxu0 0.0
    %2576 = vmatpush2.msra.mxu0 0.0
    %2577 = vmatprep.subr.mxu0 0.0
    %2578 = vmatpush2.msra.mxu0 0.0
    %2579 = vmatprep.subr.mxu0 0.0
    %2580 = vmatpush2.msra.mxu0 0.0
    %2581 = vmatprep.subr.mxu0 0.0
    %2582 = vmatpush2.msra.mxu0 0.0
    %2583 = vmatprep.subr.mxu0 0.0
    %2584 = vmatpush2.msra.mxu0 0.0
    %2585 = vmatprep.mubr.f32.mxu0 0.0
    %2586 = vmatmul.mubr.f32.gmra.mxu0 %v2494
    %v2587 = vpop.f32.mrf.mxu0
    %v2588 = vadd.f32 %v2519, %v2587
    %v2589 = vpop.f32.mrf.mxu0
    %2590 = vmatprep.mubr.f32.mxu0 0.0
    %2591 = vmatmul.mubr.f32.gmra.mxu0 %v2495
    %v2592 = vpop.f32.mrf.mxu0
    %v2593 = vadd.f32 %v2519, %v2592
    %v2594 = vpop.f32.mrf.mxu0
    %2595 = vdwg.mxu0
    %s2596 = scalar_lea.vmem [#allocation10], 384
    %v2597 = vld [vmem:[%s2596] sm:$0xff]
    %v2598 = vld [vmem:[%s2596 + $0x8] sm:$0xff]
    %v2599 = vld [vmem:[%s2596 + $0x10] sm:$0xff]
    %v2600 = vld [vmem:[%s2596 + $0x18] sm:$0xff]
    %v2601 = vld [vmem:[%s2596 + $0x20] sm:$0xff]
    %v2602 = vld [vmem:[%s2596 + $0x28] sm:$0xff]
    %v2603 = vld [vmem:[%s2596 + $0x30] sm:$0xff]
    %v2604 = vld [vmem:[%s2596 + $0x38] sm:$0xff]
    %v2605 = vld [vmem:[%s2596 + $0x40] sm:$0xff]
    %v2606 = vld [vmem:[%s2596 + $0x48] sm:$0xff]
    %v2607 = vld [vmem:[%s2596 + $0x50] sm:$0xff]
    %v2608 = vld [vmem:[%s2596 + $0x58] sm:$0xff]
    %v2609 = vld [vmem:[%s2596 + $0x60] sm:$0xff]
    %v2610 = vld [vmem:[%s2596 + $0x68] sm:$0xff]
    %v2611 = vld [vmem:[%s2596 + $0x70] sm:$0xff]
    %v2612 = vld [vmem:[%s2596 + $0x78] sm:$0xff]
    %s2613 = scalar_lea.vmem %s6, 3
    %v2614 = vld [vmem:[%s2613] sm:$0x1]
    %v2616 = vlaneseq
    %v2617 = vshrl.u32 %v2616, 7
    %v2618 = vsub.s32 0, %v2617
    %v2619 = vrot.slane %v2614, %v2618
    %2621 = vmatprep.subr.mxu0 0.0
    %2622 = vmatpush1.msra.mxu0 %v2612
    %2623 = vmatprep.subr.mxu0 0.0
    %2624 = vmatpush1.msra.mxu0 %v2611
    %2625 = vmatprep.subr.mxu0 0.0
    %2626 = vmatpush1.msra.mxu0 %v2610
    %2627 = vmatprep.subr.mxu0 0.0
    %2628 = vmatpush1.msra.mxu0 %v2609
    %2629 = vmatprep.subr.mxu0 0.0
    %2630 = vmatpush1.msra.mxu0 %v2608
    %2631 = vmatprep.subr.mxu0 0.0
    %2632 = vmatpush1.msra.mxu0 %v2607
    %2633 = vmatprep.subr.mxu0 0.0
    %2634 = vmatpush1.msra.mxu0 %v2606
    %2635 = vmatprep.subr.mxu0 0.0
    %2636 = vmatpush1.msra.mxu0 %v2605
    %2637 = vmatprep.subr.mxu0 0.0
    %2638 = vmatpush1.msra.mxu0 %v2604
    %2639 = vmatprep.subr.mxu0 0.0
    %2640 = vmatpush1.msra.mxu0 %v2603
    %2641 = vmatprep.subr.mxu0 0.0
    %2642 = vmatpush1.msra.mxu0 %v2602
    %2643 = vmatprep.subr.mxu0 0.0
    %2644 = vmatpush1.msra.mxu0 %v2601
    %2645 = vmatprep.subr.mxu0 0.0
    %2646 = vmatpush1.msra.mxu0 %v2600
    %2647 = vmatprep.subr.mxu0 0.0
    %2648 = vmatpush1.msra.mxu0 %v2599
    %2649 = vmatprep.subr.mxu0 0.0
    %2650 = vmatpush1.msra.mxu0 %v2598
    %2651 = vmatprep.subr.mxu0 0.0
    %2652 = vmatpush1.msra.mxu0 %v2597
    %2653 = vmatprep.subr.mxu0 0.0
    %2654 = vmatpush2.msra.mxu0 0.0
    %2655 = vmatprep.subr.mxu0 0.0
    %2656 = vmatpush2.msra.mxu0 0.0
    %2657 = vmatprep.subr.mxu0 0.0
    %2658 = vmatpush2.msra.mxu0 0.0
    %2659 = vmatprep.subr.mxu0 0.0
    %2660 = vmatpush2.msra.mxu0 0.0
    %2661 = vmatprep.subr.mxu0 0.0
    %2662 = vmatpush2.msra.mxu0 0.0
    %2663 = vmatprep.subr.mxu0 0.0
    %2664 = vmatpush2.msra.mxu0 0.0
    %2665 = vmatprep.subr.mxu0 0.0
    %2666 = vmatpush2.msra.mxu0 0.0
    %2667 = vmatprep.subr.mxu0 0.0
    %2668 = vmatpush2.msra.mxu0 0.0
    %2669 = vmatprep.subr.mxu0 0.0
    %2670 = vmatpush2.msra.mxu0 0.0
    %2671 = vmatprep.subr.mxu0 0.0
    %2672 = vmatpush2.msra.mxu0 0.0
    %2673 = vmatprep.subr.mxu0 0.0
    %2674 = vmatpush2.msra.mxu0 0.0
    %2675 = vmatprep.subr.mxu0 0.0
    %2676 = vmatpush2.msra.mxu0 0.0
    %2677 = vmatprep.subr.mxu0 0.0
    %2678 = vmatpush2.msra.mxu0 0.0
    %2679 = vmatprep.subr.mxu0 0.0
    %2680 = vmatpush2.msra.mxu0 0.0
    %2681 = vmatprep.subr.mxu0 0.0
    %2682 = vmatpush2.msra.mxu0 0.0
    %2683 = vmatprep.subr.mxu0 0.0
    %2684 = vmatpush2.msra.mxu0 0.0
    %2685 = vmatprep.mubr.f32.mxu0 0.0
    %2686 = vmatmul.mubr.f32.gmra.mxu0 %v2494
    %v2687 = vpop.f32.mrf.mxu0
    %v2688 = vadd.f32 %v2619, %v2687
    %v2689 = vpop.f32.mrf.mxu0
    %2690 = vmatprep.mubr.f32.mxu0 0.0
    %2691 = vmatmul.mubr.f32.gmra.mxu0 %v2495
    %v2692 = vpop.f32.mrf.mxu0
    %v2693 = vadd.f32 %v2619, %v2692
    %v2694 = vpop.f32.mrf.mxu0
    %2695 = vdwg.mxu0
    %s2696 = scalar_lea.vmem [#allocation11], 384
    %v2697 = vld [vmem:[%s2696] sm:$0xff]
    %v2698 = vld [vmem:[%s2696 + $0x8] sm:$0xff]
    %v2699 = vld [vmem:[%s2696 + $0x10] sm:$0xff]
    %v2700 = vld [vmem:[%s2696 + $0x18] sm:$0xff]
    %v2701 = vld [vmem:[%s2696 + $0x20] sm:$0xff]
    %v2702 = vld [vmem:[%s2696 + $0x28] sm:$0xff]
    %v2703 = vld [vmem:[%s2696 + $0x30] sm:$0xff]
    %v2704 = vld [vmem:[%s2696 + $0x38] sm:$0xff]
    %v2705 = vld [vmem:[%s2696 + $0x40] sm:$0xff]
    %v2706 = vld [vmem:[%s2696 + $0x48] sm:$0xff]
    %v2707 = vld [vmem:[%s2696 + $0x50] sm:$0xff]
    %v2708 = vld [vmem:[%s2696 + $0x58] sm:$0xff]
    %v2709 = vld [vmem:[%s2696 + $0x60] sm:$0xff]
    %v2710 = vld [vmem:[%s2696 + $0x68] sm:$0xff]
    %v2711 = vld [vmem:[%s2696 + $0x70] sm:$0xff]
    %v2712 = vld [vmem:[%s2696 + $0x78] sm:$0xff]
    %s2713 = scalar_lea.vmem %s8, 3
    %v2714 = vld [vmem:[%s2713] sm:$0x1]
    %v2716 = vlaneseq
    %v2717 = vshrl.u32 %v2716, 7
    %v2718 = vsub.s32 0, %v2717
    %v2719 = vrot.slane %v2714, %v2718
    %2721 = vmatprep.subr.mxu0 0.0
    %2722 = vmatpush1.msra.mxu0 %v2712
    %2723 = vmatprep.subr.mxu0 0.0
    %2724 = vmatpush1.msra.mxu0 %v2711
    %2725 = vmatprep.subr.mxu0 0.0
    %2726 = vmatpush1.msra.mxu0 %v2710
    %2727 = vmatprep.subr.mxu0 0.0
    %2728 = vmatpush1.msra.mxu0 %v2709
    %2729 = vmatprep.subr.mxu0 0.0
    %2730 = vmatpush1.msra.mxu0 %v2708
    %2731 = vmatprep.subr.mxu0 0.0
    %2732 = vmatpush1.msra.mxu0 %v2707
    %2733 = vmatprep.subr.mxu0 0.0
    %2734 = vmatpush1.msra.mxu0 %v2706
    %2735 = vmatprep.subr.mxu0 0.0
    %2736 = vmatpush1.msra.mxu0 %v2705
    %2737 = vmatprep.subr.mxu0 0.0
    %2738 = vmatpush1.msra.mxu0 %v2704
    %2739 = vmatprep.subr.mxu0 0.0
    %2740 = vmatpush1.msra.mxu0 %v2703
    %2741 = vmatprep.subr.mxu0 0.0
    %2742 = vmatpush1.msra.mxu0 %v2702
    %2743 = vmatprep.subr.mxu0 0.0
    %2744 = vmatpush1.msra.mxu0 %v2701
    %2745 = vmatprep.subr.mxu0 0.0
    %2746 = vmatpush1.msra.mxu0 %v2700
    %2747 = vmatprep.subr.mxu0 0.0
    %2748 = vmatpush1.msra.mxu0 %v2699
    %2749 = vmatprep.subr.mxu0 0.0
    %2750 = vmatpush1.msra.mxu0 %v2698
    %2751 = vmatprep.subr.mxu0 0.0
    %2752 = vmatpush1.msra.mxu0 %v2697
    %2753 = vmatprep.subr.mxu0 0.0
    %2754 = vmatpush2.msra.mxu0 0.0
    %2755 = vmatprep.subr.mxu0 0.0
    %2756 = vmatpush2.msra.mxu0 0.0
    %2757 = vmatprep.subr.mxu0 0.0
    %2758 = vmatpush2.msra.mxu0 0.0
    %2759 = vmatprep.subr.mxu0 0.0
    %2760 = vmatpush2.msra.mxu0 0.0
    %2761 = vmatprep.subr.mxu0 0.0
    %2762 = vmatpush2.msra.mxu0 0.0
    %2763 = vmatprep.subr.mxu0 0.0
    %2764 = vmatpush2.msra.mxu0 0.0
    %2765 = vmatprep.subr.mxu0 0.0
    %2766 = vmatpush2.msra.mxu0 0.0
    %2767 = vmatprep.subr.mxu0 0.0
    %2768 = vmatpush2.msra.mxu0 0.0
    %2769 = vmatprep.subr.mxu0 0.0
    %2770 = vmatpush2.msra.mxu0 0.0
    %2771 = vmatprep.subr.mxu0 0.0
    %2772 = vmatpush2.msra.mxu0 0.0
    %2773 = vmatprep.subr.mxu0 0.0
    %2774 = vmatpush2.msra.mxu0 0.0
    %2775 = vmatprep.subr.mxu0 0.0
    %2776 = vmatpush2.msra.mxu0 0.0
    %2777 = vmatprep.subr.mxu0 0.0
    %2778 = vmatpush2.msra.mxu0 0.0
    %2779 = vmatprep.subr.mxu0 0.0
    %2780 = vmatpush2.msra.mxu0 0.0
    %2781 = vmatprep.subr.mxu0 0.0
    %2782 = vmatpush2.msra.mxu0 0.0
    %2783 = vmatprep.subr.mxu0 0.0
    %2784 = vmatpush2.msra.mxu0 0.0
    %2785 = vmatprep.mubr.f32.mxu0 0.0
    %2786 = vmatmul.mubr.f32.gmra.mxu0 %v2494
    %v2787 = vpop.f32.mrf.mxu0
    %v2788 = vadd.f32 %v2719, %v2787
    %v2789 = vpop.f32.mrf.mxu0
    %2790 = vmatprep.mubr.f32.mxu0 0.0
    %2791 = vmatmul.mubr.f32.gmra.mxu0 %v2495
    %v2792 = vpop.f32.mrf.mxu0
    %v2793 = vadd.f32 %v2719, %v2792
    %v2794 = vpop.f32.mrf.mxu0
    %2795 = vdwg.mxu0
    %2796 = vmatprep.subr.mxu0 0.0
    %2797 = vmatpush1.xpose.msra.mxu0 0.0
    %2798 = vmatprep.subr.mxu0 0.0
    %2799 = vmatpush1.xpose.msra.mxu0 0.0
    %2800 = vmatprep.subr.mxu0 0.0
    %2801 = vmatpush1.xpose.msra.mxu0 0.0
    %2802 = vmatprep.subr.mxu0 0.0
    %2803 = vmatpush1.xpose.msra.mxu0 0.0
    %2804 = vmatprep.subr.mxu0 0.0
    %2805 = vmatpush1.xpose.msra.mxu0 0.0
    %2806 = vmatprep.subr.mxu0 0.0
    %2807 = vmatpush1.xpose.msra.mxu0 0.0
    %2808 = vmatprep.subr.mxu0 0.0
    %2809 = vmatpush1.xpose.msra.mxu0 0.0
    %2810 = vmatprep.subr.mxu0 0.0
    %2811 = vmatpush1.xpose.msra.mxu0 0.0
    %2812 = vmatprep.subr.mxu0 0.0
    %2813 = vmatpush1.xpose.msra.mxu0 0.0
    %2814 = vmatprep.subr.mxu0 0.0
    %2815 = vmatpush1.xpose.msra.mxu0 0.0
    %2816 = vmatprep.subr.mxu0 0.0
    %2817 = vmatpush1.xpose.msra.mxu0 0.0
    %2818 = vmatprep.subr.mxu0 0.0
    %2819 = vmatpush1.xpose.msra.mxu0 0.0
    %2820 = vmatprep.subr.mxu0 0.0
    %2821 = vmatpush1.xpose.msra.mxu0 0.0
    %2822 = vmatprep.subr.mxu0 0.0
    %2823 = vmatpush1.xpose.msra.mxu0 0.0
    %2824 = vmatprep.subr.mxu0 0.0
    %2825 = vmatpush1.xpose.msra.mxu0 0.0
    %2826 = vmatprep.subr.mxu0 0.0
    %2827 = vmatpush1.xpose.msra.mxu0 %v2788
    %2828 = vmatprep.subr.mxu0 0.0
    %2829 = vmatpush2.xpose.msra.mxu0 0.0
    %2830 = vmatprep.subr.mxu0 0.0
    %2831 = vmatpush2.xpose.msra.mxu0 0.0
    %2832 = vmatprep.subr.mxu0 0.0
    %2833 = vmatpush2.xpose.msra.mxu0 0.0
    %2834 = vmatprep.subr.mxu0 0.0
    %2835 = vmatpush2.xpose.msra.mxu0 0.0
    %2836 = vmatprep.subr.mxu0 0.0
    %2837 = vmatpush2.xpose.msra.mxu0 0.0
    %2838 = vmatprep.subr.mxu0 0.0
    %2839 = vmatpush2.xpose.msra.mxu0 0.0
    %2840 = vmatprep.subr.mxu0 0.0
    %2841 = vmatpush2.xpose.msra.mxu0 0.0
    %2842 = vmatprep.subr.mxu0 0.0
    %2843 = vmatpush2.xpose.msra.mxu0 0.0
    %2844 = vmatprep.subr.mxu0 0.0
    %2845 = vmatpush2.xpose.msra.mxu0 0.0
    %2846 = vmatprep.subr.mxu0 0.0
    %2847 = vmatpush2.xpose.msra.mxu0 0.0
    %2848 = vmatprep.subr.mxu0 0.0
    %2849 = vmatpush2.xpose.msra.mxu0 0.0
    %2850 = vmatprep.subr.mxu0 0.0
    %2851 = vmatpush2.xpose.msra.mxu0 0.0
    %2852 = vmatprep.subr.mxu0 0.0
    %2853 = vmatpush2.xpose.msra.mxu0 0.0
    %2854 = vmatprep.subr.mxu0 0.0
    %2855 = vmatpush2.xpose.msra.mxu0 0.0
    %2856 = vmatprep.subr.mxu0 0.0
    %2857 = vmatpush2.xpose.msra.mxu0 0.0
    %2858 = vmatprep.subr.mxu0 0.0
    %2859 = vmatpush2.xpose.msra.mxu0 0.0
    %2860 = vmatprep.mubr.f32.mxu0 0.0
    %2861 = vmatmul.mubr.f32.gmra.mxu0 %v2688
    %v2862 = vpop.f32.mrf.mxu0
    %v2863 = vadd.f32 0.0, %v2862
    %v2864 = vpop.f32.mrf.mxu0
    %2865 = vdwg.mxu0
    %2866 = vmatprep.subr.mxu0 0.0
    %2867 = vmatpush1.xpose.msra.mxu0 0.0
    %2868 = vmatprep.subr.mxu0 0.0
    %2869 = vmatpush1.xpose.msra.mxu0 0.0
    %2870 = vmatprep.subr.mxu0 0.0
    %2871 = vmatpush1.xpose.msra.mxu0 0.0
    %2872 = vmatprep.subr.mxu0 0.0
    %2873 = vmatpush1.xpose.msra.mxu0 0.0
    %2874 = vmatprep.subr.mxu0 0.0
    %2875 = vmatpush1.xpose.msra.mxu0 0.0
    %2876 = vmatprep.subr.mxu0 0.0
    %2877 = vmatpush1.xpose.msra.mxu0 0.0
    %2878 = vmatprep.subr.mxu0 0.0
    %2879 = vmatpush1.xpose.msra.mxu0 0.0
    %2880 = vmatprep.subr.mxu0 0.0
    %2881 = vmatpush1.xpose.msra.mxu0 0.0
    %2882 = vmatprep.subr.mxu0 0.0
    %2883 = vmatpush1.xpose.msra.mxu0 0.0
    %2884 = vmatprep.subr.mxu0 0.0
    %2885 = vmatpush1.xpose.msra.mxu0 0.0
    %2886 = vmatprep.subr.mxu0 0.0
    %2887 = vmatpush1.xpose.msra.mxu0 0.0
    %2888 = vmatprep.subr.mxu0 0.0
    %2889 = vmatpush1.xpose.msra.mxu0 0.0
    %2890 = vmatprep.subr.mxu0 0.0
    %2891 = vmatpush1.xpose.msra.mxu0 0.0
    %2892 = vmatprep.subr.mxu0 0.0
    %2893 = vmatpush1.xpose.msra.mxu0 0.0
    %2894 = vmatprep.subr.mxu0 0.0
    %2895 = vmatpush1.xpose.msra.mxu0 0.0
    %2896 = vmatprep.subr.mxu0 0.0
    %2897 = vmatpush1.xpose.msra.mxu0 %v2793
    %2898 = vmatprep.subr.mxu0 0.0
    %2899 = vmatpush2.xpose.msra.mxu0 0.0
    %2900 = vmatprep.subr.mxu0 0.0
    %2901 = vmatpush2.xpose.msra.mxu0 0.0
    %2902 = vmatprep.subr.mxu0 0.0
    %2903 = vmatpush2.xpose.msra.mxu0 0.0
    %2904 = vmatprep.subr.mxu0 0.0
    %2905 = vmatpush2.xpose.msra.mxu0 0.0
    %2906 = vmatprep.subr.mxu0 0.0
    %2907 = vmatpush2.xpose.msra.mxu0 0.0
    %2908 = vmatprep.subr.mxu0 0.0
    %2909 = vmatpush2.xpose.msra.mxu0 0.0
    %2910 = vmatprep.subr.mxu0 0.0
    %2911 = vmatpush2.xpose.msra.mxu0 0.0
    %2912 = vmatprep.subr.mxu0 0.0
    %2913 = vmatpush2.xpose.msra.mxu0 0.0
    %2914 = vmatprep.subr.mxu0 0.0
    %2915 = vmatpush2.xpose.msra.mxu0 0.0
    %2916 = vmatprep.subr.mxu0 0.0
    %2917 = vmatpush2.xpose.msra.mxu0 0.0
    %2918 = vmatprep.subr.mxu0 0.0
    %2919 = vmatpush2.xpose.msra.mxu0 0.0
    %2920 = vmatprep.subr.mxu0 0.0
    %2921 = vmatpush2.xpose.msra.mxu0 0.0
    %2922 = vmatprep.subr.mxu0 0.0
    %2923 = vmatpush2.xpose.msra.mxu0 0.0
    %2924 = vmatprep.subr.mxu0 0.0
    %2925 = vmatpush2.xpose.msra.mxu0 0.0
    %2926 = vmatprep.subr.mxu0 0.0
    %2927 = vmatpush2.xpose.msra.mxu0 0.0
    %2928 = vmatprep.subr.mxu0 0.0
    %2929 = vmatpush2.xpose.msra.mxu0 0.0
    %2930 = vmatprep.mubr.f32.mxu0 0.0
    %2931 = vmatmul.mubr.f32.gmra.mxu0 %v2693
    %v2932 = vpop.f32.mrf.mxu0
    %v2933 = vadd.f32 0.0, %v2932
    %v2934 = vpop.f32.mrf.mxu0
    %2935 = vdwg.mxu0
    %v2936 = vmul.f32 %v2863, 0.125
    %v2937 = vmul.f32 %v2933, 0.125
    %v2939 = vsel %vm768, %v2936, 0
    %2941 = vmatprep.subr.mxu0 0.0
    %2942 = vmatpush1.msra.mxu0 0.0
    %2943 = vmatprep.subr.mxu0 0.0
    %2944 = vmatpush1.msra.mxu0 0.0
    %2945 = vmatprep.subr.mxu0 0.0
    %2946 = vmatpush1.msra.mxu0 0.0
    %2947 = vmatprep.subr.mxu0 0.0
    %2948 = vmatpush1.msra.mxu0 0.0
    %2949 = vmatprep.subr.mxu0 0.0
    %2950 = vmatpush1.msra.mxu0 0.0
    %2951 = vmatprep.subr.mxu0 0.0
    %2952 = vmatpush1.msra.mxu0 0.0
    %2953 = vmatprep.subr.mxu0 0.0
    %2954 = vmatpush1.msra.mxu0 0.0
    %2955 = vmatprep.subr.mxu0 0.0
    %2956 = vmatpush1.msra.mxu0 0.0
    %2957 = vmatprep.subr.mxu0 0.0
    %2958 = vmatpush1.msra.mxu0 0.0
    %2959 = vmatprep.subr.mxu0 0.0
    %2960 = vmatpush1.msra.mxu0 0.0
    %2961 = vmatprep.subr.mxu0 0.0
    %2962 = vmatpush1.msra.mxu0 0.0
    %2963 = vmatprep.subr.mxu0 0.0
    %2964 = vmatpush1.msra.mxu0 0.0
    %2965 = vmatprep.subr.mxu0 0.0
    %2966 = vmatpush1.msra.mxu0 0.0
    %2967 = vmatprep.subr.mxu0 0.0
    %2968 = vmatpush1.msra.mxu0 0.0
    %2969 = vmatprep.subr.mxu0 0.0
    %2970 = vmatpush1.msra.mxu0 0.0
    %2971 = vmatprep.subr.mxu0 0.0
    %2972 = vmatpush1.msra.mxu0 %v2588
    %2973 = vmatprep.subr.mxu0 0.0
    %2974 = vmatpush2.msra.mxu0 0.0
    %2975 = vmatprep.subr.mxu0 0.0
    %2976 = vmatpush2.msra.mxu0 0.0
    %2977 = vmatprep.subr.mxu0 0.0
    %2978 = vmatpush2.msra.mxu0 0.0
    %2979 = vmatprep.subr.mxu0 0.0
    %2980 = vmatpush2.msra.mxu0 0.0
    %2981 = vmatprep.subr.mxu0 0.0
    %2982 = vmatpush2.msra.mxu0 0.0
    %2983 = vmatprep.subr.mxu0 0.0
    %2984 = vmatpush2.msra.mxu0 0.0
    %2985 = vmatprep.subr.mxu0 0.0
    %2986 = vmatpush2.msra.mxu0 0.0
    %2987 = vmatprep.subr.mxu0 0.0
    %2988 = vmatpush2.msra.mxu0 0.0
    %2989 = vmatprep.subr.mxu0 0.0
    %2990 = vmatpush2.msra.mxu0 0.0
    %2991 = vmatprep.subr.mxu0 0.0
    %2992 = vmatpush2.msra.mxu0 0.0
    %2993 = vmatprep.subr.mxu0 0.0
    %2994 = vmatpush2.msra.mxu0 0.0
    %2995 = vmatprep.subr.mxu0 0.0
    %2996 = vmatpush2.msra.mxu0 0.0
    %2997 = vmatprep.subr.mxu0 0.0
    %2998 = vmatpush2.msra.mxu0 0.0
    %2999 = vmatprep.subr.mxu0 0.0
    %3000 = vmatpush2.msra.mxu0 0.0
    %3001 = vmatprep.subr.mxu0 0.0
    %3002 = vmatpush2.msra.mxu0 0.0
    %3003 = vmatprep.subr.mxu0 0.0
    %3004 = vmatpush2.msra.mxu0 0.0
    %3005 = vmatprep.mubr.f32.mxu0 0.0
    %3006 = vmatmul.mubr.f32.gmra.mxu0 %v2939
    %v3007 = vpop.f32.mrf.mxu0
    %v3008 = vadd.f32 0.0, %v3007
    %v3009 = vpop.f32.mrf.mxu0
    %3010 = vdwg.mxu0
    %v3012 = vsel %vm768, %v2937, 0
    %3014 = vmatprep.subr.mxu0 0.0
    %3015 = vmatpush1.msra.mxu0 0.0
    %3016 = vmatprep.subr.mxu0 0.0
    %3017 = vmatpush1.msra.mxu0 0.0
    %3018 = vmatprep.subr.mxu0 0.0
    %3019 = vmatpush1.msra.mxu0 0.0
    %3020 = vmatprep.subr.mxu0 0.0
    %3021 = vmatpush1.msra.mxu0 0.0
    %3022 = vmatprep.subr.mxu0 0.0
    %3023 = vmatpush1.msra.mxu0 0.0
    %3024 = vmatprep.subr.mxu0 0.0
    %3025 = vmatpush1.msra.mxu0 0.0
    %3026 = vmatprep.subr.mxu0 0.0
    %3027 = vmatpush1.msra.mxu0 0.0
    %3028 = vmatprep.subr.mxu0 0.0
    %3029 = vmatpush1.msra.mxu0 0.0
    %3030 = vmatprep.subr.mxu0 0.0
    %3031 = vmatpush1.msra.mxu0 0.0
    %3032 = vmatprep.subr.mxu0 0.0
    %3033 = vmatpush1.msra.mxu0 0.0
    %3034 = vmatprep.subr.mxu0 0.0
    %3035 = vmatpush1.msra.mxu0 0.0
    %3036 = vmatprep.subr.mxu0 0.0
    %3037 = vmatpush1.msra.mxu0 0.0
    %3038 = vmatprep.subr.mxu0 0.0
    %3039 = vmatpush1.msra.mxu0 0.0
    %3040 = vmatprep.subr.mxu0 0.0
    %3041 = vmatpush1.msra.mxu0 0.0
    %3042 = vmatprep.subr.mxu0 0.0
    %3043 = vmatpush1.msra.mxu0 0.0
    %3044 = vmatprep.subr.mxu0 0.0
    %3045 = vmatpush1.msra.mxu0 %v2593
    %3046 = vmatprep.subr.mxu0 0.0
    %3047 = vmatpush2.msra.mxu0 0.0
    %3048 = vmatprep.subr.mxu0 0.0
    %3049 = vmatpush2.msra.mxu0 0.0
    %3050 = vmatprep.subr.mxu0 0.0
    %3051 = vmatpush2.msra.mxu0 0.0
    %3052 = vmatprep.subr.mxu0 0.0
    %3053 = vmatpush2.msra.mxu0 0.0
    %3054 = vmatprep.subr.mxu0 0.0
    %3055 = vmatpush2.msra.mxu0 0.0
    %3056 = vmatprep.subr.mxu0 0.0
    %3057 = vmatpush2.msra.mxu0 0.0
    %3058 = vmatprep.subr.mxu0 0.0
    %3059 = vmatpush2.msra.mxu0 0.0
    %3060 = vmatprep.subr.mxu0 0.0
    %3061 = vmatpush2.msra.mxu0 0.0
    %3062 = vmatprep.subr.mxu0 0.0
    %3063 = vmatpush2.msra.mxu0 0.0
    %3064 = vmatprep.subr.mxu0 0.0
    %3065 = vmatpush2.msra.mxu0 0.0
    %3066 = vmatprep.subr.mxu0 0.0
    %3067 = vmatpush2.msra.mxu0 0.0
    %3068 = vmatprep.subr.mxu0 0.0
    %3069 = vmatpush2.msra.mxu0 0.0
    %3070 = vmatprep.subr.mxu0 0.0
    %3071 = vmatpush2.msra.mxu0 0.0
    %3072 = vmatprep.subr.mxu0 0.0
    %3073 = vmatpush2.msra.mxu0 0.0
    %3074 = vmatprep.subr.mxu0 0.0
    %3075 = vmatpush2.msra.mxu0 0.0
    %3076 = vmatprep.subr.mxu0 0.0
    %3077 = vmatpush2.msra.mxu0 0.0
    %3078 = vmatprep.mubr.f32.mxu0 0.0
    %3079 = vmatmul.mubr.f32.gmra.mxu0 %v3012
    %v3080 = vpop.f32.mrf.mxu0
    %v3081 = vadd.f32 0.0, %v3080
    %v3082 = vpop.f32.mrf.mxu0
    %3083 = vdwg.mxu0
    %s3084 = scalar_lea.vmem [#allocation13], 384
    %v3085 = vld [vmem:[%s3084] sm:$0xff]
    %v3086 = vld [vmem:[%s3084 + $0x8] sm:$0xff]
    %v3087 = vld [vmem:[%s3084 + $0x10] sm:$0xff]
    %v3088 = vld [vmem:[%s3084 + $0x18] sm:$0xff]
    %v3089 = vld [vmem:[%s3084 + $0x20] sm:$0xff]
    %v3090 = vld [vmem:[%s3084 + $0x28] sm:$0xff]
    %v3091 = vld [vmem:[%s3084 + $0x30] sm:$0xff]
    %v3092 = vld [vmem:[%s3084 + $0x38] sm:$0xff]
    %v3093 = vld [vmem:[%s3084 + $0x40] sm:$0xff]
    %v3094 = vld [vmem:[%s3084 + $0x48] sm:$0xff]
    %v3095 = vld [vmem:[%s3084 + $0x50] sm:$0xff]
    %v3096 = vld [vmem:[%s3084 + $0x58] sm:$0xff]
    %v3097 = vld [vmem:[%s3084 + $0x60] sm:$0xff]
    %v3098 = vld [vmem:[%s3084 + $0x68] sm:$0xff]
    %v3099 = vld [vmem:[%s3084 + $0x70] sm:$0xff]
    %v3100 = vld [vmem:[%s3084 + $0x78] sm:$0xff]
    %s3101 = scalar_lea.vmem %s10, 3
    %v3102 = vld [vmem:[%s3101] sm:$0x1]
    %v3104 = vlaneseq
    %v3105 = vshrl.u32 %v3104, 7
    %v3106 = vsub.s32 0, %v3105
    %v3107 = vrot.slane %v3102, %v3106
    %3109 = vmatprep.subr.mxu0 0.0
    %3110 = vmatpush1.msra.mxu0 %v3100
    %3111 = vmatprep.subr.mxu0 0.0
    %3112 = vmatpush1.msra.mxu0 %v3099
    %3113 = vmatprep.subr.mxu0 0.0
    %3114 = vmatpush1.msra.mxu0 %v3098
    %3115 = vmatprep.subr.mxu0 0.0
    %3116 = vmatpush1.msra.mxu0 %v3097
    %3117 = vmatprep.subr.mxu0 0.0
    %3118 = vmatpush1.msra.mxu0 %v3096
    %3119 = vmatprep.subr.mxu0 0.0
    %3120 = vmatpush1.msra.mxu0 %v3095
    %3121 = vmatprep.subr.mxu0 0.0
    %3122 = vmatpush1.msra.mxu0 %v3094
    %3123 = vmatprep.subr.mxu0 0.0
    %3124 = vmatpush1.msra.mxu0 %v3093
    %3125 = vmatprep.subr.mxu0 0.0
    %3126 = vmatpush1.msra.mxu0 %v3092
    %3127 = vmatprep.subr.mxu0 0.0
    %3128 = vmatpush1.msra.mxu0 %v3091
    %3129 = vmatprep.subr.mxu0 0.0
    %3130 = vmatpush1.msra.mxu0 %v3090
    %3131 = vmatprep.subr.mxu0 0.0
    %3132 = vmatpush1.msra.mxu0 %v3089
    %3133 = vmatprep.subr.mxu0 0.0
    %3134 = vmatpush1.msra.mxu0 %v3088
    %3135 = vmatprep.subr.mxu0 0.0
    %3136 = vmatpush1.msra.mxu0 %v3087
    %3137 = vmatprep.subr.mxu0 0.0
    %3138 = vmatpush1.msra.mxu0 %v3086
    %3139 = vmatprep.subr.mxu0 0.0
    %3140 = vmatpush1.msra.mxu0 %v3085
    %3141 = vmatprep.subr.mxu0 0.0
    %3142 = vmatpush2.msra.mxu0 0.0
    %3143 = vmatprep.subr.mxu0 0.0
    %3144 = vmatpush2.msra.mxu0 0.0
    %3145 = vmatprep.subr.mxu0 0.0
    %3146 = vmatpush2.msra.mxu0 0.0
    %3147 = vmatprep.subr.mxu0 0.0
    %3148 = vmatpush2.msra.mxu0 0.0
    %3149 = vmatprep.subr.mxu0 0.0
    %3150 = vmatpush2.msra.mxu0 0.0
    %3151 = vmatprep.subr.mxu0 0.0
    %3152 = vmatpush2.msra.mxu0 0.0
    %3153 = vmatprep.subr.mxu0 0.0
    %3154 = vmatpush2.msra.mxu0 0.0
    %3155 = vmatprep.subr.mxu0 0.0
    %3156 = vmatpush2.msra.mxu0 0.0
    %3157 = vmatprep.subr.mxu0 0.0
    %3158 = vmatpush2.msra.mxu0 0.0
    %3159 = vmatprep.subr.mxu0 0.0
    %3160 = vmatpush2.msra.mxu0 0.0
    %3161 = vmatprep.subr.mxu0 0.0
    %3162 = vmatpush2.msra.mxu0 0.0
    %3163 = vmatprep.subr.mxu0 0.0
    %3164 = vmatpush2.msra.mxu0 0.0
    %3165 = vmatprep.subr.mxu0 0.0
    %3166 = vmatpush2.msra.mxu0 0.0
    %3167 = vmatprep.subr.mxu0 0.0
    %3168 = vmatpush2.msra.mxu0 0.0
    %3169 = vmatprep.subr.mxu0 0.0
    %3170 = vmatpush2.msra.mxu0 0.0
    %3171 = vmatprep.subr.mxu0 0.0
    %3172 = vmatpush2.msra.mxu0 0.0
    %3173 = vmatprep.mubr.f32.mxu0 0.0
    %3174 = vmatmul.mubr.f32.gmra.mxu0 %v3008
    %v3175 = vpop.f32.mrf.mxu0
    %v3176 = vadd.f32 %v3107, %v3175
    %v3177 = vpop.f32.mrf.mxu0
    %3178 = vmatprep.mubr.f32.mxu0 0.0
    %3179 = vmatmul.mubr.f32.gmra.mxu0 %v3081
    %v3180 = vpop.f32.mrf.mxu0
    %v3181 = vadd.f32 %v3107, %v3180
    %v3182 = vpop.f32.mrf.mxu0
    %3183 = vdwg.mxu0
    %s3184 = scalar_lea.vmem %s11, 3
    %v3185 = vld [vmem:[%s3184] sm:$0x1]
    %s3186 = scalar_lea.vmem %s14, 3
    %v3187 = vld [vmem:[%s3186] sm:$0x1]
    %v3188 = vadd.f32 %v3187, 1e-05
    %v3189 = vrsqrt.pop %v3188
    %v3190 = vmul.f32 %v3185, %v3189
    %s3191 = scalar_lea.vmem [#allocation16], 3
    %v3192 = vld [vmem:[%s3191] sm:$0x1]
    %v3194 = vlaneseq
    %v3195 = vshrl.u32 %v3194, 7
    %v3196 = vsub.s32 0, %v3195
    %v3197 = vrot.slane %v3192, %v3196
    %v3199 = vsub.f32 %v3176, %v3197
    %v3200 = vsub.f32 %v3181, %v3197
    %v3202 = vlaneseq
    %v3203 = vshrl.u32 %v3202, 7
    %v3204 = vsub.s32 0, %v3203
    %v3205 = vrot.slane %v3190, %v3204
    %v3207 = vmul.f32 %v3199, %v3205
    %v3208 = vmul.f32 %v3200, %v3205
    %s3209 = scalar_lea.vmem [#allocation14], 3
    %v3210 = vld [vmem:[%s3209] sm:$0x1]
    %v3212 = vlaneseq
    %v3213 = vshrl.u32 %v3212, 7
    %v3214 = vsub.s32 0, %v3213
    %v3215 = vrot.slane %v3210, %v3214
    %v3217 = vadd.f32 %v3207, %v3215
    %v3218 = vadd.f32 %v3208, %v3215
    %v3219 = vadd.f32 %v3217, %v2494
    %v3220 = vadd.f32 %v3218, %v2495
    %v3221 = vmul.f32 %v3219, %v3219
    %v3222 = vmul.f32 %v3220, %v3220
    %3223 = vadd.xlane.f32.xlu0 %v3221
    %v3224 = vpop.xlane.xlu0 %3223
    %3225 = vadd.xlane.f32.xlu0 %v3222
    %v3226 = vpop.xlane.xlu0 %3225
    %v3227 = vrsqrt.pop %v3224
    %v3228 = vrsqrt.pop %v3226
    %v3229 = vmul.f32 %v3219, %v3227
    %v3230 = vmul.f32 %v3220, %v3228
    %v3231 = vld [vmem:[#allocation17] sm:$0xff]
    %v3232 = vld [vmem:[#allocation17 + $0x8] sm:$0xff]
    %v3233 = vld [vmem:[#allocation17 + $0x10] sm:$0xff]
    %v3234 = vld [vmem:[#allocation17 + $0x18] sm:$0xff]
    %v3235 = vld [vmem:[#allocation17 + $0x20] sm:$0xff]
    %v3236 = vld [vmem:[#allocation17 + $0x28] sm:$0xff]
    %v3237 = vld [vmem:[#allocation17 + $0x30] sm:$0xff]
    %v3238 = vld [vmem:[#allocation17 + $0x38] sm:$0xff]
    %v3239 = vld [vmem:[#allocation17 + $0x40] sm:$0xff]
    %v3240 = vld [vmem:[#allocation17 + $0x48] sm:$0xff]
    %v3241 = vld [vmem:[#allocation17 + $0x50] sm:$0xff]
    %v3242 = vld [vmem:[#allocation17 + $0x58] sm:$0xff]
    %v3243 = vld [vmem:[#allocation17 + $0x60] sm:$0xff]
    %v3244 = vld [vmem:[#allocation17 + $0x68] sm:$0xff]
    %v3245 = vld [vmem:[#allocation17 + $0x70] sm:$0xff]
    %v3246 = vld [vmem:[#allocation17 + $0x78] sm:$0xff]
    %v3247 = vld [vmem:[#allocation17 + $0x80] sm:$0xff]
    %v3248 = vld [vmem:[#allocation17 + $0x88] sm:$0xff]
    %v3249 = vld [vmem:[#allocation17 + $0x90] sm:$0xff]
    %v3250 = vld [vmem:[#allocation17 + $0x98] sm:$0xff]
    %v3251 = vld [vmem:[#allocation17 + $0xa0] sm:$0xff]
    %v3252 = vld [vmem:[#allocation17 + $0xa8] sm:$0xff]
    %v3253 = vld [vmem:[#allocation17 + $0xb0] sm:$0xff]
    %v3254 = vld [vmem:[#allocation17 + $0xb8] sm:$0xff]
    %v3255 = vld [vmem:[#allocation17 + $0xc0] sm:$0xff]
    %v3256 = vld [vmem:[#allocation17 + $0xc8] sm:$0xff]
    %v3257 = vld [vmem:[#allocation17 + $0xd0] sm:$0xff]
    %v3258 = vld [vmem:[#allocation17 + $0xd8] sm:$0xff]
    %v3259 = vld [vmem:[#allocation17 + $0xe0] sm:$0xff]
    %v3260 = vld [vmem:[#allocation17 + $0xe8] sm:$0xff]
    %v3261 = vld [vmem:[#allocation17 + $0xf0] sm:$0xff]
    %v3262 = vld [vmem:[#allocation17 + $0xf8] sm:$0xff]
    %v3263 = vld [vmem:[#allocation17 + $0x100] sm:$0xff]
    %v3264 = vld [vmem:[#allocation17 + $0x108] sm:$0xff]
    %v3265 = vld [vmem:[#allocation17 + $0x110] sm:$0xff]
    %v3266 = vld [vmem:[#allocation17 + $0x118] sm:$0xff]
    %v3267 = vld [vmem:[#allocation17 + $0x120] sm:$0xff]
    %v3268 = vld [vmem:[#allocation17 + $0x128] sm:$0xff]
    %v3269 = vld [vmem:[#allocation17 + $0x130] sm:$0xff]
    %v3270 = vld [vmem:[#allocation17 + $0x138] sm:$0xff]
    %v3271 = vld [vmem:[#allocation17 + $0x140] sm:$0xff]
    %v3272 = vld [vmem:[#allocation17 + $0x148] sm:$0xff]
    %v3273 = vld [vmem:[#allocation17 + $0x150] sm:$0xff]
    %v3274 = vld [vmem:[#allocation17 + $0x158] sm:$0xff]
    %v3275 = vld [vmem:[#allocation17 + $0x160] sm:$0xff]
    %v3276 = vld [vmem:[#allocation17 + $0x168] sm:$0xff]
    %v3277 = vld [vmem:[#allocation17 + $0x170] sm:$0xff]
    %v3278 = vld [vmem:[#allocation17 + $0x178] sm:$0xff]
    %v3279 = vld [vmem:[%s17] sm:$0x7]
    %v3281 = vlaneseq
    %v3282 = vshrl.u32 %v3281, 7
    %v3283 = vsub.s32 0, %v3282
    %v3284 = vrot.slane %v3279, %v3283
    %v3285 = vlaneseq
    %v3286 = vshrl.u32 %v3285, 7
    %v3287 = vsub.s32 1, %v3286
    %v3288 = vrot.slane %v3279, %v3287
    %v3289 = vlaneseq
    %v3290 = vshrl.u32 %v3289, 7
    %v3291 = vsub.s32 2, %v3290
    %v3292 = vrot.slane %v3279, %v3291
    %3296 = vmatprep.subr.mxu0 %v3277
    %3297 = vmatpush1.msra.mxu0 %v3276
    %3298 = vmatprep.subr.mxu0 %v3274
    %3299 = vmatpush1.msra.mxu0 %v3273
    %3300 = vmatprep.subr.mxu0 %v3271
    %3301 = vmatpush1.msra.mxu0 %v3270
    %3302 = vmatprep.subr.mxu0 %v3268
    %3303 = vmatpush1.msra.mxu0 %v3267
    %3304 = vmatprep.subr.mxu0 %v3265
    %3305 = vmatpush1.msra.mxu0 %v3264
    %3306 = vmatprep.subr.mxu0 %v3262
    %3307 = vmatpush1.msra.mxu0 %v3261
    %3308 = vmatprep.subr.mxu0 %v3259
    %3309 = vmatpush1.msra.mxu0 %v3258
    %3310 = vmatprep.subr.mxu0 %v3256
    %3311 = vmatpush1.msra.mxu0 %v3255
    %3312 = vmatprep.subr.mxu0 %v3253
    %3313 = vmatpush1.msra.mxu0 %v3252
    %3314 = vmatprep.subr.mxu0 %v3250
    %3315 = vmatpush1.msra.mxu0 %v3249
    %3316 = vmatprep.subr.mxu0 %v3247
    %3317 = vmatpush1.msra.mxu0 %v3246
    %3318 = vmatprep.subr.mxu0 %v3244
    %3319 = vmatpush1.msra.mxu0 %v3243
    %3320 = vmatprep.subr.mxu0 %v3241
    %3321 = vmatpush1.msra.mxu0 %v3240
    %3322 = vmatprep.subr.mxu0 %v3238
    %3323 = vmatpush1.msra.mxu0 %v3237
    %3324 = vmatprep.subr.mxu0 %v3235
    %3325 = vmatpush1.msra.mxu0 %v3234
    %3326 = vmatprep.subr.mxu0 %v3232
    %3327 = vmatpush1.msra.mxu0 %v3231
    %3328 = vmatprep.subr.mxu0 0.0
    %3329 = vmatpush2.msra.mxu0 0.0
    %3330 = vmatprep.subr.mxu0 0.0
    %3331 = vmatpush2.msra.mxu0 0.0
    %3332 = vmatprep.subr.mxu0 0.0
    %3333 = vmatpush2.msra.mxu0 0.0
    %3334 = vmatprep.subr.mxu0 0.0
    %3335 = vmatpush2.msra.mxu0 0.0
    %3336 = vmatprep.subr.mxu0 0.0
    %3337 = vmatpush2.msra.mxu0 0.0
    %3338 = vmatprep.subr.mxu0 0.0
    %3339 = vmatpush2.msra.mxu0 0.0
    %3340 = vmatprep.subr.mxu0 0.0
    %3341 = vmatpush2.msra.mxu0 0.0
    %3342 = vmatprep.subr.mxu0 0.0
    %3343 = vmatpush2.msra.mxu0 0.0
    %3344 = vmatprep.subr.mxu0 0.0
    %3345 = vmatpush2.msra.mxu0 0.0
    %3346 = vmatprep.subr.mxu0 0.0
    %3347 = vmatpush2.msra.mxu0 0.0
    %3348 = vmatprep.subr.mxu0 0.0
    %3349 = vmatpush2.msra.mxu0 0.0
    %3350 = vmatprep.subr.mxu0 0.0
    %3351 = vmatpush2.msra.mxu0 0.0
    %3352 = vmatprep.subr.mxu0 0.0
    %3353 = vmatpush2.msra.mxu0 0.0
    %3354 = vmatprep.subr.mxu0 0.0
    %3355 = vmatpush2.msra.mxu0 0.0
    %3356 = vmatprep.subr.mxu0 0.0
    %3357 = vmatpush2.msra.mxu0 0.0
    %3358 = vmatprep.subr.mxu0 0.0
    %3359 = vmatpush2.msra.mxu0 0.0
    %3360 = vmatprep.mubr.f32.mxu0 0.0
    %3361 = vmatmul.mubr.f32.gmra.mxu0 %v3229
    %v3362 = vpop.f32.mrf.mxu0
    %v3363 = vadd.f32 %v3284, %v3362
    %v3364 = vpop.f32.mrf.mxu0
    %v3365 = vadd.f32 %v3288, %v3364
    %3366 = vmatprep.mubr.f32.mxu0 0.0
    %3367 = vmatmul.mubr.f32.gmra.mxu0 %v3230
    %v3368 = vpop.f32.mrf.mxu0
    %v3369 = vadd.f32 %v3284, %v3368
    %v3370 = vpop.f32.mrf.mxu0
    %v3371 = vadd.f32 %v3288, %v3370
    %3372 = vdwg.mxu0
    %3373 = vmatprep.subr.mxu0 0.0
    %3374 = vmatpush1.msra.mxu0 %v3278
    %3375 = vmatprep.subr.mxu0 0.0
    %3376 = vmatpush1.msra.mxu0 %v3275
    %3377 = vmatprep.subr.mxu0 0.0
    %3378 = vmatpush1.msra.mxu0 %v3272
    %3379 = vmatprep.subr.mxu0 0.0
    %3380 = vmatpush1.msra.mxu0 %v3269
    %3381 = vmatprep.subr.mxu0 0.0
    %3382 = vmatpush1.msra.mxu0 %v3266
    %3383 = vmatprep.subr.mxu0 0.0
    %3384 = vmatpush1.msra.mxu0 %v3263
    %3385 = vmatprep.subr.mxu0 0.0
    %3386 = vmatpush1.msra.mxu0 %v3260
    %3387 = vmatprep.subr.mxu0 0.0
    %3388 = vmatpush1.msra.mxu0 %v3257
    %3389 = vmatprep.subr.mxu0 0.0
    %3390 = vmatpush1.msra.mxu0 %v3254
    %3391 = vmatprep.subr.mxu0 0.0
    %3392 = vmatpush1.msra.mxu0 %v3251
    %3393 = vmatprep.subr.mxu0 0.0
    %3394 = vmatpush1.msra.mxu0 %v3248
    %3395 = vmatprep.subr.mxu0 0.0
    %3396 = vmatpush1.msra.mxu0 %v3245
    %3397 = vmatprep.subr.mxu0 0.0
    %3398 = vmatpush1.msra.mxu0 %v3242
    %3399 = vmatprep.subr.mxu0 0.0
    %3400 = vmatpush1.msra.mxu0 %v3239
    %3401 = vmatprep.subr.mxu0 0.0
    %3402 = vmatpush1.msra.mxu0 %v3236
    %3403 = vmatprep.subr.mxu0 0.0
    %3404 = vmatpush1.msra.mxu0 %v3233
    %3405 = vmatprep.subr.mxu0 0.0
    %3406 = vmatpush2.msra.mxu0 0.0
    %3407 = vmatprep.subr.mxu0 0.0
    %3408 = vmatpush2.msra.mxu0 0.0
    %3409 = vmatprep.subr.mxu0 0.0
    %3410 = vmatpush2.msra.mxu0 0.0
    %3411 = vmatprep.subr.mxu0 0.0
    %3412 = vmatpush2.msra.mxu0 0.0
    %3413 = vmatprep.subr.mxu0 0.0
    %3414 = vmatpush2.msra.mxu0 0.0
    %3415 = vmatprep.subr.mxu0 0.0
    %3416 = vmatpush2.msra.mxu0 0.0
    %3417 = vmatprep.subr.mxu0 0.0
    %3418 = vmatpush2.msra.mxu0 0.0
    %3419 = vmatprep.subr.mxu0 0.0
    %3420 = vmatpush2.msra.mxu0 0.0
    %3421 = vmatprep.subr.mxu0 0.0
    %3422 = vmatpush2.msra.mxu0 0.0
    %3423 = vmatprep.subr.mxu0 0.0
    %3424 = vmatpush2.msra.mxu0 0.0
    %3425 = vmatprep.subr.mxu0 0.0
    %3426 = vmatpush2.msra.mxu0 0.0
    %3427 = vmatprep.subr.mxu0 0.0
    %3428 = vmatpush2.msra.mxu0 0.0
    %3429 = vmatprep.subr.mxu0 0.0
    %3430 = vmatpush2.msra.mxu0 0.0
    %3431 = vmatprep.subr.mxu0 0.0
    %3432 = vmatpush2.msra.mxu0 0.0
    %3433 = vmatprep.subr.mxu0 0.0
    %3434 = vmatpush2.msra.mxu0 0.0
    %3435 = vmatprep.subr.mxu0 0.0
    %3436 = vmatpush2.msra.mxu0 0.0
    %3437 = vmatprep.mubr.f32.mxu0 0.0
    %3438 = vmatmul.mubr.f32.gmra.mxu0 %v3229
    %v3439 = vpop.f32.mrf.mxu0
    %v3440 = vadd.f32 %v3292, %v3439
    %v3441 = vpop.f32.mrf.mxu0
    %3442 = vmatprep.mubr.f32.mxu0 0.0
    %3443 = vmatmul.mubr.f32.gmra.mxu0 %v3230
    %v3444 = vpop.f32.mrf.mxu0
    %v3445 = vadd.f32 %v3292, %v3444
    %v3446 = vpop.f32.mrf.mxu0
    %3447 = vdwg.mxu0
    %v3448 = vld [vmem:[#allocation19] sm:$0xff]
    %v3449 = vld [vmem:[#allocation19 + $0x8] sm:$0xff]
    %v3450 = vld [vmem:[#allocation19 + $0x10] sm:$0xff]
    %v3451 = vld [vmem:[#allocation19 + $0x18] sm:$0xff]
    %v3452 = vld [vmem:[#allocation19 + $0x20] sm:$0xff]
    %v3453 = vld [vmem:[#allocation19 + $0x28] sm:$0xff]
    %v3454 = vld [vmem:[#allocation19 + $0x30] sm:$0xff]
    %v3455 = vld [vmem:[#allocation19 + $0x38] sm:$0xff]
    %v3456 = vld [vmem:[#allocation19 + $0x40] sm:$0xff]
    %v3457 = vld [vmem:[#allocation19 + $0x48] sm:$0xff]
    %v3458 = vld [vmem:[#allocation19 + $0x50] sm:$0xff]
    %v3459 = vld [vmem:[#allocation19 + $0x58] sm:$0xff]
    %v3460 = vld [vmem:[#allocation19 + $0x60] sm:$0xff]
    %v3461 = vld [vmem:[#allocation19 + $0x68] sm:$0xff]
    %v3462 = vld [vmem:[#allocation19 + $0x70] sm:$0xff]
    %v3463 = vld [vmem:[#allocation19 + $0x78] sm:$0xff]
    %v3464 = vld [vmem:[#allocation19 + $0x80] sm:$0xff]
    %v3465 = vld [vmem:[#allocation19 + $0x88] sm:$0xff]
    %v3466 = vld [vmem:[#allocation19 + $0x90] sm:$0xff]
    %v3467 = vld [vmem:[#allocation19 + $0x98] sm:$0xff]
    %v3468 = vld [vmem:[#allocation19 + $0xa0] sm:$0xff]
    %v3469 = vld [vmem:[#allocation19 + $0xa8] sm:$0xff]
    %v3470 = vld [vmem:[#allocation19 + $0xb0] sm:$0xff]
    %v3471 = vld [vmem:[#allocation19 + $0xb8] sm:$0xff]
    %v3472 = vld [vmem:[#allocation19 + $0xc0] sm:$0xff]
    %v3473 = vld [vmem:[#allocation19 + $0xc8] sm:$0xff]
    %v3474 = vld [vmem:[#allocation19 + $0xd0] sm:$0xff]
    %v3475 = vld [vmem:[#allocation19 + $0xd8] sm:$0xff]
    %v3476 = vld [vmem:[#allocation19 + $0xe0] sm:$0xff]
    %v3477 = vld [vmem:[#allocation19 + $0xe8] sm:$0xff]
    %v3478 = vld [vmem:[#allocation19 + $0xf0] sm:$0xff]
    %v3479 = vld [vmem:[#allocation19 + $0xf8] sm:$0xff]
    %v3480 = vld [vmem:[#allocation19 + $0x100] sm:$0xff]
    %v3481 = vld [vmem:[#allocation19 + $0x108] sm:$0xff]
    %v3482 = vld [vmem:[#allocation19 + $0x110] sm:$0xff]
    %v3483 = vld [vmem:[#allocation19 + $0x118] sm:$0xff]
    %v3484 = vld [vmem:[#allocation19 + $0x120] sm:$0xff]
    %v3485 = vld [vmem:[#allocation19 + $0x128] sm:$0xff]
    %v3486 = vld [vmem:[#allocation19 + $0x130] sm:$0xff]
    %v3487 = vld [vmem:[#allocation19 + $0x138] sm:$0xff]
    %v3488 = vld [vmem:[#allocation19 + $0x140] sm:$0xff]
    %v3489 = vld [vmem:[#allocation19 + $0x148] sm:$0xff]
    %v3490 = vld [vmem:[#allocation19 + $0x150] sm:$0xff]
    %v3491 = vld [vmem:[#allocation19 + $0x158] sm:$0xff]
    %v3492 = vld [vmem:[#allocation19 + $0x160] sm:$0xff]
    %v3493 = vld [vmem:[#allocation19 + $0x168] sm:$0xff]
    %v3494 = vld [vmem:[#allocation19 + $0x170] sm:$0xff]
    %v3495 = vld [vmem:[#allocation19 + $0x178] sm:$0xff]
    %v3496 = vld [vmem:[%s18] sm:$0x7]
    %v3498 = vlaneseq
    %v3499 = vshrl.u32 %v3498, 7
    %v3500 = vsub.s32 0, %v3499
    %v3501 = vrot.slane %v3496, %v3500
    %v3502 = vlaneseq
    %v3503 = vshrl.u32 %v3502, 7
    %v3504 = vsub.s32 1, %v3503
    %v3505 = vrot.slane %v3496, %v3504
    %v3506 = vlaneseq
    %v3507 = vshrl.u32 %v3506, 7
    %v3508 = vsub.s32 2, %v3507
    %v3509 = vrot.slane %v3496, %v3508
    %3513 = vmatprep.subr.mxu0 %v3494
    %3514 = vmatpush1.msra.mxu0 %v3493
    %3515 = vmatprep.subr.mxu0 %v3491
    %3516 = vmatpush1.msra.mxu0 %v3490
    %3517 = vmatprep.subr.mxu0 %v3488
    %3518 = vmatpush1.msra.mxu0 %v3487
    %3519 = vmatprep.subr.mxu0 %v3485
    %3520 = vmatpush1.msra.mxu0 %v3484
    %3521 = vmatprep.subr.mxu0 %v3482
    %3522 = vmatpush1.msra.mxu0 %v3481
    %3523 = vmatprep.subr.mxu0 %v3479
    %3524 = vmatpush1.msra.mxu0 %v3478
    %3525 = vmatprep.subr.mxu0 %v3476
    %3526 = vmatpush1.msra.mxu0 %v3475
    %3527 = vmatprep.subr.mxu0 %v3473
    %3528 = vmatpush1.msra.mxu0 %v3472
    %3529 = vmatprep.subr.mxu0 %v3470
    %3530 = vmatpush1.msra.mxu0 %v3469
    %3531 = vmatprep.subr.mxu0 %v3467
    %3532 = vmatpush1.msra.mxu0 %v3466
    %3533 = vmatprep.subr.mxu0 %v3464
    %3534 = vmatpush1.msra.mxu0 %v3463
    %3535 = vmatprep.subr.mxu0 %v3461
    %3536 = vmatpush1.msra.mxu0 %v3460
    %3537 = vmatprep.subr.mxu0 %v3458
    %3538 = vmatpush1.msra.mxu0 %v3457
    %3539 = vmatprep.subr.mxu0 %v3455
    %3540 = vmatpush1.msra.mxu0 %v3454
    %3541 = vmatprep.subr.mxu0 %v3452
    %3542 = vmatpush1.msra.mxu0 %v3451
    %3543 = vmatprep.subr.mxu0 %v3449
    %3544 = vmatpush1.msra.mxu0 %v3448
    %3545 = vmatprep.subr.mxu0 0.0
    %3546 = vmatpush2.msra.mxu0 0.0
    %3547 = vmatprep.subr.mxu0 0.0
    %3548 = vmatpush2.msra.mxu0 0.0
    %3549 = vmatprep.subr.mxu0 0.0
    %3550 = vmatpush2.msra.mxu0 0.0
    %3551 = vmatprep.subr.mxu0 0.0
    %3552 = vmatpush2.msra.mxu0 0.0
    %3553 = vmatprep.subr.mxu0 0.0
    %3554 = vmatpush2.msra.mxu0 0.0
    %3555 = vmatprep.subr.mxu0 0.0
    %3556 = vmatpush2.msra.mxu0 0.0
    %3557 = vmatprep.subr.mxu0 0.0
    %3558 = vmatpush2.msra.mxu0 0.0
    %3559 = vmatprep.subr.mxu0 0.0
    %3560 = vmatpush2.msra.mxu0 0.0
    %3561 = vmatprep.subr.mxu0 0.0
    %3562 = vmatpush2.msra.mxu0 0.0
    %3563 = vmatprep.subr.mxu0 0.0
    %3564 = vmatpush2.msra.mxu0 0.0
    %3565 = vmatprep.subr.mxu0 0.0
    %3566 = vmatpush2.msra.mxu0 0.0
    %3567 = vmatprep.subr.mxu0 0.0
    %3568 = vmatpush2.msra.mxu0 0.0
    %3569 = vmatprep.subr.mxu0 0.0
    %3570 = vmatpush2.msra.mxu0 0.0
    %3571 = vmatprep.subr.mxu0 0.0
    %3572 = vmatpush2.msra.mxu0 0.0
    %3573 = vmatprep.subr.mxu0 0.0
    %3574 = vmatpush2.msra.mxu0 0.0
    %3575 = vmatprep.subr.mxu0 0.0
    %3576 = vmatpush2.msra.mxu0 0.0
    %3577 = vmatprep.mubr.f32.mxu0 0.0
    %3578 = vmatmul.mubr.f32.gmra.mxu0 0.0
    %v3579 = vpop.f32.mrf.mxu0
    %v3580 = vadd.f32 %v3501, %v3579
    %v3581 = vpop.f32.mrf.mxu0
    %v3582 = vadd.f32 %v3505, %v3581
    %3583 = vdwg.mxu0
    %3584 = vmatprep.subr.mxu0 0.0
    %3585 = vmatpush1.msra.mxu0 %v3495
    %3586 = vmatprep.subr.mxu0 0.0
    %3587 = vmatpush1.msra.mxu0 %v3492
    %3588 = vmatprep.subr.mxu0 0.0
    %3589 = vmatpush1.msra.mxu0 %v3489
    %3590 = vmatprep.subr.mxu0 0.0
    %3591 = vmatpush1.msra.mxu0 %v3486
    %3592 = vmatprep.subr.mxu0 0.0
    %3593 = vmatpush1.msra.mxu0 %v3483
    %3594 = vmatprep.subr.mxu0 0.0
    %3595 = vmatpush1.msra.mxu0 %v3480
    %3596 = vmatprep.subr.mxu0 0.0
    %3597 = vmatpush1.msra.mxu0 %v3477
    %3598 = vmatprep.subr.mxu0 0.0
    %3599 = vmatpush1.msra.mxu0 %v3474
    %3600 = vmatprep.subr.mxu0 0.0
    %3601 = vmatpush1.msra.mxu0 %v3471
    %3602 = vmatprep.subr.mxu0 0.0
    %3603 = vmatpush1.msra.mxu0 %v3468
    %3604 = vmatprep.subr.mxu0 0.0
    %3605 = vmatpush1.msra.mxu0 %v3465
    %3606 = vmatprep.subr.mxu0 0.0
    %3607 = vmatpush1.msra.mxu0 %v3462
    %3608 = vmatprep.subr.mxu0 0.0
    %3609 = vmatpush1.msra.mxu0 %v3459
    %3610 = vmatprep.subr.mxu0 0.0
    %3611 = vmatpush1.msra.mxu0 %v3456
    %3612 = vmatprep.subr.mxu0 0.0
    %3613 = vmatpush1.msra.mxu0 %v3453
    %3614 = vmatprep.subr.mxu0 0.0
    %3615 = vmatpush1.msra.mxu0 %v3450
    %3616 = vmatprep.subr.mxu0 0.0
    %3617 = vmatpush2.msra.mxu0 0.0
    %3618 = vmatprep.subr.mxu0 0.0
    %3619 = vmatpush2.msra.mxu0 0.0
    %3620 = vmatprep.subr.mxu0 0.0
    %3621 = vmatpush2.msra.mxu0 0.0
    %3622 = vmatprep.subr.mxu0 0.0
    %3623 = vmatpush2.msra.mxu0 0.0
    %3624 = vmatprep.subr.mxu0 0.0
    %3625 = vmatpush2.msra.mxu0 0.0
    %3626 = vmatprep.subr.mxu0 0.0
    %3627 = vmatpush2.msra.mxu0 0.0
    %3628 = vmatprep.subr.mxu0 0.0
    %3629 = vmatpush2.msra.mxu0 0.0
    %3630 = vmatprep.subr.mxu0 0.0
    %3631 = vmatpush2.msra.mxu0 0.0
    %3632 = vmatprep.subr.mxu0 0.0
    %3633 = vmatpush2.msra.mxu0 0.0
    %3634 = vmatprep.subr.mxu0 0.0
    %3635 = vmatpush2.msra.mxu0 0.0
    %3636 = vmatprep.subr.mxu0 0.0
    %3637 = vmatpush2.msra.mxu0 0.0
    %3638 = vmatprep.subr.mxu0 0.0
    %3639 = vmatpush2.msra.mxu0 0.0
    %3640 = vmatprep.subr.mxu0 0.0
    %3641 = vmatpush2.msra.mxu0 0.0
    %3642 = vmatprep.subr.mxu0 0.0
    %3643 = vmatpush2.msra.mxu0 0.0
    %3644 = vmatprep.subr.mxu0 0.0
    %3645 = vmatpush2.msra.mxu0 0.0
    %3646 = vmatprep.subr.mxu0 0.0
    %3647 = vmatpush2.msra.mxu0 0.0
    %3648 = vmatprep.mubr.f32.mxu0 0.0
    %3649 = vmatmul.mubr.f32.gmra.mxu0 0.0
    %v3650 = vpop.f32.mrf.mxu0
    %v3651 = vadd.f32 %v3509, %v3650
    %v3652 = vpop.f32.mrf.mxu0
    %3653 = vdwg.mxu0
    %v3655 = vrot.slane %v3580, 1
    %v3658 = vadd.f32 %v3363, %v3580
    %v3659 = vadd.f32 %v3369, %v3655
    %v3660 = vxor.u32 %v3658, 2147483648
    %v3661 = vxor.u32 %v3659, 2147483648
    %v3662 = vmul.f32 %v3660, 1.442695
    %v3663 = vpow.pop %v3662
    %v3664 = vmul.f32 %v3661, 1.442695
    %v3665 = vpow.pop %v3664
    %v3666 = vadd.f32 %v3663, 1.0
    %v3667 = vadd.f32 %v3665, 1.0
    %v3668 = vrcp.pop %v3666
    %v3669 = vmul.f32 1.0, %v3668
    %v3670 = vrcp.pop %v3667
    %v3671 = vmul.f32 1.0, %v3670
    %v3673 = vrot.slane %v3582, 1
    %v3676 = vadd.f32 %v3365, %v3582
    %v3677 = vadd.f32 %v3371, %v3673
    %v3678 = vxor.u32 %v3676, 2147483648
    %v3679 = vxor.u32 %v3677, 2147483648
    %v3680 = vmul.f32 %v3678, 1.442695
    %v3681 = vpow.pop %v3680
    %v3682 = vmul.f32 %v3679, 1.442695
    %v3683 = vpow.pop %v3682
    %v3684 = vadd.f32 %v3681, 1.0
    %v3685 = vadd.f32 %v3683, 1.0
    %v3686 = vrcp.pop %v3684
    %v3687 = vmul.f32 1.0, %v3686
    %v3688 = vrcp.pop %v3685
    %v3689 = vmul.f32 1.0, %v3688
    %v3691 = vrot.slane %v3651, 1
    %v3694 = vmul.f32 %v3669, %v3651
    %v3695 = vmul.f32 %v3671, %v3691
    %v3696 = vadd.f32 %v3440, %v3694
    %v3697 = vadd.f32 %v3445, %v3695
    %v3698 = vtanh.pop %v3696
    %v3699 = vtanh.pop %v3697
    %v3700 = vsub.f32 1.0, %v3687
    %v3701 = vsub.f32 1.0, %v3689
    %v3702 = vmul.f32 %v3700, %v3698
    %v3703 = vmul.f32 %v3701, %v3699
    %v3704 = vmul.f32 %v3687, 0.0
    %v3705 = vmul.f32 %v3689, 0.0
    %v3706 = vadd.f32 %v3702, %v3704
    %v3707 = vadd.f32 %v3703, %v3705
    %v3710 = vrot.slane %v3707, 7
    %vm3711 = vcmask 1041409
    %v3712 = vsel %vm3711, %v3710, %v3706
    %3714 = vmatprep.subr.mxu0 %v3494
    %3715 = vmatpush1.msra.mxu0 %v3493
    %3716 = vmatprep.subr.mxu0 %v3491
    %3717 = vmatpush1.msra.mxu0 %v3490
    %3718 = vmatprep.subr.mxu0 %v3488
    %3719 = vmatpush1.msra.mxu0 %v3487
    %3720 = vmatprep.subr.mxu0 %v3485
    %3721 = vmatpush1.msra.mxu0 %v3484
    %3722 = vmatprep.subr.mxu0 %v3482
    %3723 = vmatpush1.msra.mxu0 %v3481
    %3724 = vmatprep.subr.mxu0 %v3479
    %3725 = vmatpush1.msra.mxu0 %v3478
    %3726 = vmatprep.subr.mxu0 %v3476
    %3727 = vmatpush1.msra.mxu0 %v3475
    %3728 = vmatprep.subr.mxu0 %v3473
    %3729 = vmatpush1.msra.mxu0 %v3472
    %3730 = vmatprep.subr.mxu0 %v3470
    %3731 = vmatpush1.msra.mxu0 %v3469
    %3732 = vmatprep.subr.mxu0 %v3467
    %3733 = vmatpush1.msra.mxu0 %v3466
    %3734 = vmatprep.subr.mxu0 %v3464
    %3735 = vmatpush1.msra.mxu0 %v3463
    %3736 = vmatprep.subr.mxu0 %v3461
    %3737 = vmatpush1.msra.mxu0 %v3460
    %3738 = vmatprep.subr.mxu0 %v3458
    %3739 = vmatpush1.msra.mxu0 %v3457
    %3740 = vmatprep.subr.mxu0 %v3455
    %3741 = vmatpush1.msra.mxu0 %v3454
    %3742 = vmatprep.subr.mxu0 %v3452
    %3743 = vmatpush1.msra.mxu0 %v3451
    %3744 = vmatprep.subr.mxu0 %v3449
    %3745 = vmatpush1.msra.mxu0 %v3448
    %3746 = vmatprep.subr.mxu0 0.0
    %3747 = vmatpush2.msra.mxu0 0.0
    %3748 = vmatprep.subr.mxu0 0.0
    %3749 = vmatpush2.msra.mxu0 0.0
    %3750 = vmatprep.subr.mxu0 0.0
    %3751 = vmatpush2.msra.mxu0 0.0
    %3752 = vmatprep.subr.mxu0 0.0
    %3753 = vmatpush2.msra.mxu0 0.0
    %3754 = vmatprep.subr.mxu0 0.0
    %3755 = vmatpush2.msra.mxu0 0.0
    %3756 = vmatprep.subr.mxu0 0.0
    %3757 = vmatpush2.msra.mxu0 0.0
    %3758 = vmatprep.subr.mxu0 0.0
    %3759 = vmatpush2.msra.mxu0 0.0
    %3760 = vmatprep.subr.mxu0 0.0
    %3761 = vmatpush2.msra.mxu0 0.0
    %3762 = vmatprep.subr.mxu0 0.0
    %3763 = vmatpush2.msra.mxu0 0.0
    %3764 = vmatprep.subr.mxu0 0.0
    %3765 = vmatpush2.msra.mxu0 0.0
    %3766 = vmatprep.subr.mxu0 0.0
    %3767 = vmatpush2.msra.mxu0 0.0
    %3768 = vmatprep.subr.mxu0 0.0
    %3769 = vmatpush2.msra.mxu0 0.0
    %3770 = vmatprep.subr.mxu0 0.0
    %3771 = vmatpush2.msra.mxu0 0.0
    %3772 = vmatprep.subr.mxu0 0.0
    %3773 = vmatpush2.msra.mxu0 0.0
    %3774 = vmatprep.subr.mxu0 0.0
    %3775 = vmatpush2.msra.mxu0 0.0
    %3776 = vmatprep.subr.mxu0 0.0
    %3777 = vmatpush2.msra.mxu0 0.0
    %3778 = vmatprep.mubr.f32.mxu0 0.0
    %3779 = vmatmul.mubr.f32.gmra.mxu0 %v3712
    %v3780 = vpop.f32.mrf.mxu0
    %v3781 = vadd.f32 %v3501, %v3780
    %v3782 = vpop.f32.mrf.mxu0
    %v3783 = vadd.f32 %v3505, %v3782
    %3784 = vdwg.mxu0
    %3785 = vmatprep.subr.mxu0 0.0
    %3786 = vmatpush1.msra.mxu0 %v3495
    %3787 = vmatprep.subr.mxu0 0.0
    %3788 = vmatpush1.msra.mxu0 %v3492
    %3789 = vmatprep.subr.mxu0 0.0
    %3790 = vmatpush1.msra.mxu0 %v3489
    %3791 = vmatprep.subr.mxu0 0.0
    %3792 = vmatpush1.msra.mxu0 %v3486
    %3793 = vmatprep.subr.mxu0 0.0
    %3794 = vmatpush1.msra.mxu0 %v3483
    %3795 = vmatprep.subr.mxu0 0.0
    %3796 = vmatpush1.msra.mxu0 %v3480
    %3797 = vmatprep.subr.mxu0 0.0
    %3798 = vmatpush1.msra.mxu0 %v3477
    %3799 = vmatprep.subr.mxu0 0.0
    %3800 = vmatpush1.msra.mxu0 %v3474
    %3801 = vmatprep.subr.mxu0 0.0
    %3802 = vmatpush1.msra.mxu0 %v3471
    %3803 = vmatprep.subr.mxu0 0.0
    %3804 = vmatpush1.msra.mxu0 %v3468
    %3805 = vmatprep.subr.mxu0 0.0
    %3806 = vmatpush1.msra.mxu0 %v3465
    %3807 = vmatprep.subr.mxu0 0.0
    %3808 = vmatpush1.msra.mxu0 %v3462
    %3809 = vmatprep.subr.mxu0 0.0
    %3810 = vmatpush1.msra.mxu0 %v3459
    %3811 = vmatprep.subr.mxu0 0.0
    %3812 = vmatpush1.msra.mxu0 %v3456
    %3813 = vmatprep.subr.mxu0 0.0
    %3814 = vmatpush1.msra.mxu0 %v3453
    %3815 = vmatprep.subr.mxu0 0.0
    %3816 = vmatpush1.msra.mxu0 %v3450
    %3817 = vmatprep.subr.mxu0 0.0
    %3818 = vmatpush2.msra.mxu0 0.0
    %3819 = vmatprep.subr.mxu0 0.0
    %3820 = vmatpush2.msra.mxu0 0.0
    %3821 = vmatprep.subr.mxu0 0.0
    %3822 = vmatpush2.msra.mxu0 0.0
    %3823 = vmatprep.subr.mxu0 0.0
    %3824 = vmatpush2.msra.mxu0 0.0
    %3825 = vmatprep.subr.mxu0 0.0
    %3826 = vmatpush2.msra.mxu0 0.0
    %3827 = vmatprep.subr.mxu0 0.0
    %3828 = vmatpush2.msra.mxu0 0.0
    %3829 = vmatprep.subr.mxu0 0.0
    %3830 = vmatpush2.msra.mxu0 0.0
    %3831 = vmatprep.subr.mxu0 0.0
    %3832 = vmatpush2.msra.mxu0 0.0
    %3833 = vmatprep.subr.mxu0 0.0
    %3834 = vmatpush2.msra.mxu0 0.0
    %3835 = vmatprep.subr.mxu0 0.0
    %3836 = vmatpush2.msra.mxu0 0.0
    %3837 = vmatprep.subr.mxu0 0.0
    %3838 = vmatpush2.msra.mxu0 0.0
    %3839 = vmatprep.subr.mxu0 0.0
    %3840 = vmatpush2.msra.mxu0 0.0
    %3841 = vmatprep.subr.mxu0 0.0
    %3842 = vmatpush2.msra.mxu0 0.0
    %3843 = vmatprep.subr.mxu0 0.0
    %3844 = vmatpush2.msra.mxu0 0.0
    %3845 = vmatprep.subr.mxu0 0.0
    %3846 = vmatpush2.msra.mxu0 0.0
    %3847 = vmatprep.subr.mxu0 0.0
    %3848 = vmatpush2.msra.mxu0 0.0
    %3849 = vmatprep.mubr.f32.mxu0 0.0
    %3850 = vmatmul.mubr.f32.gmra.mxu0 %v3712
    %v3851 = vpop.f32.mrf.mxu0
    %v3852 = vadd.f32 %v3509, %v3851
    %v3853 = vpop.f32.mrf.mxu0
    %3854 = vdwg.mxu0
    %v3856 = vrot.slane %v3781, 7
    %v3859 = vadd.f32 %v3363, %v3856
    %v3860 = vadd.f32 %v3369, %v3781
    %v3861 = vxor.u32 %v3859, 2147483648
    %v3862 = vxor.u32 %v3860, 2147483648
    %v3863 = vmul.f32 %v3861, 1.442695
    %v3864 = vpow.pop %v3863
    %v3865 = vmul.f32 %v3862, 1.442695
    %v3866 = vpow.pop %v3865
    %v3867 = vadd.f32 %v3864, 1.0
    %v3868 = vadd.f32 %v3866, 1.0
    %v3869 = vrcp.pop %v3867
    %v3870 = vmul.f32 1.0, %v3869
    %v3871 = vrcp.pop %v3868
    %v3872 = vmul.f32 1.0, %v3871
    %v3874 = vrot.slane %v3783, 7
    %v3877 = vadd.f32 %v3365, %v3874
    %v3878 = vadd.f32 %v3371, %v3783
    %v3879 = vxor.u32 %v3877, 2147483648
    %v3880 = vxor.u32 %v3878, 2147483648
    %v3881 = vmul.f32 %v3879, 1.442695
    %v3882 = vpow.pop %v3881
    %v3883 = vmul.f32 %v3880, 1.442695
    %v3884 = vpow.pop %v3883
    %v3885 = vadd.f32 %v3882, 1.0
    %v3886 = vadd.f32 %v3884, 1.0
    %v3887 = vrcp.pop %v3885
    %v3888 = vmul.f32 1.0, %v3887
    %v3889 = vrcp.pop %v3886
    %v3890 = vmul.f32 1.0, %v3889
    %v3892 = vrot.slane %v3852, 7
    %v3895 = vmul.f32 %v3870, %v3892
    %v3896 = vmul.f32 %v3872, %v3852
    %v3897 = vadd.f32 %v3440, %v3895
    %v3898 = vadd.f32 %v3445, %v3896
    %v3899 = vtanh.pop %v3897
    %v3900 = vtanh.pop %v3898
    %v3901 = vsub.f32 1.0, %v3888
    %v3902 = vsub.f32 1.0, %v3890
    %v3903 = vmul.f32 %v3901, %v3899
    %v3904 = vmul.f32 %v3902, %v3900
    %v3905 = vrot.slane %v3706, 7
    %v3908 = vmul.f32 %v3888, %v3905
    %v3909 = vmul.f32 %v3890, %v3710
    %v3910 = vadd.f32 %v3903, %v3908
    %v3911 = vadd.f32 %v3904, %v3909
    %v3914 = vrot.slane %v3910, 1
    %v3915 = vsel %vm3711, %v3911, %v3914
    %3917 = vmatprep.subr.mxu0 %v3494
    %3918 = vmatpush1.msra.mxu0 %v3493
    %3919 = vmatprep.subr.mxu0 %v3491
    %3920 = vmatpush1.msra.mxu0 %v3490
    %3921 = vmatprep.subr.mxu0 %v3488
    %3922 = vmatpush1.msra.mxu0 %v3487
    %3923 = vmatprep.subr.mxu0 %v3485
    %3924 = vmatpush1.msra.mxu0 %v3484
    %3925 = vmatprep.subr.mxu0 %v3482
    %3926 = vmatpush1.msra.mxu0 %v3481
    %3927 = vmatprep.subr.mxu0 %v3479
    %3928 = vmatpush1.msra.mxu0 %v3478
    %3929 = vmatprep.subr.mxu0 %v3476
    %3930 = vmatpush1.msra.mxu0 %v3475
    %3931 = vmatprep.subr.mxu0 %v3473
    %3932 = vmatpush1.msra.mxu0 %v3472
    %3933 = vmatprep.subr.mxu0 %v3470
    %3934 = vmatpush1.msra.mxu0 %v3469
    %3935 = vmatprep.subr.mxu0 %v3467
    %3936 = vmatpush1.msra.mxu0 %v3466
    %3937 = vmatprep.subr.mxu0 %v3464
    %3938 = vmatpush1.msra.mxu0 %v3463
    %3939 = vmatprep.subr.mxu0 %v3461
    %3940 = vmatpush1.msra.mxu0 %v3460
    %3941 = vmatprep.subr.mxu0 %v3458
    %3942 = vmatpush1.msra.mxu0 %v3457
    %3943 = vmatprep.subr.mxu0 %v3455
    %3944 = vmatpush1.msra.mxu0 %v3454
    %3945 = vmatprep.subr.mxu0 %v3452
    %3946 = vmatpush1.msra.mxu0 %v3451
    %3947 = vmatprep.subr.mxu0 %v3449
    %3948 = vmatpush1.msra.mxu0 %v3448
    %3949 = vmatprep.subr.mxu0 0.0
    %3950 = vmatpush2.msra.mxu0 0.0
    %3951 = vmatprep.subr.mxu0 0.0
    %3952 = vmatpush2.msra.mxu0 0.0
    %3953 = vmatprep.subr.mxu0 0.0
    %3954 = vmatpush2.msra.mxu0 0.0
    %3955 = vmatprep.subr.mxu0 0.0
    %3956 = vmatpush2.msra.mxu0 0.0
    %3957 = vmatprep.subr.mxu0 0.0
    %3958 = vmatpush2.msra.mxu0 0.0
    %3959 = vmatprep.subr.mxu0 0.0
    %3960 = vmatpush2.msra.mxu0 0.0
    %3961 = vmatprep.subr.mxu0 0.0
    %3962 = vmatpush2.msra.mxu0 0.0
    %3963 = vmatprep.subr.mxu0 0.0
    %3964 = vmatpush2.msra.mxu0 0.0
    %3965 = vmatprep.subr.mxu0 0.0
    %3966 = vmatpush2.msra.mxu0 0.0
    %3967 = vmatprep.subr.mxu0 0.0
    %3968 = vmatpush2.msra.mxu0 0.0
    %3969 = vmatprep.subr.mxu0 0.0
    %3970 = vmatpush2.msra.mxu0 0.0
    %3971 = vmatprep.subr.mxu0 0.0
    %3972 = vmatpush2.msra.mxu0 0.0
    %3973 = vmatprep.subr.mxu0 0.0
    %3974 = vmatpush2.msra.mxu0 0.0
    %3975 = vmatprep.subr.mxu0 0.0
    %3976 = vmatpush2.msra.mxu0 0.0
    %3977 = vmatprep.subr.mxu0 0.0
    %3978 = vmatpush2.msra.mxu0 0.0
    %3979 = vmatprep.subr.mxu0 0.0
    %3980 = vmatpush2.msra.mxu0 0.0
    %3981 = vmatprep.mubr.f32.mxu0 0.0
    %3982 = vmatmul.mubr.f32.gmra.mxu0 %v3915
    %v3983 = vpop.f32.mrf.mxu0
    %v3984 = vadd.f32 %v3501, %v3983
    %v3985 = vpop.f32.mrf.mxu0
    %v3986 = vadd.f32 %v3505, %v3985
    %3987 = vdwg.mxu0
    %3988 = vmatprep.subr.mxu0 0.0
    %3989 = vmatpush1.msra.mxu0 %v3495
    %3990 = vmatprep.subr.mxu0 0.0
    %3991 = vmatpush1.msra.mxu0 %v3492
    %3992 = vmatprep.subr.mxu0 0.0
    %3993 = vmatpush1.msra.mxu0 %v3489
    %3994 = vmatprep.subr.mxu0 0.0
    %3995 = vmatpush1.msra.mxu0 %v3486
    %3996 = vmatprep.subr.mxu0 0.0
    %3997 = vmatpush1.msra.mxu0 %v3483
    %3998 = vmatprep.subr.mxu0 0.0
    %3999 = vmatpush1.msra.mxu0 %v3480
    %4000 = vmatprep.subr.mxu0 0.0
    %4001 = vmatpush1.msra.mxu0 %v3477
    %4002 = vmatprep.subr.mxu0 0.0
    %4003 = vmatpush1.msra.mxu0 %v3474
    %4004 = vmatprep.subr.mxu0 0.0
    %4005 = vmatpush1.msra.mxu0 %v3471
    %4006 = vmatprep.subr.mxu0 0.0
    %4007 = vmatpush1.msra.mxu0 %v3468
    %4008 = vmatprep.subr.mxu0 0.0
    %4009 = vmatpush1.msra.mxu0 %v3465
    %4010 = vmatprep.subr.mxu0 0.0
    %4011 = vmatpush1.msra.mxu0 %v3462
    %4012 = vmatprep.subr.mxu0 0.0
    %4013 = vmatpush1.msra.mxu0 %v3459
    %4014 = vmatprep.subr.mxu0 0.0
    %4015 = vmatpush1.msra.mxu0 %v3456
    %4016 = vmatprep.subr.mxu0 0.0
    %4017 = vmatpush1.msra.mxu0 %v3453
    %4018 = vmatprep.subr.mxu0 0.0
    %4019 = vmatpush1.msra.mxu0 %v3450
    %4020 = vmatprep.subr.mxu0 0.0
    %4021 = vmatpush2.msra.mxu0 0.0
    %4022 = vmatprep.subr.mxu0 0.0
    %4023 = vmatpush2.msra.mxu0 0.0
    %4024 = vmatprep.subr.mxu0 0.0
    %4025 = vmatpush2.msra.mxu0 0.0
    %4026 = vmatprep.subr.mxu0 0.0
    %4027 = vmatpush2.msra.mxu0 0.0
    %4028 = vmatprep.subr.mxu0 0.0
    %4029 = vmatpush2.msra.mxu0 0.0
    %4030 = vmatprep.subr.mxu0 0.0
    %4031 = vmatpush2.msra.mxu0 0.0
    %4032 = vmatprep.subr.mxu0 0.0
    %4033 = vmatpush2.msra.mxu0 0.0
    %4034 = vmatprep.subr.mxu0 0.0
    %4035 = vmatpush2.msra.mxu0 0.0
    %4036 = vmatprep.subr.mxu0 0.0
    %4037 = vmatpush2.msra.mxu0 0.0
    %4038 = vmatprep.subr.mxu0 0.0
    %4039 = vmatpush2.msra.mxu0 0.0
    %4040 = vmatprep.subr.mxu0 0.0
    %4041 = vmatpush2.msra.mxu0 0.0
    %4042 = vmatprep.subr.mxu0 0.0
    %4043 = vmatpush2.msra.mxu0 0.0
    %4044 = vmatprep.subr.mxu0 0.0
    %4045 = vmatpush2.msra.mxu0 0.0
    %4046 = vmatprep.subr.mxu0 0.0
    %4047 = vmatpush2.msra.mxu0 0.0
    %4048 = vmatprep.subr.mxu0 0.0
    %4049 = vmatpush2.msra.mxu0 0.0
    %4050 = vmatprep.subr.mxu0 0.0
    %4051 = vmatpush2.msra.mxu0 0.0
    %4052 = vmatprep.mubr.f32.mxu0 0.0
    %4053 = vmatmul.mubr.f32.gmra.mxu0 %v3915
    %v4054 = vpop.f32.mrf.mxu0
    %v4055 = vadd.f32 %v3509, %v4054
    %v4056 = vpop.f32.mrf.mxu0
    %4057 = vdwg.mxu0
    %v4059 = vrot.slane %v3984, 6
    %v4060 = vrot.slane %v3984, 7
    %v4063 = vadd.f32 %v3363, %v4059
    %v4064 = vadd.f32 %v3369, %v4060
    %v4065 = vxor.u32 %v4063, 2147483648
    %v4066 = vxor.u32 %v4064, 2147483648
    %v4067 = vmul.f32 %v4065, 1.442695
    %v4068 = vpow.pop %v4067
    %v4069 = vmul.f32 %v4066, 1.442695
    %v4070 = vpow.pop %v4069
    %v4071 = vadd.f32 %v4068, 1.0
    %v4072 = vadd.f32 %v4070, 1.0
    %v4073 = vrcp.pop %v4071
    %v4074 = vmul.f32 1.0, %v4073
    %v4075 = vrcp.pop %v4072
    %v4076 = vmul.f32 1.0, %v4075
    %v4078 = vrot.slane %v3986, 6
    %v4079 = vrot.slane %v3986, 7
    %v4082 = vadd.f32 %v3365, %v4078
    %v4083 = vadd.f32 %v3371, %v4079
    %v4084 = vxor.u32 %v4082, 2147483648
    %v4085 = vxor.u32 %v4083, 2147483648
    %v4086 = vmul.f32 %v4084, 1.442695
    %v4087 = vpow.pop %v4086
    %v4088 = vmul.f32 %v4085, 1.442695
    %v4089 = vpow.pop %v4088
    %v4090 = vadd.f32 %v4087, 1.0
    %v4091 = vadd.f32 %v4089, 1.0
    %v4092 = vrcp.pop %v4090
    %v4093 = vmul.f32 1.0, %v4092
    %v4094 = vrcp.pop %v4091
    %v4095 = vmul.f32 1.0, %v4094
    %v4097 = vrot.slane %v4055, 6
    %v4098 = vrot.slane %v4055, 7
    %v4101 = vmul.f32 %v4074, %v4097
    %v4102 = vmul.f32 %v4076, %v4098
    %v4103 = vadd.f32 %v3440, %v4101
    %v4104 = vadd.f32 %v3445, %v4102
    %v4105 = vtanh.pop %v4103
    %v4106 = vtanh.pop %v4104
    %v4107 = vsub.f32 1.0, %v4093
    %v4108 = vsub.f32 1.0, %v4095
    %v4109 = vmul.f32 %v4107, %v4105
    %v4110 = vmul.f32 %v4108, %v4106
    %v4111 = vrot.slane %v3910, 7
    %v4112 = vrot.slane %v3911, 7
    %v4115 = vmul.f32 %v4093, %v4111
    %v4116 = vmul.f32 %v4095, %v4112
    %v4117 = vadd.f32 %v4109, %v4115
    %v4118 = vadd.f32 %v4110, %v4116
    %v4121 = vrot.slane %v4117, 2
    %v4122 = vrot.slane %v4118, 1
    %v4123 = vsel %vm3711, %v4122, %v4121
    %4125 = vmatprep.subr.mxu0 %v3494
    %4126 = vmatpush1.msra.mxu0 %v3493
    %4127 = vmatprep.subr.mxu0 %v3491
    %4128 = vmatpush1.msra.mxu0 %v3490
    %4129 = vmatprep.subr.mxu0 %v3488
    %4130 = vmatpush1.msra.mxu0 %v3487
    %4131 = vmatprep.subr.mxu0 %v3485
    %4132 = vmatpush1.msra.mxu0 %v3484
    %4133 = vmatprep.subr.mxu0 %v3482
    %4134 = vmatpush1.msra.mxu0 %v3481
    %4135 = vmatprep.subr.mxu0 %v3479
    %4136 = vmatpush1.msra.mxu0 %v3478
    %4137 = vmatprep.subr.mxu0 %v3476
    %4138 = vmatpush1.msra.mxu0 %v3475
    %4139 = vmatprep.subr.mxu0 %v3473
    %4140 = vmatpush1.msra.mxu0 %v3472
    %4141 = vmatprep.subr.mxu0 %v3470
    %4142 = vmatpush1.msra.mxu0 %v3469
    %4143 = vmatprep.subr.mxu0 %v3467
    %4144 = vmatpush1.msra.mxu0 %v3466
    %4145 = vmatprep.subr.mxu0 %v3464
    %4146 = vmatpush1.msra.mxu0 %v3463
    %4147 = vmatprep.subr.mxu0 %v3461
    %4148 = vmatpush1.msra.mxu0 %v3460
    %4149 = vmatprep.subr.mxu0 %v3458
    %4150 = vmatpush1.msra.mxu0 %v3457
    %4151 = vmatprep.subr.mxu0 %v3455
    %4152 = vmatpush1.msra.mxu0 %v3454
    %4153 = vmatprep.subr.mxu0 %v3452
    %4154 = vmatpush1.msra.mxu0 %v3451
    %4155 = vmatprep.subr.mxu0 %v3449
    %4156 = vmatpush1.msra.mxu0 %v3448
    %4157 = vmatprep.subr.mxu0 0.0
    %4158 = vmatpush2.msra.mxu0 0.0
    %4159 = vmatprep.subr.mxu0 0.0
    %4160 = vmatpush2.msra.mxu0 0.0
    %4161 = vmatprep.subr.mxu0 0.0
    %4162 = vmatpush2.msra.mxu0 0.0
    %4163 = vmatprep.subr.mxu0 0.0
    %4164 = vmatpush2.msra.mxu0 0.0
    %4165 = vmatprep.subr.mxu0 0.0
    %4166 = vmatpush2.msra.mxu0 0.0
    %4167 = vmatprep.subr.mxu0 0.0
    %4168 = vmatpush2.msra.mxu0 0.0
    %4169 = vmatprep.subr.mxu0 0.0
    %4170 = vmatpush2.msra.mxu0 0.0
    %4171 = vmatprep.subr.mxu0 0.0
    %4172 = vmatpush2.msra.mxu0 0.0
    %4173 = vmatprep.subr.mxu0 0.0
    %4174 = vmatpush2.msra.mxu0 0.0
    %4175 = vmatprep.subr.mxu0 0.0
    %4176 = vmatpush2.msra.mxu0 0.0
    %4177 = vmatprep.subr.mxu0 0.0
    %4178 = vmatpush2.msra.mxu0 0.0
    %4179 = vmatprep.subr.mxu0 0.0
    %4180 = vmatpush2.msra.mxu0 0.0
    %4181 = vmatprep.subr.mxu0 0.0
    %4182 = vmatpush2.msra.mxu0 0.0
    %4183 = vmatprep.subr.mxu0 0.0
    %4184 = vmatpush2.msra.mxu0 0.0
    %4185 = vmatprep.subr.mxu0 0.0
    %4186 = vmatpush2.msra.mxu0 0.0
    %4187 = vmatprep.subr.mxu0 0.0
    %4188 = vmatpush2.msra.mxu0 0.0
    %4189 = vmatprep.mubr.f32.mxu0 0.0
    %4190 = vmatmul.mubr.f32.gmra.mxu0 %v4123
    %v4191 = vpop.f32.mrf.mxu0
    %v4192 = vadd.f32 %v3501, %v4191
    %v4193 = vpop.f32.mrf.mxu0
    %v4194 = vadd.f32 %v3505, %v4193
    %4195 = vdwg.mxu0
    %4196 = vmatprep.subr.mxu0 0.0
    %4197 = vmatpush1.msra.mxu0 %v3495
    %4198 = vmatprep.subr.mxu0 0.0
    %4199 = vmatpush1.msra.mxu0 %v3492
    %4200 = vmatprep.subr.mxu0 0.0
    %4201 = vmatpush1.msra.mxu0 %v3489
    %4202 = vmatprep.subr.mxu0 0.0
    %4203 = vmatpush1.msra.mxu0 %v3486
    %4204 = vmatprep.subr.mxu0 0.0
    %4205 = vmatpush1.msra.mxu0 %v3483
    %4206 = vmatprep.subr.mxu0 0.0
    %4207 = vmatpush1.msra.mxu0 %v3480
    %4208 = vmatprep.subr.mxu0 0.0
    %4209 = vmatpush1.msra.mxu0 %v3477
    %4210 = vmatprep.subr.mxu0 0.0
    %4211 = vmatpush1.msra.mxu0 %v3474
    %4212 = vmatprep.subr.mxu0 0.0
    %4213 = vmatpush1.msra.mxu0 %v3471
    %4214 = vmatprep.subr.mxu0 0.0
    %4215 = vmatpush1.msra.mxu0 %v3468
    %4216 = vmatprep.subr.mxu0 0.0
    %4217 = vmatpush1.msra.mxu0 %v3465
    %4218 = vmatprep.subr.mxu0 0.0
    %4219 = vmatpush1.msra.mxu0 %v3462
    %4220 = vmatprep.subr.mxu0 0.0
    %4221 = vmatpush1.msra.mxu0 %v3459
    %4222 = vmatprep.subr.mxu0 0.0
    %4223 = vmatpush1.msra.mxu0 %v3456
    %4224 = vmatprep.subr.mxu0 0.0
    %4225 = vmatpush1.msra.mxu0 %v3453
    %4226 = vmatprep.subr.mxu0 0.0
    %4227 = vmatpush1.msra.mxu0 %v3450
    %4228 = vmatprep.subr.mxu0 0.0
    %4229 = vmatpush2.msra.mxu0 0.0
    %4230 = vmatprep.subr.mxu0 0.0
    %4231 = vmatpush2.msra.mxu0 0.0
    %4232 = vmatprep.subr.mxu0 0.0
    %4233 = vmatpush2.msra.mxu0 0.0
    %4234 = vmatprep.subr.mxu0 0.0
    %4235 = vmatpush2.msra.mxu0 0.0
    %4236 = vmatprep.subr.mxu0 0.0
    %4237 = vmatpush2.msra.mxu0 0.0
    %4238 = vmatprep.subr.mxu0 0.0
    %4239 = vmatpush2.msra.mxu0 0.0
    %4240 = vmatprep.subr.mxu0 0.0
    %4241 = vmatpush2.msra.mxu0 0.0
    %4242 = vmatprep.subr.mxu0 0.0
    %4243 = vmatpush2.msra.mxu0 0.0
    %4244 = vmatprep.subr.mxu0 0.0
    %4245 = vmatpush2.msra.mxu0 0.0
    %4246 = vmatprep.subr.mxu0 0.0
    %4247 = vmatpush2.msra.mxu0 0.0
    %4248 = vmatprep.subr.mxu0 0.0
    %4249 = vmatpush2.msra.mxu0 0.0
    %4250 = vmatprep.subr.mxu0 0.0
    %4251 = vmatpush2.msra.mxu0 0.0
    %4252 = vmatprep.subr.mxu0 0.0
    %4253 = vmatpush2.msra.mxu0 0.0
    %4254 = vmatprep.subr.mxu0 0.0
    %4255 = vmatpush2.msra.mxu0 0.0
    %4256 = vmatprep.subr.mxu0 0.0
    %4257 = vmatpush2.msra.mxu0 0.0
    %4258 = vmatprep.subr.mxu0 0.0
    %4259 = vmatpush2.msra.mxu0 0.0
    %4260 = vmatprep.mubr.f32.mxu0 0.0
    %4261 = vmatmul.mubr.f32.gmra.mxu0 %v4123
    %v4262 = vpop.f32.mrf.mxu0
    %v4263 = vadd.f32 %v3509, %v4262
    %v4264 = vpop.f32.mrf.mxu0
    %4265 = vdwg.mxu0
    %v4267 = vrot.slane %v4192, 5
    %v4268 = vrot.slane %v4192, 6
    %v4271 = vadd.f32 %v3363, %v4267
    %v4272 = vadd.f32 %v3369, %v4268
    %v4273 = vxor.u32 %v4271, 2147483648
    %v4274 = vxor.u32 %v4272, 2147483648
    %v4275 = vmul.f32 %v4273, 1.442695
    %v4276 = vpow.pop %v4275
    %v4277 = vmul.f32 %v4274, 1.442695
    %v4278 = vpow.pop %v4277
    %v4279 = vadd.f32 %v4276, 1.0
    %v4280 = vadd.f32 %v4278, 1.0
    %v4281 = vrcp.pop %v4279
    %v4282 = vmul.f32 1.0, %v4281
    %v4283 = vrcp.pop %v4280
    %v4284 = vmul.f32 1.0, %v4283
    %v4286 = vrot.slane %v4194, 5
    %v4287 = vrot.slane %v4194, 6
    %v4290 = vadd.f32 %v3365, %v4286
    %v4291 = vadd.f32 %v3371, %v4287
    %v4292 = vxor.u32 %v4290, 2147483648
    %v4293 = vxor.u32 %v4291, 2147483648
    %v4294 = vmul.f32 %v4292, 1.442695
    %v4295 = vpow.pop %v4294
    %v4296 = vmul.f32 %v4293, 1.442695
    %v4297 = vpow.pop %v4296
    %v4298 = vadd.f32 %v4295, 1.0
    %v4299 = vadd.f32 %v4297, 1.0
    %v4300 = vrcp.pop %v4298
    %v4301 = vmul.f32 1.0, %v4300
    %v4302 = vrcp.pop %v4299
    %v4303 = vmul.f32 1.0, %v4302
    %v4305 = vrot.slane %v4263, 5
    %v4306 = vrot.slane %v4263, 6
    %v4309 = vmul.f32 %v4282, %v4305
    %v4310 = vmul.f32 %v4284, %v4306
    %v4311 = vadd.f32 %v3440, %v4309
    %v4312 = vadd.f32 %v3445, %v4310
    %v4313 = vtanh.pop %v4311
    %v4314 = vtanh.pop %v4312
    %v4315 = vsub.f32 1.0, %v4301
    %v4316 = vsub.f32 1.0, %v4303
    %v4317 = vmul.f32 %v4315, %v4313
    %v4318 = vmul.f32 %v4316, %v4314
    %v4319 = vrot.slane %v4117, 7
    %v4320 = vrot.slane %v4118, 7
    %v4323 = vmul.f32 %v4301, %v4319
    %v4324 = vmul.f32 %v4303, %v4320
    %v4325 = vadd.f32 %v4317, %v4323
    %v4326 = vadd.f32 %v4318, %v4324
    %v4329 = vrot.slane %v4325, 3
    %v4330 = vrot.slane %v4326, 2
    %v4331 = vsel %vm3711, %v4330, %v4329
    %4333 = vmatprep.subr.mxu0 %v3494
    %4334 = vmatpush1.msra.mxu0 %v3493
    %4335 = vmatprep.subr.mxu0 %v3491
    %4336 = vmatpush1.msra.mxu0 %v3490
    %4337 = vmatprep.subr.mxu0 %v3488
    %4338 = vmatpush1.msra.mxu0 %v3487
    %4339 = vmatprep.subr.mxu0 %v3485
    %4340 = vmatpush1.msra.mxu0 %v3484
    %4341 = vmatprep.subr.mxu0 %v3482
    %4342 = vmatpush1.msra.mxu0 %v3481
    %4343 = vmatprep.subr.mxu0 %v3479
    %4344 = vmatpush1.msra.mxu0 %v3478
    %4345 = vmatprep.subr.mxu0 %v3476
    %4346 = vmatpush1.msra.mxu0 %v3475
    %4347 = vmatprep.subr.mxu0 %v3473
    %4348 = vmatpush1.msra.mxu0 %v3472
    %4349 = vmatprep.subr.mxu0 %v3470
    %4350 = vmatpush1.msra.mxu0 %v3469
    %4351 = vmatprep.subr.mxu0 %v3467
    %4352 = vmatpush1.msra.mxu0 %v3466
    %4353 = vmatprep.subr.mxu0 %v3464
    %4354 = vmatpush1.msra.mxu0 %v3463
    %4355 = vmatprep.subr.mxu0 %v3461
    %4356 = vmatpush1.msra.mxu0 %v3460
    %4357 = vmatprep.subr.mxu0 %v3458
    %4358 = vmatpush1.msra.mxu0 %v3457
    %4359 = vmatprep.subr.mxu0 %v3455
    %4360 = vmatpush1.msra.mxu0 %v3454
    %4361 = vmatprep.subr.mxu0 %v3452
    %4362 = vmatpush1.msra.mxu0 %v3451
    %4363 = vmatprep.subr.mxu0 %v3449
    %4364 = vmatpush1.msra.mxu0 %v3448
    %4365 = vmatprep.subr.mxu0 0.0
    %4366 = vmatpush2.msra.mxu0 0.0
    %4367 = vmatprep.subr.mxu0 0.0
    %4368 = vmatpush2.msra.mxu0 0.0
    %4369 = vmatprep.subr.mxu0 0.0
    %4370 = vmatpush2.msra.mxu0 0.0
    %4371 = vmatprep.subr.mxu0 0.0
    %4372 = vmatpush2.msra.mxu0 0.0
    %4373 = vmatprep.subr.mxu0 0.0
    %4374 = vmatpush2.msra.mxu0 0.0
    %4375 = vmatprep.subr.mxu0 0.0
    %4376 = vmatpush2.msra.mxu0 0.0
    %4377 = vmatprep.subr.mxu0 0.0
    %4378 = vmatpush2.msra.mxu0 0.0
    %4379 = vmatprep.subr.mxu0 0.0
    %4380 = vmatpush2.msra.mxu0 0.0
    %4381 = vmatprep.subr.mxu0 0.0
    %4382 = vmatpush2.msra.mxu0 0.0
    %4383 = vmatprep.subr.mxu0 0.0
    %4384 = vmatpush2.msra.mxu0 0.0
    %4385 = vmatprep.subr.mxu0 0.0
    %4386 = vmatpush2.msra.mxu0 0.0
    %4387 = vmatprep.subr.mxu0 0.0
    %4388 = vmatpush2.msra.mxu0 0.0
    %4389 = vmatprep.subr.mxu0 0.0
    %4390 = vmatpush2.msra.mxu0 0.0
    %4391 = vmatprep.subr.mxu0 0.0
    %4392 = vmatpush2.msra.mxu0 0.0
    %4393 = vmatprep.subr.mxu0 0.0
    %4394 = vmatpush2.msra.mxu0 0.0
    %4395 = vmatprep.subr.mxu0 0.0
    %4396 = vmatpush2.msra.mxu0 0.0
    %4397 = vmatprep.mubr.f32.mxu0 0.0
    %4398 = vmatmul.mubr.f32.gmra.mxu0 %v4331
    %v4399 = vpop.f32.mrf.mxu0
    %v4400 = vadd.f32 %v3501, %v4399
    %v4401 = vpop.f32.mrf.mxu0
    %v4402 = vadd.f32 %v3505, %v4401
    %4403 = vdwg.mxu0
    %4404 = vmatprep.subr.mxu0 0.0
    %4405 = vmatpush1.msra.mxu0 %v3495
    %4406 = vmatprep.subr.mxu0 0.0
    %4407 = vmatpush1.msra.mxu0 %v3492
    %4408 = vmatprep.subr.mxu0 0.0
    %4409 = vmatpush1.msra.mxu0 %v3489
    %4410 = vmatprep.subr.mxu0 0.0
    %4411 = vmatpush1.msra.mxu0 %v3486
    %4412 = vmatprep.subr.mxu0 0.0
    %4413 = vmatpush1.msra.mxu0 %v3483
    %4414 = vmatprep.subr.mxu0 0.0
    %4415 = vmatpush1.msra.mxu0 %v3480
    %4416 = vmatprep.subr.mxu0 0.0
    %4417 = vmatpush1.msra.mxu0 %v3477
    %4418 = vmatprep.subr.mxu0 0.0
    %4419 = vmatpush1.msra.mxu0 %v3474
    %4420 = vmatprep.subr.mxu0 0.0
    %4421 = vmatpush1.msra.mxu0 %v3471
    %4422 = vmatprep.subr.mxu0 0.0
    %4423 = vmatpush1.msra.mxu0 %v3468
    %4424 = vmatprep.subr.mxu0 0.0
    %4425 = vmatpush1.msra.mxu0 %v3465
    %4426 = vmatprep.subr.mxu0 0.0
    %4427 = vmatpush1.msra.mxu0 %v3462
    %4428 = vmatprep.subr.mxu0 0.0
    %4429 = vmatpush1.msra.mxu0 %v3459
    %4430 = vmatprep.subr.mxu0 0.0
    %4431 = vmatpush1.msra.mxu0 %v3456
    %4432 = vmatprep.subr.mxu0 0.0
    %4433 = vmatpush1.msra.mxu0 %v3453
    %4434 = vmatprep.subr.mxu0 0.0
    %4435 = vmatpush1.msra.mxu0 %v3450
    %4436 = vmatprep.subr.mxu0 0.0
    %4437 = vmatpush2.msra.mxu0 0.0
    %4438 = vmatprep.subr.mxu0 0.0
    %4439 = vmatpush2.msra.mxu0 0.0
    %4440 = vmatprep.subr.mxu0 0.0
    %4441 = vmatpush2.msra.mxu0 0.0
    %4442 = vmatprep.subr.mxu0 0.0
    %4443 = vmatpush2.msra.mxu0 0.0
    %4444 = vmatprep.subr.mxu0 0.0
    %4445 = vmatpush2.msra.mxu0 0.0
    %4446 = vmatprep.subr.mxu0 0.0
    %4447 = vmatpush2.msra.mxu0 0.0
    %4448 = vmatprep.subr.mxu0 0.0
    %4449 = vmatpush2.msra.mxu0 0.0
    %4450 = vmatprep.subr.mxu0 0.0
    %4451 = vmatpush2.msra.mxu0 0.0
    %4452 = vmatprep.subr.mxu0 0.0
    %4453 = vmatpush2.msra.mxu0 0.0
    %4454 = vmatprep.subr.mxu0 0.0
    %4455 = vmatpush2.msra.mxu0 0.0
    %4456 = vmatprep.subr.mxu0 0.0
    %4457 = vmatpush2.msra.mxu0 0.0
    %4458 = vmatprep.subr.mxu0 0.0
    %4459 = vmatpush2.msra.mxu0 0.0
    %4460 = vmatprep.subr.mxu0 0.0
    %4461 = vmatpush2.msra.mxu0 0.0
    %4462 = vmatprep.subr.mxu0 0.0
    %4463 = vmatpush2.msra.mxu0 0.0
    %4464 = vmatprep.subr.mxu0 0.0
    %4465 = vmatpush2.msra.mxu0 0.0
    %4466 = vmatprep.subr.mxu0 0.0
    %4467 = vmatpush2.msra.mxu0 0.0
    %4468 = vmatprep.mubr.f32.mxu0 0.0
    %4469 = vmatmul.mubr.f32.gmra.mxu0 %v4331
    %v4470 = vpop.f32.mrf.mxu0
    %v4471 = vadd.f32 %v3509, %v4470
    %v4472 = vpop.f32.mrf.mxu0
    %4473 = vdwg.mxu0
    %v4475 = vrot.slane %v4400, 4
    %v4476 = vrot.slane %v4400, 5
    %v4479 = vadd.f32 %v3363, %v4475
    %v4480 = vadd.f32 %v3369, %v4476
    %v4481 = vxor.u32 %v4479, 2147483648
    %v4482 = vxor.u32 %v4480, 2147483648
    %v4483 = vmul.f32 %v4481, 1.442695
    %v4484 = vpow.pop %v4483
    %v4485 = vmul.f32 %v4482, 1.442695
    %v4486 = vpow.pop %v4485
    %v4487 = vadd.f32 %v4484, 1.0
    %v4488 = vadd.f32 %v4486, 1.0
    %v4489 = vrcp.pop %v4487
    %v4490 = vmul.f32 1.0, %v4489
    %v4491 = vrcp.pop %v4488
    %v4492 = vmul.f32 1.0, %v4491
    %v4494 = vrot.slane %v4402, 4
    %v4495 = vrot.slane %v4402, 5
    %v4498 = vadd.f32 %v3365, %v4494
    %v4499 = vadd.f32 %v3371, %v4495
    %v4500 = vxor.u32 %v4498, 2147483648
    %v4501 = vxor.u32 %v4499, 2147483648
    %v4502 = vmul.f32 %v4500, 1.442695
    %v4503 = vpow.pop %v4502
    %v4504 = vmul.f32 %v4501, 1.442695
    %v4505 = vpow.pop %v4504
    %v4506 = vadd.f32 %v4503, 1.0
    %v4507 = vadd.f32 %v4505, 1.0
    %v4508 = vrcp.pop %v4506
    %v4509 = vmul.f32 1.0, %v4508
    %v4510 = vrcp.pop %v4507
    %v4511 = vmul.f32 1.0, %v4510
    %v4513 = vrot.slane %v4471, 4
    %v4514 = vrot.slane %v4471, 5
    %v4517 = vmul.f32 %v4490, %v4513
    %v4518 = vmul.f32 %v4492, %v4514
    %v4519 = vadd.f32 %v3440, %v4517
    %v4520 = vadd.f32 %v3445, %v4518
    %v4521 = vtanh.pop %v4519
    %v4522 = vtanh.pop %v4520
    %v4523 = vsub.f32 1.0, %v4509
    %v4524 = vsub.f32 1.0, %v4511
    %v4525 = vmul.f32 %v4523, %v4521
    %v4526 = vmul.f32 %v4524, %v4522
    %v4527 = vrot.slane %v4325, 7
    %v4528 = vrot.slane %v4326, 7
    %v4531 = vmul.f32 %v4509, %v4527
    %v4532 = vmul.f32 %v4511, %v4528
    %v4533 = vadd.f32 %v4525, %v4531
    %v4534 = vadd.f32 %v4526, %v4532
    %v4537 = vrot.slane %v4533, 4
    %v4538 = vrot.slane %v4534, 3
    %v4539 = vsel %vm3711, %v4538, %v4537
    %4541 = vmatprep.subr.mxu0 %v3494
    %4542 = vmatpush1.msra.mxu0 %v3493
    %4543 = vmatprep.subr.mxu0 %v3491
    %4544 = vmatpush1.msra.mxu0 %v3490
    %4545 = vmatprep.subr.mxu0 %v3488
    %4546 = vmatpush1.msra.mxu0 %v3487
    %4547 = vmatprep.subr.mxu0 %v3485
    %4548 = vmatpush1.msra.mxu0 %v3484
    %4549 = vmatprep.subr.mxu0 %v3482
    %4550 = vmatpush1.msra.mxu0 %v3481
    %4551 = vmatprep.subr.mxu0 %v3479
    %4552 = vmatpush1.msra.mxu0 %v3478
    %4553 = vmatprep.subr.mxu0 %v3476
    %4554 = vmatpush1.msra.mxu0 %v3475
    %4555 = vmatprep.subr.mxu0 %v3473
    %4556 = vmatpush1.msra.mxu0 %v3472
    %4557 = vmatprep.subr.mxu0 %v3470
    %4558 = vmatpush1.msra.mxu0 %v3469
    %4559 = vmatprep.subr.mxu0 %v3467
    %4560 = vmatpush1.msra.mxu0 %v3466
    %4561 = vmatprep.subr.mxu0 %v3464
    %4562 = vmatpush1.msra.mxu0 %v3463
    %4563 = vmatprep.subr.mxu0 %v3461
    %4564 = vmatpush1.msra.mxu0 %v3460
    %4565 = vmatprep.subr.mxu0 %v3458
    %4566 = vmatpush1.msra.mxu0 %v3457
    %4567 = vmatprep.subr.mxu0 %v3455
    %4568 = vmatpush1.msra.mxu0 %v3454
    %4569 = vmatprep.subr.mxu0 %v3452
    %4570 = vmatpush1.msra.mxu0 %v3451
    %4571 = vmatprep.subr.mxu0 %v3449
    %4572 = vmatpush1.msra.mxu0 %v3448
    %4573 = vmatprep.subr.mxu0 0.0
    %4574 = vmatpush2.msra.mxu0 0.0
    %4575 = vmatprep.subr.mxu0 0.0
    %4576 = vmatpush2.msra.mxu0 0.0
    %4577 = vmatprep.subr.mxu0 0.0
    %4578 = vmatpush2.msra.mxu0 0.0
    %4579 = vmatprep.subr.mxu0 0.0
    %4580 = vmatpush2.msra.mxu0 0.0
    %4581 = vmatprep.subr.mxu0 0.0
    %4582 = vmatpush2.msra.mxu0 0.0
    %4583 = vmatprep.subr.mxu0 0.0
    %4584 = vmatpush2.msra.mxu0 0.0
    %4585 = vmatprep.subr.mxu0 0.0
    %4586 = vmatpush2.msra.mxu0 0.0
    %4587 = vmatprep.subr.mxu0 0.0
    %4588 = vmatpush2.msra.mxu0 0.0
    %4589 = vmatprep.subr.mxu0 0.0
    %4590 = vmatpush2.msra.mxu0 0.0
    %4591 = vmatprep.subr.mxu0 0.0
    %4592 = vmatpush2.msra.mxu0 0.0
    %4593 = vmatprep.subr.mxu0 0.0
    %4594 = vmatpush2.msra.mxu0 0.0
    %4595 = vmatprep.subr.mxu0 0.0
    %4596 = vmatpush2.msra.mxu0 0.0
    %4597 = vmatprep.subr.mxu0 0.0
    %4598 = vmatpush2.msra.mxu0 0.0
    %4599 = vmatprep.subr.mxu0 0.0
    %4600 = vmatpush2.msra.mxu0 0.0
    %4601 = vmatprep.subr.mxu0 0.0
    %4602 = vmatpush2.msra.mxu0 0.0
    %4603 = vmatprep.subr.mxu0 0.0
    %4604 = vmatpush2.msra.mxu0 0.0
    %4605 = vmatprep.mubr.f32.mxu0 0.0
    %4606 = vmatmul.mubr.f32.gmra.mxu0 %v4539
    %v4607 = vpop.f32.mrf.mxu0
    %v4608 = vadd.f32 %v3501, %v4607
    %v4609 = vpop.f32.mrf.mxu0
    %v4610 = vadd.f32 %v3505, %v4609
    %4611 = vdwg.mxu0
    %4612 = vmatprep.subr.mxu0 0.0
    %4613 = vmatpush1.msra.mxu0 %v3495
    %4614 = vmatprep.subr.mxu0 0.0
    %4615 = vmatpush1.msra.mxu0 %v3492
    %4616 = vmatprep.subr.mxu0 0.0
    %4617 = vmatpush1.msra.mxu0 %v3489
    %4618 = vmatprep.subr.mxu0 0.0
    %4619 = vmatpush1.msra.mxu0 %v3486
    %4620 = vmatprep.subr.mxu0 0.0
    %4621 = vmatpush1.msra.mxu0 %v3483
    %4622 = vmatprep.subr.mxu0 0.0
    %4623 = vmatpush1.msra.mxu0 %v3480
    %4624 = vmatprep.subr.mxu0 0.0
    %4625 = vmatpush1.msra.mxu0 %v3477
    %4626 = vmatprep.subr.mxu0 0.0
    %4627 = vmatpush1.msra.mxu0 %v3474
    %4628 = vmatprep.subr.mxu0 0.0
    %4629 = vmatpush1.msra.mxu0 %v3471
    %4630 = vmatprep.subr.mxu0 0.0
    %4631 = vmatpush1.msra.mxu0 %v3468
    %4632 = vmatprep.subr.mxu0 0.0
    %4633 = vmatpush1.msra.mxu0 %v3465
    %4634 = vmatprep.subr.mxu0 0.0
    %4635 = vmatpush1.msra.mxu0 %v3462
    %4636 = vmatprep.subr.mxu0 0.0
    %4637 = vmatpush1.msra.mxu0 %v3459
    %4638 = vmatprep.subr.mxu0 0.0
    %4639 = vmatpush1.msra.mxu0 %v3456
    %4640 = vmatprep.subr.mxu0 0.0
    %4641 = vmatpush1.msra.mxu0 %v3453
    %4642 = vmatprep.subr.mxu0 0.0
    %4643 = vmatpush1.msra.mxu0 %v3450
    %4644 = vmatprep.subr.mxu0 0.0
    %4645 = vmatpush2.msra.mxu0 0.0
    %4646 = vmatprep.subr.mxu0 0.0
    %4647 = vmatpush2.msra.mxu0 0.0
    %4648 = vmatprep.subr.mxu0 0.0
    %4649 = vmatpush2.msra.mxu0 0.0
    %4650 = vmatprep.subr.mxu0 0.0
    %4651 = vmatpush2.msra.mxu0 0.0
    %4652 = vmatprep.subr.mxu0 0.0
    %4653 = vmatpush2.msra.mxu0 0.0
    %4654 = vmatprep.subr.mxu0 0.0
    %4655 = vmatpush2.msra.mxu0 0.0
    %4656 = vmatprep.subr.mxu0 0.0
    %4657 = vmatpush2.msra.mxu0 0.0
    %4658 = vmatprep.subr.mxu0 0.0
    %4659 = vmatpush2.msra.mxu0 0.0
    %4660 = vmatprep.subr.mxu0 0.0
    %4661 = vmatpush2.msra.mxu0 0.0
    %4662 = vmatprep.subr.mxu0 0.0
    %4663 = vmatpush2.msra.mxu0 0.0
    %4664 = vmatprep.subr.mxu0 0.0
    %4665 = vmatpush2.msra.mxu0 0.0
    %4666 = vmatprep.subr.mxu0 0.0
    %4667 = vmatpush2.msra.mxu0 0.0
    %4668 = vmatprep.subr.mxu0 0.0
    %4669 = vmatpush2.msra.mxu0 0.0
    %4670 = vmatprep.subr.mxu0 0.0
    %4671 = vmatpush2.msra.mxu0 0.0
    %4672 = vmatprep.subr.mxu0 0.0
    %4673 = vmatpush2.msra.mxu0 0.0
    %4674 = vmatprep.subr.mxu0 0.0
    %4675 = vmatpush2.msra.mxu0 0.0
    %4676 = vmatprep.mubr.f32.mxu0 0.0
    %4677 = vmatmul.mubr.f32.gmra.mxu0 %v4539
    %v4678 = vpop.f32.mrf.mxu0
    %v4679 = vadd.f32 %v3509, %v4678
    %v4680 = vpop.f32.mrf.mxu0
    %4681 = vdwg.mxu0
    %v4683 = vrot.slane %v4608, 3
    %v4684 = vrot.slane %v4608, 4
    %v4687 = vadd.f32 %v3363, %v4683
    %v4688 = vadd.f32 %v3369, %v4684
    %v4689 = vxor.u32 %v4687, 2147483648
    %v4690 = vxor.u32 %v4688, 2147483648
    %v4691 = vmul.f32 %v4689, 1.442695
    %v4692 = vpow.pop %v4691
    %v4693 = vmul.f32 %v4690, 1.442695
    %v4694 = vpow.pop %v4693
    %v4695 = vadd.f32 %v4692, 1.0
    %v4696 = vadd.f32 %v4694, 1.0
    %v4697 = vrcp.pop %v4695
    %v4698 = vmul.f32 1.0, %v4697
    %v4699 = vrcp.pop %v4696
    %v4700 = vmul.f32 1.0, %v4699
    %v4702 = vrot.slane %v4610, 3
    %v4703 = vrot.slane %v4610, 4
    %v4706 = vadd.f32 %v3365, %v4702
    %v4707 = vadd.f32 %v3371, %v4703
    %v4708 = vxor.u32 %v4706, 2147483648
    %v4709 = vxor.u32 %v4707, 2147483648
    %v4710 = vmul.f32 %v4708, 1.442695
    %v4711 = vpow.pop %v4710
    %v4712 = vmul.f32 %v4709, 1.442695
    %v4713 = vpow.pop %v4712
    %v4714 = vadd.f32 %v4711, 1.0
    %v4715 = vadd.f32 %v4713, 1.0
    %v4716 = vrcp.pop %v4714
    %v4717 = vmul.f32 1.0, %v4716
    %v4718 = vrcp.pop %v4715
    %v4719 = vmul.f32 1.0, %v4718
    %v4721 = vrot.slane %v4679, 3
    %v4722 = vrot.slane %v4679, 4
    %v4725 = vmul.f32 %v4698, %v4721
    %v4726 = vmul.f32 %v4700, %v4722
    %v4727 = vadd.f32 %v3440, %v4725
    %v4728 = vadd.f32 %v3445, %v4726
    %v4729 = vtanh.pop %v4727
    %v4730 = vtanh.pop %v4728
    %v4731 = vsub.f32 1.0, %v4717
    %v4732 = vsub.f32 1.0, %v4719
    %v4733 = vmul.f32 %v4731, %v4729
    %v4734 = vmul.f32 %v4732, %v4730
    %v4735 = vrot.slane %v4533, 7
    %v4736 = vrot.slane %v4534, 7
    %v4739 = vmul.f32 %v4717, %v4735
    %v4740 = vmul.f32 %v4719, %v4736
    %v4741 = vadd.f32 %v4733, %v4739
    %v4742 = vadd.f32 %v4734, %v4740
    %v4745 = vrot.slane %v4741, 5
    %v4746 = vrot.slane %v4742, 4
    %v4747 = vsel %vm3711, %v4746, %v4745
    %4749 = vmatprep.subr.mxu0 %v3494
    %4750 = vmatpush1.msra.mxu0 %v3493
    %4751 = vmatprep.subr.mxu0 %v3491
    %4752 = vmatpush1.msra.mxu0 %v3490
    %4753 = vmatprep.subr.mxu0 %v3488
    %4754 = vmatpush1.msra.mxu0 %v3487
    %4755 = vmatprep.subr.mxu0 %v3485
    %4756 = vmatpush1.msra.mxu0 %v3484
    %4757 = vmatprep.subr.mxu0 %v3482
    %4758 = vmatpush1.msra.mxu0 %v3481
    %4759 = vmatprep.subr.mxu0 %v3479
    %4760 = vmatpush1.msra.mxu0 %v3478
    %4761 = vmatprep.subr.mxu0 %v3476
    %4762 = vmatpush1.msra.mxu0 %v3475
    %4763 = vmatprep.subr.mxu0 %v3473
    %4764 = vmatpush1.msra.mxu0 %v3472
    %4765 = vmatprep.subr.mxu0 %v3470
    %4766 = vmatpush1.msra.mxu0 %v3469
    %4767 = vmatprep.subr.mxu0 %v3467
    %4768 = vmatpush1.msra.mxu0 %v3466
    %4769 = vmatprep.subr.mxu0 %v3464
    %4770 = vmatpush1.msra.mxu0 %v3463
    %4771 = vmatprep.subr.mxu0 %v3461
    %4772 = vmatpush1.msra.mxu0 %v3460
    %4773 = vmatprep.subr.mxu0 %v3458
    %4774 = vmatpush1.msra.mxu0 %v3457
    %4775 = vmatprep.subr.mxu0 %v3455
    %4776 = vmatpush1.msra.mxu0 %v3454
    %4777 = vmatprep.subr.mxu0 %v3452
    %4778 = vmatpush1.msra.mxu0 %v3451
    %4779 = vmatprep.subr.mxu0 %v3449
    %4780 = vmatpush1.msra.mxu0 %v3448
    %4781 = vmatprep.subr.mxu0 0.0
    %4782 = vmatpush2.msra.mxu0 0.0
    %4783 = vmatprep.subr.mxu0 0.0
    %4784 = vmatpush2.msra.mxu0 0.0
    %4785 = vmatprep.subr.mxu0 0.0
    %4786 = vmatpush2.msra.mxu0 0.0
    %4787 = vmatprep.subr.mxu0 0.0
    %4788 = vmatpush2.msra.mxu0 0.0
    %4789 = vmatprep.subr.mxu0 0.0
    %4790 = vmatpush2.msra.mxu0 0.0
    %4791 = vmatprep.subr.mxu0 0.0
    %4792 = vmatpush2.msra.mxu0 0.0
    %4793 = vmatprep.subr.mxu0 0.0
    %4794 = vmatpush2.msra.mxu0 0.0
    %4795 = vmatprep.subr.mxu0 0.0
    %4796 = vmatpush2.msra.mxu0 0.0
    %4797 = vmatprep.subr.mxu0 0.0
    %4798 = vmatpush2.msra.mxu0 0.0
    %4799 = vmatprep.subr.mxu0 0.0
    %4800 = vmatpush2.msra.mxu0 0.0
    %4801 = vmatprep.subr.mxu0 0.0
    %4802 = vmatpush2.msra.mxu0 0.0
    %4803 = vmatprep.subr.mxu0 0.0
    %4804 = vmatpush2.msra.mxu0 0.0
    %4805 = vmatprep.subr.mxu0 0.0
    %4806 = vmatpush2.msra.mxu0 0.0
    %4807 = vmatprep.subr.mxu0 0.0
    %4808 = vmatpush2.msra.mxu0 0.0
    %4809 = vmatprep.subr.mxu0 0.0
    %4810 = vmatpush2.msra.mxu0 0.0
    %4811 = vmatprep.subr.mxu0 0.0
    %4812 = vmatpush2.msra.mxu0 0.0
    %4813 = vmatprep.mubr.f32.mxu0 0.0
    %4814 = vmatmul.mubr.f32.gmra.mxu0 %v4747
    %v4815 = vpop.f32.mrf.mxu0
    %v4816 = vadd.f32 %v3501, %v4815
    %v4817 = vpop.f32.mrf.mxu0
    %v4818 = vadd.f32 %v3505, %v4817
    %4819 = vdwg.mxu0
    %4820 = vmatprep.subr.mxu0 0.0
    %4821 = vmatpush1.msra.mxu0 %v3495
    %4822 = vmatprep.subr.mxu0 0.0
    %4823 = vmatpush1.msra.mxu0 %v3492
    %4824 = vmatprep.subr.mxu0 0.0
    %4825 = vmatpush1.msra.mxu0 %v3489
    %4826 = vmatprep.subr.mxu0 0.0
    %4827 = vmatpush1.msra.mxu0 %v3486
    %4828 = vmatprep.subr.mxu0 0.0
    %4829 = vmatpush1.msra.mxu0 %v3483
    %4830 = vmatprep.subr.mxu0 0.0
    %4831 = vmatpush1.msra.mxu0 %v3480
    %4832 = vmatprep.subr.mxu0 0.0
    %4833 = vmatpush1.msra.mxu0 %v3477
    %4834 = vmatprep.subr.mxu0 0.0
    %4835 = vmatpush1.msra.mxu0 %v3474
    %4836 = vmatprep.subr.mxu0 0.0
    %4837 = vmatpush1.msra.mxu0 %v3471
    %4838 = vmatprep.subr.mxu0 0.0
    %4839 = vmatpush1.msra.mxu0 %v3468
    %4840 = vmatprep.subr.mxu0 0.0
    %4841 = vmatpush1.msra.mxu0 %v3465
    %4842 = vmatprep.subr.mxu0 0.0
    %4843 = vmatpush1.msra.mxu0 %v3462
    %4844 = vmatprep.subr.mxu0 0.0
    %4845 = vmatpush1.msra.mxu0 %v3459
    %4846 = vmatprep.subr.mxu0 0.0
    %4847 = vmatpush1.msra.mxu0 %v3456
    %4848 = vmatprep.subr.mxu0 0.0
    %4849 = vmatpush1.msra.mxu0 %v3453
    %4850 = vmatprep.subr.mxu0 0.0
    %4851 = vmatpush1.msra.mxu0 %v3450
    %4852 = vmatprep.subr.mxu0 0.0
    %4853 = vmatpush2.msra.mxu0 0.0
    %4854 = vmatprep.subr.mxu0 0.0
    %4855 = vmatpush2.msra.mxu0 0.0
    %4856 = vmatprep.subr.mxu0 0.0
    %4857 = vmatpush2.msra.mxu0 0.0
    %4858 = vmatprep.subr.mxu0 0.0
    %4859 = vmatpush2.msra.mxu0 0.0
    %4860 = vmatprep.subr.mxu0 0.0
    %4861 = vmatpush2.msra.mxu0 0.0
    %4862 = vmatprep.subr.mxu0 0.0
    %4863 = vmatpush2.msra.mxu0 0.0
    %4864 = vmatprep.subr.mxu0 0.0
    %4865 = vmatpush2.msra.mxu0 0.0
    %4866 = vmatprep.subr.mxu0 0.0
    %4867 = vmatpush2.msra.mxu0 0.0
    %4868 = vmatprep.subr.mxu0 0.0
    %4869 = vmatpush2.msra.mxu0 0.0
    %4870 = vmatprep.subr.mxu0 0.0
    %4871 = vmatpush2.msra.mxu0 0.0
    %4872 = vmatprep.subr.mxu0 0.0
    %4873 = vmatpush2.msra.mxu0 0.0
    %4874 = vmatprep.subr.mxu0 0.0
    %4875 = vmatpush2.msra.mxu0 0.0
    %4876 = vmatprep.subr.mxu0 0.0
    %4877 = vmatpush2.msra.mxu0 0.0
    %4878 = vmatprep.subr.mxu0 0.0
    %4879 = vmatpush2.msra.mxu0 0.0
    %4880 = vmatprep.subr.mxu0 0.0
    %4881 = vmatpush2.msra.mxu0 0.0
    %4882 = vmatprep.subr.mxu0 0.0
    %4883 = vmatpush2.msra.mxu0 0.0
    %4884 = vmatprep.mubr.f32.mxu0 0.0
    %4885 = vmatmul.mubr.f32.gmra.mxu0 %v4747
    %v4886 = vpop.f32.mrf.mxu0
    %v4887 = vadd.f32 %v3509, %v4886
    %v4888 = vpop.f32.mrf.mxu0
    %4889 = vdwg.mxu0
    %v4891 = vrot.slane %v4816, 2
    %v4892 = vrot.slane %v4816, 3
    %v4895 = vadd.f32 %v3363, %v4891
    %v4896 = vadd.f32 %v3369, %v4892
    %v4897 = vxor.u32 %v4895, 2147483648
    %v4898 = vxor.u32 %v4896, 2147483648
    %v4899 = vmul.f32 %v4897, 1.442695
    %v4900 = vpow.pop %v4899
    %v4901 = vmul.f32 %v4898, 1.442695
    %v4902 = vpow.pop %v4901
    %v4903 = vadd.f32 %v4900, 1.0
    %v4904 = vadd.f32 %v4902, 1.0
    %v4905 = vrcp.pop %v4903
    %v4906 = vmul.f32 1.0, %v4905
    %v4907 = vrcp.pop %v4904
    %v4908 = vmul.f32 1.0, %v4907
    %v4910 = vrot.slane %v4818, 2
    %v4911 = vrot.slane %v4818, 3
    %v4914 = vadd.f32 %v3365, %v4910
    %v4915 = vadd.f32 %v3371, %v4911
    %v4916 = vxor.u32 %v4914, 2147483648
    %v4917 = vxor.u32 %v4915, 2147483648
    %v4918 = vmul.f32 %v4916, 1.442695
    %v4919 = vpow.pop %v4918
    %v4920 = vmul.f32 %v4917, 1.442695
    %v4921 = vpow.pop %v4920
    %v4922 = vadd.f32 %v4919, 1.0
    %v4923 = vadd.f32 %v4921, 1.0
    %v4924 = vrcp.pop %v4922
    %v4925 = vmul.f32 1.0, %v4924
    %v4926 = vrcp.pop %v4923
    %v4927 = vmul.f32 1.0, %v4926
    %v4929 = vrot.slane %v4887, 2
    %v4930 = vrot.slane %v4887, 3
    %v4933 = vmul.f32 %v4906, %v4929
    %v4934 = vmul.f32 %v4908, %v4930
    %v4935 = vadd.f32 %v3440, %v4933
    %v4936 = vadd.f32 %v3445, %v4934
    %v4937 = vtanh.pop %v4935
    %v4938 = vtanh.pop %v4936
    %v4939 = vsub.f32 1.0, %v4925
    %v4940 = vsub.f32 1.0, %v4927
    %v4941 = vmul.f32 %v4939, %v4937
    %v4942 = vmul.f32 %v4940, %v4938
    %v4943 = vrot.slane %v4741, 7
    %v4944 = vrot.slane %v4742, 7
    %v4947 = vmul.f32 %v4925, %v4943
    %v4948 = vmul.f32 %v4927, %v4944
    %v4949 = vadd.f32 %v4941, %v4947
    %v4950 = vadd.f32 %v4942, %v4948
    %v4953 = vrot.slane %v4949, 6
    %v4954 = vrot.slane %v4950, 5
    %v4955 = vsel %vm3711, %v4954, %v4953
    %4957 = vmatprep.subr.mxu0 %v3494
    %4958 = vmatpush1.msra.mxu0 %v3493
    %4959 = vmatprep.subr.mxu0 %v3491
    %4960 = vmatpush1.msra.mxu0 %v3490
    %4961 = vmatprep.subr.mxu0 %v3488
    %4962 = vmatpush1.msra.mxu0 %v3487
    %4963 = vmatprep.subr.mxu0 %v3485
    %4964 = vmatpush1.msra.mxu0 %v3484
    %4965 = vmatprep.subr.mxu0 %v3482
    %4966 = vmatpush1.msra.mxu0 %v3481
    %4967 = vmatprep.subr.mxu0 %v3479
    %4968 = vmatpush1.msra.mxu0 %v3478
    %4969 = vmatprep.subr.mxu0 %v3476
    %4970 = vmatpush1.msra.mxu0 %v3475
    %4971 = vmatprep.subr.mxu0 %v3473
    %4972 = vmatpush1.msra.mxu0 %v3472
    %4973 = vmatprep.subr.mxu0 %v3470
    %4974 = vmatpush1.msra.mxu0 %v3469
    %4975 = vmatprep.subr.mxu0 %v3467
    %4976 = vmatpush1.msra.mxu0 %v3466
    %4977 = vmatprep.subr.mxu0 %v3464
    %4978 = vmatpush1.msra.mxu0 %v3463
    %4979 = vmatprep.subr.mxu0 %v3461
    %4980 = vmatpush1.msra.mxu0 %v3460
    %4981 = vmatprep.subr.mxu0 %v3458
    %4982 = vmatpush1.msra.mxu0 %v3457
    %4983 = vmatprep.subr.mxu0 %v3455
    %4984 = vmatpush1.msra.mxu0 %v3454
    %4985 = vmatprep.subr.mxu0 %v3452
    %4986 = vmatpush1.msra.mxu0 %v3451
    %4987 = vmatprep.subr.mxu0 %v3449
    %4988 = vmatpush1.msra.mxu0 %v3448
    %4989 = vmatprep.subr.mxu0 0.0
    %4990 = vmatpush2.msra.mxu0 0.0
    %4991 = vmatprep.subr.mxu0 0.0
    %4992 = vmatpush2.msra.mxu0 0.0
    %4993 = vmatprep.subr.mxu0 0.0
    %4994 = vmatpush2.msra.mxu0 0.0
    %4995 = vmatprep.subr.mxu0 0.0
    %4996 = vmatpush2.msra.mxu0 0.0
    %4997 = vmatprep.subr.mxu0 0.0
    %4998 = vmatpush2.msra.mxu0 0.0
    %4999 = vmatprep.subr.mxu0 0.0
    %5000 = vmatpush2.msra.mxu0 0.0
    %5001 = vmatprep.subr.mxu0 0.0
    %5002 = vmatpush2.msra.mxu0 0.0
    %5003 = vmatprep.subr.mxu0 0.0
    %5004 = vmatpush2.msra.mxu0 0.0
    %5005 = vmatprep.subr.mxu0 0.0
    %5006 = vmatpush2.msra.mxu0 0.0
    %5007 = vmatprep.subr.mxu0 0.0
    %5008 = vmatpush2.msra.mxu0 0.0
    %5009 = vmatprep.subr.mxu0 0.0
    %5010 = vmatpush2.msra.mxu0 0.0
    %5011 = vmatprep.subr.mxu0 0.0
    %5012 = vmatpush2.msra.mxu0 0.0
    %5013 = vmatprep.subr.mxu0 0.0
    %5014 = vmatpush2.msra.mxu0 0.0
    %5015 = vmatprep.subr.mxu0 0.0
    %5016 = vmatpush2.msra.mxu0 0.0
    %5017 = vmatprep.subr.mxu0 0.0
    %5018 = vmatpush2.msra.mxu0 0.0
    %5019 = vmatprep.subr.mxu0 0.0
    %5020 = vmatpush2.msra.mxu0 0.0
    %5021 = vmatprep.mubr.f32.mxu0 0.0
    %5022 = vmatmul.mubr.f32.gmra.mxu0 %v4955
    %v5023 = vpop.f32.mrf.mxu0
    %v5024 = vadd.f32 %v3501, %v5023
    %v5025 = vpop.f32.mrf.mxu0
    %v5026 = vadd.f32 %v3505, %v5025
    %5027 = vdwg.mxu0
    %5028 = vmatprep.subr.mxu0 0.0
    %5029 = vmatpush1.msra.mxu0 %v3495
    %5030 = vmatprep.subr.mxu0 0.0
    %5031 = vmatpush1.msra.mxu0 %v3492
    %5032 = vmatprep.subr.mxu0 0.0
    %5033 = vmatpush1.msra.mxu0 %v3489
    %5034 = vmatprep.subr.mxu0 0.0
    %5035 = vmatpush1.msra.mxu0 %v3486
    %5036 = vmatprep.subr.mxu0 0.0
    %5037 = vmatpush1.msra.mxu0 %v3483
    %5038 = vmatprep.subr.mxu0 0.0
    %5039 = vmatpush1.msra.mxu0 %v3480
    %5040 = vmatprep.subr.mxu0 0.0
    %5041 = vmatpush1.msra.mxu0 %v3477
    %5042 = vmatprep.subr.mxu0 0.0
    %5043 = vmatpush1.msra.mxu0 %v3474
    %5044 = vmatprep.subr.mxu0 0.0
    %5045 = vmatpush1.msra.mxu0 %v3471
    %5046 = vmatprep.subr.mxu0 0.0
    %5047 = vmatpush1.msra.mxu0 %v3468
    %5048 = vmatprep.subr.mxu0 0.0
    %5049 = vmatpush1.msra.mxu0 %v3465
    %5050 = vmatprep.subr.mxu0 0.0
    %5051 = vmatpush1.msra.mxu0 %v3462
    %5052 = vmatprep.subr.mxu0 0.0
    %5053 = vmatpush1.msra.mxu0 %v3459
    %5054 = vmatprep.subr.mxu0 0.0
    %5055 = vmatpush1.msra.mxu0 %v3456
    %5056 = vmatprep.subr.mxu0 0.0
    %5057 = vmatpush1.msra.mxu0 %v3453
    %5058 = vmatprep.subr.mxu0 0.0
    %5059 = vmatpush1.msra.mxu0 %v3450
    %5060 = vmatprep.subr.mxu0 0.0
    %5061 = vmatpush2.msra.mxu0 0.0
    %5062 = vmatprep.subr.mxu0 0.0
    %5063 = vmatpush2.msra.mxu0 0.0
    %5064 = vmatprep.subr.mxu0 0.0
    %5065 = vmatpush2.msra.mxu0 0.0
    %5066 = vmatprep.subr.mxu0 0.0
    %5067 = vmatpush2.msra.mxu0 0.0
    %5068 = vmatprep.subr.mxu0 0.0
    %5069 = vmatpush2.msra.mxu0 0.0
    %5070 = vmatprep.subr.mxu0 0.0
    %5071 = vmatpush2.msra.mxu0 0.0
    %5072 = vmatprep.subr.mxu0 0.0
    %5073 = vmatpush2.msra.mxu0 0.0
    %5074 = vmatprep.subr.mxu0 0.0
    %5075 = vmatpush2.msra.mxu0 0.0
    %5076 = vmatprep.subr.mxu0 0.0
    %5077 = vmatpush2.msra.mxu0 0.0
    %5078 = vmatprep.subr.mxu0 0.0
    %5079 = vmatpush2.msra.mxu0 0.0
    %5080 = vmatprep.subr.mxu0 0.0
    %5081 = vmatpush2.msra.mxu0 0.0
    %5082 = vmatprep.subr.mxu0 0.0
    %5083 = vmatpush2.msra.mxu0 0.0
    %5084 = vmatprep.subr.mxu0 0.0
    %5085 = vmatpush2.msra.mxu0 0.0
    %5086 = vmatprep.subr.mxu0 0.0
    %5087 = vmatpush2.msra.mxu0 0.0
    %5088 = vmatprep.subr.mxu0 0.0
    %5089 = vmatpush2.msra.mxu0 0.0
    %5090 = vmatprep.subr.mxu0 0.0
    %5091 = vmatpush2.msra.mxu0 0.0
    %5092 = vmatprep.mubr.f32.mxu0 0.0
    %5093 = vmatmul.mubr.f32.gmra.mxu0 %v4955
    %v5094 = vpop.f32.mrf.mxu0
    %v5095 = vadd.f32 %v3509, %v5094
    %v5096 = vpop.f32.mrf.mxu0
    %5097 = vdwg.mxu0
    %v5099 = vrot.slane %v5024, 1
    %v5100 = vrot.slane %v5024, 2
    %v5103 = vadd.f32 %v3363, %v5099
    %v5104 = vadd.f32 %v3369, %v5100
    %v5105 = vxor.u32 %v5103, 2147483648
    %v5106 = vxor.u32 %v5104, 2147483648
    %v5107 = vmul.f32 %v5105, 1.442695
    %v5108 = vpow.pop %v5107
    %v5109 = vmul.f32 %v5106, 1.442695
    %v5110 = vpow.pop %v5109
    %v5111 = vadd.f32 %v5108, 1.0
    %v5112 = vadd.f32 %v5110, 1.0
    %v5113 = vrcp.pop %v5111
    %v5114 = vmul.f32 1.0, %v5113
    %v5115 = vrcp.pop %v5112
    %v5116 = vmul.f32 1.0, %v5115
    %v5118 = vrot.slane %v5026, 1
    %v5119 = vrot.slane %v5026, 2
    %v5122 = vadd.f32 %v3365, %v5118
    %v5123 = vadd.f32 %v3371, %v5119
    %v5124 = vxor.u32 %v5122, 2147483648
    %v5125 = vxor.u32 %v5123, 2147483648
    %v5126 = vmul.f32 %v5124, 1.442695
    %v5127 = vpow.pop %v5126
    %v5128 = vmul.f32 %v5125, 1.442695
    %v5129 = vpow.pop %v5128
    %v5130 = vadd.f32 %v5127, 1.0
    %v5131 = vadd.f32 %v5129, 1.0
    %v5132 = vrcp.pop %v5130
    %v5133 = vmul.f32 1.0, %v5132
    %v5134 = vrcp.pop %v5131
    %v5135 = vmul.f32 1.0, %v5134
    %v5137 = vrot.slane %v5095, 1
    %v5138 = vrot.slane %v5095, 2
    %v5141 = vmul.f32 %v5114, %v5137
    %v5142 = vmul.f32 %v5116, %v5138
    %v5143 = vadd.f32 %v3440, %v5141
    %v5144 = vadd.f32 %v3445, %v5142
    %v5145 = vtanh.pop %v5143
    %v5146 = vtanh.pop %v5144
    %v5147 = vsub.f32 1.0, %v5133
    %v5148 = vsub.f32 1.0, %v5135
    %v5149 = vmul.f32 %v5147, %v5145
    %v5150 = vmul.f32 %v5148, %v5146
    %v5151 = vrot.slane %v4949, 7
    %v5152 = vrot.slane %v4950, 7
    %v5155 = vmul.f32 %v5133, %v5151
    %v5156 = vmul.f32 %v5135, %v5152
    %v5157 = vadd.f32 %v5149, %v5155
    %v5158 = vadd.f32 %v5150, %v5156
    %v5159 = vld [vmem:[%s19] sm:$0x1]
    %v5160 = vld [vmem:[%s22] sm:$0x1]
    %v5161 = vadd.f32 %v5160, 1e-05
    %v5162 = vrsqrt.pop %v5161
    %v5163 = vmul.f32 %v5159, %v5162
    %v5164 = vld [vmem:[%s21] sm:$0x1]
    %v5166 = vlaneseq
    %v5167 = vshrl.u32 %v5166, 7
    %v5168 = vsub.s32 0, %v5167
    %v5169 = vrot.slane %v5164, %v5168
    %v5171 = vsub.f32 %v5157, %v5169
    %v5172 = vsub.f32 %v5158, %v5169
    %v5174 = vlaneseq
    %v5175 = vshrl.u32 %v5174, 7
    %v5176 = vsub.s32 0, %v5175
    %v5177 = vrot.slane %v5163, %v5176
    %v5179 = vmul.f32 %v5171, %v5177
    %v5180 = vmul.f32 %v5172, %v5177
    %v5181 = vld [vmem:[%s20] sm:$0x1]
    %v5183 = vlaneseq
    %v5184 = vshrl.u32 %v5183, 7
    %v5185 = vsub.s32 0, %v5184
    %v5186 = vrot.slane %v5181, %v5185
    %v5188 = vadd.f32 %v5179, %v5186
    %v5189 = vadd.f32 %v5180, %v5186
    %v5190 = vmul.f32 %v5188, %v5188
    %v5191 = vmul.f32 %v5189, %v5189
    %v5194 = vrot.slane %v5191, 7
    %vm5197 = vcmask 1047559
    %v5198 = vsel %vm5197, %v5190, 0.0
    %5199 = vadd.xlane.f32.xlu0 %v5198
    %v5200 = vpop.xlane.xlu0 %5199
    %vm5201 = vcmask 1040384
    %v5202 = vsel %vm5201, %v5194, 0.0
    %5203 = vadd.xlane.f32.xlu0 %v5202
    %v5204 = vpop.xlane.xlu0 %5203
    %v5205 = vrsqrt.pop %v5200
    %v5206 = vrsqrt.pop %v5204
    %v5209 = vrot.slane %v5206, 1
    %v5212 = vmul.f32 %v5188, %v5205
    %v5213 = vmul.f32 %v5189, %v5209
    %v5216 = vrot.slane %v5213, 7
    %5219 = vst [vmem:[#allocation20 - $0x7] sm:$0x80] %v5212
    %5220 = vst [vmem:[#allocation20 + $0x1] sm:$0x1] %v5216
    // Predicated region
    $region138: #{tpu_custom_call.1} parent=1 // pred_check
      _
    $region139: #{tpu_custom_call.1} parent=1 // pred_check_branch
      %5222 = sbr.rel (0) target = $region141
    $region140: #{tpu_custom_call.1} parent=1 // pred_region
      %s5224 = ssub.s32 32, 32
      %5225 = vsyncadd [#allocation4], %s5224
      %s5227 = sshll.u32 [#allocation20], 4
      %s5228 = int_to_ptr.vmem [resolvable:$true] %s5227
      %5230 = dma.vmem_to_hbm [thread:$0]  %s5228, 32, %s23, [#allocation4]
    $region141: #{tpu_custom_call.1} parent=1 // pred_fallthru
      _
    // Predicated region
    $region142: #{tpu_custom_call.1} parent=1 // pred_check
      _
    $region143: #{tpu_custom_call.1} parent=1 // pred_check_branch
      %5232 = sbr.rel (0) target = $region145
    $region144: #{tpu_custom_call.1} parent=1 // pred_region
      %5233 = dma.done [#allocation4], 32
    $region145: #{tpu_custom_call.1} parent=1 // pred_fallthru
      _
    %5234 = vsyncpa [#allocation3], 1
    %5235 = vsyncpa [#allocation6], 1
    %5236 = vsyncpa [#allocation9], 1
    %5237 = vsyncpa [#allocation12], 1
    %5238 = vsyncpa [#allocation15], 1
    %5239 = vsyncpa [#allocation18], 1
    %5240 = vsyncpa [#allocation4], 1

</llo_original>
